<compile_context>
chip_gen: v5e
topology: v5e:2x2
jax: 0.10.0
libtpu: 0.0.40
codegen_flags: <defaults>
</compile_context>

<pallas_src>
import functools

import numpy as np
import jax
import jax.numpy as jnp
from jax.experimental import pallas as pl
from jax.experimental.pallas import tpu as pltpu

GN_EPS = 1e-5                       # nn.GroupNorm default eps
_VMEM_LIMIT = 32 * 1024 * 1024      # safe on v5e (16 MiB default) .. v7x (64 MiB)


def _pad_to(n, m=128):
    return ((n + m - 1) // m) * m


# ----------------------------------------------------------------------------
# In-kernel GroupNorm(num_groups=1) + affine over a list of (rows, Cp) blocks
# ----------------------------------------------------------------------------
def _groupnorm_affine(blocks, vec, n_true):
    """vec is the packed (8, Cp) tile: row0=bias(already added), row1=gamma,
    row2=beta, row3=channel mask (1 for true channels, 0 for lane padding).

    Statistics are joint over all blocks and divided by the TRUE element
    count `n_true`.  Padded columns contribute exactly zero (zero weight /
    bias pads for the mean; mask row for the centered sum of squares).
    Two-pass for numerical robustness; affine folded into one FMA.
    """
    gamma, beta, mask = vec[1:2], vec[2:3], vec[3:4]
    inv_n = 1.0 / float(n_true)

    col = jnp.zeros((1, blocks[0].shape[1]), jnp.float32)
    for b in blocks:
        col = col + jnp.sum(b, axis=0, keepdims=True)
    mean = jnp.sum(col) * inv_n

    centered = [(b - mean) * mask for b in blocks]
    col2 = jnp.zeros_like(col)
    for c in centered:
        col2 = col2 + jnp.sum(c * c, axis=0, keepdims=True)
    var = jnp.sum(col2) * inv_n

    scale = gamma * jax.lax.rsqrt(var + GN_EPS)
    return [c * scale + beta for c in centered]


# ----------------------------------------------------------------------------
# Kernel 1: Stage 0  (Conv3d k=4,s=4 as matmul + GroupNorm), one sample/step
# ----------------------------------------------------------------------------
def stage0_kernel(x_ref, w_ref, v_ref, o_ref, *, true_c):
    v = v_ref[...]                                                   # (8, Cp)
    y = jnp.dot(x_ref[0], w_ref[...],
                preferred_element_type=jnp.float32) + v[0:1]         # (P, Cp)
    out = _groupnorm_affine([y], v, x_ref.shape[1] * true_c)[0]
    o_ref[0] = out.astype(o_ref.dtype)                               # bf16 out


# ----------------------------------------------------------------------------
# Kernel 2: Stages 1+2+3 fused (+ position-embedding add), one sample/step
# ----------------------------------------------------------------------------
def fused_stages_kernel(p1_ref, w1_ref, v1_ref, w2_ref, v2_ref, w3_ref, v3_ref,
                        pos_ref, t1_ref, t2_ref, o3_ref, *, c1, c2, c3):
    n_off = p1_ref.shape[1]        # 8 = offsets of the stage-2 r=2 conv
    p2 = p1_ref.shape[2]           # 27 final token positions

    # ---- Stage 1: Conv3d(k=2,s=2) + GroupNorm ---------------------------
    v1 = v1_ref[...]
    w1 = w1_ref[...]
    y1 = [jnp.dot(p1_ref[0, o], w1,
                  preferred_element_type=jnp.float32) + v1[0:1]
          for o in range(n_off)]                                     # 8x(27,Cp1)
    tok1 = _groupnorm_affine(y1, v1, n_off * p2 * c1)
    for o in range(n_off):
        t1_ref[0, o] = tok1[o].astype(t1_ref.dtype)

    # ---- Stage 2: Conv3d(k=2,s=2) + GroupNorm ---------------------------
    # Rows were pre-grouped offset-major outside the kernel, so the conv is a
    # sum of 8 aligned matmuls - no in-kernel gather/transpose.
    v2 = v2_ref[...]
    acc2 = jnp.zeros((p2, w2_ref.shape[2]), jnp.float32)
    for o in range(n_off):
        acc2 = acc2 + jnp.dot(tok1[o].astype(jnp.bfloat16), w2_ref[o],
                              preferred_element_type=jnp.float32)
    y2 = acc2 + v2[0:1]
    tok2 = _groupnorm_affine([y2], v2, p2 * c2)[0]                   # (27, Cp2)
    t2_ref[0] = tok2.astype(t2_ref.dtype)

    # ---- Stage 3: Conv3d(k=1,s=1) + GroupNorm + fused pos-embedding -----
    v3 = v3_ref[...]
    y3 = jnp.dot(tok2.astype(jnp.bfloat16), w3_ref[...],
                 preferred_element_type=jnp.float32) + v3[0:1]
    tok3 = _groupnorm_affine([y3], v3, p2 * c3)[0]                   # (27, 384)
    o3_ref[0] = (tok3 + pos_ref[0]).astype(o3_ref.dtype)


# ----------------------------------------------------------------------------
# pallas_call wrappers
# ----------------------------------------------------------------------------
def _stage0_call(patches, w, vec, *, true_c):
    B, P, K = patches.shape
    Cp = w.shape[1]
    kernel = functools.partial(stage0_kernel, true_c=true_c)
    return pl.pallas_call(
        kernel,
        out_shape=jax.ShapeDtypeStruct((B, P, Cp), jnp.bfloat16),
        grid_spec=pltpu.PrefetchScalarGridSpec(
            num_scalar_prefetch=0,
            grid=(B,),
            in_specs=[
                pl.BlockSpec((1, P, K), lambda b: (b, 0, 0)),
                pl.BlockSpec((K, Cp), lambda b: (0, 0)),
                pl.BlockSpec((8, Cp), lambda b: (0, 0)),
            ],
            out_specs=pl.BlockSpec((1, P, Cp), lambda b: (b, 0, 0)),
        ),
        compiler_params=pltpu.CompilerParams(
            dimension_semantics=("parallel",),
            vmem_limit_bytes=_VMEM_LIMIT,
            allow_input_fusion=[True, False, False],
        ),
    )(patches, w, vec)


def _fused_stages_call(p1, w1, v1, w2, v2, w3, v3, pos, *, c1, c2, c3):
    B, n_off, P2, K1 = p1.shape
    Cp1, Cp2, Cp3 = w1.shape[1], w2.shape[2], w3.shape[1]
    kernel = functools.partial(fused_stages_kernel, c1=c1, c2=c2, c3=c3)
    return pl.pallas_call(
        kernel,
        out_shape=(
            jax.ShapeDtypeStruct((B, n_off, P2, Cp1), jnp.float32),  # stage-1 tokens
            jax.ShapeDtypeStruct((B, P2, Cp2), jnp.float32),         # stage-2 tokens
            jax.ShapeDtypeStruct((B, P2, Cp3), jnp.float32),         # final tokens
        ),
        grid_spec=pltpu.PrefetchScalarGridSpec(
            num_scalar_prefetch=0,
            grid=(B,),
            in_specs=[
                pl.BlockSpec((1, n_off, P2, K1), lambda b: (b, 0, 0, 0)),
                pl.BlockSpec((K1, Cp1), lambda b: (0, 0)),
                pl.BlockSpec((8, Cp1), lambda b: (0, 0)),
                pl.BlockSpec((n_off, Cp1, Cp2), lambda b: (0, 0, 0)),
                pl.BlockSpec((8, Cp2), lambda b: (0, 0)),
                pl.BlockSpec((Cp2, Cp3), lambda b: (0, 0)),
                pl.BlockSpec((8, Cp3), lambda b: (0, 0)),
                pl.BlockSpec((1, P2, Cp3), lambda b: (0, 0, 0)),
            ],
            out_specs=(
                pl.BlockSpec((1, n_off, P2, Cp1), lambda b: (b, 0, 0, 0)),
                pl.BlockSpec((1, P2, Cp2), lambda b: (b, 0, 0)),
                pl.BlockSpec((1, P2, Cp3), lambda b: (b, 0, 0)),
            ),
        ),
        compiler_params=pltpu.CompilerParams(
            dimension_semantics=("parallel",),
            vmem_limit_bytes=_VMEM_LIMIT,
            allow_input_fusion=[True] + [False] * 7,
        ),
    )(p1, w1, v1, w2, v2, w3, v3, pos)


# ----------------------------------------------------------------------------
# Plain-JAX glue (fused by XLA under the single outer jit)
# ----------------------------------------------------------------------------
def _extract_patches(x, r):
    """(B, C, W, H, Z) -> (B, P, C*r^3) with K ordered (c_in, dw, dh, dz)."""
    B, C, W, H, Z = x.shape
    Wp, Hp, Zp = W // r, H // r, Z // r
    x = x.reshape(B, C, Wp, r, Hp, r, Zp, r)
    x = x.transpose(0, 2, 4, 6, 1, 3, 5, 7)
    return x.reshape(B, Wp * Hp * Zp, C * r ** 3), (Wp, Hp, Zp)


def _tokens_to_volume(tokens, spatial):
    B, P, C = tokens.shape
    Wp, Hp, Zp = spatial
    return tokens.reshape(B, Wp, Hp, Zp, C).transpose(0, 4, 1, 2, 3)


@functools.partial(jax.jit, static_argnames=("channels", "depth"))
def _encoder_forward(params, x, channels, depth):
    if depth != 0:
        # TODO(synk): In_Conv_List path for depth in {1, 2}.
        raise NotImplementedError("only the depth=0 path is implemented")
    c0, c1, c2, c3 = channels
    B, _, W, H, Z = x.shape
    assert W == H == Z and W % 16 == 0
    s3 = W // 16                               # final spatial extent (3)
    assert s3 ** 3 == params["pos_emb"].shape[1]
    st = params["stages"]

    # ---- Stage 0: Conv3d(k=4,s=4) + GroupNorm --------------------------
    p0, sp0 = _extract_patches(x, 4)
    p0 = p0.astype(jnp.bfloat16)
    tok0 = _stage0_call(p0, st[0]["w"], st[0]["vec"], true_c=c0)   # bf16
    hid0 = _tokens_to_volume(tok0[:, :, :c0].astype(jnp.float32), sp0)

    # ---- Pre-permuted stage-1 patches: rows grouped by the stage-2 conv
    #      offset (offset-major, final-token-minor) so stages 1-3 fuse into a
    #      single pallas_call with no in-kernel gather / transpose. ----------
    t = tok0[:, :, :c0].reshape(B, s3, 2, 2, s3, 2, 2, s3, 2, 2, c0)
    #    dims: (B, u, o1, d1, v, o2, d2, t, o3, d3, c0)
    t = t.transpose(0, 2, 5, 8, 1, 4, 7, 10, 3, 6, 9)
    #    dims: (B, o1, o2, o3, u, v, t, c0, d1, d2, d3)
    p1 = t.reshape(B, 8, s3 ** 3, c0 * 8)                           # bf16

    t1, t2, out3 = _fused_stages_call(
        p1, st[1]["w"], st[1]["vec"], st[2]["w"], st[2]["vec"],
        st[3]["w"], st[3]["vec"], params["pos_emb"], c1=c1, c2=c2, c3=c3)

    # Hidden state 1: un-permute rows back to the natural 6^3 volume order.
    h1 = t1[:, :, :, :c1].reshape(B, 2, 2, 2, s3, s3, s3, c1)
    h1 = h1.transpose(0, 7, 4, 1, 5, 2, 6, 3)
    hid1 = h1.reshape(B, c1, 2 * s3, 2 * s3, 2 * s3)
    hid2 = _tokens_to_volume(t2[:, :, :c2], (s3, s3, s3))

    return out3, (hid0, hid1, hid2)


def encoder_forward(params, x, depth=0, channels=(48, 96, 240, 384)):
    tokens, hidden = _encoder_forward(params, x, channels=tuple(channels),
                                      depth=depth)
    B, _, W, H, Z = x.shape
    shape_info = (B, channels[3], W // 16, H // 16, Z // 16)
    return tokens, list(hidden), shape_info


# ----------------------------------------------------------------------------
# Parameters
# ----------------------------------------------------------------------------
def _assert_zero_padding(params, true_out=(48, 96, 240, 384),
                         true_in=(4, 48, 96, 240)):
    st = params["stages"]
    for i in range(4):
        w = np.asarray(st[i]["w"], np.float32)
        v = np.asarray(st[i]["vec"], np.float32)
        co = true_out[i]
        assert np.all(w[..., co:] == 0.0), f"stage {i}: nonzero padded W cols"
        assert np.all(v[:3, co:] == 0.0), f"stage {i}: nonzero padded b/gamma/beta"
        assert np.all(v[3, :co] == 1.0) and np.all(v[3, co:] == 0.0), \
            f"stage {i}: bad channel mask"
    assert np.all(np.asarray(st[2]["w"], np.float32)[:, true_in[2]:, :] == 0.0)
    assert np.all(np.asarray(st[3]["w"], np.float32)[true_in[3]:, :] == 0.0)


def init_encoder_params(key, in_channels=4, embed_dim=384, embedding_dim=27,
                        channels=(48, 96, 240)):
    dims = (in_channels, channels[0], channels[1], channels[2], embed_dim)
    rs = (4, 2, 2, 1)
    raw = []
    for i in range(4):
        key, kw, kb = jax.random.split(key, 3)
        cin, cout, r = dims[i], dims[i + 1], rs[i]
        fan_in = cin * r ** 3
        w = jax.random.normal(kw, (cout, cin, r, r, r), jnp.float32) / np.sqrt(fan_in)
        b = jax.random.normal(kb, (cout,), jnp.float32) * 0.01
        raw.append({"w": w, "b": b,
                    "gamma": jnp.ones((cout,), jnp.float32),     # GroupNorm init
                    "beta": jnp.zeros((cout,), jnp.float32)})

    def pack_vec(p, cp):
        cout = p["b"].shape[0]
        vec = np.zeros((8, cp), np.float32)
        vec[0, :cout] = np.asarray(p["b"])
        vec[1, :cout] = np.asarray(p["gamma"])
        vec[2, :cout] = np.asarray(p["beta"])
        vec[3, :cout] = 1.0                                      # channel mask
        return jnp.asarray(vec)

    stages = []
    # Stages 0, 1: (K, Cp) matmul weight, K ordered (c_in, dw, dh, dz).
    for i in (0, 1):
        cin, cout, r = dims[i], dims[i + 1], rs[i]
        cp = _pad_to(cout)
        wm = raw[i]["w"].reshape(cout, cin * r ** 3).T
        wm = jnp.pad(wm, ((0, 0), (0, cp - cout))).astype(jnp.bfloat16)
        stages.append({"w": wm, "vec": pack_vec(raw[i], cp)})
    # Stage 2: per-offset (8, Cp_in, Cp_out) weight, offsets ordered (dw,dh,dz).
    cin, cout = dims[2], dims[3]
    cpi, cpo = _pad_to(cin), _pad_to(cout)
    w2 = jnp.transpose(raw[2]["w"], (2, 3, 4, 1, 0)).reshape(8, cin, cout)
    w2 = jnp.pad(w2, ((0, 0), (0, cpi - cin), (0, cpo - cout))).astype(jnp.bfloat16)
    stages.append({"w": w2, "vec": pack_vec(raw[2], cpo)})
    # Stage 3 (r=1): (Cp_in, Cp_out); K rows padded to stage-2's padded width.
    cin, cout = dims[3], dims[4]
    cpi, cpo = _pad_to(cin), _pad_to(cout)
    w3 = raw[3]["w"].reshape(cout, cin).T
    w3 = jnp.pad(w3, ((0, cpi - cin), (0, cpo - cout))).astype(jnp.bfloat16)
    stages.append({"w": w3, "vec": pack_vec(raw[3], cpo)})

    # nn.Parameter(torch.zeros(1, embedding_dim, embed_dim))
    pos = jnp.zeros((1, embedding_dim, embed_dim), jnp.float32)

    params = {"stages": stages, "pos_emb": pos}
    _assert_zero_padding(params)
    return params, raw


# ----------------------------------------------------------------------------
# Straightforward (non-Pallas) JAX reference for the self-check
# ----------------------------------------------------------------------------
def _reference_forward(raw, pos, x):
    def stage(vol, p, r):
        patches, sp = _extract_patches(vol, r)
        wmat = p["w"].reshape(p["w"].shape[0], -1).T.astype(jnp.bfloat16)
        y = jnp.dot(patches.astype(jnp.bfloat16), wmat,
                    preferred_element_type=jnp.float32) + p["b"]
        mean = jnp.mean(y, axis=(1, 2), keepdims=True)
        var = jnp.mean(jnp.square(y - mean), axis=(1, 2), keepdims=True)
        yn = (y - mean) * jax.lax.rsqrt(var + GN_EPS)
        yn = yn * p["gamma"] + p["beta"]
        return yn, sp

    hiddens = []
    vol = x
    for i in range(3):
        tok, sp = stage(vol, raw[i], (4, 2, 2)[i])
        vol = _tokens_to_volume(tok, sp)
        hiddens.append(vol)
    tok, _ = stage(vol, raw[3], 1)
    return tok + pos, hiddens


# ----------------------------------------------------------------------------
if __name__ == "__main__":
    key = jax.random.PRNGKey(0)
    k_params, k_x = jax.random.split(key)

    # Default config: in_channels=4, channels=(48,96,240), embed_dim=384,
    # conv_r=(4,2,2,1), embedding_dim=27 => input spatial must be 48 so the
    # final token count is 3*3*3 = 27 (matching position_embeddings).
    params, raw = init_encoder_params(k_params)

    B, C_in, S = 2, 4, 48
    x = jax.random.normal(k_x, (B, C_in, S, S, S), dtype=jnp.float32)

    tokens, hiddens, shape_info = encoder_forward(params, x, depth=0)
    tokens = jax.block_until_ready(tokens)
    for h in hiddens:
        jax.block_until_ready(h)

    assert tokens.shape == (B, 27, 384), tokens.shape
    assert shape_info == (B, 384, 3, 3, 3), shape_info
    assert hiddens[0].shape == (B, 48, 12, 12, 12)
    assert hiddens[1].shape == (B, 96, 6, 6, 6)
    assert hiddens[2].shape == (B, 240, 3, 3, 3)
    assert bool(jnp.all(jnp.isfinite(tokens)))

    # Numerical cross-check against the plain-JAX reference (bf16 matmul
    # inputs / f32 accumulation on both paths; the kernel additionally rounds
    # the stage-0 activation to bf16, hence the loose tolerance).
    ref_tok, ref_hid = _reference_forward(raw, params["pos_emb"], x)
    np.testing.assert_allclose(np.asarray(tokens), np.asarray(ref_tok),
                               rtol=0.1, atol=0.05)
    for got, want in zip(hiddens, ref_hid):
        np.testing.assert_allclose(np.asarray(got), np.asarray(want),
                                   rtol=0.1, atol=0.05)

    print("KERNEL_OK")
</pallas_src>

<mosaic_0001>
module attributes {stable_mosaic.version = 11 : i64} {
  func.func @stage0_kernel(%arg0: i32, %arg1: memref<1x1728x256xbf16, #tpu.memory_space<vmem>>, %arg2: memref<256x128xbf16, #tpu.memory_space<vmem>>, %arg3: memref<8x128xf32, #tpu.memory_space<vmem>>, %arg4: memref<1x1728x128xbf16, #tpu.memory_space<vmem>>) attributes {dimension_semantics = [#tpu.dimension_semantics<parallel>], iteration_bounds = array<i64: 2>, scalar_prefetch = 0 : i64, scratch_operands = 0 : i64, tpu.core_type = #tpu.core_type<tc>, window_params = [{transform_indices = @transform_0, window_bounds = array<i64: 1, 1728, 256>}, {pipeline_mode = #tpu.pipeline_mode<synchronous>, transform_indices = @transform_1, window_bounds = array<i64: 256, 128>}, {pipeline_mode = #tpu.pipeline_mode<synchronous>, transform_indices = @transform_2, window_bounds = array<i64: 8, 128>}, {transform_indices = @transform_3, window_bounds = array<i64: 1, 1728, 128>}]} {
    %c0 = arith.constant 0 : index
    %c0_0 = arith.constant 0 : index
    %0 = vector.load %arg3[%c0, %c0_0] : memref<8x128xf32, #tpu.memory_space<vmem>>, vector<8x128xf32>
    %c0_1 = arith.constant 0 : index
    %c0_2 = arith.constant 0 : index
    %c0_3 = arith.constant 0 : index
    %1 = vector.load %arg1[%c0_1, %c0_2, %c0_3] : memref<1x1728x256xbf16, #tpu.memory_space<vmem>>, vector<1x1728x256xbf16>
    %2 = vector.shape_cast %1 : vector<1x1728x256xbf16> to vector<1728x256xbf16>
    %c0_4 = arith.constant 0 : index
    %c0_5 = arith.constant 0 : index
    %3 = vector.load %arg2[%c0_4, %c0_5] : memref<256x128xbf16, #tpu.memory_space<vmem>>, vector<256x128xbf16>
    %cst = arith.constant dense<0.000000e+00> : vector<1728x128xf32>
    %4 = tpu.matmul %2, %3, %cst {dimension_numbers = #tpu.dot_dimension_numbers<[1], [0], [0], [1], [0, 0, 1, 1], [], []>} : vector<1728x256xbf16>, vector<256x128xbf16>, vector<1728x128xf32> -> vector<1728x128xf32>
    %5 = vector.extract_strided_slice %0 {offsets = [0, 0], sizes = [1, 128], strides = [1, 1]} : vector<8x128xf32> to vector<1x128xf32>
    %6 = vector.broadcast %5 : vector<1x128xf32> to vector<1728x128xf32>
    %7 = arith.addf %4, %6 : vector<1728x128xf32>
    %8 = vector.extract_strided_slice %0 {offsets = [1, 0], sizes = [1, 128], strides = [1, 1]} : vector<8x128xf32> to vector<1x128xf32>
    %9 = vector.extract_strided_slice %0 {offsets = [2, 0], sizes = [1, 128], strides = [1, 1]} : vector<8x128xf32> to vector<1x128xf32>
    %10 = vector.extract_strided_slice %0 {offsets = [3, 0], sizes = [1, 128], strides = [1, 1]} : vector<8x128xf32> to vector<1x128xf32>
    %cst_6 = arith.constant 0.000000e+00 : f32
    %11 = vector.broadcast %cst_6 : f32 to vector<1x128xf32>
    %cst_7 = arith.constant dense<0.000000e+00> : vector<128xf32>
    %12 = vector.multi_reduction <add>, %7, %cst_7 [0] : vector<1728x128xf32> to vector<128xf32>
    %13 = vector.shape_cast %12 : vector<128xf32> to vector<1x128xf32>
    %14 = arith.addf %11, %13 : vector<1x128xf32>
    %15 = vector.shape_cast %14 : vector<1x128xf32> to vector<1x1x128xf32>
    %cst_8 = arith.constant dense<0.000000e+00> : vector<1xf32>
    %16 = vector.multi_reduction <add>, %15, %cst_8 [1, 2] : vector<1x1x128xf32> to vector<1xf32>
    %17 = vector.shape_cast %16 : vector<1xf32> to vector<1x1x1xf32>
    %18 = vector.extract %17[0, 0, 0] : f32 from vector<1x1x1xf32>
    %cst_9 = arith.constant 1.20563273E-5 : f32
    %19 = arith.mulf %18, %cst_9 : f32
    %20 = vector.broadcast %19 : f32 to vector<1728x128xf32>
    %21 = arith.subf %7, %20 : vector<1728x128xf32>
    %22 = vector.broadcast %10 : vector<1x128xf32> to vector<1728x128xf32>
    %23 = arith.mulf %21, %22 : vector<1728x128xf32>
    %cst_10 = arith.constant 0.000000e+00 : f32
    %24 = vector.broadcast %cst_10 : f32 to vector<1x128xf32>
    %25 = arith.mulf %23, %23 : vector<1728x128xf32>
    %cst_11 = arith.constant dense<0.000000e+00> : vector<128xf32>
    %26 = vector.multi_reduction <add>, %25, %cst_11 [0] : vector<1728x128xf32> to vector<128xf32>
    %27 = vector.shape_cast %26 : vector<128xf32> to vector<1x128xf32>
    %28 = arith.addf %24, %27 : vector<1x128xf32>
    %29 = vector.shape_cast %28 : vector<1x128xf32> to vector<1x1x128xf32>
    %cst_12 = arith.constant dense<0.000000e+00> : vector<1xf32>
    %30 = vector.multi_reduction <add>, %29, %cst_12 [1, 2] : vector<1x1x128xf32> to vector<1xf32>
    %31 = vector.shape_cast %30 : vector<1xf32> to vector<1x1x1xf32>
    %32 = vector.extract %31[0, 0, 0] : f32 from vector<1x1x1xf32>
    %cst_13 = arith.constant 1.20563273E-5 : f32
    %33 = arith.mulf %32, %cst_13 : f32
    %cst_14 = arith.constant 9.99999974E-6 : f32
    %34 = arith.addf %33, %cst_14 : f32
    %35 = math.rsqrt %34 : f32
    %36 = vector.broadcast %35 : f32 to vector<1x128xf32>
    %37 = arith.mulf %8, %36 : vector<1x128xf32>
    %38 = vector.broadcast %37 : vector<1x128xf32> to vector<1728x128xf32>
    %39 = arith.mulf %23, %38 : vector<1728x128xf32>
    %40 = vector.broadcast %9 : vector<1x128xf32> to vector<1728x128xf32>
    %41 = arith.addf %39, %40 : vector<1728x128xf32>
    %42 = arith.truncf %41 : vector<1728x128xf32> to vector<1728x128xbf16>
    %c0_15 = arith.constant 0 : index
    %c0_16 = arith.constant 0 : index
    %c0_17 = arith.constant 0 : index
    %43 = vector.load %arg4[%c0_15, %c0_16, %c0_17] : memref<1x1728x128xbf16, #tpu.memory_space<vmem>>, vector<1x1728x128xbf16>
    %44 = vector.shape_cast %43 : vector<1x1728x128xbf16> to vector<1728x128xbf16>
    %45 = vector.shape_cast %42 : vector<1728x128xbf16> to vector<1x1728x128xbf16>
    tpu.vector_store %arg4[%c0_15, %c0_16, %c0_17], %45 {strides = array<i32>} : memref<1x1728x128xbf16, #tpu.memory_space<vmem>>, vector<1x1728x128xbf16>,
    return
  }
  func.func @transform_0(%arg0: i32) -> (i32, i32, i32) {
    %c0_i32 = arith.constant 0 : i32
    %c0_i32_0 = arith.constant 0 : i32
    %c0_i32_1 = arith.constant 0 : i32
    return %arg0, %c0_i32, %c0_i32_0 : i32, i32, i32
  }
  func.func @transform_1(%arg0: i32) -> (i32, i32) {
    %c0_i32 = arith.constant 0 : i32
    %c0_i32_0 = arith.constant 0 : i32
    %c0_i32_1 = arith.constant 0 : i32
    return %c0_i32, %c0_i32_0 : i32, i32
  }
  func.func @transform_2(%arg0: i32) -> (i32, i32) {
    %c0_i32 = arith.constant 0 : i32
    %c0_i32_0 = arith.constant 0 : i32
    %c0_i32_1 = arith.constant 0 : i32
    return %c0_i32, %c0_i32_0 : i32, i32
  }
  func.func @transform_3(%arg0: i32) -> (i32, i32, i32) {
    %c0_i32 = arith.constant 0 : i32
    %c0_i32_0 = arith.constant 0 : i32
    %c0_i32_1 = arith.constant 0 : i32
    return %arg0, %c0_i32, %c0_i32_0 : i32, i32, i32
  }
}

module attributes {stable_mosaic.version = 11 : i64} {
  func.func @fused_stages_kernel(%arg0: i32, %arg1: memref<1x8x27x384xbf16, #tpu.memory_space<vmem>>, %arg2: memref<384x128xbf16, #tpu.memory_space<vmem>>, %arg3: memref<8x128xf32, #tpu.memory_space<vmem>>, %arg4: memref<8x128x256xbf16, #tpu.memory_space<vmem>>, %arg5: memref<8x256xf32, #tpu.memory_space<vmem>>, %arg6: memref<256x384xbf16, #tpu.memory_space<vmem>>, %arg7: memref<8x384xf32, #tpu.memory_space<vmem>>, %arg8: memref<1x27x384xf32, #tpu.memory_space<vmem>>, %arg9: memref<1x8x27x128xf32, #tpu.memory_space<vmem>>, %arg10: memref<1x27x256xf32, #tpu.memory_space<vmem>>, %arg11: memref<1x27x384xf32, #tpu.memory_space<vmem>>) attributes {dimension_semantics = [#tpu.dimension_semantics<parallel>], iteration_bounds = array<i64: 2>, scalar_prefetch = 0 : i64, scratch_operands = 0 : i64, tpu.core_type = #tpu.core_type<tc>, window_params = [{transform_indices = @transform_0, window_bounds = array<i64: 1, 8, 27, 384>}, {pipeline_mode = #tpu.pipeline_mode<synchronous>, transform_indices = @transform_1, window_bounds = array<i64: 384, 128>}, {pipeline_mode = #tpu.pipeline_mode<synchronous>, transform_indices = @transform_2, window_bounds = array<i64: 8, 128>}, {pipeline_mode = #tpu.pipeline_mode<synchronous>, transform_indices = @transform_3, window_bounds = array<i64: 8, 128, 256>}, {pipeline_mode = #tpu.pipeline_mode<synchronous>, transform_indices = @transform_4, window_bounds = array<i64: 8, 256>}, {pipeline_mode = #tpu.pipeline_mode<synchronous>, transform_indices = @transform_5, window_bounds = array<i64: 256, 384>}, {pipeline_mode = #tpu.pipeline_mode<synchronous>, transform_indices = @transform_6, window_bounds = array<i64: 8, 384>}, {pipeline_mode = #tpu.pipeline_mode<synchronous>, transform_indices = @transform_7, window_bounds = array<i64: 1, 27, 384>}, {transform_indices = @transform_8, window_bounds = array<i64: 1, 8, 27, 128>}, {transform_indices = @transform_9, window_bounds = array<i64: 1, 27, 256>}, {transform_indices = @transform_10, window_bounds = array<i64: 1, 27, 384>}]} {
    %c0 = arith.constant 0 : index
    %c0_0 = arith.constant 0 : index
    %0 = vector.load %arg3[%c0, %c0_0] : memref<8x128xf32, #tpu.memory_space<vmem>>, vector<8x128xf32>
    %c0_1 = arith.constant 0 : index
    %c0_2 = arith.constant 0 : index
    %1 = vector.load %arg2[%c0_1, %c0_2] : memref<384x128xbf16, #tpu.memory_space<vmem>>, vector<384x128xbf16>
    %c0_3 = arith.constant 0 : index
    %c0_4 = arith.constant 0 : index
    %c0_5 = arith.constant 0 : index
    %c0_6 = arith.constant 0 : index
    %2 = vector.load %arg1[%c0_3, %c0_4, %c0_5, %c0_6] : memref<1x8x27x384xbf16, #tpu.memory_space<vmem>>, vector<1x1x27x384xbf16>
    %3 = vector.shape_cast %2 : vector<1x1x27x384xbf16> to vector<27x384xbf16>
    %cst = arith.constant dense<0.000000e+00> : vector<27x128xf32>
    %4 = tpu.matmul %3, %1, %cst {dimension_numbers = #tpu.dot_dimension_numbers<[1], [0], [0], [1], [0, 0, 1, 1], [], []>} : vector<27x384xbf16>, vector<384x128xbf16>, vector<27x128xf32> -> vector<27x128xf32>
    %5 = vector.extract_strided_slice %0 {offsets = [0, 0], sizes = [1, 128], strides = [1, 1]} : vector<8x128xf32> to vector<1x128xf32>
    %6 = vector.broadcast %5 : vector<1x128xf32> to vector<27x128xf32>
    %7 = arith.addf %4, %6 : vector<27x128xf32>
    %c0_7 = arith.constant 0 : index
    %c1 = arith.constant 1 : index
    %c0_8 = arith.constant 0 : index
    %c0_9 = arith.constant 0 : index
    %8 = vector.load %arg1[%c0_7, %c1, %c0_8, %c0_9] : memref<1x8x27x384xbf16, #tpu.memory_space<vmem>>, vector<1x1x27x384xbf16>
    %9 = vector.shape_cast %8 : vector<1x1x27x384xbf16> to vector<27x384xbf16>
    %cst_10 = arith.constant dense<0.000000e+00> : vector<27x128xf32>
    %10 = tpu.matmul %9, %1, %cst_10 {dimension_numbers = #tpu.dot_dimension_numbers<[1], [0], [0], [1], [0, 0, 1, 1], [], []>} : vector<27x384xbf16>, vector<384x128xbf16>, vector<27x128xf32> -> vector<27x128xf32>
    %11 = vector.extract_strided_slice %0 {offsets = [0, 0], sizes = [1, 128], strides = [1, 1]} : vector<8x128xf32> to vector<1x128xf32>
    %12 = vector.broadcast %11 : vector<1x128xf32> to vector<27x128xf32>
    %13 = arith.addf %10, %12 : vector<27x128xf32>
    %c0_11 = arith.constant 0 : index
    %c2 = arith.constant 2 : index
    %c0_12 = arith.constant 0 : index
    %c0_13 = arith.constant 0 : index
    %14 = vector.load %arg1[%c0_11, %c2, %c0_12, %c0_13] : memref<1x8x27x384xbf16, #tpu.memory_space<vmem>>, vector<1x1x27x384xbf16>
    %15 = vector.shape_cast %14 : vector<1x1x27x384xbf16> to vector<27x384xbf16>
    %cst_14 = arith.constant dense<0.000000e+00> : vector<27x128xf32>
    %16 = tpu.matmul %15, %1, %cst_14 {dimension_numbers = #tpu.dot_dimension_numbers<[1], [0], [0], [1], [0, 0, 1, 1], [], []>} : vector<27x384xbf16>, vector<384x128xbf16>, vector<27x128xf32> -> vector<27x128xf32>
    %17 = vector.extract_strided_slice %0 {offsets = [0, 0], sizes = [1, 128], strides = [1, 1]} : vector<8x128xf32> to vector<1x128xf32>
    %18 = vector.broadcast %17 : vector<1x128xf32> to vector<27x128xf32>
    %19 = arith.addf %16, %18 : vector<27x128xf32>
    %c0_15 = arith.constant 0 : index
    %c3 = arith.constant 3 : index
    %c0_16 = arith.constant 0 : index
    %c0_17 = arith.constant 0 : index
    %20 = vector.load %arg1[%c0_15, %c3, %c0_16, %c0_17] : memref<1x8x27x384xbf16, #tpu.memory_space<vmem>>, vector<1x1x27x384xbf16>
    %21 = vector.shape_cast %20 : vector<1x1x27x384xbf16> to vector<27x384xbf16>
    %cst_18 = arith.constant dense<0.000000e+00> : vector<27x128xf32>
    %22 = tpu.matmul %21, %1, %cst_18 {dimension_numbers = #tpu.dot_dimension_numbers<[1], [0], [0], [1], [0, 0, 1, 1], [], []>} : vector<27x384xbf16>, vector<384x128xbf16>, vector<27x128xf32> -> vector<27x128xf32>
    %23 = vector.extract_strided_slice %0 {offsets = [0, 0], sizes = [1, 128], strides = [1, 1]} : vector<8x128xf32> to vector<1x128xf32>
    %24 = vector.broadcast %23 : vector<1x128xf32> to vector<27x128xf32>
    %25 = arith.addf %22, %24 : vector<27x128xf32>
    %c0_19 = arith.constant 0 : index
    %c4 = arith.constant 4 : index
    %c0_20 = arith.constant 0 : index
    %c0_21 = arith.constant 0 : index
    %26 = vector.load %arg1[%c0_19, %c4, %c0_20, %c0_21] : memref<1x8x27x384xbf16, #tpu.memory_space<vmem>>, vector<1x1x27x384xbf16>
    %27 = vector.shape_cast %26 : vector<1x1x27x384xbf16> to vector<27x384xbf16>
    %cst_22 = arith.constant dense<0.000000e+00> : vector<27x128xf32>
    %28 = tpu.matmul %27, %1, %cst_22 {dimension_numbers = #tpu.dot_dimension_numbers<[1], [0], [0], [1], [0, 0, 1, 1], [], []>} : vector<27x384xbf16>, vector<384x128xbf16>, vector<27x128xf32> -> vector<27x128xf32>
    %29 = vector.extract_strided_slice %0 {offsets = [0, 0], sizes = [1, 128], strides = [1, 1]} : vector<8x128xf32> to vector<1x128xf32>
    %30 = vector.broadcast %29 : vector<1x128xf32> to vector<27x128xf32>
    %31 = arith.addf %28, %30 : vector<27x128xf32>
    %c0_23 = arith.constant 0 : index
    %c5 = arith.constant 5 : index
    %c0_24 = arith.constant 0 : index
    %c0_25 = arith.constant 0 : index
    %32 = vector.load %arg1[%c0_23, %c5, %c0_24, %c0_25] : memref<1x8x27x384xbf16, #tpu.memory_space<vmem>>, vector<1x1x27x384xbf16>
    %33 = vector.shape_cast %32 : vector<1x1x27x384xbf16> to vector<27x384xbf16>
    %cst_26 = arith.constant dense<0.000000e+00> : vector<27x128xf32>
    %34 = tpu.matmul %33, %1, %cst_26 {dimension_numbers = #tpu.dot_dimension_numbers<[1], [0], [0], [1], [0, 0, 1, 1], [], []>} : vector<27x384xbf16>, vector<384x128xbf16>, vector<27x128xf32> -> vector<27x128xf32>
    %35 = vector.extract_strided_slice %0 {offsets = [0, 0], sizes = [1, 128], strides = [1, 1]} : vector<8x128xf32> to vector<1x128xf32>
    %36 = vector.broadcast %35 : vector<1x128xf32> to vector<27x128xf32>
    %37 = arith.addf %34, %36 : vector<27x128xf32>
    %c0_27 = arith.constant 0 : index
    %c6 = arith.constant 6 : index
    %c0_28 = arith.constant 0 : index
    %c0_29 = arith.constant 0 : index
    %38 = vector.load %arg1[%c0_27, %c6, %c0_28, %c0_29] : memref<1x8x27x384xbf16, #tpu.memory_space<vmem>>, vector<1x1x27x384xbf16>
    %39 = vector.shape_cast %38 : vector<1x1x27x384xbf16> to vector<27x384xbf16>
    %cst_30 = arith.constant dense<0.000000e+00> : vector<27x128xf32>
    %40 = tpu.matmul %39, %1, %cst_30 {dimension_numbers = #tpu.dot_dimension_numbers<[1], [0], [0], [1], [0, 0, 1, 1], [], []>} : vector<27x384xbf16>, vector<384x128xbf16>, vector<27x128xf32> -> vector<27x128xf32>
    %41 = vector.extract_strided_slice %0 {offsets = [0, 0], sizes = [1, 128], strides = [1, 1]} : vector<8x128xf32> to vector<1x128xf32>
    %42 = vector.broadcast %41 : vector<1x128xf32> to vector<27x128xf32>
    %43 = arith.addf %40, %42 : vector<27x128xf32>
    %c0_31 = arith.constant 0 : index
    %c7 = arith.constant 7 : index
    %c0_32 = arith.constant 0 : index
    %c0_33 = arith.constant 0 : index
    %44 = vector.load %arg1[%c0_31, %c7, %c0_32, %c0_33] : memref<1x8x27x384xbf16, #tpu.memory_space<vmem>>, vector<1x1x27x384xbf16>
    %45 = vector.shape_cast %44 : vector<1x1x27x384xbf16> to vector<27x384xbf16>
    %cst_34 = arith.constant dense<0.000000e+00> : vector<27x128xf32>
    %46 = tpu.matmul %45, %1, %cst_34 {dimension_numbers = #tpu.dot_dimension_numbers<[1], [0], [0], [1], [0, 0, 1, 1], [], []>} : vector<27x384xbf16>, vector<384x128xbf16>, vector<27x128xf32> -> vector<27x128xf32>
    %47 = vector.extract_strided_slice %0 {offsets = [0, 0], sizes = [1, 128], strides = [1, 1]} : vector<8x128xf32> to vector<1x128xf32>
    %48 = vector.broadcast %47 : vector<1x128xf32> to vector<27x128xf32>
    %49 = arith.addf %46, %48 : vector<27x128xf32>
    %50 = vector.extract_strided_slice %0 {offsets = [1, 0], sizes = [1, 128], strides = [1, 1]} : vector<8x128xf32> to vector<1x128xf32>
    %51 = vector.extract_strided_slice %0 {offsets = [2, 0], sizes = [1, 128], strides = [1, 1]} : vector<8x128xf32> to vector<1x128xf32>
    %52 = vector.extract_strided_slice %0 {offsets = [3, 0], sizes = [1, 128], strides = [1, 1]} : vector<8x128xf32> to vector<1x128xf32>
    %cst_35 = arith.constant 0.000000e+00 : f32
    %53 = vector.broadcast %cst_35 : f32 to vector<1x128xf32>
    %cst_36 = arith.constant dense<0.000000e+00> : vector<128xf32>
    %54 = vector.multi_reduction <add>, %7, %cst_36 [0] : vector<27x128xf32> to vector<128xf32>
    %55 = vector.shape_cast %54 : vector<128xf32> to vector<1x128xf32>
    %56 = arith.addf %53, %55 : vector<1x128xf32>
    %cst_37 = arith.constant dense<0.000000e+00> : vector<128xf32>
    %57 = vector.multi_reduction <add>, %13, %cst_37 [0] : vector<27x128xf32> to vector<128xf32>
    %58 = vector.shape_cast %57 : vector<128xf32> to vector<1x128xf32>
    %59 = arith.addf %56, %58 : vector<1x128xf32>
    %cst_38 = arith.constant dense<0.000000e+00> : vector<128xf32>
    %60 = vector.multi_reduction <add>, %19, %cst_38 [0] : vector<27x128xf32> to vector<128xf32>
    %61 = vector.shape_cast %60 : vector<128xf32> to vector<1x128xf32>
    %62 = arith.addf %59, %61 : vector<1x128xf32>
    %cst_39 = arith.constant dense<0.000000e+00> : vector<128xf32>
    %63 = vector.multi_reduction <add>, %25, %cst_39 [0] : vector<27x128xf32> to vector<128xf32>
    %64 = vector.shape_cast %63 : vector<128xf32> to vector<1x128xf32>
    %65 = arith.addf %62, %64 : vector<1x128xf32>
    %cst_40 = arith.constant dense<0.000000e+00> : vector<128xf32>
    %66 = vector.multi_reduction <add>, %31, %cst_40 [0] : vector<27x128xf32> to vector<128xf32>
    %67 = vector.shape_cast %66 : vector<128xf32> to vector<1x128xf32>
    %68 = arith.addf %65, %67 : vector<1x128xf32>
    %cst_41 = arith.constant dense<0.000000e+00> : vector<128xf32>
    %69 = vector.multi_reduction <add>, %37, %cst_41 [0] : vector<27x128xf32> to vector<128xf32>
    %70 = vector.shape_cast %69 : vector<128xf32> to vector<1x128xf32>
    %71 = arith.addf %68, %70 : vector<1x128xf32>
    %cst_42 = arith.constant dense<0.000000e+00> : vector<128xf32>
    %72 = vector.multi_reduction <add>, %43, %cst_42 [0] : vector<27x128xf32> to vector<128xf32>
    %73 = vector.shape_cast %72 : vector<128xf32> to vector<1x128xf32>
    %74 = arith.addf %71, %73 : vector<1x128xf32>
    %cst_43 = arith.constant dense<0.000000e+00> : vector<128xf32>
    %75 = vector.multi_reduction <add>, %49, %cst_43 [0] : vector<27x128xf32> to vector<128xf32>
    %76 = vector.shape_cast %75 : vector<128xf32> to vector<1x128xf32>
    %77 = arith.addf %74, %76 : vector<1x128xf32>
    %78 = vector.shape_cast %77 : vector<1x128xf32> to vector<1x1x128xf32>
    %cst_44 = arith.constant dense<0.000000e+00> : vector<1xf32>
    %79 = vector.multi_reduction <add>, %78, %cst_44 [1, 2] : vector<1x1x128xf32> to vector<1xf32>
    %80 = vector.shape_cast %79 : vector<1xf32> to vector<1x1x1xf32>
    %81 = vector.extract %80[0, 0, 0] : f32 from vector<1x1x1xf32>
    %cst_45 = arith.constant 4.8225309E-5 : f32
    %82 = arith.mulf %81, %cst_45 : f32
    %83 = vector.broadcast %82 : f32 to vector<27x128xf32>
    %84 = arith.subf %7, %83 : vector<27x128xf32>
    %85 = vector.broadcast %52 : vector<1x128xf32> to vector<27x128xf32>
    %86 = arith.mulf %84, %85 : vector<27x128xf32>
    %87 = vector.broadcast %82 : f32 to vector<27x128xf32>
    %88 = arith.subf %13, %87 : vector<27x128xf32>
    %89 = vector.broadcast %52 : vector<1x128xf32> to vector<27x128xf32>
    %90 = arith.mulf %88, %89 : vector<27x128xf32>
    %91 = vector.broadcast %82 : f32 to vector<27x128xf32>
    %92 = arith.subf %19, %91 : vector<27x128xf32>
    %93 = vector.broadcast %52 : vector<1x128xf32> to vector<27x128xf32>
    %94 = arith.mulf %92, %93 : vector<27x128xf32>
    %95 = vector.broadcast %82 : f32 to vector<27x128xf32>
    %96 = arith.subf %25, %95 : vector<27x128xf32>
    %97 = vector.broadcast %52 : vector<1x128xf32> to vector<27x128xf32>
    %98 = arith.mulf %96, %97 : vector<27x128xf32>
    %99 = vector.broadcast %82 : f32 to vector<27x128xf32>
    %100 = arith.subf %31, %99 : vector<27x128xf32>
    %101 = vector.broadcast %52 : vector<1x128xf32> to vector<27x128xf32>
    %102 = arith.mulf %100, %101 : vector<27x128xf32>
    %103 = vector.broadcast %82 : f32 to vector<27x128xf32>
    %104 = arith.subf %37, %103 : vector<27x128xf32>
    %105 = vector.broadcast %52 : vector<1x128xf32> to vector<27x128xf32>
    %106 = arith.mulf %104, %105 : vector<27x128xf32>
    %107 = vector.broadcast %82 : f32 to vector<27x128xf32>
    %108 = arith.subf %43, %107 : vector<27x128xf32>
    %109 = vector.broadcast %52 : vector<1x128xf32> to vector<27x128xf32>
    %110 = arith.mulf %108, %109 : vector<27x128xf32>
    %111 = vector.broadcast %82 : f32 to vector<27x128xf32>
    %112 = arith.subf %49, %111 : vector<27x128xf32>
    %113 = vector.broadcast %52 : vector<1x128xf32> to vector<27x128xf32>
    %114 = arith.mulf %112, %113 : vector<27x128xf32>
    %cst_46 = arith.constant 0.000000e+00 : f32
    %115 = vector.broadcast %cst_46 : f32 to vector<1x128xf32>
    %116 = arith.mulf %86, %86 : vector<27x128xf32>
    %cst_47 = arith.constant dense<0.000000e+00> : vector<128xf32>
    %117 = vector.multi_reduction <add>, %116, %cst_47 [0] : vector<27x128xf32> to vector<128xf32>
    %118 = vector.shape_cast %117 : vector<128xf32> to vector<1x128xf32>
    %119 = arith.addf %115, %118 : vector<1x128xf32>
    %120 = arith.mulf %90, %90 : vector<27x128xf32>
    %cst_48 = arith.constant dense<0.000000e+00> : vector<128xf32>
    %121 = vector.multi_reduction <add>, %120, %cst_48 [0] : vector<27x128xf32> to vector<128xf32>
    %122 = vector.shape_cast %121 : vector<128xf32> to vector<1x128xf32>
    %123 = arith.addf %119, %122 : vector<1x128xf32>
    %124 = arith.mulf %94, %94 : vector<27x128xf32>
    %cst_49 = arith.constant dense<0.000000e+00> : vector<128xf32>
    %125 = vector.multi_reduction <add>, %124, %cst_49 [0] : vector<27x128xf32> to vector<128xf32>
    %126 = vector.shape_cast %125 : vector<128xf32> to vector<1x128xf32>
    %127 = arith.addf %123, %126 : vector<1x128xf32>
    %128 = arith.mulf %98, %98 : vector<27x128xf32>
    %cst_50 = arith.constant dense<0.000000e+00> : vector<128xf32>
    %129 = vector.multi_reduction <add>, %128, %cst_50 [0] : vector<27x128xf32> to vector<128xf32>
    %130 = vector.shape_cast %129 : vector<128xf32> to vector<1x128xf32>
    %131 = arith.addf %127, %130 : vector<1x128xf32>
    %132 = arith.mulf %102, %102 : vector<27x128xf32>
    %cst_51 = arith.constant dense<0.000000e+00> : vector<128xf32>
    %133 = vector.multi_reduction <add>, %132, %cst_51 [0] : vector<27x128xf32> to vector<128xf32>
    %134 = vector.shape_cast %133 : vector<128xf32> to vector<1x128xf32>
    %135 = arith.addf %131, %134 : vector<1x128xf32>
    %136 = arith.mulf %106, %106 : vector<27x128xf32>
    %cst_52 = arith.constant dense<0.000000e+00> : vector<128xf32>
    %137 = vector.multi_reduction <add>, %136, %cst_52 [0] : vector<27x128xf32> to vector<128xf32>
    %138 = vector.shape_cast %137 : vector<128xf32> to vector<1x128xf32>
    %139 = arith.addf %135, %138 : vector<1x128xf32>
    %140 = arith.mulf %110, %110 : vector<27x128xf32>
    %cst_53 = arith.constant dense<0.000000e+00> : vector<128xf32>
    %141 = vector.multi_reduction <add>, %140, %cst_53 [0] : vector<27x128xf32> to vector<128xf32>
    %142 = vector.shape_cast %141 : vector<128xf32> to vector<1x128xf32>
    %143 = arith.addf %139, %142 : vector<1x128xf32>
    %144 = arith.mulf %114, %114 : vector<27x128xf32>
    %cst_54 = arith.constant dense<0.000000e+00> : vector<128xf32>
    %145 = vector.multi_reduction <add>, %144, %cst_54 [0] : vector<27x128xf32> to vector<128xf32>
    %146 = vector.shape_cast %145 : vector<128xf32> to vector<1x128xf32>
    %147 = arith.addf %143, %146 : vector<1x128xf32>
    %148 = vector.shape_cast %147 : vector<1x128xf32> to vector<1x1x128xf32>
    %cst_55 = arith.constant dense<0.000000e+00> : vector<1xf32>
    %149 = vector.multi_reduction <add>, %148, %cst_55 [1, 2] : vector<1x1x128xf32> to vector<1xf32>
    %150 = vector.shape_cast %149 : vector<1xf32> to vector<1x1x1xf32>
    %151 = vector.extract %150[0, 0, 0] : f32 from vector<1x1x1xf32>
    %cst_56 = arith.constant 4.8225309E-5 : f32
    %152 = arith.mulf %151, %cst_56 : f32
    %cst_57 = arith.constant 9.99999974E-6 : f32
    %153 = arith.addf %152, %cst_57 : f32
    %154 = math.rsqrt %153 : f32
    %155 = vector.broadcast %154 : f32 to vector<1x128xf32>
    %156 = arith.mulf %50, %155 : vector<1x128xf32>
    %157 = vector.broadcast %156 : vector<1x128xf32> to vector<27x128xf32>
    %158 = arith.mulf %86, %157 : vector<27x128xf32>
    %159 = vector.broadcast %51 : vector<1x128xf32> to vector<27x128xf32>
    %160 = arith.addf %158, %159 : vector<27x128xf32>
    %161 = vector.broadcast %156 : vector<1x128xf32> to vector<27x128xf32>
    %162 = arith.mulf %90, %161 : vector<27x128xf32>
    %163 = vector.broadcast %51 : vector<1x128xf32> to vector<27x128xf32>
    %164 = arith.addf %162, %163 : vector<27x128xf32>
    %165 = vector.broadcast %156 : vector<1x128xf32> to vector<27x128xf32>
    %166 = arith.mulf %94, %165 : vector<27x128xf32>
    %167 = vector.broadcast %51 : vector<1x128xf32> to vector<27x128xf32>
    %168 = arith.addf %166, %167 : vector<27x128xf32>
    %169 = vector.broadcast %156 : vector<1x128xf32> to vector<27x128xf32>
    %170 = arith.mulf %98, %169 : vector<27x128xf32>
    %171 = vector.broadcast %51 : vector<1x128xf32> to vector<27x128xf32>
    %172 = arith.addf %170, %171 : vector<27x128xf32>
    %173 = vector.broadcast %156 : vector<1x128xf32> to vector<27x128xf32>
    %174 = arith.mulf %102, %173 : vector<27x128xf32>
    %175 = vector.broadcast %51 : vector<1x128xf32> to vector<27x128xf32>
    %176 = arith.addf %174, %175 : vector<27x128xf32>
    %177 = vector.broadcast %156 : vector<1x128xf32> to vector<27x128xf32>
    %178 = arith.mulf %106, %177 : vector<27x128xf32>
    %179 = vector.broadcast %51 : vector<1x128xf32> to vector<27x128xf32>
    %180 = arith.addf %178, %179 : vector<27x128xf32>
    %181 = vector.broadcast %156 : vector<1x128xf32> to vector<27x128xf32>
    %182 = arith.mulf %110, %181 : vector<27x128xf32>
    %183 = vector.broadcast %51 : vector<1x128xf32> to vector<27x128xf32>
    %184 = arith.addf %182, %183 : vector<27x128xf32>
    %185 = vector.broadcast %156 : vector<1x128xf32> to vector<27x128xf32>
    %186 = arith.mulf %114, %185 : vector<27x128xf32>
    %187 = vector.broadcast %51 : vector<1x128xf32> to vector<27x128xf32>
    %188 = arith.addf %186, %187 : vector<27x128xf32>
    %c0_58 = arith.constant 0 : index
    %c0_59 = arith.constant 0 : index
    %c0_60 = arith.constant 0 : index
    %c0_61 = arith.constant 0 : index
    %189 = vector.load %arg9[%c0_58, %c0_59, %c0_60, %c0_61] : memref<1x8x27x128xf32, #tpu.memory_space<vmem>>, vector<1x1x27x128xf32>
    %190 = vector.shape_cast %189 : vector<1x1x27x128xf32> to vector<27x128xf32>
    %191 = vector.shape_cast %160 : vector<27x128xf32> to vector<1x1x27x128xf32>
    tpu.vector_store %arg9[%c0_58, %c0_59, %c0_60, %c0_61], %191 {strides = array<i32>} : memref<1x8x27x128xf32, #tpu.memory_space<vmem>>, vector<1x1x27x128xf32>,
    %c0_62 = arith.constant 0 : index
    %c1_63 = arith.constant 1 : index
    %c0_64 = arith.constant 0 : index
    %c0_65 = arith.constant 0 : index
    %192 = vector.load %arg9[%c0_62, %c1_63, %c0_64, %c0_65] : memref<1x8x27x128xf32, #tpu.memory_space<vmem>>, vector<1x1x27x128xf32>
    %193 = vector.shape_cast %192 : vector<1x1x27x128xf32> to vector<27x128xf32>
    %194 = vector.shape_cast %164 : vector<27x128xf32> to vector<1x1x27x128xf32>
    tpu.vector_store %arg9[%c0_62, %c1_63, %c0_64, %c0_65], %194 {strides = array<i32>} : memref<1x8x27x128xf32, #tpu.memory_space<vmem>>, vector<1x1x27x128xf32>,
    %c0_66 = arith.constant 0 : index
    %c2_67 = arith.constant 2 : index
    %c0_68 = arith.constant 0 : index
    %c0_69 = arith.constant 0 : index
    %195 = vector.load %arg9[%c0_66, %c2_67, %c0_68, %c0_69] : memref<1x8x27x128xf32, #tpu.memory_space<vmem>>, vector<1x1x27x128xf32>
    %196 = vector.shape_cast %195 : vector<1x1x27x128xf32> to vector<27x128xf32>
    %197 = vector.shape_cast %168 : vector<27x128xf32> to vector<1x1x27x128xf32>
    tpu.vector_store %arg9[%c0_66, %c2_67, %c0_68, %c0_69], %197 {strides = array<i32>} : memref<1x8x27x128xf32, #tpu.memory_space<vmem>>, vector<1x1x27x128xf32>,
    %c0_70 = arith.constant 0 : index
    %c3_71 = arith.constant 3 : index
    %c0_72 = arith.constant 0 : index
    %c0_73 = arith.constant 0 : index
    %198 = vector.load %arg9[%c0_70, %c3_71, %c0_72, %c0_73] : memref<1x8x27x128xf32, #tpu.memory_space<vmem>>, vector<1x1x27x128xf32>
    %199 = vector.shape_cast %198 : vector<1x1x27x128xf32> to vector<27x128xf32>
    %200 = vector.shape_cast %172 : vector<27x128xf32> to vector<1x1x27x128xf32>
    tpu.vector_store %arg9[%c0_70, %c3_71, %c0_72, %c0_73], %200 {strides = array<i32>} : memref<1x8x27x128xf32, #tpu.memory_space<vmem>>, vector<1x1x27x128xf32>,
    %c0_74 = arith.constant 0 : index
    %c4_75 = arith.constant 4 : index
    %c0_76 = arith.constant 0 : index
    %c0_77 = arith.constant 0 : index
    %201 = vector.load %arg9[%c0_74, %c4_75, %c0_76, %c0_77] : memref<1x8x27x128xf32, #tpu.memory_space<vmem>>, vector<1x1x27x128xf32>
    %202 = vector.shape_cast %201 : vector<1x1x27x128xf32> to vector<27x128xf32>
    %203 = vector.shape_cast %176 : vector<27x128xf32> to vector<1x1x27x128xf32>
    tpu.vector_store %arg9[%c0_74, %c4_75, %c0_76, %c0_77], %203 {strides = array<i32>} : memref<1x8x27x128xf32, #tpu.memory_space<vmem>>, vector<1x1x27x128xf32>,
    %c0_78 = arith.constant 0 : index
    %c5_79 = arith.constant 5 : index
    %c0_80 = arith.constant 0 : index
    %c0_81 = arith.constant 0 : index
    %204 = vector.load %arg9[%c0_78, %c5_79, %c0_80, %c0_81] : memref<1x8x27x128xf32, #tpu.memory_space<vmem>>, vector<1x1x27x128xf32>
    %205 = vector.shape_cast %204 : vector<1x1x27x128xf32> to vector<27x128xf32>
    %206 = vector.shape_cast %180 : vector<27x128xf32> to vector<1x1x27x128xf32>
    tpu.vector_store %arg9[%c0_78, %c5_79, %c0_80, %c0_81], %206 {strides = array<i32>} : memref<1x8x27x128xf32, #tpu.memory_space<vmem>>, vector<1x1x27x128xf32>,
    %c0_82 = arith.constant 0 : index
    %c6_83 = arith.constant 6 : index
    %c0_84 = arith.constant 0 : index
    %c0_85 = arith.constant 0 : index
    %207 = vector.load %arg9[%c0_82, %c6_83, %c0_84, %c0_85] : memref<1x8x27x128xf32, #tpu.memory_space<vmem>>, vector<1x1x27x128xf32>
    %208 = vector.shape_cast %207 : vector<1x1x27x128xf32> to vector<27x128xf32>
    %209 = vector.shape_cast %184 : vector<27x128xf32> to vector<1x1x27x128xf32>
    tpu.vector_store %arg9[%c0_82, %c6_83, %c0_84, %c0_85], %209 {strides = array<i32>} : memref<1x8x27x128xf32, #tpu.memory_space<vmem>>, vector<1x1x27x128xf32>,
    %c0_86 = arith.constant 0 : index
    %c7_87 = arith.constant 7 : index
    %c0_88 = arith.constant 0 : index
    %c0_89 = arith.constant 0 : index
    %210 = vector.load %arg9[%c0_86, %c7_87, %c0_88, %c0_89] : memref<1x8x27x128xf32, #tpu.memory_space<vmem>>, vector<1x1x27x128xf32>
    %211 = vector.shape_cast %210 : vector<1x1x27x128xf32> to vector<27x128xf32>
    %212 = vector.shape_cast %188 : vector<27x128xf32> to vector<1x1x27x128xf32>
    tpu.vector_store %arg9[%c0_86, %c7_87, %c0_88, %c0_89], %212 {strides = array<i32>} : memref<1x8x27x128xf32, #tpu.memory_space<vmem>>, vector<1x1x27x128xf32>,
    %c0_90 = arith.constant 0 : index
    %c0_91 = arith.constant 0 : index
    %213 = vector.load %arg5[%c0_90, %c0_91] : memref<8x256xf32, #tpu.memory_space<vmem>>, vector<8x256xf32>
    %cst_92 = arith.constant 0.000000e+00 : f32
    %214 = vector.broadcast %cst_92 : f32 to vector<27x256xf32>
    %215 = arith.truncf %160 : vector<27x128xf32> to vector<27x128xbf16>
    %c0_93 = arith.constant 0 : index
    %c0_94 = arith.constant 0 : index
    %c0_95 = arith.constant 0 : index
    %216 = vector.load %arg4[%c0_93, %c0_94, %c0_95] : memref<8x128x256xbf16, #tpu.memory_space<vmem>>, vector<1x128x256xbf16>
    %217 = vector.shape_cast %216 : vector<1x128x256xbf16> to vector<128x256xbf16>
    %cst_96 = arith.constant dense<0.000000e+00> : vector<27x256xf32>
    %218 = tpu.matmul %215, %217, %cst_96 {dimension_numbers = #tpu.dot_dimension_numbers<[1], [0], [0], [1], [0, 0, 1, 1], [], []>} : vector<27x128xbf16>, vector<128x256xbf16>, vector<27x256xf32> -> vector<27x256xf32>
    %219 = arith.addf %214, %218 : vector<27x256xf32>
    %220 = arith.truncf %164 : vector<27x128xf32> to vector<27x128xbf16>
    %c1_97 = arith.constant 1 : index
    %c0_98 = arith.constant 0 : index
    %c0_99 = arith.constant 0 : index
    %221 = vector.load %arg4[%c1_97, %c0_98, %c0_99] : memref<8x128x256xbf16, #tpu.memory_space<vmem>>, vector<1x128x256xbf16>
    %222 = vector.shape_cast %221 : vector<1x128x256xbf16> to vector<128x256xbf16>
    %cst_100 = arith.constant dense<0.000000e+00> : vector<27x256xf32>
    %223 = tpu.matmul %220, %222, %cst_100 {dimension_numbers = #tpu.dot_dimension_numbers<[1], [0], [0], [1], [0, 0, 1, 1], [], []>} : vector<27x128xbf16>, vector<128x256xbf16>, vector<27x256xf32> -> vector<27x256xf32>
    %224 = arith.addf %219, %223 : vector<27x256xf32>
    %225 = arith.truncf %168 : vector<27x128xf32> to vector<27x128xbf16>
    %c2_101 = arith.constant 2 : index
    %c0_102 = arith.constant 0 : index
    %c0_103 = arith.constant 0 : index
    %226 = vector.load %arg4[%c2_101, %c0_102, %c0_103] : memref<8x128x256xbf16, #tpu.memory_space<vmem>>, vector<1x128x256xbf16>
    %227 = vector.shape_cast %226 : vector<1x128x256xbf16> to vector<128x256xbf16>
    %cst_104 = arith.constant dense<0.000000e+00> : vector<27x256xf32>
    %228 = tpu.matmul %225, %227, %cst_104 {dimension_numbers = #tpu.dot_dimension_numbers<[1], [0], [0], [1], [0, 0, 1, 1], [], []>} : vector<27x128xbf16>, vector<128x256xbf16>, vector<27x256xf32> -> vector<27x256xf32>
    %229 = arith.addf %224, %228 : vector<27x256xf32>
    %230 = arith.truncf %172 : vector<27x128xf32> to vector<27x128xbf16>
    %c3_105 = arith.constant 3 : index
    %c0_106 = arith.constant 0 : index
    %c0_107 = arith.constant 0 : index
    %231 = vector.load %arg4[%c3_105, %c0_106, %c0_107] : memref<8x128x256xbf16, #tpu.memory_space<vmem>>, vector<1x128x256xbf16>
    %232 = vector.shape_cast %231 : vector<1x128x256xbf16> to vector<128x256xbf16>
    %cst_108 = arith.constant dense<0.000000e+00> : vector<27x256xf32>
    %233 = tpu.matmul %230, %232, %cst_108 {dimension_numbers = #tpu.dot_dimension_numbers<[1], [0], [0], [1], [0, 0, 1, 1], [], []>} : vector<27x128xbf16>, vector<128x256xbf16>, vector<27x256xf32> -> vector<27x256xf32>
    %234 = arith.addf %229, %233 : vector<27x256xf32>
    %235 = arith.truncf %176 : vector<27x128xf32> to vector<27x128xbf16>
    %c4_109 = arith.constant 4 : index
    %c0_110 = arith.constant 0 : index
    %c0_111 = arith.constant 0 : index
    %236 = vector.load %arg4[%c4_109, %c0_110, %c0_111] : memref<8x128x256xbf16, #tpu.memory_space<vmem>>, vector<1x128x256xbf16>
    %237 = vector.shape_cast %236 : vector<1x128x256xbf16> to vector<128x256xbf16>
    %cst_112 = arith.constant dense<0.000000e+00> : vector<27x256xf32>
    %238 = tpu.matmul %235, %237, %cst_112 {dimension_numbers = #tpu.dot_dimension_numbers<[1], [0], [0], [1], [0, 0, 1, 1], [], []>} : vector<27x128xbf16>, vector<128x256xbf16>, vector<27x256xf32> -> vector<27x256xf32>
    %239 = arith.addf %234, %238 : vector<27x256xf32>
    %240 = arith.truncf %180 : vector<27x128xf32> to vector<27x128xbf16>
    %c5_113 = arith.constant 5 : index
    %c0_114 = arith.constant 0 : index
    %c0_115 = arith.constant 0 : index
    %241 = vector.load %arg4[%c5_113, %c0_114, %c0_115] : memref<8x128x256xbf16, #tpu.memory_space<vmem>>, vector<1x128x256xbf16>
    %242 = vector.shape_cast %241 : vector<1x128x256xbf16> to vector<128x256xbf16>
    %cst_116 = arith.constant dense<0.000000e+00> : vector<27x256xf32>
    %243 = tpu.matmul %240, %242, %cst_116 {dimension_numbers = #tpu.dot_dimension_numbers<[1], [0], [0], [1], [0, 0, 1, 1], [], []>} : vector<27x128xbf16>, vector<128x256xbf16>, vector<27x256xf32> -> vector<27x256xf32>
    %244 = arith.addf %239, %243 : vector<27x256xf32>
    %245 = arith.truncf %184 : vector<27x128xf32> to vector<27x128xbf16>
    %c6_117 = arith.constant 6 : index
    %c0_118 = arith.constant 0 : index
    %c0_119 = arith.constant 0 : index
    %246 = vector.load %arg4[%c6_117, %c0_118, %c0_119] : memref<8x128x256xbf16, #tpu.memory_space<vmem>>, vector<1x128x256xbf16>
    %247 = vector.shape_cast %246 : vector<1x128x256xbf16> to vector<128x256xbf16>
    %cst_120 = arith.constant dense<0.000000e+00> : vector<27x256xf32>
    %248 = tpu.matmul %245, %247, %cst_120 {dimension_numbers = #tpu.dot_dimension_numbers<[1], [0], [0], [1], [0, 0, 1, 1], [], []>} : vector<27x128xbf16>, vector<128x256xbf16>, vector<27x256xf32> -> vector<27x256xf32>
    %249 = arith.addf %244, %248 : vector<27x256xf32>
    %250 = arith.truncf %188 : vector<27x128xf32> to vector<27x128xbf16>
    %c7_121 = arith.constant 7 : index
    %c0_122 = arith.constant 0 : index
    %c0_123 = arith.constant 0 : index
    %251 = vector.load %arg4[%c7_121, %c0_122, %c0_123] : memref<8x128x256xbf16, #tpu.memory_space<vmem>>, vector<1x128x256xbf16>
    %252 = vector.shape_cast %251 : vector<1x128x256xbf16> to vector<128x256xbf16>
    %cst_124 = arith.constant dense<0.000000e+00> : vector<27x256xf32>
    %253 = tpu.matmul %250, %252, %cst_124 {dimension_numbers = #tpu.dot_dimension_numbers<[1], [0], [0], [1], [0, 0, 1, 1], [], []>} : vector<27x128xbf16>, vector<128x256xbf16>, vector<27x256xf32> -> vector<27x256xf32>
    %254 = arith.addf %249, %253 : vector<27x256xf32>
    %255 = vector.extract_strided_slice %213 {offsets = [0, 0], sizes = [1, 256], strides = [1, 1]} : vector<8x256xf32> to vector<1x256xf32>
    %256 = vector.broadcast %255 : vector<1x256xf32> to vector<27x256xf32>
    %257 = arith.addf %254, %256 : vector<27x256xf32>
    %258 = vector.extract_strided_slice %213 {offsets = [1, 0], sizes = [1, 256], strides = [1, 1]} : vector<8x256xf32> to vector<1x256xf32>
    %259 = vector.extract_strided_slice %213 {offsets = [2, 0], sizes = [1, 256], strides = [1, 1]} : vector<8x256xf32> to vector<1x256xf32>
    %260 = vector.extract_strided_slice %213 {offsets = [3, 0], sizes = [1, 256], strides = [1, 1]} : vector<8x256xf32> to vector<1x256xf32>
    %cst_125 = arith.constant 0.000000e+00 : f32
    %261 = vector.broadcast %cst_125 : f32 to vector<1x256xf32>
    %cst_126 = arith.constant dense<0.000000e+00> : vector<256xf32>
    %262 = vector.multi_reduction <add>, %257, %cst_126 [0] : vector<27x256xf32> to vector<256xf32>
    %263 = vector.shape_cast %262 : vector<256xf32> to vector<1x256xf32>
    %264 = arith.addf %261, %263 : vector<1x256xf32>
    %265 = vector.shape_cast %264 : vector<1x256xf32> to vector<1x1x256xf32>
    %cst_127 = arith.constant dense<0.000000e+00> : vector<1xf32>
    %266 = vector.multi_reduction <add>, %265, %cst_127 [1, 2] : vector<1x1x256xf32> to vector<1xf32>
    %267 = vector.shape_cast %266 : vector<1xf32> to vector<1x1x1xf32>
    %268 = vector.extract %267[0, 0, 0] : f32 from vector<1x1x1xf32>
    %cst_128 = arith.constant 1.543210e-04 : f32
    %269 = arith.mulf %268, %cst_128 : f32
    %270 = vector.broadcast %269 : f32 to vector<27x256xf32>
    %271 = arith.subf %257, %270 : vector<27x256xf32>
    %272 = vector.broadcast %260 : vector<1x256xf32> to vector<27x256xf32>
    %273 = arith.mulf %271, %272 : vector<27x256xf32>
    %cst_129 = arith.constant 0.000000e+00 : f32
    %274 = vector.broadcast %cst_129 : f32 to vector<1x256xf32>
    %275 = arith.mulf %273, %273 : vector<27x256xf32>
    %cst_130 = arith.constant dense<0.000000e+00> : vector<256xf32>
    %276 = vector.multi_reduction <add>, %275, %cst_130 [0] : vector<27x256xf32> to vector<256xf32>
    %277 = vector.shape_cast %276 : vector<256xf32> to vector<1x256xf32>
    %278 = arith.addf %274, %277 : vector<1x256xf32>
    %279 = vector.shape_cast %278 : vector<1x256xf32> to vector<1x1x256xf32>
    %cst_131 = arith.constant dense<0.000000e+00> : vector<1xf32>
    %280 = vector.multi_reduction <add>, %279, %cst_131 [1, 2] : vector<1x1x256xf32> to vector<1xf32>
    %281 = vector.shape_cast %280 : vector<1xf32> to vector<1x1x1xf32>
    %282 = vector.extract %281[0, 0, 0] : f32 from vector<1x1x1xf32>
    %cst_132 = arith.constant 1.543210e-04 : f32
    %283 = arith.mulf %282, %cst_132 : f32
    %cst_133 = arith.constant 9.99999974E-6 : f32
    %284 = arith.addf %283, %cst_133 : f32
    %285 = math.rsqrt %284 : f32
    %286 = vector.broadcast %285 : f32 to vector<1x256xf32>
    %287 = arith.mulf %258, %286 : vector<1x256xf32>
    %288 = vector.broadcast %287 : vector<1x256xf32> to vector<27x256xf32>
    %289 = arith.mulf %273, %288 : vector<27x256xf32>
    %290 = vector.broadcast %259 : vector<1x256xf32> to vector<27x256xf32>
    %291 = arith.addf %289, %290 : vector<27x256xf32>
    %c0_134 = arith.constant 0 : index
    %c0_135 = arith.constant 0 : index
    %c0_136 = arith.constant 0 : index
    %292 = vector.load %arg10[%c0_134, %c0_135, %c0_136] : memref<1x27x256xf32, #tpu.memory_space<vmem>>, vector<1x27x256xf32>
    %293 = vector.shape_cast %292 : vector<1x27x256xf32> to vector<27x256xf32>
    %294 = vector.shape_cast %291 : vector<27x256xf32> to vector<1x27x256xf32>
    tpu.vector_store %arg10[%c0_134, %c0_135, %c0_136], %294 {strides = array<i32>} : memref<1x27x256xf32, #tpu.memory_space<vmem>>, vector<1x27x256xf32>,
    %c0_137 = arith.constant 0 : index
    %c0_138 = arith.constant 0 : index
    %295 = vector.load %arg7[%c0_137, %c0_138] : memref<8x384xf32, #tpu.memory_space<vmem>>, vector<8x384xf32>
    %296 = arith.truncf %291 : vector<27x256xf32> to vector<27x256xbf16>
    %c0_139 = arith.constant 0 : index
    %c0_140 = arith.constant 0 : index
    %297 = vector.load %arg6[%c0_139, %c0_140] : memref<256x384xbf16, #tpu.memory_space<vmem>>, vector<256x384xbf16>
    %cst_141 = arith.constant dense<0.000000e+00> : vector<27x384xf32>
    %298 = tpu.matmul %296, %297, %cst_141 {dimension_numbers = #tpu.dot_dimension_numbers<[1], [0], [0], [1], [0, 0, 1, 1], [], []>} : vector<27x256xbf16>, vector<256x384xbf16>, vector<27x384xf32> -> vector<27x384xf32>
    %299 = vector.extract_strided_slice %295 {offsets = [0, 0], sizes = [1, 384], strides = [1, 1]} : vector<8x384xf32> to vector<1x384xf32>
    %300 = vector.broadcast %299 : vector<1x384xf32> to vector<27x384xf32>
    %301 = arith.addf %298, %300 : vector<27x384xf32>
    %302 = vector.extract_strided_slice %295 {offsets = [1, 0], sizes = [1, 384], strides = [1, 1]} : vector<8x384xf32> to vector<1x384xf32>
    %303 = vector.extract_strided_slice %295 {offsets = [2, 0], sizes = [1, 384], strides = [1, 1]} : vector<8x384xf32> to vector<1x384xf32>
    %304 = vector.extract_strided_slice %295 {offsets = [3, 0], sizes = [1, 384], strides = [1, 1]} : vector<8x384xf32> to vector<1x384xf32>
    %cst_142 = arith.constant 0.000000e+00 : f32
    %305 = vector.broadcast %cst_142 : f32 to vector<1x384xf32>
    %cst_143 = arith.constant dense<0.000000e+00> : vector<384xf32>
    %306 = vector.multi_reduction <add>, %301, %cst_143 [0] : vector<27x384xf32> to vector<384xf32>
    %307 = vector.shape_cast %306 : vector<384xf32> to vector<1x384xf32>
    %308 = arith.addf %305, %307 : vector<1x384xf32>
    %309 = vector.shape_cast %308 : vector<1x384xf32> to vector<1x1x384xf32>
    %cst_144 = arith.constant dense<0.000000e+00> : vector<1xf32>
    %310 = vector.multi_reduction <add>, %309, %cst_144 [1, 2] : vector<1x1x384xf32> to vector<1xf32>
    %311 = vector.shape_cast %310 : vector<1xf32> to vector<1x1x1xf32>
    %312 = vector.extract %311[0, 0, 0] : f32 from vector<1x1x1xf32>
    %cst_145 = arith.constant 9.6450618E-5 : f32
    %313 = arith.mulf %312, %cst_145 : f32
    %314 = vector.broadcast %313 : f32 to vector<27x384xf32>
    %315 = arith.subf %301, %314 : vector<27x384xf32>
    %316 = vector.broadcast %304 : vector<1x384xf32> to vector<27x384xf32>
    %317 = arith.mulf %315, %316 : vector<27x384xf32>
    %cst_146 = arith.constant 0.000000e+00 : f32
    %318 = vector.broadcast %cst_146 : f32 to vector<1x384xf32>
    %319 = arith.mulf %317, %317 : vector<27x384xf32>
    %cst_147 = arith.constant dense<0.000000e+00> : vector<384xf32>
    %320 = vector.multi_reduction <add>, %319, %cst_147 [0] : vector<27x384xf32> to vector<384xf32>
    %321 = vector.shape_cast %320 : vector<384xf32> to vector<1x384xf32>
    %322 = arith.addf %318, %321 : vector<1x384xf32>
    %323 = vector.shape_cast %322 : vector<1x384xf32> to vector<1x1x384xf32>
    %cst_148 = arith.constant dense<0.000000e+00> : vector<1xf32>
    %324 = vector.multi_reduction <add>, %323, %cst_148 [1, 2] : vector<1x1x384xf32> to vector<1xf32>
    %325 = vector.shape_cast %324 : vector<1xf32> to vector<1x1x1xf32>
    %326 = vector.extract %325[0, 0, 0] : f32 from vector<1x1x1xf32>
    %cst_149 = arith.constant 9.6450618E-5 : f32
    %327 = arith.mulf %326, %cst_149 : f32
    %cst_150 = arith.constant 9.99999974E-6 : f32
    %328 = arith.addf %327, %cst_150 : f32
    %329 = math.rsqrt %328 : f32
    %330 = vector.broadcast %329 : f32 to vector<1x384xf32>
    %331 = arith.mulf %302, %330 : vector<1x384xf32>
    %332 = vector.broadcast %331 : vector<1x384xf32> to vector<27x384xf32>
    %333 = arith.mulf %317, %332 : vector<27x384xf32>
    %334 = vector.broadcast %303 : vector<1x384xf32> to vector<27x384xf32>
    %335 = arith.addf %333, %334 : vector<27x384xf32>
    %c0_151 = arith.constant 0 : index
    %c0_152 = arith.constant 0 : index
    %c0_153 = arith.constant 0 : index
    %336 = vector.load %arg8[%c0_151, %c0_152, %c0_153] : memref<1x27x384xf32, #tpu.memory_space<vmem>>, vector<1x27x384xf32>
    %337 = vector.shape_cast %336 : vector<1x27x384xf32> to vector<27x384xf32>
    %338 = arith.addf %335, %337 : vector<27x384xf32>
    %c0_154 = arith.constant 0 : index
    %c0_155 = arith.constant 0 : index
    %c0_156 = arith.constant 0 : index
    %339 = vector.load %arg11[%c0_154, %c0_155, %c0_156] : memref<1x27x384xf32, #tpu.memory_space<vmem>>, vector<1x27x384xf32>
    %340 = vector.shape_cast %339 : vector<1x27x384xf32> to vector<27x384xf32>
    %341 = vector.shape_cast %338 : vector<27x384xf32> to vector<1x27x384xf32>
    tpu.vector_store %arg11[%c0_154, %c0_155, %c0_156], %341 {strides = array<i32>} : memref<1x27x384xf32, #tpu.memory_space<vmem>>, vector<1x27x384xf32>,
    return
  }
  func.func @transform_0(%arg0: i32) -> (i32, i32, i32, i32) {
    %c0_i32 = arith.constant 0 : i32
    %c0_i32_0 = arith.constant 0 : i32
    %c0_i32_1 = arith.constant 0 : i32
    %c0_i32_2 = arith.constant 0 : i32
    return %arg0, %c0_i32, %c0_i32_0, %c0_i32_1 : i32, i32, i32, i32
  }
  func.func @transform_1(%arg0: i32) -> (i32, i32) {
    %c0_i32 = arith.constant 0 : i32
    %c0_i32_0 = arith.constant 0 : i32
    %c0_i32_1 = arith.constant 0 : i32
    return %c0_i32, %c0_i32_0 : i32, i32
  }
  func.func @transform_2(%arg0: i32) -> (i32, i32) {
    %c0_i32 = arith.constant 0 : i32
    %c0_i32_0 = arith.constant 0 : i32
    %c0_i32_1 = arith.constant 0 : i32
    return %c0_i32, %c0_i32_0 : i32, i32
  }
  func.func @transform_3(%arg0: i32) -> (i32, i32, i32) {
    %c0_i32 = arith.constant 0 : i32
    %c0_i32_0 = arith.constant 0 : i32
    %c0_i32_1 = arith.constant 0 : i32
    %c0_i32_2 = arith.constant 0 : i32
    return %c0_i32, %c0_i32_0, %c0_i32_1 : i32, i32, i32
  }
  func.func @transform_4(%arg0: i32) -> (i32, i32) {
    %c0_i32 = arith.constant 0 : i32
    %c0_i32_0 = arith.constant 0 : i32
    %c0_i32_1 = arith.constant 0 : i32
    return %c0_i32, %c0_i32_0 : i32, i32
  }
  func.func @transform_5(%arg0: i32) -> (i32, i32) {
    %c0_i32 = arith.constant 0 : i32
    %c0_i32_0 = arith.constant 0 : i32
    %c0_i32_1 = arith.constant 0 : i32
    return %c0_i32, %c0_i32_0 : i32, i32
  }
  func.func @transform_6(%arg0: i32) -> (i32, i32) {
    %c0_i32 = arith.constant 0 : i32
    %c0_i32_0 = arith.constant 0 : i32
    %c0_i32_1 = arith.constant 0 : i32
    return %c0_i32, %c0_i32_0 : i32, i32
  }
  func.func @transform_7(%arg0: i32) -> (i32, i32, i32) {
    %c0_i32 = arith.constant 0 : i32
    %c0_i32_0 = arith.constant 0 : i32
    %c0_i32_1 = arith.constant 0 : i32
    %c0_i32_2 = arith.constant 0 : i32
    return %c0_i32, %c0_i32_0, %c0_i32_1 : i32, i32, i32
  }
  func.func @transform_8(%arg0: i32) -> (i32, i32, i32, i32) {
    %c0_i32 = arith.constant 0 : i32
    %c0_i32_0 = arith.constant 0 : i32
    %c0_i32_1 = arith.constant 0 : i32
    %c0_i32_2 = arith.constant 0 : i32
    return %arg0, %c0_i32, %c0_i32_0, %c0_i32_1 : i32, i32, i32, i32
  }
  func.func @transform_9(%arg0: i32) -> (i32, i32, i32) {
    %c0_i32 = arith.constant 0 : i32
    %c0_i32_0 = arith.constant 0 : i32
    %c0_i32_1 = arith.constant 0 : i32
    return %arg0, %c0_i32, %c0_i32_0 : i32, i32, i32
  }
  func.func @transform_10(%arg0: i32) -> (i32, i32, i32) {
    %c0_i32 = arith.constant 0 : i32
    %c0_i32_0 = arith.constant 0 : i32
    %c0_i32_1 = arith.constant 0 : i32
    return %arg0, %c0_i32, %c0_i32_0 : i32, i32, i32
  }
}

</mosaic_0001>

<llo_original>
// kernel: _encoder_forward.2
$region0: #{_encoder_forward.2}
  #allocation0 [shape = 'u32[]', space=smem, size = 0x4, offset = 0x4, fixed_abs, tag = 'smem constant byte address 0x4 - core index']
  #allocation1 [shape = 'u32[72,128]{1,0:T(1,128)}', space=vmem, size = 0x9000, scoped, tag = 'internal scratch']
  %s0 = inlined_call_operand.vmem [shape: bf16[2,1728,256], index: 0, kind: input, shape index: {}]
  %s1 = inlined_call_operand.vmem [shape: bf16[256,128], index: 1, kind: input, shape index: {}]
  %s2 = inlined_call_operand.vmem [shape: f32[8,128], index: 2, kind: input, shape index: {}]
  %s3 = inlined_call_operand.vmem [shape: bf16[2,1728,128], index: 3, kind: output, shape index: {}]
  %s4 = sld [smem:[#allocation0]]
  $region45: #{_encoder_forward.2} parent=0
    _
  %s6 = ssub.s32 1, %s4
  %s7 = scalar_select 0, %s6, %s4
  loop: start=0, step=1, limit=4
  $region2: #{_encoder_forward.2} parent=0 // loop_pre_header
    _
  $region3: #{_encoder_forward.2} parent=0 // loop_header
    %s9 = sphi 0, %s13
    %p10 = scmp.ge.s32.totalorder %s9, 4
    %s19 = sphi 0, %s21
    %s22 = sphi 0, %s19
    %s23 = sphi 0, %s22
    %s39 = sphi 0, %s23
    %s43 = sphi 0, %s43
    %s45 = sphi 0, %s43
    %s46 = sphi 0, %s45
    %s60 = sphi 0, %s46
    %s64 = sphi 0, %s64
    %s66 = sphi 0, %s64
    %s67 = sphi 0, %s66
    %s81 = sphi 0, %s67
    %s87 = sphi 0, %s89
    %s90 = sphi 0, %s87
    %s91 = sphi 0, %s90
    %s107 = sphi 0, %s91
  $region4: #{_encoder_forward.2} parent=0 // loop_header_branch
    %12 = sbr.rel (%p10) target = $region8
  $region5: #{_encoder_forward.2} parent=0 // loop_body
    %s14 = ssub.s32 %s9, 1
    %s15 = ssub.s32 %s9, 2
    %s16 = sadd.s32 %s9, 1
    %s17 = ssub.s32 %s9, %s16
    %p18 = scmp.eq.s32.totalorder %s17, 0
    %s20 = sadd.s32 %s19, 1
    %s21 = scalar_select %p18, %s19, %s20
    %p24 = pneg %p18
    %p25 = scmp.eq.s32.totalorder %s9, 1
    %p26 = por %p24, %p25
    %p27 = scmp.ne.s32.totalorder %s19, %s22
    %p28 = scmp.eq.s32.totalorder %s9, 0
    %p29 = por %p27, %p28
    %p30 = scmp.ne.s32.totalorder %s19, %s22
    %p31 = scmp.eq.s32.totalorder %s14, 1
    %p32 = por %p30, %p31
    %p33 = scmp.ne.s32.totalorder %s22, %s23
    %p34 = scmp.eq.s32.totalorder %s14, 0
    %p35 = por %p33, %p34
    %p36 = scmp.ne.s32.totalorder %s22, %s23
    %p37 = scmp.eq.s32.totalorder %s15, 1
    %p38 = por %p36, %p37
    %p40 = scmp.ne.s32.totalorder %s23, %s39
    %p41 = scmp.eq.s32.totalorder %s15, 0
    %p42 = por %p40, %p41
    %s44 = sadd.s32 %s43, 1
    %p47 = scmp.eq.s32.totalorder %s9, 1
    %p48 = scmp.ne.s32.totalorder %s43, %s45
    %p49 = scmp.eq.s32.totalorder %s9, 0
    %p50 = por %p48, %p49
    %p51 = scmp.ne.s32.totalorder %s43, %s45
    %p52 = scmp.eq.s32.totalorder %s14, 1
    %p53 = por %p51, %p52
    %p54 = scmp.ne.s32.totalorder %s45, %s46
    %p55 = scmp.eq.s32.totalorder %s14, 0
    %p56 = por %p54, %p55
    %p57 = scmp.ne.s32.totalorder %s45, %s46
    %p58 = scmp.eq.s32.totalorder %s15, 1
    %p59 = por %p57, %p58
    %p61 = scmp.ne.s32.totalorder %s46, %s60
    %p62 = scmp.eq.s32.totalorder %s15, 0
    %p63 = por %p61, %p62
    %s65 = sadd.s32 %s64, 1
    %p68 = scmp.eq.s32.totalorder %s9, 1
    %p69 = scmp.ne.s32.totalorder %s64, %s66
    %p70 = scmp.eq.s32.totalorder %s9, 0
    %p71 = por %p69, %p70
    %p72 = scmp.ne.s32.totalorder %s64, %s66
    %p73 = scmp.eq.s32.totalorder %s14, 1
    %p74 = por %p72, %p73
    %p75 = scmp.ne.s32.totalorder %s66, %s67
    %p76 = scmp.eq.s32.totalorder %s14, 0
    %p77 = por %p75, %p76
    %p78 = scmp.ne.s32.totalorder %s66, %s67
    %p79 = scmp.eq.s32.totalorder %s15, 1
    %p80 = por %p78, %p79
    %p82 = scmp.ne.s32.totalorder %s67, %s81
    %p83 = scmp.eq.s32.totalorder %s15, 0
    %p84 = por %p82, %p83
    %s85 = ssub.s32 %s9, %s16
    %p86 = scmp.eq.s32.totalorder %s85, 0
    %s88 = sadd.s32 %s87, 1
    %s89 = scalar_select %p86, %s87, %s88
    %p92 = pneg %p86
    %p93 = scmp.eq.s32.totalorder %s9, 1
    %p94 = por %p92, %p93
    %p95 = scmp.ne.s32.totalorder %s87, %s90
    %p96 = scmp.eq.s32.totalorder %s9, 0
    %p97 = por %p95, %p96
    %p98 = scmp.ne.s32.totalorder %s87, %s90
    %p99 = scmp.eq.s32.totalorder %s14, 1
    %p100 = por %p98, %p99
    %p101 = scmp.ne.s32.totalorder %s90, %s91
    %p102 = scmp.eq.s32.totalorder %s14, 0
    %p103 = por %p101, %p102
    %p104 = scmp.ne.s32.totalorder %s90, %s91
    %p105 = scmp.eq.s32.totalorder %s15, 1
    %p106 = por %p104, %p105
    %p108 = scmp.ne.s32.totalorder %s91, %s107
    %p109 = scmp.eq.s32.totalorder %s15, 0
    %p110 = por %p108, %p109
    %p111 = scmp.le.s32.totalorder 1, %s9
    %p112 = scmp.lt.s32.totalorder %s9, 3
    %p113 = pnand %p111, %p112
    %p114 = pneg %p113
    // Predicated region
    $region9: #{_encoder_forward.2} parent=5 // pred_check
      _
    $region10: #{_encoder_forward.2} parent=5 // pred_check_branch
      %116 = sbr.rel (%p113) target = $region12
    $region11: #{_encoder_forward.2} parent=5 // pred_region
      %s117 = ssub.s32 %s9, 1
      // Predicated region
      $region13: #{_encoder_forward.2} parent=11 // pred_check
        %p118 = pneg %p56
      $region14: #{_encoder_forward.2} parent=11 // pred_check_branch
        %120 = sbr.rel (%p118) target = $region16
      $region15: #{_encoder_forward.2} parent=11 // pred_region
        _
      $region16: #{_encoder_forward.2} parent=11 // pred_fallthru
        _
      // Predicated region
      $region17: #{_encoder_forward.2} parent=11 // pred_check
        %p121 = pneg %p77
      $region18: #{_encoder_forward.2} parent=11 // pred_check_branch
        %123 = sbr.rel (%p121) target = $region20
      $region19: #{_encoder_forward.2} parent=11 // pred_region
        _
      $region20: #{_encoder_forward.2} parent=11 // pred_fallthru
        _
    $region12: #{_encoder_forward.2} parent=5 // pred_fallthru
      _
    %p124 = scmp.lt.s32.totalorder %s9, 2
    // Predicated region
    $region21: #{_encoder_forward.2} parent=5 // pred_check
      %p125 = pneg %p124
    $region22: #{_encoder_forward.2} parent=5 // pred_check_branch
      %127 = sbr.rel (%p125) target = $region24
    $region23: #{_encoder_forward.2} parent=5 // pred_region
      // Predicated region
      $region25: #{_encoder_forward.2} parent=23 // pred_check
        %p128 = pneg %p29
      $region26: #{_encoder_forward.2} parent=23 // pred_check_branch
        %130 = sbr.rel (%p128) target = $region28
      $region27: #{_encoder_forward.2} parent=23 // pred_region
        %p131 = scmp.lt.s32.totalorder %s9, 1
        %s132 = scalar_select %p131, %s9, 1
        %s133 = smul.addr %s132, 432
        %s134 = smul.addr %s133, 4
        %s135 = scalar_lea.vmem %s0, %s134
      $region28: #{_encoder_forward.2} parent=23 // pred_fallthru
        _
    $region24: #{_encoder_forward.2} parent=5 // pred_fallthru
      _
    %p136 = scmp.le.s32.totalorder 1, %s9
    %p137 = scmp.lt.s32.totalorder %s9, 3
    %p138 = pnand %p136, %p137
    %p139 = pneg %p138
    // Predicated region
    $region29: #{_encoder_forward.2} parent=5 // pred_check
      _
    $region30: #{_encoder_forward.2} parent=5 // pred_check_branch
      %141 = sbr.rel (%p138) target = $region32
    $region31: #{_encoder_forward.2} parent=5 // pred_region
      %s142 = ssub.s32 %s9, 1
      %p143 = scmp.lt.s32.totalorder %s14, 1
      %s144 = scalar_select %p143, %s14, 1
      %s145 = smul.addr %s144, 432
      %s146 = smul.addr %s145, 4
      %s147 = scalar_lea.vmem %s0, %s146
      %p148 = pneg %p35
      %p149 = pneg %p32
      %p150 = pneg %p56
      %p151 = pneg %p53
      %p152 = pneg %p77
      %p153 = pneg %p74
      %p154 = pneg %p103
      %p155 = pneg %p100
      %p156 = scmp.lt.s32.totalorder %s14, 1
      %s157 = scalar_select %p156, %s14, 1
      %s158 = smul.addr %s157, 216
      %s159 = smul.addr %s158, 4
      %s160 = scalar_lea.vmem %s3, %s159
      %p161 = scmp.lt.s32.totalorder %s14, 1
      %s162 = scalar_select %p161, %s14, 1
      %s163 = smul.addr %s162, 432
      %s164 = smul.addr %s163, 4
      %s165 = scalar_lea.vmem %s0, %s164
      %p166 = scmp.lt.s32.totalorder %s14, 1
      %s167 = scalar_select %p166, %s14, 1
      %s168 = smul.addr %s167, 216
      %s169 = smul.addr %s168, 4
      %s170 = scalar_lea.vmem %s3, %s169
      %v171 = vld [vmem:[%s2] sm:$0xff]
      %v172 = vld [vmem:[%s165] sm:$0xff]
      %v173 = vld [vmem:[%s165 + $0x8] sm:$0xff]
      %v174 = vld [vmem:[%s165 + $0x10] sm:$0xff]
      %v175 = vld [vmem:[%s165 + $0x18] sm:$0xff]
      %v176 = vld [vmem:[%s165 + $0x20] sm:$0xff]
      %v177 = vld [vmem:[%s165 + $0x28] sm:$0xff]
      %v178 = vld [vmem:[%s165 + $0x30] sm:$0xff]
      %v179 = vld [vmem:[%s165 + $0x38] sm:$0xff]
      %v180 = vld [vmem:[%s165 + $0x40] sm:$0xff]
      %v181 = vld [vmem:[%s165 + $0x48] sm:$0xff]
      %v182 = vld [vmem:[%s165 + $0x50] sm:$0xff]
      %v183 = vld [vmem:[%s165 + $0x58] sm:$0xff]
      %v184 = vld [vmem:[%s165 + $0x60] sm:$0xff]
      %v185 = vld [vmem:[%s165 + $0x68] sm:$0xff]
      %v186 = vld [vmem:[%s165 + $0x70] sm:$0xff]
      %v187 = vld [vmem:[%s165 + $0x78] sm:$0xff]
      %v188 = vld [vmem:[%s165 + $0x80] sm:$0xff]
      %v189 = vld [vmem:[%s165 + $0x88] sm:$0xff]
      %v190 = vld [vmem:[%s165 + $0x90] sm:$0xff]
      %v191 = vld [vmem:[%s165 + $0x98] sm:$0xff]
      %v192 = vld [vmem:[%s165 + $0xa0] sm:$0xff]
      %v193 = vld [vmem:[%s165 + $0xa8] sm:$0xff]
      %v194 = vld [vmem:[%s165 + $0xb0] sm:$0xff]
      %v195 = vld [vmem:[%s165 + $0xb8] sm:$0xff]
      %v196 = vld [vmem:[%s165 + $0xc0] sm:$0xff]
      %v197 = vld [vmem:[%s165 + $0xc8] sm:$0xff]
      %v198 = vld [vmem:[%s165 + $0xd0] sm:$0xff]
      %v199 = vld [vmem:[%s165 + $0xd8] sm:$0xff]
      %v200 = vld [vmem:[%s165 + $0xe0] sm:$0xff]
      %v201 = vld [vmem:[%s165 + $0xe8] sm:$0xff]
      %v202 = vld [vmem:[%s165 + $0xf0] sm:$0xff]
      %v203 = vld [vmem:[%s165 + $0xf8] sm:$0xff]
      %v204 = vld [vmem:[%s165 + $0x100] sm:$0xff]
      %v205 = vld [vmem:[%s165 + $0x108] sm:$0xff]
      %v206 = vld [vmem:[%s165 + $0x110] sm:$0xff]
      %v207 = vld [vmem:[%s165 + $0x118] sm:$0xff]
      %v208 = vld [vmem:[%s165 + $0x120] sm:$0xff]
      %v209 = vld [vmem:[%s165 + $0x128] sm:$0xff]
      %v210 = vld [vmem:[%s165 + $0x130] sm:$0xff]
      %v211 = vld [vmem:[%s165 + $0x138] sm:$0xff]
      %v212 = vld [vmem:[%s165 + $0x140] sm:$0xff]
      %v213 = vld [vmem:[%s165 + $0x148] sm:$0xff]
      %v214 = vld [vmem:[%s165 + $0x150] sm:$0xff]
      %v215 = vld [vmem:[%s165 + $0x158] sm:$0xff]
      %v216 = vld [vmem:[%s165 + $0x160] sm:$0xff]
      %v217 = vld [vmem:[%s165 + $0x168] sm:$0xff]
      %v218 = vld [vmem:[%s165 + $0x170] sm:$0xff]
      %v219 = vld [vmem:[%s165 + $0x178] sm:$0xff]
      %v220 = vld [vmem:[%s165 + $0x180] sm:$0xff]
      %v221 = vld [vmem:[%s165 + $0x188] sm:$0xff]
      %v222 = vld [vmem:[%s165 + $0x190] sm:$0xff]
      %v223 = vld [vmem:[%s165 + $0x198] sm:$0xff]
      %v224 = vld [vmem:[%s165 + $0x1a0] sm:$0xff]
      %v225 = vld [vmem:[%s165 + $0x1a8] sm:$0xff]
      %v226 = vld [vmem:[%s165 + $0x1b0] sm:$0xff]
      %v227 = vld [vmem:[%s165 + $0x1b8] sm:$0xff]
      %v228 = vld [vmem:[%s165 + $0x1c0] sm:$0xff]
      %v229 = vld [vmem:[%s165 + $0x1c8] sm:$0xff]
      %v230 = vld [vmem:[%s165 + $0x1d0] sm:$0xff]
      %v231 = vld [vmem:[%s165 + $0x1d8] sm:$0xff]
      %v232 = vld [vmem:[%s165 + $0x1e0] sm:$0xff]
      %v233 = vld [vmem:[%s165 + $0x1e8] sm:$0xff]
      %v234 = vld [vmem:[%s165 + $0x1f0] sm:$0xff]
      %v235 = vld [vmem:[%s165 + $0x1f8] sm:$0xff]
      %v236 = vld [vmem:[%s165 + $0x200] sm:$0xff]
      %v237 = vld [vmem:[%s165 + $0x208] sm:$0xff]
      %v238 = vld [vmem:[%s165 + $0x210] sm:$0xff]
      %v239 = vld [vmem:[%s165 + $0x218] sm:$0xff]
      %v240 = vld [vmem:[%s165 + $0x220] sm:$0xff]
      %v241 = vld [vmem:[%s165 + $0x228] sm:$0xff]
      %v242 = vld [vmem:[%s165 + $0x230] sm:$0xff]
      %v243 = vld [vmem:[%s165 + $0x238] sm:$0xff]
      %v244 = vld [vmem:[%s165 + $0x240] sm:$0xff]
      %v245 = vld [vmem:[%s165 + $0x248] sm:$0xff]
      %v246 = vld [vmem:[%s165 + $0x250] sm:$0xff]
      %v247 = vld [vmem:[%s165 + $0x258] sm:$0xff]
      %v248 = vld [vmem:[%s165 + $0x260] sm:$0xff]
      %v249 = vld [vmem:[%s165 + $0x268] sm:$0xff]
      %v250 = vld [vmem:[%s165 + $0x270] sm:$0xff]
      %v251 = vld [vmem:[%s165 + $0x278] sm:$0xff]
      %v252 = vld [vmem:[%s165 + $0x280] sm:$0xff]
      %v253 = vld [vmem:[%s165 + $0x288] sm:$0xff]
      %v254 = vld [vmem:[%s165 + $0x290] sm:$0xff]
      %v255 = vld [vmem:[%s165 + $0x298] sm:$0xff]
      %v256 = vld [vmem:[%s165 + $0x2a0] sm:$0xff]
      %v257 = vld [vmem:[%s165 + $0x2a8] sm:$0xff]
      %v258 = vld [vmem:[%s165 + $0x2b0] sm:$0xff]
      %v259 = vld [vmem:[%s165 + $0x2b8] sm:$0xff]
      %v260 = vld [vmem:[%s165 + $0x2c0] sm:$0xff]
      %v261 = vld [vmem:[%s165 + $0x2c8] sm:$0xff]
      %v262 = vld [vmem:[%s165 + $0x2d0] sm:$0xff]
      %v263 = vld [vmem:[%s165 + $0x2d8] sm:$0xff]
      %v264 = vld [vmem:[%s165 + $0x2e0] sm:$0xff]
      %v265 = vld [vmem:[%s165 + $0x2e8] sm:$0xff]
      %v266 = vld [vmem:[%s165 + $0x2f0] sm:$0xff]
      %v267 = vld [vmem:[%s165 + $0x2f8] sm:$0xff]
      %v268 = vld [vmem:[%s165 + $0x300] sm:$0xff]
      %v269 = vld [vmem:[%s165 + $0x308] sm:$0xff]
      %v270 = vld [vmem:[%s165 + $0x310] sm:$0xff]
      %v271 = vld [vmem:[%s165 + $0x318] sm:$0xff]
      %v272 = vld [vmem:[%s165 + $0x320] sm:$0xff]
      %v273 = vld [vmem:[%s165 + $0x328] sm:$0xff]
      %v274 = vld [vmem:[%s165 + $0x330] sm:$0xff]
      %v275 = vld [vmem:[%s165 + $0x338] sm:$0xff]
      %v276 = vld [vmem:[%s165 + $0x340] sm:$0xff]
      %v277 = vld [vmem:[%s165 + $0x348] sm:$0xff]
      %v278 = vld [vmem:[%s165 + $0x350] sm:$0xff]
      %v279 = vld [vmem:[%s165 + $0x358] sm:$0xff]
      %v280 = vld [vmem:[%s165 + $0x360] sm:$0xff]
      %v281 = vld [vmem:[%s165 + $0x368] sm:$0xff]
      %v282 = vld [vmem:[%s165 + $0x370] sm:$0xff]
      %v283 = vld [vmem:[%s165 + $0x378] sm:$0xff]
      %v284 = vld [vmem:[%s165 + $0x380] sm:$0xff]
      %v285 = vld [vmem:[%s165 + $0x388] sm:$0xff]
      %v286 = vld [vmem:[%s165 + $0x390] sm:$0xff]
      %v287 = vld [vmem:[%s165 + $0x398] sm:$0xff]
      %v288 = vld [vmem:[%s165 + $0x3a0] sm:$0xff]
      %v289 = vld [vmem:[%s165 + $0x3a8] sm:$0xff]
      %v290 = vld [vmem:[%s165 + $0x3b0] sm:$0xff]
      %v291 = vld [vmem:[%s165 + $0x3b8] sm:$0xff]
      %v292 = vld [vmem:[%s165 + $0x3c0] sm:$0xff]
      %v293 = vld [vmem:[%s165 + $0x3c8] sm:$0xff]
      %v294 = vld [vmem:[%s165 + $0x3d0] sm:$0xff]
      %v295 = vld [vmem:[%s165 + $0x3d8] sm:$0xff]
      %v296 = vld [vmem:[%s165 + $0x3e0] sm:$0xff]
      %v297 = vld [vmem:[%s165 + $0x3e8] sm:$0xff]
      %v298 = vld [vmem:[%s165 + $0x3f0] sm:$0xff]
      %v299 = vld [vmem:[%s165 + $0x3f8] sm:$0xff]
      %v300 = vld [vmem:[%s165 + $0x400] sm:$0xff]
      %v301 = vld [vmem:[%s165 + $0x408] sm:$0xff]
      %v302 = vld [vmem:[%s165 + $0x410] sm:$0xff]
      %v303 = vld [vmem:[%s165 + $0x418] sm:$0xff]
      %v304 = vld [vmem:[%s165 + $0x420] sm:$0xff]
      %v305 = vld [vmem:[%s165 + $0x428] sm:$0xff]
      %v306 = vld [vmem:[%s165 + $0x430] sm:$0xff]
      %v307 = vld [vmem:[%s165 + $0x438] sm:$0xff]
      %v308 = vld [vmem:[%s165 + $0x440] sm:$0xff]
      %v309 = vld [vmem:[%s165 + $0x448] sm:$0xff]
      %v310 = vld [vmem:[%s165 + $0x450] sm:$0xff]
      %v311 = vld [vmem:[%s165 + $0x458] sm:$0xff]
      %v312 = vld [vmem:[%s165 + $0x460] sm:$0xff]
      %v313 = vld [vmem:[%s165 + $0x468] sm:$0xff]
      %v314 = vld [vmem:[%s165 + $0x470] sm:$0xff]
      %v315 = vld [vmem:[%s165 + $0x478] sm:$0xff]
      %v316 = vld [vmem:[%s165 + $0x480] sm:$0xff]
      %v317 = vld [vmem:[%s165 + $0x488] sm:$0xff]
      %v318 = vld [vmem:[%s165 + $0x490] sm:$0xff]
      %v319 = vld [vmem:[%s165 + $0x498] sm:$0xff]
      %v320 = vld [vmem:[%s165 + $0x4a0] sm:$0xff]
      %v321 = vld [vmem:[%s165 + $0x4a8] sm:$0xff]
      %v322 = vld [vmem:[%s165 + $0x4b0] sm:$0xff]
      %v323 = vld [vmem:[%s165 + $0x4b8] sm:$0xff]
      %v324 = vld [vmem:[%s165 + $0x4c0] sm:$0xff]
      %v325 = vld [vmem:[%s165 + $0x4c8] sm:$0xff]
      %v326 = vld [vmem:[%s165 + $0x4d0] sm:$0xff]
      %v327 = vld [vmem:[%s165 + $0x4d8] sm:$0xff]
      %v328 = vld [vmem:[%s165 + $0x4e0] sm:$0xff]
      %v329 = vld [vmem:[%s165 + $0x4e8] sm:$0xff]
      %v330 = vld [vmem:[%s165 + $0x4f0] sm:$0xff]
      %v331 = vld [vmem:[%s165 + $0x4f8] sm:$0xff]
      %v332 = vld [vmem:[%s165 + $0x500] sm:$0xff]
      %v333 = vld [vmem:[%s165 + $0x508] sm:$0xff]
      %v334 = vld [vmem:[%s165 + $0x510] sm:$0xff]
      %v335 = vld [vmem:[%s165 + $0x518] sm:$0xff]
      %v336 = vld [vmem:[%s165 + $0x520] sm:$0xff]
      %v337 = vld [vmem:[%s165 + $0x528] sm:$0xff]
      %v338 = vld [vmem:[%s165 + $0x530] sm:$0xff]
      %v339 = vld [vmem:[%s165 + $0x538] sm:$0xff]
      %v340 = vld [vmem:[%s165 + $0x540] sm:$0xff]
      %v341 = vld [vmem:[%s165 + $0x548] sm:$0xff]
      %v342 = vld [vmem:[%s165 + $0x550] sm:$0xff]
      %v343 = vld [vmem:[%s165 + $0x558] sm:$0xff]
      %v344 = vld [vmem:[%s165 + $0x560] sm:$0xff]
      %v345 = vld [vmem:[%s165 + $0x568] sm:$0xff]
      %v346 = vld [vmem:[%s165 + $0x570] sm:$0xff]
      %v347 = vld [vmem:[%s165 + $0x578] sm:$0xff]
      %v348 = vld [vmem:[%s165 + $0x580] sm:$0xff]
      %v349 = vld [vmem:[%s165 + $0x588] sm:$0xff]
      %v350 = vld [vmem:[%s165 + $0x590] sm:$0xff]
      %v351 = vld [vmem:[%s165 + $0x598] sm:$0xff]
      %v352 = vld [vmem:[%s165 + $0x5a0] sm:$0xff]
      %v353 = vld [vmem:[%s165 + $0x5a8] sm:$0xff]
      %v354 = vld [vmem:[%s165 + $0x5b0] sm:$0xff]
      %v355 = vld [vmem:[%s165 + $0x5b8] sm:$0xff]
      %v356 = vld [vmem:[%s165 + $0x5c0] sm:$0xff]
      %v357 = vld [vmem:[%s165 + $0x5c8] sm:$0xff]
      %v358 = vld [vmem:[%s165 + $0x5d0] sm:$0xff]
      %v359 = vld [vmem:[%s165 + $0x5d8] sm:$0xff]
      %v360 = vld [vmem:[%s165 + $0x5e0] sm:$0xff]
      %v361 = vld [vmem:[%s165 + $0x5e8] sm:$0xff]
      %v362 = vld [vmem:[%s165 + $0x5f0] sm:$0xff]
      %v363 = vld [vmem:[%s165 + $0x5f8] sm:$0xff]
      %v364 = vld [vmem:[%s165 + $0x600] sm:$0xff]
      %v365 = vld [vmem:[%s165 + $0x608] sm:$0xff]
      %v366 = vld [vmem:[%s165 + $0x610] sm:$0xff]
      %v367 = vld [vmem:[%s165 + $0x618] sm:$0xff]
      %v368 = vld [vmem:[%s165 + $0x620] sm:$0xff]
      %v369 = vld [vmem:[%s165 + $0x628] sm:$0xff]
      %v370 = vld [vmem:[%s165 + $0x630] sm:$0xff]
      %v371 = vld [vmem:[%s165 + $0x638] sm:$0xff]
      %v372 = vld [vmem:[%s165 + $0x640] sm:$0xff]
      %v373 = vld [vmem:[%s165 + $0x648] sm:$0xff]
      %v374 = vld [vmem:[%s165 + $0x650] sm:$0xff]
      %v375 = vld [vmem:[%s165 + $0x658] sm:$0xff]
      %v376 = vld [vmem:[%s165 + $0x660] sm:$0xff]
      %v377 = vld [vmem:[%s165 + $0x668] sm:$0xff]
      %v378 = vld [vmem:[%s165 + $0x670] sm:$0xff]
      %v379 = vld [vmem:[%s165 + $0x678] sm:$0xff]
      %v380 = vld [vmem:[%s165 + $0x680] sm:$0xff]
      %v381 = vld [vmem:[%s165 + $0x688] sm:$0xff]
      %v382 = vld [vmem:[%s165 + $0x690] sm:$0xff]
      %v383 = vld [vmem:[%s165 + $0x698] sm:$0xff]
      %v384 = vld [vmem:[%s165 + $0x6a0] sm:$0xff]
      %v385 = vld [vmem:[%s165 + $0x6a8] sm:$0xff]
      %v386 = vld [vmem:[%s165 + $0x6b0] sm:$0xff]
      %v387 = vld [vmem:[%s165 + $0x6b8] sm:$0xff]
      %v388 = vld [vmem:[%s1] sm:$0xf]
      %v389 = vld [vmem:[%s1 + $0x4] sm:$0xf]
      %v390 = vld [vmem:[%s1 + $0x8] sm:$0xf]
      %v391 = vld [vmem:[%s1 + $0xc] sm:$0xf]
      %v392 = vld [vmem:[%s1 + $0x10] sm:$0xf]
      %v393 = vld [vmem:[%s1 + $0x14] sm:$0xf]
      %v394 = vld [vmem:[%s1 + $0x18] sm:$0xf]
      %v395 = vld [vmem:[%s1 + $0x1c] sm:$0xf]
      %v396 = vld [vmem:[%s1 + $0x20] sm:$0xf]
      %v397 = vld [vmem:[%s1 + $0x24] sm:$0xf]
      %v398 = vld [vmem:[%s1 + $0x28] sm:$0xf]
      %v399 = vld [vmem:[%s1 + $0x2c] sm:$0xf]
      %v400 = vld [vmem:[%s1 + $0x30] sm:$0xf]
      %v401 = vld [vmem:[%s1 + $0x34] sm:$0xf]
      %v402 = vld [vmem:[%s1 + $0x38] sm:$0xf]
      %v403 = vld [vmem:[%s1 + $0x3c] sm:$0xf]
      %v404 = vld [vmem:[%s1 + $0x40] sm:$0xf]
      %v405 = vld [vmem:[%s1 + $0x44] sm:$0xf]
      %v406 = vld [vmem:[%s1 + $0x48] sm:$0xf]
      %v407 = vld [vmem:[%s1 + $0x4c] sm:$0xf]
      %v408 = vld [vmem:[%s1 + $0x50] sm:$0xf]
      %v409 = vld [vmem:[%s1 + $0x54] sm:$0xf]
      %v410 = vld [vmem:[%s1 + $0x58] sm:$0xf]
      %v411 = vld [vmem:[%s1 + $0x5c] sm:$0xf]
      %v412 = vld [vmem:[%s1 + $0x60] sm:$0xf]
      %v413 = vld [vmem:[%s1 + $0x64] sm:$0xf]
      %v414 = vld [vmem:[%s1 + $0x68] sm:$0xf]
      %v415 = vld [vmem:[%s1 + $0x6c] sm:$0xf]
      %v416 = vld [vmem:[%s1 + $0x70] sm:$0xf]
      %v417 = vld [vmem:[%s1 + $0x74] sm:$0xf]
      %v418 = vld [vmem:[%s1 + $0x78] sm:$0xf]
      %v419 = vld [vmem:[%s1 + $0x7c] sm:$0xf]
      %v420 = vperm.slane %v171, 0
      %v637 = vunpack.c.l.b16 %v172
      %v638 = vunpack.c.h.b16 %v172
      %v639 = vunpack.c.l.b16 %v173
      %v640 = vunpack.c.h.b16 %v173
      %v641 = vunpack.c.l.b16 %v174
      %v642 = vunpack.c.h.b16 %v174
      %v643 = vunpack.c.l.b16 %v175
      %v644 = vunpack.c.h.b16 %v175
      %v645 = vunpack.c.l.b16 %v176
      %v646 = vunpack.c.h.b16 %v176
      %v647 = vunpack.c.l.b16 %v177
      %v648 = vunpack.c.h.b16 %v177
      %v649 = vunpack.c.l.b16 %v178
      %v650 = vunpack.c.h.b16 %v178
      %v651 = vunpack.c.l.b16 %v179
      %v652 = vunpack.c.h.b16 %v179
      %v653 = vunpack.c.l.b16 %v180
      %v654 = vunpack.c.h.b16 %v180
      %v655 = vunpack.c.l.b16 %v181
      %v656 = vunpack.c.h.b16 %v181
      %v657 = vunpack.c.l.b16 %v182
      %v658 = vunpack.c.h.b16 %v182
      %v659 = vunpack.c.l.b16 %v183
      %v660 = vunpack.c.h.b16 %v183
      %v661 = vunpack.c.l.b16 %v184
      %v662 = vunpack.c.h.b16 %v184
      %v663 = vunpack.c.l.b16 %v185
      %v664 = vunpack.c.h.b16 %v185
      %v665 = vunpack.c.l.b16 %v186
      %v666 = vunpack.c.h.b16 %v186
      %v667 = vunpack.c.l.b16 %v187
      %v668 = vunpack.c.h.b16 %v187
      %v669 = vunpack.c.l.b16 %v188
      %v670 = vunpack.c.h.b16 %v188
      %v671 = vunpack.c.l.b16 %v189
      %v672 = vunpack.c.h.b16 %v189
      %v673 = vunpack.c.l.b16 %v190
      %v674 = vunpack.c.h.b16 %v190
      %v675 = vunpack.c.l.b16 %v191
      %v676 = vunpack.c.h.b16 %v191
      %v677 = vunpack.c.l.b16 %v192
      %v678 = vunpack.c.h.b16 %v192
      %v679 = vunpack.c.l.b16 %v193
      %v680 = vunpack.c.h.b16 %v193
      %v681 = vunpack.c.l.b16 %v194
      %v682 = vunpack.c.h.b16 %v194
      %v683 = vunpack.c.l.b16 %v195
      %v684 = vunpack.c.h.b16 %v195
      %v685 = vunpack.c.l.b16 %v196
      %v686 = vunpack.c.h.b16 %v196
      %v687 = vunpack.c.l.b16 %v197
      %v688 = vunpack.c.h.b16 %v197
      %v689 = vunpack.c.l.b16 %v198
      %v690 = vunpack.c.h.b16 %v198
      %v691 = vunpack.c.l.b16 %v199
      %v692 = vunpack.c.h.b16 %v199
      %v693 = vunpack.c.l.b16 %v200
      %v694 = vunpack.c.h.b16 %v200
      %v695 = vunpack.c.l.b16 %v201
      %v696 = vunpack.c.h.b16 %v201
      %v697 = vunpack.c.l.b16 %v202
      %v698 = vunpack.c.h.b16 %v202
      %v699 = vunpack.c.l.b16 %v203
      %v700 = vunpack.c.h.b16 %v203
      %v701 = vunpack.c.l.b16 %v204
      %v702 = vunpack.c.h.b16 %v204
      %v703 = vunpack.c.l.b16 %v205
      %v704 = vunpack.c.h.b16 %v205
      %v705 = vunpack.c.l.b16 %v206
      %v706 = vunpack.c.h.b16 %v206
      %v707 = vunpack.c.l.b16 %v207
      %v708 = vunpack.c.h.b16 %v207
      %v709 = vunpack.c.l.b16 %v208
      %v710 = vunpack.c.h.b16 %v208
      %v711 = vunpack.c.l.b16 %v209
      %v712 = vunpack.c.h.b16 %v209
      %v713 = vunpack.c.l.b16 %v210
      %v714 = vunpack.c.h.b16 %v210
      %v715 = vunpack.c.l.b16 %v211
      %v716 = vunpack.c.h.b16 %v211
      %v717 = vunpack.c.l.b16 %v212
      %v718 = vunpack.c.h.b16 %v212
      %v719 = vunpack.c.l.b16 %v213
      %v720 = vunpack.c.h.b16 %v213
      %v721 = vunpack.c.l.b16 %v214
      %v722 = vunpack.c.h.b16 %v214
      %v723 = vunpack.c.l.b16 %v215
      %v724 = vunpack.c.h.b16 %v215
      %v725 = vunpack.c.l.b16 %v216
      %v726 = vunpack.c.h.b16 %v216
      %v727 = vunpack.c.l.b16 %v217
      %v728 = vunpack.c.h.b16 %v217
      %v729 = vunpack.c.l.b16 %v218
      %v730 = vunpack.c.h.b16 %v218
      %v731 = vunpack.c.l.b16 %v219
      %v732 = vunpack.c.h.b16 %v219
      %v733 = vunpack.c.l.b16 %v220
      %v734 = vunpack.c.h.b16 %v220
      %v735 = vunpack.c.l.b16 %v221
      %v736 = vunpack.c.h.b16 %v221
      %v737 = vunpack.c.l.b16 %v222
      %v738 = vunpack.c.h.b16 %v222
      %v739 = vunpack.c.l.b16 %v223
      %v740 = vunpack.c.h.b16 %v223
      %v741 = vunpack.c.l.b16 %v224
      %v742 = vunpack.c.h.b16 %v224
      %v743 = vunpack.c.l.b16 %v225
      %v744 = vunpack.c.h.b16 %v225
      %v745 = vunpack.c.l.b16 %v226
      %v746 = vunpack.c.h.b16 %v226
      %v747 = vunpack.c.l.b16 %v227
      %v748 = vunpack.c.h.b16 %v227
      %v749 = vunpack.c.l.b16 %v228
      %v750 = vunpack.c.h.b16 %v228
      %v751 = vunpack.c.l.b16 %v229
      %v752 = vunpack.c.h.b16 %v229
      %v753 = vunpack.c.l.b16 %v230
      %v754 = vunpack.c.h.b16 %v230
      %v755 = vunpack.c.l.b16 %v231
      %v756 = vunpack.c.h.b16 %v231
      %v757 = vunpack.c.l.b16 %v232
      %v758 = vunpack.c.h.b16 %v232
      %v759 = vunpack.c.l.b16 %v233
      %v760 = vunpack.c.h.b16 %v233
      %v761 = vunpack.c.l.b16 %v234
      %v762 = vunpack.c.h.b16 %v234
      %v763 = vunpack.c.l.b16 %v235
      %v764 = vunpack.c.h.b16 %v235
      %v765 = vunpack.c.l.b16 %v236
      %v766 = vunpack.c.h.b16 %v236
      %v767 = vunpack.c.l.b16 %v237
      %v768 = vunpack.c.h.b16 %v237
      %v769 = vunpack.c.l.b16 %v238
      %v770 = vunpack.c.h.b16 %v238
      %v771 = vunpack.c.l.b16 %v239
      %v772 = vunpack.c.h.b16 %v239
      %v773 = vunpack.c.l.b16 %v240
      %v774 = vunpack.c.h.b16 %v240
      %v775 = vunpack.c.l.b16 %v241
      %v776 = vunpack.c.h.b16 %v241
      %v777 = vunpack.c.l.b16 %v242
      %v778 = vunpack.c.h.b16 %v242
      %v779 = vunpack.c.l.b16 %v243
      %v780 = vunpack.c.h.b16 %v243
      %v781 = vunpack.c.l.b16 %v244
      %v782 = vunpack.c.h.b16 %v244
      %v783 = vunpack.c.l.b16 %v245
      %v784 = vunpack.c.h.b16 %v245
      %v785 = vunpack.c.l.b16 %v246
      %v786 = vunpack.c.h.b16 %v246
      %v787 = vunpack.c.l.b16 %v247
      %v788 = vunpack.c.h.b16 %v247
      %v789 = vunpack.c.l.b16 %v248
      %v790 = vunpack.c.h.b16 %v248
      %v791 = vunpack.c.l.b16 %v249
      %v792 = vunpack.c.h.b16 %v249
      %v793 = vunpack.c.l.b16 %v250
      %v794 = vunpack.c.h.b16 %v250
      %v795 = vunpack.c.l.b16 %v251
      %v796 = vunpack.c.h.b16 %v251
      %v797 = vunpack.c.l.b16 %v252
      %v798 = vunpack.c.h.b16 %v252
      %v799 = vunpack.c.l.b16 %v253
      %v800 = vunpack.c.h.b16 %v253
      %v801 = vunpack.c.l.b16 %v254
      %v802 = vunpack.c.h.b16 %v254
      %v803 = vunpack.c.l.b16 %v255
      %v804 = vunpack.c.h.b16 %v255
      %v805 = vunpack.c.l.b16 %v256
      %v806 = vunpack.c.h.b16 %v256
      %v807 = vunpack.c.l.b16 %v257
      %v808 = vunpack.c.h.b16 %v257
      %v809 = vunpack.c.l.b16 %v258
      %v810 = vunpack.c.h.b16 %v258
      %v811 = vunpack.c.l.b16 %v259
      %v812 = vunpack.c.h.b16 %v259
      %v813 = vunpack.c.l.b16 %v260
      %v814 = vunpack.c.h.b16 %v260
      %v815 = vunpack.c.l.b16 %v261
      %v816 = vunpack.c.h.b16 %v261
      %v817 = vunpack.c.l.b16 %v262
      %v818 = vunpack.c.h.b16 %v262
      %v819 = vunpack.c.l.b16 %v263
      %v820 = vunpack.c.h.b16 %v263
      %v821 = vunpack.c.l.b16 %v264
      %v822 = vunpack.c.h.b16 %v264
      %v823 = vunpack.c.l.b16 %v265
      %v824 = vunpack.c.h.b16 %v265
      %v825 = vunpack.c.l.b16 %v266
      %v826 = vunpack.c.h.b16 %v266
      %v827 = vunpack.c.l.b16 %v267
      %v828 = vunpack.c.h.b16 %v267
      %v829 = vunpack.c.l.b16 %v268
      %v830 = vunpack.c.h.b16 %v268
      %v831 = vunpack.c.l.b16 %v269
      %v832 = vunpack.c.h.b16 %v269
      %v833 = vunpack.c.l.b16 %v270
      %v834 = vunpack.c.h.b16 %v270
      %v835 = vunpack.c.l.b16 %v271
      %v836 = vunpack.c.h.b16 %v271
      %v837 = vunpack.c.l.b16 %v272
      %v838 = vunpack.c.h.b16 %v272
      %v839 = vunpack.c.l.b16 %v273
      %v840 = vunpack.c.h.b16 %v273
      %v841 = vunpack.c.l.b16 %v274
      %v842 = vunpack.c.h.b16 %v274
      %v843 = vunpack.c.l.b16 %v275
      %v844 = vunpack.c.h.b16 %v275
      %v845 = vunpack.c.l.b16 %v276
      %v846 = vunpack.c.h.b16 %v276
      %v847 = vunpack.c.l.b16 %v277
      %v848 = vunpack.c.h.b16 %v277
      %v849 = vunpack.c.l.b16 %v278
      %v850 = vunpack.c.h.b16 %v278
      %v851 = vunpack.c.l.b16 %v279
      %v852 = vunpack.c.h.b16 %v279
      %v853 = vunpack.c.l.b16 %v280
      %v854 = vunpack.c.h.b16 %v280
      %v855 = vunpack.c.l.b16 %v281
      %v856 = vunpack.c.h.b16 %v281
      %v857 = vunpack.c.l.b16 %v282
      %v858 = vunpack.c.h.b16 %v282
      %v859 = vunpack.c.l.b16 %v283
      %v860 = vunpack.c.h.b16 %v283
      %v861 = vunpack.c.l.b16 %v284
      %v862 = vunpack.c.h.b16 %v284
      %v863 = vunpack.c.l.b16 %v285
      %v864 = vunpack.c.h.b16 %v285
      %v865 = vunpack.c.l.b16 %v286
      %v866 = vunpack.c.h.b16 %v286
      %v867 = vunpack.c.l.b16 %v287
      %v868 = vunpack.c.h.b16 %v287
      %v869 = vunpack.c.l.b16 %v288
      %v870 = vunpack.c.h.b16 %v288
      %v871 = vunpack.c.l.b16 %v289
      %v872 = vunpack.c.h.b16 %v289
      %v873 = vunpack.c.l.b16 %v290
      %v874 = vunpack.c.h.b16 %v290
      %v875 = vunpack.c.l.b16 %v291
      %v876 = vunpack.c.h.b16 %v291
      %v877 = vunpack.c.l.b16 %v292
      %v878 = vunpack.c.h.b16 %v292
      %v879 = vunpack.c.l.b16 %v293
      %v880 = vunpack.c.h.b16 %v293
      %v881 = vunpack.c.l.b16 %v294
      %v882 = vunpack.c.h.b16 %v294
      %v883 = vunpack.c.l.b16 %v295
      %v884 = vunpack.c.h.b16 %v295
      %v885 = vunpack.c.l.b16 %v296
      %v886 = vunpack.c.h.b16 %v296
      %v887 = vunpack.c.l.b16 %v297
      %v888 = vunpack.c.h.b16 %v297
      %v889 = vunpack.c.l.b16 %v298
      %v890 = vunpack.c.h.b16 %v298
      %v891 = vunpack.c.l.b16 %v299
      %v892 = vunpack.c.h.b16 %v299
      %v893 = vunpack.c.l.b16 %v300
      %v894 = vunpack.c.h.b16 %v300
      %v895 = vunpack.c.l.b16 %v301
      %v896 = vunpack.c.h.b16 %v301
      %v897 = vunpack.c.l.b16 %v302
      %v898 = vunpack.c.h.b16 %v302
      %v899 = vunpack.c.l.b16 %v303
      %v900 = vunpack.c.h.b16 %v303
      %v901 = vunpack.c.l.b16 %v304
      %v902 = vunpack.c.h.b16 %v304
      %v903 = vunpack.c.l.b16 %v305
      %v904 = vunpack.c.h.b16 %v305
      %v905 = vunpack.c.l.b16 %v306
      %v906 = vunpack.c.h.b16 %v306
      %v907 = vunpack.c.l.b16 %v307
      %v908 = vunpack.c.h.b16 %v307
      %v909 = vunpack.c.l.b16 %v308
      %v910 = vunpack.c.h.b16 %v308
      %v911 = vunpack.c.l.b16 %v309
      %v912 = vunpack.c.h.b16 %v309
      %v913 = vunpack.c.l.b16 %v310
      %v914 = vunpack.c.h.b16 %v310
      %v915 = vunpack.c.l.b16 %v311
      %v916 = vunpack.c.h.b16 %v311
      %v917 = vunpack.c.l.b16 %v312
      %v918 = vunpack.c.h.b16 %v312
      %v919 = vunpack.c.l.b16 %v313
      %v920 = vunpack.c.h.b16 %v313
      %v921 = vunpack.c.l.b16 %v314
      %v922 = vunpack.c.h.b16 %v314
      %v923 = vunpack.c.l.b16 %v315
      %v924 = vunpack.c.h.b16 %v315
      %v925 = vunpack.c.l.b16 %v316
      %v926 = vunpack.c.h.b16 %v316
      %v927 = vunpack.c.l.b16 %v317
      %v928 = vunpack.c.h.b16 %v317
      %v929 = vunpack.c.l.b16 %v318
      %v930 = vunpack.c.h.b16 %v318
      %v931 = vunpack.c.l.b16 %v319
      %v932 = vunpack.c.h.b16 %v319
      %v933 = vunpack.c.l.b16 %v320
      %v934 = vunpack.c.h.b16 %v320
      %v935 = vunpack.c.l.b16 %v321
      %v936 = vunpack.c.h.b16 %v321
      %v937 = vunpack.c.l.b16 %v322
      %v938 = vunpack.c.h.b16 %v322
      %v939 = vunpack.c.l.b16 %v323
      %v940 = vunpack.c.h.b16 %v323
      %v941 = vunpack.c.l.b16 %v324
      %v942 = vunpack.c.h.b16 %v324
      %v943 = vunpack.c.l.b16 %v325
      %v944 = vunpack.c.h.b16 %v325
      %v945 = vunpack.c.l.b16 %v326
      %v946 = vunpack.c.h.b16 %v326
      %v947 = vunpack.c.l.b16 %v327
      %v948 = vunpack.c.h.b16 %v327
      %v949 = vunpack.c.l.b16 %v328
      %v950 = vunpack.c.h.b16 %v328
      %v951 = vunpack.c.l.b16 %v329
      %v952 = vunpack.c.h.b16 %v329
      %v953 = vunpack.c.l.b16 %v330
      %v954 = vunpack.c.h.b16 %v330
      %v955 = vunpack.c.l.b16 %v331
      %v956 = vunpack.c.h.b16 %v331
      %v957 = vunpack.c.l.b16 %v332
      %v958 = vunpack.c.h.b16 %v332
      %v959 = vunpack.c.l.b16 %v333
      %v960 = vunpack.c.h.b16 %v333
      %v961 = vunpack.c.l.b16 %v334
      %v962 = vunpack.c.h.b16 %v334
      %v963 = vunpack.c.l.b16 %v335
      %v964 = vunpack.c.h.b16 %v335
      %v965 = vunpack.c.l.b16 %v336
      %v966 = vunpack.c.h.b16 %v336
      %v967 = vunpack.c.l.b16 %v337
      %v968 = vunpack.c.h.b16 %v337
      %v969 = vunpack.c.l.b16 %v338
      %v970 = vunpack.c.h.b16 %v338
      %v971 = vunpack.c.l.b16 %v339
      %v972 = vunpack.c.h.b16 %v339
      %v973 = vunpack.c.l.b16 %v340
      %v974 = vunpack.c.h.b16 %v340
      %v975 = vunpack.c.l.b16 %v341
      %v976 = vunpack.c.h.b16 %v341
      %v977 = vunpack.c.l.b16 %v342
      %v978 = vunpack.c.h.b16 %v342
      %v979 = vunpack.c.l.b16 %v343
      %v980 = vunpack.c.h.b16 %v343
      %v981 = vunpack.c.l.b16 %v344
      %v982 = vunpack.c.h.b16 %v344
      %v983 = vunpack.c.l.b16 %v345
      %v984 = vunpack.c.h.b16 %v345
      %v985 = vunpack.c.l.b16 %v346
      %v986 = vunpack.c.h.b16 %v346
      %v987 = vunpack.c.l.b16 %v347
      %v988 = vunpack.c.h.b16 %v347
      %v989 = vunpack.c.l.b16 %v348
      %v990 = vunpack.c.h.b16 %v348
      %v991 = vunpack.c.l.b16 %v349
      %v992 = vunpack.c.h.b16 %v349
      %v993 = vunpack.c.l.b16 %v350
      %v994 = vunpack.c.h.b16 %v350
      %v995 = vunpack.c.l.b16 %v351
      %v996 = vunpack.c.h.b16 %v351
      %v997 = vunpack.c.l.b16 %v352
      %v998 = vunpack.c.h.b16 %v352
      %v999 = vunpack.c.l.b16 %v353
      %v1000 = vunpack.c.h.b16 %v353
      %v1001 = vunpack.c.l.b16 %v354
      %v1002 = vunpack.c.h.b16 %v354
      %v1003 = vunpack.c.l.b16 %v355
      %v1004 = vunpack.c.h.b16 %v355
      %v1005 = vunpack.c.l.b16 %v356
      %v1006 = vunpack.c.h.b16 %v356
      %v1007 = vunpack.c.l.b16 %v357
      %v1008 = vunpack.c.h.b16 %v357
      %v1009 = vunpack.c.l.b16 %v358
      %v1010 = vunpack.c.h.b16 %v358
      %v1011 = vunpack.c.l.b16 %v359
      %v1012 = vunpack.c.h.b16 %v359
      %v1013 = vunpack.c.l.b16 %v360
      %v1014 = vunpack.c.h.b16 %v360
      %v1015 = vunpack.c.l.b16 %v361
      %v1016 = vunpack.c.h.b16 %v361
      %v1017 = vunpack.c.l.b16 %v362
      %v1018 = vunpack.c.h.b16 %v362
      %v1019 = vunpack.c.l.b16 %v363
      %v1020 = vunpack.c.h.b16 %v363
      %v1021 = vunpack.c.l.b16 %v364
      %v1022 = vunpack.c.h.b16 %v364
      %v1023 = vunpack.c.l.b16 %v365
      %v1024 = vunpack.c.h.b16 %v365
      %v1025 = vunpack.c.l.b16 %v366
      %v1026 = vunpack.c.h.b16 %v366
      %v1027 = vunpack.c.l.b16 %v367
      %v1028 = vunpack.c.h.b16 %v367
      %v1029 = vunpack.c.l.b16 %v368
      %v1030 = vunpack.c.h.b16 %v368
      %v1031 = vunpack.c.l.b16 %v369
      %v1032 = vunpack.c.h.b16 %v369
      %v1033 = vunpack.c.l.b16 %v370
      %v1034 = vunpack.c.h.b16 %v370
      %v1035 = vunpack.c.l.b16 %v371
      %v1036 = vunpack.c.h.b16 %v371
      %v1037 = vunpack.c.l.b16 %v372
      %v1038 = vunpack.c.h.b16 %v372
      %v1039 = vunpack.c.l.b16 %v373
      %v1040 = vunpack.c.h.b16 %v373
      %v1041 = vunpack.c.l.b16 %v374
      %v1042 = vunpack.c.h.b16 %v374
      %v1043 = vunpack.c.l.b16 %v375
      %v1044 = vunpack.c.h.b16 %v375
      %v1045 = vunpack.c.l.b16 %v376
      %v1046 = vunpack.c.h.b16 %v376
      %v1047 = vunpack.c.l.b16 %v377
      %v1048 = vunpack.c.h.b16 %v377
      %v1049 = vunpack.c.l.b16 %v378
      %v1050 = vunpack.c.h.b16 %v378
      %v1051 = vunpack.c.l.b16 %v379
      %v1052 = vunpack.c.h.b16 %v379
      %v1053 = vunpack.c.l.b16 %v380
      %v1054 = vunpack.c.h.b16 %v380
      %v1055 = vunpack.c.l.b16 %v381
      %v1056 = vunpack.c.h.b16 %v381
      %v1057 = vunpack.c.l.b16 %v382
      %v1058 = vunpack.c.h.b16 %v382
      %v1059 = vunpack.c.l.b16 %v383
      %v1060 = vunpack.c.h.b16 %v383
      %v1061 = vunpack.c.l.b16 %v384
      %v1062 = vunpack.c.h.b16 %v384
      %v1063 = vunpack.c.l.b16 %v385
      %v1064 = vunpack.c.h.b16 %v385
      %v1065 = vunpack.c.l.b16 %v386
      %v1066 = vunpack.c.h.b16 %v386
      %v1067 = vunpack.c.l.b16 %v387
      %v1068 = vunpack.c.h.b16 %v387
      %v1069 = vpack.c.b16 %v639, %v637
      %v1070 = vpack.c.b16 %v640, %v638
      %v1071 = vpack.c.b16 %v643, %v641
      %v1072 = vpack.c.b16 %v644, %v642
      %v1073 = vpack.c.b16 %v647, %v645
      %v1074 = vpack.c.b16 %v648, %v646
      %v1075 = vpack.c.b16 %v651, %v649
      %v1076 = vpack.c.b16 %v652, %v650
      %v1077 = vpack.c.b16 %v655, %v653
      %v1078 = vpack.c.b16 %v656, %v654
      %v1079 = vpack.c.b16 %v659, %v657
      %v1080 = vpack.c.b16 %v660, %v658
      %v1081 = vpack.c.b16 %v663, %v661
      %v1082 = vpack.c.b16 %v664, %v662
      %v1083 = vpack.c.b16 %v667, %v665
      %v1084 = vpack.c.b16 %v668, %v666
      %v1085 = vpack.c.b16 %v671, %v669
      %v1086 = vpack.c.b16 %v672, %v670
      %v1087 = vpack.c.b16 %v675, %v673
      %v1088 = vpack.c.b16 %v676, %v674
      %v1089 = vpack.c.b16 %v679, %v677
      %v1090 = vpack.c.b16 %v680, %v678
      %v1091 = vpack.c.b16 %v683, %v681
      %v1092 = vpack.c.b16 %v684, %v682
      %v1093 = vpack.c.b16 %v687, %v685
      %v1094 = vpack.c.b16 %v688, %v686
      %v1095 = vpack.c.b16 %v691, %v689
      %v1096 = vpack.c.b16 %v692, %v690
      %v1097 = vpack.c.b16 %v695, %v693
      %v1098 = vpack.c.b16 %v696, %v694
      %v1099 = vpack.c.b16 %v699, %v697
      %v1100 = vpack.c.b16 %v700, %v698
      %v1101 = vpack.c.b16 %v703, %v701
      %v1102 = vpack.c.b16 %v704, %v702
      %v1103 = vpack.c.b16 %v707, %v705
      %v1104 = vpack.c.b16 %v708, %v706
      %v1105 = vpack.c.b16 %v711, %v709
      %v1106 = vpack.c.b16 %v712, %v710
      %v1107 = vpack.c.b16 %v715, %v713
      %v1108 = vpack.c.b16 %v716, %v714
      %v1109 = vpack.c.b16 %v719, %v717
      %v1110 = vpack.c.b16 %v720, %v718
      %v1111 = vpack.c.b16 %v723, %v721
      %v1112 = vpack.c.b16 %v724, %v722
      %v1113 = vpack.c.b16 %v727, %v725
      %v1114 = vpack.c.b16 %v728, %v726
      %v1115 = vpack.c.b16 %v731, %v729
      %v1116 = vpack.c.b16 %v732, %v730
      %v1117 = vpack.c.b16 %v735, %v733
      %v1118 = vpack.c.b16 %v736, %v734
      %v1119 = vpack.c.b16 %v739, %v737
      %v1120 = vpack.c.b16 %v740, %v738
      %v1121 = vpack.c.b16 %v743, %v741
      %v1122 = vpack.c.b16 %v744, %v742
      %v1123 = vpack.c.b16 %v747, %v745
      %v1124 = vpack.c.b16 %v748, %v746
      %v1125 = vpack.c.b16 %v751, %v749
      %v1126 = vpack.c.b16 %v752, %v750
      %v1127 = vpack.c.b16 %v755, %v753
      %v1128 = vpack.c.b16 %v756, %v754
      %v1129 = vpack.c.b16 %v759, %v757
      %v1130 = vpack.c.b16 %v760, %v758
      %v1131 = vpack.c.b16 %v763, %v761
      %v1132 = vpack.c.b16 %v764, %v762
      %v1133 = vpack.c.b16 %v767, %v765
      %v1134 = vpack.c.b16 %v768, %v766
      %v1135 = vpack.c.b16 %v771, %v769
      %v1136 = vpack.c.b16 %v772, %v770
      %v1137 = vpack.c.b16 %v775, %v773
      %v1138 = vpack.c.b16 %v776, %v774
      %v1139 = vpack.c.b16 %v779, %v777
      %v1140 = vpack.c.b16 %v780, %v778
      %v1141 = vpack.c.b16 %v783, %v781
      %v1142 = vpack.c.b16 %v784, %v782
      %v1143 = vpack.c.b16 %v787, %v785
      %v1144 = vpack.c.b16 %v788, %v786
      %v1145 = vpack.c.b16 %v791, %v789
      %v1146 = vpack.c.b16 %v792, %v790
      %v1147 = vpack.c.b16 %v795, %v793
      %v1148 = vpack.c.b16 %v796, %v794
      %v1149 = vpack.c.b16 %v799, %v797
      %v1150 = vpack.c.b16 %v800, %v798
      %v1151 = vpack.c.b16 %v803, %v801
      %v1152 = vpack.c.b16 %v804, %v802
      %v1153 = vpack.c.b16 %v807, %v805
      %v1154 = vpack.c.b16 %v808, %v806
      %v1155 = vpack.c.b16 %v811, %v809
      %v1156 = vpack.c.b16 %v812, %v810
      %v1157 = vpack.c.b16 %v815, %v813
      %v1158 = vpack.c.b16 %v816, %v814
      %v1159 = vpack.c.b16 %v819, %v817
      %v1160 = vpack.c.b16 %v820, %v818
      %v1161 = vpack.c.b16 %v823, %v821
      %v1162 = vpack.c.b16 %v824, %v822
      %v1163 = vpack.c.b16 %v827, %v825
      %v1164 = vpack.c.b16 %v828, %v826
      %v1165 = vpack.c.b16 %v831, %v829
      %v1166 = vpack.c.b16 %v832, %v830
      %v1167 = vpack.c.b16 %v835, %v833
      %v1168 = vpack.c.b16 %v836, %v834
      %v1169 = vpack.c.b16 %v839, %v837
      %v1170 = vpack.c.b16 %v840, %v838
      %v1171 = vpack.c.b16 %v843, %v841
      %v1172 = vpack.c.b16 %v844, %v842
      %v1173 = vpack.c.b16 %v847, %v845
      %v1174 = vpack.c.b16 %v848, %v846
      %v1175 = vpack.c.b16 %v851, %v849
      %v1176 = vpack.c.b16 %v852, %v850
      %v1177 = vpack.c.b16 %v855, %v853
      %v1178 = vpack.c.b16 %v856, %v854
      %v1179 = vpack.c.b16 %v859, %v857
      %v1180 = vpack.c.b16 %v860, %v858
      %v1181 = vpack.c.b16 %v863, %v861
      %v1182 = vpack.c.b16 %v864, %v862
      %v1183 = vpack.c.b16 %v867, %v865
      %v1184 = vpack.c.b16 %v868, %v866
      %v1185 = vpack.c.b16 %v871, %v869
      %v1186 = vpack.c.b16 %v872, %v870
      %v1187 = vpack.c.b16 %v875, %v873
      %v1188 = vpack.c.b16 %v876, %v874
      %v1189 = vpack.c.b16 %v879, %v877
      %v1190 = vpack.c.b16 %v880, %v878
      %v1191 = vpack.c.b16 %v883, %v881
      %v1192 = vpack.c.b16 %v884, %v882
      %v1193 = vpack.c.b16 %v887, %v885
      %v1194 = vpack.c.b16 %v888, %v886
      %v1195 = vpack.c.b16 %v891, %v889
      %v1196 = vpack.c.b16 %v892, %v890
      %v1197 = vpack.c.b16 %v895, %v893
      %v1198 = vpack.c.b16 %v896, %v894
      %v1199 = vpack.c.b16 %v899, %v897
      %v1200 = vpack.c.b16 %v900, %v898
      %v1201 = vpack.c.b16 %v903, %v901
      %v1202 = vpack.c.b16 %v904, %v902
      %v1203 = vpack.c.b16 %v907, %v905
      %v1204 = vpack.c.b16 %v908, %v906
      %v1205 = vpack.c.b16 %v911, %v909
      %v1206 = vpack.c.b16 %v912, %v910
      %v1207 = vpack.c.b16 %v915, %v913
      %v1208 = vpack.c.b16 %v916, %v914
      %v1209 = vpack.c.b16 %v919, %v917
      %v1210 = vpack.c.b16 %v920, %v918
      %v1211 = vpack.c.b16 %v923, %v921
      %v1212 = vpack.c.b16 %v924, %v922
      %v1213 = vpack.c.b16 %v927, %v925
      %v1214 = vpack.c.b16 %v928, %v926
      %v1215 = vpack.c.b16 %v931, %v929
      %v1216 = vpack.c.b16 %v932, %v930
      %v1217 = vpack.c.b16 %v935, %v933
      %v1218 = vpack.c.b16 %v936, %v934
      %v1219 = vpack.c.b16 %v939, %v937
      %v1220 = vpack.c.b16 %v940, %v938
      %v1221 = vpack.c.b16 %v943, %v941
      %v1222 = vpack.c.b16 %v944, %v942
      %v1223 = vpack.c.b16 %v947, %v945
      %v1224 = vpack.c.b16 %v948, %v946
      %v1225 = vpack.c.b16 %v951, %v949
      %v1226 = vpack.c.b16 %v952, %v950
      %v1227 = vpack.c.b16 %v955, %v953
      %v1228 = vpack.c.b16 %v956, %v954
      %v1229 = vpack.c.b16 %v959, %v957
      %v1230 = vpack.c.b16 %v960, %v958
      %v1231 = vpack.c.b16 %v963, %v961
      %v1232 = vpack.c.b16 %v964, %v962
      %v1233 = vpack.c.b16 %v967, %v965
      %v1234 = vpack.c.b16 %v968, %v966
      %v1235 = vpack.c.b16 %v971, %v969
      %v1236 = vpack.c.b16 %v972, %v970
      %v1237 = vpack.c.b16 %v975, %v973
      %v1238 = vpack.c.b16 %v976, %v974
      %v1239 = vpack.c.b16 %v979, %v977
      %v1240 = vpack.c.b16 %v980, %v978
      %v1241 = vpack.c.b16 %v983, %v981
      %v1242 = vpack.c.b16 %v984, %v982
      %v1243 = vpack.c.b16 %v987, %v985
      %v1244 = vpack.c.b16 %v988, %v986
      %v1245 = vpack.c.b16 %v991, %v989
      %v1246 = vpack.c.b16 %v992, %v990
      %v1247 = vpack.c.b16 %v995, %v993
      %v1248 = vpack.c.b16 %v996, %v994
      %v1249 = vpack.c.b16 %v999, %v997
      %v1250 = vpack.c.b16 %v1000, %v998
      %v1251 = vpack.c.b16 %v1003, %v1001
      %v1252 = vpack.c.b16 %v1004, %v1002
      %v1253 = vpack.c.b16 %v1007, %v1005
      %v1254 = vpack.c.b16 %v1008, %v1006
      %v1255 = vpack.c.b16 %v1011, %v1009
      %v1256 = vpack.c.b16 %v1012, %v1010
      %v1257 = vpack.c.b16 %v1015, %v1013
      %v1258 = vpack.c.b16 %v1016, %v1014
      %v1259 = vpack.c.b16 %v1019, %v1017
      %v1260 = vpack.c.b16 %v1020, %v1018
      %v1261 = vpack.c.b16 %v1023, %v1021
      %v1262 = vpack.c.b16 %v1024, %v1022
      %v1263 = vpack.c.b16 %v1027, %v1025
      %v1264 = vpack.c.b16 %v1028, %v1026
      %v1265 = vpack.c.b16 %v1031, %v1029
      %v1266 = vpack.c.b16 %v1032, %v1030
      %v1267 = vpack.c.b16 %v1035, %v1033
      %v1268 = vpack.c.b16 %v1036, %v1034
      %v1269 = vpack.c.b16 %v1039, %v1037
      %v1270 = vpack.c.b16 %v1040, %v1038
      %v1271 = vpack.c.b16 %v1043, %v1041
      %v1272 = vpack.c.b16 %v1044, %v1042
      %v1273 = vpack.c.b16 %v1047, %v1045
      %v1274 = vpack.c.b16 %v1048, %v1046
      %v1275 = vpack.c.b16 %v1051, %v1049
      %v1276 = vpack.c.b16 %v1052, %v1050
      %v1277 = vpack.c.b16 %v1055, %v1053
      %v1278 = vpack.c.b16 %v1056, %v1054
      %v1279 = vpack.c.b16 %v1059, %v1057
      %v1280 = vpack.c.b16 %v1060, %v1058
      %v1281 = vpack.c.b16 %v1063, %v1061
      %v1282 = vpack.c.b16 %v1064, %v1062
      %v1283 = vpack.c.b16 %v1067, %v1065
      %v1284 = vpack.c.b16 %v1068, %v1066
      %v1533 = vunpack.c.l.b16 %v388
      %v1534 = vunpack.c.l.b16 %v389
      %v1535 = vunpack.c.l.b16 %v390
      %v1536 = vunpack.c.l.b16 %v391
      %v1537 = vunpack.c.l.b16 %v392
      %v1538 = vunpack.c.l.b16 %v393
      %v1539 = vunpack.c.l.b16 %v394
      %v1540 = vunpack.c.l.b16 %v395
      %v1541 = vunpack.c.l.b16 %v396
      %v1542 = vunpack.c.l.b16 %v397
      %v1543 = vunpack.c.l.b16 %v398
      %v1544 = vunpack.c.l.b16 %v399
      %v1545 = vunpack.c.l.b16 %v400
      %v1546 = vunpack.c.l.b16 %v401
      %v1547 = vunpack.c.l.b16 %v402
      %v1548 = vunpack.c.l.b16 %v403
      %v1549 = vunpack.c.l.b16 %v404
      %v1550 = vunpack.c.l.b16 %v405
      %v1551 = vunpack.c.l.b16 %v406
      %v1552 = vunpack.c.l.b16 %v407
      %v1553 = vunpack.c.l.b16 %v408
      %v1554 = vunpack.c.l.b16 %v409
      %v1555 = vunpack.c.l.b16 %v410
      %v1556 = vunpack.c.l.b16 %v411
      %v1557 = vunpack.c.l.b16 %v412
      %v1558 = vunpack.c.l.b16 %v413
      %v1559 = vunpack.c.l.b16 %v414
      %v1560 = vunpack.c.l.b16 %v415
      %v1561 = vunpack.c.l.b16 %v416
      %v1562 = vunpack.c.l.b16 %v417
      %v1563 = vunpack.c.l.b16 %v418
      %v1564 = vunpack.c.l.b16 %v419
      %v1565 = vpack.c.b16 %v1534, %v1533
      %v1566 = vpack.c.b16 %v1536, %v1535
      %v1567 = vpack.c.b16 %v1538, %v1537
      %v1568 = vpack.c.b16 %v1540, %v1539
      %v1569 = vpack.c.b16 %v1542, %v1541
      %v1570 = vpack.c.b16 %v1544, %v1543
      %v1571 = vpack.c.b16 %v1546, %v1545
      %v1572 = vpack.c.b16 %v1548, %v1547
      %v1573 = vpack.c.b16 %v1550, %v1549
      %v1574 = vpack.c.b16 %v1552, %v1551
      %v1575 = vpack.c.b16 %v1554, %v1553
      %v1576 = vpack.c.b16 %v1556, %v1555
      %v1577 = vpack.c.b16 %v1558, %v1557
      %v1578 = vpack.c.b16 %v1560, %v1559
      %v1579 = vpack.c.b16 %v1562, %v1561
      %v1580 = vpack.c.b16 %v1564, %v1563
      %1597 = vmatpush.bf16.msra.mxu0 %v1572
      %1598 = vmatpush.bf16.msra.mxu0 %v1571
      %1599 = vmatpush.bf16.msra.mxu0 %v1570
      %1600 = vmatpush.bf16.msra.mxu0 %v1569
      %1601 = vmatpush.bf16.msra.mxu0 %v1568
      %1602 = vmatpush.bf16.msra.mxu0 %v1567
      %1603 = vmatpush.bf16.msra.mxu0 %v1566
      %1604 = vmatpush.bf16.msra.mxu0 %v1565
      %1605 = vmatmul.bf16.gmra.mxu0 %v1069
      %v1606 = vpop.f32.mrf.mxu0
      %v1607 = vadd.f32 %v420, %v1606
      %v1608 = vpop.f32.mrf.mxu0
      %v1609 = vadd.f32 %v420, %v1608
      %1610 = vmatmul.bf16.gmra.mxu0 %v1071
      %v1611 = vpop.f32.mrf.mxu0
      %v1612 = vadd.f32 %v420, %v1611
      %v1613 = vpop.f32.mrf.mxu0
      %v1614 = vadd.f32 %v420, %v1613
      %1615 = vmatmul.bf16.gmra.mxu0 %v1073
      %v1616 = vpop.f32.mrf.mxu0
      %v1617 = vadd.f32 %v420, %v1616
      %v1618 = vpop.f32.mrf.mxu0
      %v1619 = vadd.f32 %v420, %v1618
      %1620 = vmatmul.bf16.gmra.mxu0 %v1075
      %v1621 = vpop.f32.mrf.mxu0
      %v1622 = vadd.f32 %v420, %v1621
      %v1623 = vpop.f32.mrf.mxu0
      %v1624 = vadd.f32 %v420, %v1623
      %1625 = vmatmul.bf16.gmra.mxu0 %v1077
      %v1626 = vpop.f32.mrf.mxu0
      %v1627 = vadd.f32 %v420, %v1626
      %v1628 = vpop.f32.mrf.mxu0
      %v1629 = vadd.f32 %v420, %v1628
      %1630 = vmatmul.bf16.gmra.mxu0 %v1079
      %v1631 = vpop.f32.mrf.mxu0
      %v1632 = vadd.f32 %v420, %v1631
      %v1633 = vpop.f32.mrf.mxu0
      %v1634 = vadd.f32 %v420, %v1633
      %1635 = vmatmul.bf16.gmra.mxu0 %v1081
      %v1636 = vpop.f32.mrf.mxu0
      %v1637 = vadd.f32 %v420, %v1636
      %v1638 = vpop.f32.mrf.mxu0
      %v1639 = vadd.f32 %v420, %v1638
      %1640 = vmatmul.bf16.gmra.mxu0 %v1083
      %v1641 = vpop.f32.mrf.mxu0
      %v1642 = vadd.f32 %v420, %v1641
      %v1643 = vpop.f32.mrf.mxu0
      %v1644 = vadd.f32 %v420, %v1643
      %1645 = vmatmul.bf16.gmra.mxu0 %v1085
      %v1646 = vpop.f32.mrf.mxu0
      %v1647 = vadd.f32 %v420, %v1646
      %v1648 = vpop.f32.mrf.mxu0
      %v1649 = vadd.f32 %v420, %v1648
      %1650 = vmatmul.bf16.gmra.mxu0 %v1087
      %v1651 = vpop.f32.mrf.mxu0
      %v1652 = vadd.f32 %v420, %v1651
      %v1653 = vpop.f32.mrf.mxu0
      %v1654 = vadd.f32 %v420, %v1653
      %1655 = vmatmul.bf16.gmra.mxu0 %v1089
      %v1656 = vpop.f32.mrf.mxu0
      %v1657 = vadd.f32 %v420, %v1656
      %v1658 = vpop.f32.mrf.mxu0
      %v1659 = vadd.f32 %v420, %v1658
      %1660 = vmatmul.bf16.gmra.mxu0 %v1091
      %v1661 = vpop.f32.mrf.mxu0
      %v1662 = vadd.f32 %v420, %v1661
      %v1663 = vpop.f32.mrf.mxu0
      %v1664 = vadd.f32 %v420, %v1663
      %1665 = vmatmul.bf16.gmra.mxu0 %v1093
      %v1666 = vpop.f32.mrf.mxu0
      %v1667 = vadd.f32 %v420, %v1666
      %v1668 = vpop.f32.mrf.mxu0
      %v1669 = vadd.f32 %v420, %v1668
      %1670 = vmatmul.bf16.gmra.mxu0 %v1095
      %v1671 = vpop.f32.mrf.mxu0
      %v1672 = vadd.f32 %v420, %v1671
      %v1673 = vpop.f32.mrf.mxu0
      %v1674 = vadd.f32 %v420, %v1673
      %1675 = vmatmul.bf16.gmra.mxu0 %v1097
      %v1676 = vpop.f32.mrf.mxu0
      %v1677 = vadd.f32 %v420, %v1676
      %v1678 = vpop.f32.mrf.mxu0
      %v1679 = vadd.f32 %v420, %v1678
      %1680 = vmatmul.bf16.gmra.mxu0 %v1099
      %v1681 = vpop.f32.mrf.mxu0
      %v1682 = vadd.f32 %v420, %v1681
      %v1683 = vpop.f32.mrf.mxu0
      %v1684 = vadd.f32 %v420, %v1683
      %1685 = vmatmul.bf16.gmra.mxu0 %v1101
      %v1686 = vpop.f32.mrf.mxu0
      %v1687 = vadd.f32 %v420, %v1686
      %v1688 = vpop.f32.mrf.mxu0
      %v1689 = vadd.f32 %v420, %v1688
      %1690 = vmatmul.bf16.gmra.mxu0 %v1103
      %v1691 = vpop.f32.mrf.mxu0
      %v1692 = vadd.f32 %v420, %v1691
      %v1693 = vpop.f32.mrf.mxu0
      %v1694 = vadd.f32 %v420, %v1693
      %1695 = vmatmul.bf16.gmra.mxu0 %v1105
      %v1696 = vpop.f32.mrf.mxu0
      %v1697 = vadd.f32 %v420, %v1696
      %v1698 = vpop.f32.mrf.mxu0
      %v1699 = vadd.f32 %v420, %v1698
      %1700 = vmatmul.bf16.gmra.mxu0 %v1107
      %v1701 = vpop.f32.mrf.mxu0
      %v1702 = vadd.f32 %v420, %v1701
      %v1703 = vpop.f32.mrf.mxu0
      %v1704 = vadd.f32 %v420, %v1703
      %1705 = vmatmul.bf16.gmra.mxu0 %v1109
      %v1706 = vpop.f32.mrf.mxu0
      %v1707 = vadd.f32 %v420, %v1706
      %v1708 = vpop.f32.mrf.mxu0
      %v1709 = vadd.f32 %v420, %v1708
      %1710 = vmatmul.bf16.gmra.mxu0 %v1111
      %v1711 = vpop.f32.mrf.mxu0
      %v1712 = vadd.f32 %v420, %v1711
      %v1713 = vpop.f32.mrf.mxu0
      %v1714 = vadd.f32 %v420, %v1713
      %1715 = vmatmul.bf16.gmra.mxu0 %v1113
      %v1716 = vpop.f32.mrf.mxu0
      %v1717 = vadd.f32 %v420, %v1716
      %v1718 = vpop.f32.mrf.mxu0
      %v1719 = vadd.f32 %v420, %v1718
      %1720 = vmatmul.bf16.gmra.mxu0 %v1115
      %v1721 = vpop.f32.mrf.mxu0
      %v1722 = vadd.f32 %v420, %v1721
      %v1723 = vpop.f32.mrf.mxu0
      %v1724 = vadd.f32 %v420, %v1723
      %1725 = vmatmul.bf16.gmra.mxu0 %v1117
      %v1726 = vpop.f32.mrf.mxu0
      %v1727 = vadd.f32 %v420, %v1726
      %v1728 = vpop.f32.mrf.mxu0
      %v1729 = vadd.f32 %v420, %v1728
      %1730 = vmatmul.bf16.gmra.mxu0 %v1119
      %v1731 = vpop.f32.mrf.mxu0
      %v1732 = vadd.f32 %v420, %v1731
      %v1733 = vpop.f32.mrf.mxu0
      %v1734 = vadd.f32 %v420, %v1733
      %1735 = vmatmul.bf16.gmra.mxu0 %v1121
      %v1736 = vpop.f32.mrf.mxu0
      %v1737 = vadd.f32 %v420, %v1736
      %v1738 = vpop.f32.mrf.mxu0
      %v1739 = vadd.f32 %v420, %v1738
      %1740 = vmatmul.bf16.gmra.mxu0 %v1123
      %v1741 = vpop.f32.mrf.mxu0
      %v1742 = vadd.f32 %v420, %v1741
      %v1743 = vpop.f32.mrf.mxu0
      %v1744 = vadd.f32 %v420, %v1743
      %1745 = vmatmul.bf16.gmra.mxu0 %v1125
      %v1746 = vpop.f32.mrf.mxu0
      %v1747 = vadd.f32 %v420, %v1746
      %v1748 = vpop.f32.mrf.mxu0
      %v1749 = vadd.f32 %v420, %v1748
      %1750 = vmatmul.bf16.gmra.mxu0 %v1127
      %v1751 = vpop.f32.mrf.mxu0
      %v1752 = vadd.f32 %v420, %v1751
      %v1753 = vpop.f32.mrf.mxu0
      %v1754 = vadd.f32 %v420, %v1753
      %1755 = vmatmul.bf16.gmra.mxu0 %v1129
      %v1756 = vpop.f32.mrf.mxu0
      %v1757 = vadd.f32 %v420, %v1756
      %v1758 = vpop.f32.mrf.mxu0
      %v1759 = vadd.f32 %v420, %v1758
      %1760 = vmatmul.bf16.gmra.mxu0 %v1131
      %v1761 = vpop.f32.mrf.mxu0
      %v1762 = vadd.f32 %v420, %v1761
      %v1763 = vpop.f32.mrf.mxu0
      %v1764 = vadd.f32 %v420, %v1763
      %1765 = vmatmul.bf16.gmra.mxu0 %v1133
      %v1766 = vpop.f32.mrf.mxu0
      %v1767 = vadd.f32 %v420, %v1766
      %v1768 = vpop.f32.mrf.mxu0
      %v1769 = vadd.f32 %v420, %v1768
      %1770 = vmatmul.bf16.gmra.mxu0 %v1135
      %v1771 = vpop.f32.mrf.mxu0
      %v1772 = vadd.f32 %v420, %v1771
      %v1773 = vpop.f32.mrf.mxu0
      %v1774 = vadd.f32 %v420, %v1773
      %1775 = vmatmul.bf16.gmra.mxu0 %v1137
      %v1776 = vpop.f32.mrf.mxu0
      %v1777 = vadd.f32 %v420, %v1776
      %v1778 = vpop.f32.mrf.mxu0
      %v1779 = vadd.f32 %v420, %v1778
      %1780 = vmatmul.bf16.gmra.mxu0 %v1139
      %v1781 = vpop.f32.mrf.mxu0
      %v1782 = vadd.f32 %v420, %v1781
      %v1783 = vpop.f32.mrf.mxu0
      %v1784 = vadd.f32 %v420, %v1783
      %1785 = vmatmul.bf16.gmra.mxu0 %v1141
      %v1786 = vpop.f32.mrf.mxu0
      %v1787 = vadd.f32 %v420, %v1786
      %v1788 = vpop.f32.mrf.mxu0
      %v1789 = vadd.f32 %v420, %v1788
      %1790 = vmatmul.bf16.gmra.mxu0 %v1143
      %v1791 = vpop.f32.mrf.mxu0
      %v1792 = vadd.f32 %v420, %v1791
      %v1793 = vpop.f32.mrf.mxu0
      %v1794 = vadd.f32 %v420, %v1793
      %1795 = vmatmul.bf16.gmra.mxu0 %v1145
      %v1796 = vpop.f32.mrf.mxu0
      %v1797 = vadd.f32 %v420, %v1796
      %v1798 = vpop.f32.mrf.mxu0
      %v1799 = vadd.f32 %v420, %v1798
      %1800 = vmatmul.bf16.gmra.mxu0 %v1147
      %v1801 = vpop.f32.mrf.mxu0
      %v1802 = vadd.f32 %v420, %v1801
      %v1803 = vpop.f32.mrf.mxu0
      %v1804 = vadd.f32 %v420, %v1803
      %1805 = vmatmul.bf16.gmra.mxu0 %v1149
      %v1806 = vpop.f32.mrf.mxu0
      %v1807 = vadd.f32 %v420, %v1806
      %v1808 = vpop.f32.mrf.mxu0
      %v1809 = vadd.f32 %v420, %v1808
      %1810 = vmatmul.bf16.gmra.mxu0 %v1151
      %v1811 = vpop.f32.mrf.mxu0
      %v1812 = vadd.f32 %v420, %v1811
      %v1813 = vpop.f32.mrf.mxu0
      %v1814 = vadd.f32 %v420, %v1813
      %1815 = vmatmul.bf16.gmra.mxu0 %v1153
      %v1816 = vpop.f32.mrf.mxu0
      %v1817 = vadd.f32 %v420, %v1816
      %v1818 = vpop.f32.mrf.mxu0
      %v1819 = vadd.f32 %v420, %v1818
      %1820 = vmatmul.bf16.gmra.mxu0 %v1155
      %v1821 = vpop.f32.mrf.mxu0
      %v1822 = vadd.f32 %v420, %v1821
      %v1823 = vpop.f32.mrf.mxu0
      %v1824 = vadd.f32 %v420, %v1823
      %1825 = vmatmul.bf16.gmra.mxu0 %v1157
      %v1826 = vpop.f32.mrf.mxu0
      %v1827 = vadd.f32 %v420, %v1826
      %v1828 = vpop.f32.mrf.mxu0
      %v1829 = vadd.f32 %v420, %v1828
      %1830 = vmatmul.bf16.gmra.mxu0 %v1159
      %v1831 = vpop.f32.mrf.mxu0
      %v1832 = vadd.f32 %v420, %v1831
      %v1833 = vpop.f32.mrf.mxu0
      %v1834 = vadd.f32 %v420, %v1833
      %1835 = vmatmul.bf16.gmra.mxu0 %v1161
      %v1836 = vpop.f32.mrf.mxu0
      %v1837 = vadd.f32 %v420, %v1836
      %v1838 = vpop.f32.mrf.mxu0
      %v1839 = vadd.f32 %v420, %v1838
      %1840 = vmatmul.bf16.gmra.mxu0 %v1163
      %v1841 = vpop.f32.mrf.mxu0
      %v1842 = vadd.f32 %v420, %v1841
      %v1843 = vpop.f32.mrf.mxu0
      %v1844 = vadd.f32 %v420, %v1843
      %1845 = vmatmul.bf16.gmra.mxu0 %v1165
      %v1846 = vpop.f32.mrf.mxu0
      %v1847 = vadd.f32 %v420, %v1846
      %v1848 = vpop.f32.mrf.mxu0
      %v1849 = vadd.f32 %v420, %v1848
      %1850 = vmatmul.bf16.gmra.mxu0 %v1167
      %v1851 = vpop.f32.mrf.mxu0
      %v1852 = vadd.f32 %v420, %v1851
      %v1853 = vpop.f32.mrf.mxu0
      %v1854 = vadd.f32 %v420, %v1853
      %1855 = vmatmul.bf16.gmra.mxu0 %v1169
      %v1856 = vpop.f32.mrf.mxu0
      %v1857 = vadd.f32 %v420, %v1856
      %v1858 = vpop.f32.mrf.mxu0
      %v1859 = vadd.f32 %v420, %v1858
      %1860 = vmatmul.bf16.gmra.mxu0 %v1171
      %v1861 = vpop.f32.mrf.mxu0
      %v1862 = vadd.f32 %v420, %v1861
      %v1863 = vpop.f32.mrf.mxu0
      %v1864 = vadd.f32 %v420, %v1863
      %1865 = vmatmul.bf16.gmra.mxu0 %v1173
      %v1866 = vpop.f32.mrf.mxu0
      %v1867 = vadd.f32 %v420, %v1866
      %v1868 = vpop.f32.mrf.mxu0
      %v1869 = vadd.f32 %v420, %v1868
      %1870 = vmatmul.bf16.gmra.mxu0 %v1175
      %v1871 = vpop.f32.mrf.mxu0
      %v1872 = vadd.f32 %v420, %v1871
      %v1873 = vpop.f32.mrf.mxu0
      %v1874 = vadd.f32 %v420, %v1873
      %1875 = vmatmul.bf16.gmra.mxu0 %v1177
      %v1876 = vpop.f32.mrf.mxu0
      %v1877 = vadd.f32 %v420, %v1876
      %v1878 = vpop.f32.mrf.mxu0
      %v1879 = vadd.f32 %v420, %v1878
      %1880 = vmatmul.bf16.gmra.mxu0 %v1179
      %v1881 = vpop.f32.mrf.mxu0
      %v1882 = vadd.f32 %v420, %v1881
      %v1883 = vpop.f32.mrf.mxu0
      %v1884 = vadd.f32 %v420, %v1883
      %1885 = vmatmul.bf16.gmra.mxu0 %v1181
      %v1886 = vpop.f32.mrf.mxu0
      %v1887 = vadd.f32 %v420, %v1886
      %v1888 = vpop.f32.mrf.mxu0
      %v1889 = vadd.f32 %v420, %v1888
      %1890 = vmatmul.bf16.gmra.mxu0 %v1183
      %v1891 = vpop.f32.mrf.mxu0
      %v1892 = vadd.f32 %v420, %v1891
      %v1893 = vpop.f32.mrf.mxu0
      %v1894 = vadd.f32 %v420, %v1893
      %1895 = vmatmul.bf16.gmra.mxu0 %v1185
      %v1896 = vpop.f32.mrf.mxu0
      %v1897 = vadd.f32 %v420, %v1896
      %v1898 = vpop.f32.mrf.mxu0
      %v1899 = vadd.f32 %v420, %v1898
      %1900 = vmatmul.bf16.gmra.mxu0 %v1187
      %v1901 = vpop.f32.mrf.mxu0
      %v1902 = vadd.f32 %v420, %v1901
      %v1903 = vpop.f32.mrf.mxu0
      %v1904 = vadd.f32 %v420, %v1903
      %1905 = vmatmul.bf16.gmra.mxu0 %v1189
      %v1906 = vpop.f32.mrf.mxu0
      %v1907 = vadd.f32 %v420, %v1906
      %v1908 = vpop.f32.mrf.mxu0
      %v1909 = vadd.f32 %v420, %v1908
      %1910 = vmatmul.bf16.gmra.mxu0 %v1191
      %v1911 = vpop.f32.mrf.mxu0
      %v1912 = vadd.f32 %v420, %v1911
      %v1913 = vpop.f32.mrf.mxu0
      %v1914 = vadd.f32 %v420, %v1913
      %1915 = vmatmul.bf16.gmra.mxu0 %v1193
      %v1916 = vpop.f32.mrf.mxu0
      %v1917 = vadd.f32 %v420, %v1916
      %v1918 = vpop.f32.mrf.mxu0
      %v1919 = vadd.f32 %v420, %v1918
      %1920 = vmatmul.bf16.gmra.mxu0 %v1195
      %v1921 = vpop.f32.mrf.mxu0
      %v1922 = vadd.f32 %v420, %v1921
      %v1923 = vpop.f32.mrf.mxu0
      %v1924 = vadd.f32 %v420, %v1923
      %1925 = vmatmul.bf16.gmra.mxu0 %v1197
      %v1926 = vpop.f32.mrf.mxu0
      %v1927 = vadd.f32 %v420, %v1926
      %v1928 = vpop.f32.mrf.mxu0
      %v1929 = vadd.f32 %v420, %v1928
      %1930 = vmatmul.bf16.gmra.mxu0 %v1199
      %v1931 = vpop.f32.mrf.mxu0
      %v1932 = vadd.f32 %v420, %v1931
      %v1933 = vpop.f32.mrf.mxu0
      %v1934 = vadd.f32 %v420, %v1933
      %1935 = vmatmul.bf16.gmra.mxu0 %v1201
      %v1936 = vpop.f32.mrf.mxu0
      %v1937 = vadd.f32 %v420, %v1936
      %v1938 = vpop.f32.mrf.mxu0
      %v1939 = vadd.f32 %v420, %v1938
      %1940 = vmatmul.bf16.gmra.mxu0 %v1203
      %v1941 = vpop.f32.mrf.mxu0
      %v1942 = vadd.f32 %v420, %v1941
      %v1943 = vpop.f32.mrf.mxu0
      %v1944 = vadd.f32 %v420, %v1943
      %1945 = vmatmul.bf16.gmra.mxu0 %v1205
      %v1946 = vpop.f32.mrf.mxu0
      %v1947 = vadd.f32 %v420, %v1946
      %v1948 = vpop.f32.mrf.mxu0
      %v1949 = vadd.f32 %v420, %v1948
      %1950 = vmatmul.bf16.gmra.mxu0 %v1207
      %v1951 = vpop.f32.mrf.mxu0
      %v1952 = vadd.f32 %v420, %v1951
      %v1953 = vpop.f32.mrf.mxu0
      %v1954 = vadd.f32 %v420, %v1953
      %1955 = vmatmul.bf16.gmra.mxu0 %v1209
      %v1956 = vpop.f32.mrf.mxu0
      %v1957 = vadd.f32 %v420, %v1956
      %v1958 = vpop.f32.mrf.mxu0
      %v1959 = vadd.f32 %v420, %v1958
      %1960 = vmatmul.bf16.gmra.mxu0 %v1211
      %v1961 = vpop.f32.mrf.mxu0
      %v1962 = vadd.f32 %v420, %v1961
      %v1963 = vpop.f32.mrf.mxu0
      %v1964 = vadd.f32 %v420, %v1963
      %1965 = vmatmul.bf16.gmra.mxu0 %v1213
      %v1966 = vpop.f32.mrf.mxu0
      %v1967 = vadd.f32 %v420, %v1966
      %v1968 = vpop.f32.mrf.mxu0
      %v1969 = vadd.f32 %v420, %v1968
      %1970 = vmatmul.bf16.gmra.mxu0 %v1215
      %v1971 = vpop.f32.mrf.mxu0
      %v1972 = vadd.f32 %v420, %v1971
      %v1973 = vpop.f32.mrf.mxu0
      %v1974 = vadd.f32 %v420, %v1973
      %1975 = vmatmul.bf16.gmra.mxu0 %v1217
      %v1976 = vpop.f32.mrf.mxu0
      %v1977 = vadd.f32 %v420, %v1976
      %v1978 = vpop.f32.mrf.mxu0
      %v1979 = vadd.f32 %v420, %v1978
      %1980 = vmatmul.bf16.gmra.mxu0 %v1219
      %v1981 = vpop.f32.mrf.mxu0
      %v1982 = vadd.f32 %v420, %v1981
      %v1983 = vpop.f32.mrf.mxu0
      %v1984 = vadd.f32 %v420, %v1983
      %1985 = vmatmul.bf16.gmra.mxu0 %v1221
      %v1986 = vpop.f32.mrf.mxu0
      %v1987 = vadd.f32 %v420, %v1986
      %v1988 = vpop.f32.mrf.mxu0
      %v1989 = vadd.f32 %v420, %v1988
      %1990 = vmatmul.bf16.gmra.mxu0 %v1223
      %v1991 = vpop.f32.mrf.mxu0
      %v1992 = vadd.f32 %v420, %v1991
      %v1993 = vpop.f32.mrf.mxu0
      %v1994 = vadd.f32 %v420, %v1993
      %1995 = vmatmul.bf16.gmra.mxu0 %v1225
      %v1996 = vpop.f32.mrf.mxu0
      %v1997 = vadd.f32 %v420, %v1996
      %v1998 = vpop.f32.mrf.mxu0
      %v1999 = vadd.f32 %v420, %v1998
      %2000 = vmatmul.bf16.gmra.mxu0 %v1227
      %v2001 = vpop.f32.mrf.mxu0
      %v2002 = vadd.f32 %v420, %v2001
      %v2003 = vpop.f32.mrf.mxu0
      %v2004 = vadd.f32 %v420, %v2003
      %2005 = vmatmul.bf16.gmra.mxu0 %v1229
      %v2006 = vpop.f32.mrf.mxu0
      %v2007 = vadd.f32 %v420, %v2006
      %v2008 = vpop.f32.mrf.mxu0
      %v2009 = vadd.f32 %v420, %v2008
      %2010 = vmatmul.bf16.gmra.mxu0 %v1231
      %v2011 = vpop.f32.mrf.mxu0
      %v2012 = vadd.f32 %v420, %v2011
      %v2013 = vpop.f32.mrf.mxu0
      %v2014 = vadd.f32 %v420, %v2013
      %2015 = vmatmul.bf16.gmra.mxu0 %v1233
      %v2016 = vpop.f32.mrf.mxu0
      %v2017 = vadd.f32 %v420, %v2016
      %v2018 = vpop.f32.mrf.mxu0
      %v2019 = vadd.f32 %v420, %v2018
      %2020 = vmatmul.bf16.gmra.mxu0 %v1235
      %v2021 = vpop.f32.mrf.mxu0
      %v2022 = vadd.f32 %v420, %v2021
      %v2023 = vpop.f32.mrf.mxu0
      %v2024 = vadd.f32 %v420, %v2023
      %2025 = vmatmul.bf16.gmra.mxu0 %v1237
      %v2026 = vpop.f32.mrf.mxu0
      %v2027 = vadd.f32 %v420, %v2026
      %v2028 = vpop.f32.mrf.mxu0
      %v2029 = vadd.f32 %v420, %v2028
      %2030 = vmatmul.bf16.gmra.mxu0 %v1239
      %v2031 = vpop.f32.mrf.mxu0
      %v2032 = vadd.f32 %v420, %v2031
      %v2033 = vpop.f32.mrf.mxu0
      %v2034 = vadd.f32 %v420, %v2033
      %2035 = vmatmul.bf16.gmra.mxu0 %v1241
      %v2036 = vpop.f32.mrf.mxu0
      %v2037 = vadd.f32 %v420, %v2036
      %v2038 = vpop.f32.mrf.mxu0
      %v2039 = vadd.f32 %v420, %v2038
      %2040 = vmatmul.bf16.gmra.mxu0 %v1243
      %v2041 = vpop.f32.mrf.mxu0
      %v2042 = vadd.f32 %v420, %v2041
      %v2043 = vpop.f32.mrf.mxu0
      %v2044 = vadd.f32 %v420, %v2043
      %2045 = vmatmul.bf16.gmra.mxu0 %v1245
      %v2046 = vpop.f32.mrf.mxu0
      %v2047 = vadd.f32 %v420, %v2046
      %v2048 = vpop.f32.mrf.mxu0
      %v2049 = vadd.f32 %v420, %v2048
      %2050 = vmatmul.bf16.gmra.mxu0 %v1247
      %v2051 = vpop.f32.mrf.mxu0
      %v2052 = vadd.f32 %v420, %v2051
      %v2053 = vpop.f32.mrf.mxu0
      %v2054 = vadd.f32 %v420, %v2053
      %2055 = vmatmul.bf16.gmra.mxu0 %v1249
      %v2056 = vpop.f32.mrf.mxu0
      %v2057 = vadd.f32 %v420, %v2056
      %v2058 = vpop.f32.mrf.mxu0
      %v2059 = vadd.f32 %v420, %v2058
      %2060 = vmatmul.bf16.gmra.mxu0 %v1251
      %v2061 = vpop.f32.mrf.mxu0
      %v2062 = vadd.f32 %v420, %v2061
      %v2063 = vpop.f32.mrf.mxu0
      %v2064 = vadd.f32 %v420, %v2063
      %2065 = vmatmul.bf16.gmra.mxu0 %v1253
      %v2066 = vpop.f32.mrf.mxu0
      %v2067 = vadd.f32 %v420, %v2066
      %v2068 = vpop.f32.mrf.mxu0
      %v2069 = vadd.f32 %v420, %v2068
      %2070 = vmatmul.bf16.gmra.mxu0 %v1255
      %v2071 = vpop.f32.mrf.mxu0
      %v2072 = vadd.f32 %v420, %v2071
      %v2073 = vpop.f32.mrf.mxu0
      %v2074 = vadd.f32 %v420, %v2073
      %2075 = vmatmul.bf16.gmra.mxu0 %v1257
      %v2076 = vpop.f32.mrf.mxu0
      %v2077 = vadd.f32 %v420, %v2076
      %v2078 = vpop.f32.mrf.mxu0
      %v2079 = vadd.f32 %v420, %v2078
      %2080 = vmatmul.bf16.gmra.mxu0 %v1259
      %v2081 = vpop.f32.mrf.mxu0
      %v2082 = vadd.f32 %v420, %v2081
      %v2083 = vpop.f32.mrf.mxu0
      %v2084 = vadd.f32 %v420, %v2083
      %2085 = vmatmul.bf16.gmra.mxu0 %v1261
      %v2086 = vpop.f32.mrf.mxu0
      %v2087 = vadd.f32 %v420, %v2086
      %v2088 = vpop.f32.mrf.mxu0
      %v2089 = vadd.f32 %v420, %v2088
      %2090 = vmatmul.bf16.gmra.mxu0 %v1263
      %v2091 = vpop.f32.mrf.mxu0
      %v2092 = vadd.f32 %v420, %v2091
      %v2093 = vpop.f32.mrf.mxu0
      %v2094 = vadd.f32 %v420, %v2093
      %2095 = vmatmul.bf16.gmra.mxu0 %v1265
      %v2096 = vpop.f32.mrf.mxu0
      %v2097 = vadd.f32 %v420, %v2096
      %v2098 = vpop.f32.mrf.mxu0
      %v2099 = vadd.f32 %v420, %v2098
      %2100 = vmatmul.bf16.gmra.mxu0 %v1267
      %v2101 = vpop.f32.mrf.mxu0
      %v2102 = vadd.f32 %v420, %v2101
      %v2103 = vpop.f32.mrf.mxu0
      %v2104 = vadd.f32 %v420, %v2103
      %2105 = vmatmul.bf16.gmra.mxu0 %v1269
      %v2106 = vpop.f32.mrf.mxu0
      %v2107 = vadd.f32 %v420, %v2106
      %v2108 = vpop.f32.mrf.mxu0
      %v2109 = vadd.f32 %v420, %v2108
      %2110 = vmatmul.bf16.gmra.mxu0 %v1271
      %v2111 = vpop.f32.mrf.mxu0
      %v2112 = vadd.f32 %v420, %v2111
      %v2113 = vpop.f32.mrf.mxu0
      %v2114 = vadd.f32 %v420, %v2113
      %2115 = vmatmul.bf16.gmra.mxu0 %v1273
      %v2116 = vpop.f32.mrf.mxu0
      %v2117 = vadd.f32 %v420, %v2116
      %v2118 = vpop.f32.mrf.mxu0
      %v2119 = vadd.f32 %v420, %v2118
      %2120 = vmatmul.bf16.gmra.mxu0 %v1275
      %v2121 = vpop.f32.mrf.mxu0
      %v2122 = vadd.f32 %v420, %v2121
      %v2123 = vpop.f32.mrf.mxu0
      %v2124 = vadd.f32 %v420, %v2123
      %2125 = vmatmul.bf16.gmra.mxu0 %v1277
      %v2126 = vpop.f32.mrf.mxu0
      %v2127 = vadd.f32 %v420, %v2126
      %v2128 = vpop.f32.mrf.mxu0
      %v2129 = vadd.f32 %v420, %v2128
      %2130 = vmatmul.bf16.gmra.mxu0 %v1279
      %v2131 = vpop.f32.mrf.mxu0
      %v2132 = vadd.f32 %v420, %v2131
      %v2133 = vpop.f32.mrf.mxu0
      %v2134 = vadd.f32 %v420, %v2133
      %2135 = vmatmul.bf16.gmra.mxu0 %v1281
      %v2136 = vpop.f32.mrf.mxu0
      %v2137 = vadd.f32 %v420, %v2136
      %v2138 = vpop.f32.mrf.mxu0
      %v2139 = vadd.f32 %v420, %v2138
      %2140 = vmatmul.bf16.gmra.mxu0 %v1283
      %v2141 = vpop.f32.mrf.mxu0
      %v2142 = vadd.f32 %v420, %v2141
      %v2143 = vpop.f32.mrf.mxu0
      %v2144 = vadd.f32 %v420, %v2143
      %2145 = vdwg.mxu0
      %2146 = vmatpush.bf16.msra.mxu0 %v1580
      %2147 = vmatpush.bf16.msra.mxu0 %v1579
      %2148 = vmatpush.bf16.msra.mxu0 %v1578
      %2149 = vmatpush.bf16.msra.mxu0 %v1577
      %2150 = vmatpush.bf16.msra.mxu0 %v1576
      %2151 = vmatpush.bf16.msra.mxu0 %v1575
      %2152 = vmatpush.bf16.msra.mxu0 %v1574
      %2153 = vmatpush.bf16.msra.mxu0 %v1573
      %2154 = vmatmul.bf16.gmra.mxu0 %v1070
      %v2155 = vpop.f32.mrf.mxu0
      %v2156 = vadd.f32 %v1607, %v2155
      %v2157 = vpop.f32.mrf.mxu0
      %v2158 = vadd.f32 %v1609, %v2157
      %2159 = vmatmul.bf16.gmra.mxu0 %v1072
      %v2160 = vpop.f32.mrf.mxu0
      %v2161 = vadd.f32 %v1612, %v2160
      %v2162 = vpop.f32.mrf.mxu0
      %v2163 = vadd.f32 %v1614, %v2162
      %2164 = vmatmul.bf16.gmra.mxu0 %v1074
      %v2165 = vpop.f32.mrf.mxu0
      %v2166 = vadd.f32 %v1617, %v2165
      %v2167 = vpop.f32.mrf.mxu0
      %v2168 = vadd.f32 %v1619, %v2167
      %2169 = vmatmul.bf16.gmra.mxu0 %v1076
      %v2170 = vpop.f32.mrf.mxu0
      %v2171 = vadd.f32 %v1622, %v2170
      %v2172 = vpop.f32.mrf.mxu0
      %v2173 = vadd.f32 %v1624, %v2172
      %2174 = vmatmul.bf16.gmra.mxu0 %v1078
      %v2175 = vpop.f32.mrf.mxu0
      %v2176 = vadd.f32 %v1627, %v2175
      %v2177 = vpop.f32.mrf.mxu0
      %v2178 = vadd.f32 %v1629, %v2177
      %2179 = vmatmul.bf16.gmra.mxu0 %v1080
      %v2180 = vpop.f32.mrf.mxu0
      %v2181 = vadd.f32 %v1632, %v2180
      %v2182 = vpop.f32.mrf.mxu0
      %v2183 = vadd.f32 %v1634, %v2182
      %2184 = vmatmul.bf16.gmra.mxu0 %v1082
      %v2185 = vpop.f32.mrf.mxu0
      %v2186 = vadd.f32 %v1637, %v2185
      %v2187 = vpop.f32.mrf.mxu0
      %v2188 = vadd.f32 %v1639, %v2187
      %2189 = vmatmul.bf16.gmra.mxu0 %v1084
      %v2190 = vpop.f32.mrf.mxu0
      %v2191 = vadd.f32 %v1642, %v2190
      %v2192 = vpop.f32.mrf.mxu0
      %v2193 = vadd.f32 %v1644, %v2192
      %2194 = vmatmul.bf16.gmra.mxu0 %v1086
      %v2195 = vpop.f32.mrf.mxu0
      %v2196 = vadd.f32 %v1647, %v2195
      %v2197 = vpop.f32.mrf.mxu0
      %v2198 = vadd.f32 %v1649, %v2197
      %2199 = vmatmul.bf16.gmra.mxu0 %v1088
      %v2200 = vpop.f32.mrf.mxu0
      %v2201 = vadd.f32 %v1652, %v2200
      %v2202 = vpop.f32.mrf.mxu0
      %v2203 = vadd.f32 %v1654, %v2202
      %2204 = vmatmul.bf16.gmra.mxu0 %v1090
      %v2205 = vpop.f32.mrf.mxu0
      %v2206 = vadd.f32 %v1657, %v2205
      %v2207 = vpop.f32.mrf.mxu0
      %v2208 = vadd.f32 %v1659, %v2207
      %2209 = vmatmul.bf16.gmra.mxu0 %v1092
      %v2210 = vpop.f32.mrf.mxu0
      %v2211 = vadd.f32 %v1662, %v2210
      %v2212 = vpop.f32.mrf.mxu0
      %v2213 = vadd.f32 %v1664, %v2212
      %2214 = vmatmul.bf16.gmra.mxu0 %v1094
      %v2215 = vpop.f32.mrf.mxu0
      %v2216 = vadd.f32 %v1667, %v2215
      %v2217 = vpop.f32.mrf.mxu0
      %v2218 = vadd.f32 %v1669, %v2217
      %2219 = vmatmul.bf16.gmra.mxu0 %v1096
      %v2220 = vpop.f32.mrf.mxu0
      %v2221 = vadd.f32 %v1672, %v2220
      %v2222 = vpop.f32.mrf.mxu0
      %v2223 = vadd.f32 %v1674, %v2222
      %2224 = vmatmul.bf16.gmra.mxu0 %v1098
      %v2225 = vpop.f32.mrf.mxu0
      %v2226 = vadd.f32 %v1677, %v2225
      %v2227 = vpop.f32.mrf.mxu0
      %v2228 = vadd.f32 %v1679, %v2227
      %2229 = vmatmul.bf16.gmra.mxu0 %v1100
      %v2230 = vpop.f32.mrf.mxu0
      %v2231 = vadd.f32 %v1682, %v2230
      %v2232 = vpop.f32.mrf.mxu0
      %v2233 = vadd.f32 %v1684, %v2232
      %2234 = vmatmul.bf16.gmra.mxu0 %v1102
      %v2235 = vpop.f32.mrf.mxu0
      %v2236 = vadd.f32 %v1687, %v2235
      %v2237 = vpop.f32.mrf.mxu0
      %v2238 = vadd.f32 %v1689, %v2237
      %2239 = vmatmul.bf16.gmra.mxu0 %v1104
      %v2240 = vpop.f32.mrf.mxu0
      %v2241 = vadd.f32 %v1692, %v2240
      %v2242 = vpop.f32.mrf.mxu0
      %v2243 = vadd.f32 %v1694, %v2242
      %2244 = vmatmul.bf16.gmra.mxu0 %v1106
      %v2245 = vpop.f32.mrf.mxu0
      %v2246 = vadd.f32 %v1697, %v2245
      %v2247 = vpop.f32.mrf.mxu0
      %v2248 = vadd.f32 %v1699, %v2247
      %2249 = vmatmul.bf16.gmra.mxu0 %v1108
      %v2250 = vpop.f32.mrf.mxu0
      %v2251 = vadd.f32 %v1702, %v2250
      %v2252 = vpop.f32.mrf.mxu0
      %v2253 = vadd.f32 %v1704, %v2252
      %2254 = vmatmul.bf16.gmra.mxu0 %v1110
      %v2255 = vpop.f32.mrf.mxu0
      %v2256 = vadd.f32 %v1707, %v2255
      %v2257 = vpop.f32.mrf.mxu0
      %v2258 = vadd.f32 %v1709, %v2257
      %2259 = vmatmul.bf16.gmra.mxu0 %v1112
      %v2260 = vpop.f32.mrf.mxu0
      %v2261 = vadd.f32 %v1712, %v2260
      %v2262 = vpop.f32.mrf.mxu0
      %v2263 = vadd.f32 %v1714, %v2262
      %2264 = vmatmul.bf16.gmra.mxu0 %v1114
      %v2265 = vpop.f32.mrf.mxu0
      %v2266 = vadd.f32 %v1717, %v2265
      %v2267 = vpop.f32.mrf.mxu0
      %v2268 = vadd.f32 %v1719, %v2267
      %2269 = vmatmul.bf16.gmra.mxu0 %v1116
      %v2270 = vpop.f32.mrf.mxu0
      %v2271 = vadd.f32 %v1722, %v2270
      %v2272 = vpop.f32.mrf.mxu0
      %v2273 = vadd.f32 %v1724, %v2272
      %2274 = vmatmul.bf16.gmra.mxu0 %v1118
      %v2275 = vpop.f32.mrf.mxu0
      %v2276 = vadd.f32 %v1727, %v2275
      %v2277 = vpop.f32.mrf.mxu0
      %v2278 = vadd.f32 %v1729, %v2277
      %2279 = vmatmul.bf16.gmra.mxu0 %v1120
      %v2280 = vpop.f32.mrf.mxu0
      %v2281 = vadd.f32 %v1732, %v2280
      %v2282 = vpop.f32.mrf.mxu0
      %v2283 = vadd.f32 %v1734, %v2282
      %2284 = vmatmul.bf16.gmra.mxu0 %v1122
      %v2285 = vpop.f32.mrf.mxu0
      %v2286 = vadd.f32 %v1737, %v2285
      %v2287 = vpop.f32.mrf.mxu0
      %v2288 = vadd.f32 %v1739, %v2287
      %2289 = vmatmul.bf16.gmra.mxu0 %v1124
      %v2290 = vpop.f32.mrf.mxu0
      %v2291 = vadd.f32 %v1742, %v2290
      %v2292 = vpop.f32.mrf.mxu0
      %v2293 = vadd.f32 %v1744, %v2292
      %2294 = vmatmul.bf16.gmra.mxu0 %v1126
      %v2295 = vpop.f32.mrf.mxu0
      %v2296 = vadd.f32 %v1747, %v2295
      %v2297 = vpop.f32.mrf.mxu0
      %v2298 = vadd.f32 %v1749, %v2297
      %2299 = vmatmul.bf16.gmra.mxu0 %v1128
      %v2300 = vpop.f32.mrf.mxu0
      %v2301 = vadd.f32 %v1752, %v2300
      %v2302 = vpop.f32.mrf.mxu0
      %v2303 = vadd.f32 %v1754, %v2302
      %2304 = vmatmul.bf16.gmra.mxu0 %v1130
      %v2305 = vpop.f32.mrf.mxu0
      %v2306 = vadd.f32 %v1757, %v2305
      %v2307 = vpop.f32.mrf.mxu0
      %v2308 = vadd.f32 %v1759, %v2307
      %2309 = vmatmul.bf16.gmra.mxu0 %v1132
      %v2310 = vpop.f32.mrf.mxu0
      %v2311 = vadd.f32 %v1762, %v2310
      %v2312 = vpop.f32.mrf.mxu0
      %v2313 = vadd.f32 %v1764, %v2312
      %2314 = vmatmul.bf16.gmra.mxu0 %v1134
      %v2315 = vpop.f32.mrf.mxu0
      %v2316 = vadd.f32 %v1767, %v2315
      %v2317 = vpop.f32.mrf.mxu0
      %v2318 = vadd.f32 %v1769, %v2317
      %2319 = vmatmul.bf16.gmra.mxu0 %v1136
      %v2320 = vpop.f32.mrf.mxu0
      %v2321 = vadd.f32 %v1772, %v2320
      %v2322 = vpop.f32.mrf.mxu0
      %v2323 = vadd.f32 %v1774, %v2322
      %2324 = vmatmul.bf16.gmra.mxu0 %v1138
      %v2325 = vpop.f32.mrf.mxu0
      %v2326 = vadd.f32 %v1777, %v2325
      %v2327 = vpop.f32.mrf.mxu0
      %v2328 = vadd.f32 %v1779, %v2327
      %2329 = vmatmul.bf16.gmra.mxu0 %v1140
      %v2330 = vpop.f32.mrf.mxu0
      %v2331 = vadd.f32 %v1782, %v2330
      %v2332 = vpop.f32.mrf.mxu0
      %v2333 = vadd.f32 %v1784, %v2332
      %2334 = vmatmul.bf16.gmra.mxu0 %v1142
      %v2335 = vpop.f32.mrf.mxu0
      %v2336 = vadd.f32 %v1787, %v2335
      %v2337 = vpop.f32.mrf.mxu0
      %v2338 = vadd.f32 %v1789, %v2337
      %2339 = vmatmul.bf16.gmra.mxu0 %v1144
      %v2340 = vpop.f32.mrf.mxu0
      %v2341 = vadd.f32 %v1792, %v2340
      %v2342 = vpop.f32.mrf.mxu0
      %v2343 = vadd.f32 %v1794, %v2342
      %2344 = vmatmul.bf16.gmra.mxu0 %v1146
      %v2345 = vpop.f32.mrf.mxu0
      %v2346 = vadd.f32 %v1797, %v2345
      %v2347 = vpop.f32.mrf.mxu0
      %v2348 = vadd.f32 %v1799, %v2347
      %2349 = vmatmul.bf16.gmra.mxu0 %v1148
      %v2350 = vpop.f32.mrf.mxu0
      %v2351 = vadd.f32 %v1802, %v2350
      %v2352 = vpop.f32.mrf.mxu0
      %v2353 = vadd.f32 %v1804, %v2352
      %2354 = vmatmul.bf16.gmra.mxu0 %v1150
      %v2355 = vpop.f32.mrf.mxu0
      %v2356 = vadd.f32 %v1807, %v2355
      %v2357 = vpop.f32.mrf.mxu0
      %v2358 = vadd.f32 %v1809, %v2357
      %2359 = vmatmul.bf16.gmra.mxu0 %v1152
      %v2360 = vpop.f32.mrf.mxu0
      %v2361 = vadd.f32 %v1812, %v2360
      %v2362 = vpop.f32.mrf.mxu0
      %v2363 = vadd.f32 %v1814, %v2362
      %2364 = vmatmul.bf16.gmra.mxu0 %v1154
      %v2365 = vpop.f32.mrf.mxu0
      %v2366 = vadd.f32 %v1817, %v2365
      %v2367 = vpop.f32.mrf.mxu0
      %v2368 = vadd.f32 %v1819, %v2367
      %2369 = vmatmul.bf16.gmra.mxu0 %v1156
      %v2370 = vpop.f32.mrf.mxu0
      %v2371 = vadd.f32 %v1822, %v2370
      %v2372 = vpop.f32.mrf.mxu0
      %v2373 = vadd.f32 %v1824, %v2372
      %2374 = vmatmul.bf16.gmra.mxu0 %v1158
      %v2375 = vpop.f32.mrf.mxu0
      %v2376 = vadd.f32 %v1827, %v2375
      %v2377 = vpop.f32.mrf.mxu0
      %v2378 = vadd.f32 %v1829, %v2377
      %2379 = vmatmul.bf16.gmra.mxu0 %v1160
      %v2380 = vpop.f32.mrf.mxu0
      %v2381 = vadd.f32 %v1832, %v2380
      %v2382 = vpop.f32.mrf.mxu0
      %v2383 = vadd.f32 %v1834, %v2382
      %2384 = vmatmul.bf16.gmra.mxu0 %v1162
      %v2385 = vpop.f32.mrf.mxu0
      %v2386 = vadd.f32 %v1837, %v2385
      %v2387 = vpop.f32.mrf.mxu0
      %v2388 = vadd.f32 %v1839, %v2387
      %2389 = vmatmul.bf16.gmra.mxu0 %v1164
      %v2390 = vpop.f32.mrf.mxu0
      %v2391 = vadd.f32 %v1842, %v2390
      %v2392 = vpop.f32.mrf.mxu0
      %v2393 = vadd.f32 %v1844, %v2392
      %2394 = vmatmul.bf16.gmra.mxu0 %v1166
      %v2395 = vpop.f32.mrf.mxu0
      %v2396 = vadd.f32 %v1847, %v2395
      %v2397 = vpop.f32.mrf.mxu0
      %v2398 = vadd.f32 %v1849, %v2397
      %2399 = vmatmul.bf16.gmra.mxu0 %v1168
      %v2400 = vpop.f32.mrf.mxu0
      %v2401 = vadd.f32 %v1852, %v2400
      %v2402 = vpop.f32.mrf.mxu0
      %v2403 = vadd.f32 %v1854, %v2402
      %2404 = vmatmul.bf16.gmra.mxu0 %v1170
      %v2405 = vpop.f32.mrf.mxu0
      %v2406 = vadd.f32 %v1857, %v2405
      %v2407 = vpop.f32.mrf.mxu0
      %v2408 = vadd.f32 %v1859, %v2407
      %2409 = vmatmul.bf16.gmra.mxu0 %v1172
      %v2410 = vpop.f32.mrf.mxu0
      %v2411 = vadd.f32 %v1862, %v2410
      %v2412 = vpop.f32.mrf.mxu0
      %v2413 = vadd.f32 %v1864, %v2412
      %2414 = vmatmul.bf16.gmra.mxu0 %v1174
      %v2415 = vpop.f32.mrf.mxu0
      %v2416 = vadd.f32 %v1867, %v2415
      %v2417 = vpop.f32.mrf.mxu0
      %v2418 = vadd.f32 %v1869, %v2417
      %2419 = vmatmul.bf16.gmra.mxu0 %v1176
      %v2420 = vpop.f32.mrf.mxu0
      %v2421 = vadd.f32 %v1872, %v2420
      %v2422 = vpop.f32.mrf.mxu0
      %v2423 = vadd.f32 %v1874, %v2422
      %2424 = vmatmul.bf16.gmra.mxu0 %v1178
      %v2425 = vpop.f32.mrf.mxu0
      %v2426 = vadd.f32 %v1877, %v2425
      %v2427 = vpop.f32.mrf.mxu0
      %v2428 = vadd.f32 %v1879, %v2427
      %2429 = vmatmul.bf16.gmra.mxu0 %v1180
      %v2430 = vpop.f32.mrf.mxu0
      %v2431 = vadd.f32 %v1882, %v2430
      %v2432 = vpop.f32.mrf.mxu0
      %v2433 = vadd.f32 %v1884, %v2432
      %2434 = vmatmul.bf16.gmra.mxu0 %v1182
      %v2435 = vpop.f32.mrf.mxu0
      %v2436 = vadd.f32 %v1887, %v2435
      %v2437 = vpop.f32.mrf.mxu0
      %v2438 = vadd.f32 %v1889, %v2437
      %2439 = vmatmul.bf16.gmra.mxu0 %v1184
      %v2440 = vpop.f32.mrf.mxu0
      %v2441 = vadd.f32 %v1892, %v2440
      %v2442 = vpop.f32.mrf.mxu0
      %v2443 = vadd.f32 %v1894, %v2442
      %2444 = vmatmul.bf16.gmra.mxu0 %v1186
      %v2445 = vpop.f32.mrf.mxu0
      %v2446 = vadd.f32 %v1897, %v2445
      %v2447 = vpop.f32.mrf.mxu0
      %v2448 = vadd.f32 %v1899, %v2447
      %2449 = vmatmul.bf16.gmra.mxu0 %v1188
      %v2450 = vpop.f32.mrf.mxu0
      %v2451 = vadd.f32 %v1902, %v2450
      %v2452 = vpop.f32.mrf.mxu0
      %v2453 = vadd.f32 %v1904, %v2452
      %2454 = vmatmul.bf16.gmra.mxu0 %v1190
      %v2455 = vpop.f32.mrf.mxu0
      %v2456 = vadd.f32 %v1907, %v2455
      %v2457 = vpop.f32.mrf.mxu0
      %v2458 = vadd.f32 %v1909, %v2457
      %2459 = vmatmul.bf16.gmra.mxu0 %v1192
      %v2460 = vpop.f32.mrf.mxu0
      %v2461 = vadd.f32 %v1912, %v2460
      %v2462 = vpop.f32.mrf.mxu0
      %v2463 = vadd.f32 %v1914, %v2462
      %2464 = vmatmul.bf16.gmra.mxu0 %v1194
      %v2465 = vpop.f32.mrf.mxu0
      %v2466 = vadd.f32 %v1917, %v2465
      %v2467 = vpop.f32.mrf.mxu0
      %v2468 = vadd.f32 %v1919, %v2467
      %2469 = vmatmul.bf16.gmra.mxu0 %v1196
      %v2470 = vpop.f32.mrf.mxu0
      %v2471 = vadd.f32 %v1922, %v2470
      %v2472 = vpop.f32.mrf.mxu0
      %v2473 = vadd.f32 %v1924, %v2472
      %2474 = vmatmul.bf16.gmra.mxu0 %v1198
      %v2475 = vpop.f32.mrf.mxu0
      %v2476 = vadd.f32 %v1927, %v2475
      %v2477 = vpop.f32.mrf.mxu0
      %v2478 = vadd.f32 %v1929, %v2477
      %2479 = vmatmul.bf16.gmra.mxu0 %v1200
      %v2480 = vpop.f32.mrf.mxu0
      %v2481 = vadd.f32 %v1932, %v2480
      %v2482 = vpop.f32.mrf.mxu0
      %v2483 = vadd.f32 %v1934, %v2482
      %2484 = vmatmul.bf16.gmra.mxu0 %v1202
      %v2485 = vpop.f32.mrf.mxu0
      %v2486 = vadd.f32 %v1937, %v2485
      %v2487 = vpop.f32.mrf.mxu0
      %v2488 = vadd.f32 %v1939, %v2487
      %2489 = vmatmul.bf16.gmra.mxu0 %v1204
      %v2490 = vpop.f32.mrf.mxu0
      %v2491 = vadd.f32 %v1942, %v2490
      %v2492 = vpop.f32.mrf.mxu0
      %v2493 = vadd.f32 %v1944, %v2492
      %2494 = vmatmul.bf16.gmra.mxu0 %v1206
      %v2495 = vpop.f32.mrf.mxu0
      %v2496 = vadd.f32 %v1947, %v2495
      %v2497 = vpop.f32.mrf.mxu0
      %v2498 = vadd.f32 %v1949, %v2497
      %2499 = vmatmul.bf16.gmra.mxu0 %v1208
      %v2500 = vpop.f32.mrf.mxu0
      %v2501 = vadd.f32 %v1952, %v2500
      %v2502 = vpop.f32.mrf.mxu0
      %v2503 = vadd.f32 %v1954, %v2502
      %2504 = vmatmul.bf16.gmra.mxu0 %v1210
      %v2505 = vpop.f32.mrf.mxu0
      %v2506 = vadd.f32 %v1957, %v2505
      %v2507 = vpop.f32.mrf.mxu0
      %v2508 = vadd.f32 %v1959, %v2507
      %2509 = vmatmul.bf16.gmra.mxu0 %v1212
      %v2510 = vpop.f32.mrf.mxu0
      %v2511 = vadd.f32 %v1962, %v2510
      %v2512 = vpop.f32.mrf.mxu0
      %v2513 = vadd.f32 %v1964, %v2512
      %2514 = vmatmul.bf16.gmra.mxu0 %v1214
      %v2515 = vpop.f32.mrf.mxu0
      %v2516 = vadd.f32 %v1967, %v2515
      %v2517 = vpop.f32.mrf.mxu0
      %v2518 = vadd.f32 %v1969, %v2517
      %2519 = vmatmul.bf16.gmra.mxu0 %v1216
      %v2520 = vpop.f32.mrf.mxu0
      %v2521 = vadd.f32 %v1972, %v2520
      %v2522 = vpop.f32.mrf.mxu0
      %v2523 = vadd.f32 %v1974, %v2522
      %2524 = vmatmul.bf16.gmra.mxu0 %v1218
      %v2525 = vpop.f32.mrf.mxu0
      %v2526 = vadd.f32 %v1977, %v2525
      %v2527 = vpop.f32.mrf.mxu0
      %v2528 = vadd.f32 %v1979, %v2527
      %2529 = vmatmul.bf16.gmra.mxu0 %v1220
      %v2530 = vpop.f32.mrf.mxu0
      %v2531 = vadd.f32 %v1982, %v2530
      %v2532 = vpop.f32.mrf.mxu0
      %v2533 = vadd.f32 %v1984, %v2532
      %2534 = vmatmul.bf16.gmra.mxu0 %v1222
      %v2535 = vpop.f32.mrf.mxu0
      %v2536 = vadd.f32 %v1987, %v2535
      %v2537 = vpop.f32.mrf.mxu0
      %v2538 = vadd.f32 %v1989, %v2537
      %2539 = vmatmul.bf16.gmra.mxu0 %v1224
      %v2540 = vpop.f32.mrf.mxu0
      %v2541 = vadd.f32 %v1992, %v2540
      %v2542 = vpop.f32.mrf.mxu0
      %v2543 = vadd.f32 %v1994, %v2542
      %2544 = vmatmul.bf16.gmra.mxu0 %v1226
      %v2545 = vpop.f32.mrf.mxu0
      %v2546 = vadd.f32 %v1997, %v2545
      %v2547 = vpop.f32.mrf.mxu0
      %v2548 = vadd.f32 %v1999, %v2547
      %2549 = vmatmul.bf16.gmra.mxu0 %v1228
      %v2550 = vpop.f32.mrf.mxu0
      %v2551 = vadd.f32 %v2002, %v2550
      %v2552 = vpop.f32.mrf.mxu0
      %v2553 = vadd.f32 %v2004, %v2552
      %2554 = vmatmul.bf16.gmra.mxu0 %v1230
      %v2555 = vpop.f32.mrf.mxu0
      %v2556 = vadd.f32 %v2007, %v2555
      %v2557 = vpop.f32.mrf.mxu0
      %v2558 = vadd.f32 %v2009, %v2557
      %2559 = vmatmul.bf16.gmra.mxu0 %v1232
      %v2560 = vpop.f32.mrf.mxu0
      %v2561 = vadd.f32 %v2012, %v2560
      %v2562 = vpop.f32.mrf.mxu0
      %v2563 = vadd.f32 %v2014, %v2562
      %2564 = vmatmul.bf16.gmra.mxu0 %v1234
      %v2565 = vpop.f32.mrf.mxu0
      %v2566 = vadd.f32 %v2017, %v2565
      %v2567 = vpop.f32.mrf.mxu0
      %v2568 = vadd.f32 %v2019, %v2567
      %2569 = vmatmul.bf16.gmra.mxu0 %v1236
      %v2570 = vpop.f32.mrf.mxu0
      %v2571 = vadd.f32 %v2022, %v2570
      %v2572 = vpop.f32.mrf.mxu0
      %v2573 = vadd.f32 %v2024, %v2572
      %2574 = vmatmul.bf16.gmra.mxu0 %v1238
      %v2575 = vpop.f32.mrf.mxu0
      %v2576 = vadd.f32 %v2027, %v2575
      %v2577 = vpop.f32.mrf.mxu0
      %v2578 = vadd.f32 %v2029, %v2577
      %2579 = vmatmul.bf16.gmra.mxu0 %v1240
      %v2580 = vpop.f32.mrf.mxu0
      %v2581 = vadd.f32 %v2032, %v2580
      %v2582 = vpop.f32.mrf.mxu0
      %v2583 = vadd.f32 %v2034, %v2582
      %2584 = vmatmul.bf16.gmra.mxu0 %v1242
      %v2585 = vpop.f32.mrf.mxu0
      %v2586 = vadd.f32 %v2037, %v2585
      %v2587 = vpop.f32.mrf.mxu0
      %v2588 = vadd.f32 %v2039, %v2587
      %2589 = vmatmul.bf16.gmra.mxu0 %v1244
      %v2590 = vpop.f32.mrf.mxu0
      %v2591 = vadd.f32 %v2042, %v2590
      %v2592 = vpop.f32.mrf.mxu0
      %v2593 = vadd.f32 %v2044, %v2592
      %2594 = vmatmul.bf16.gmra.mxu0 %v1246
      %v2595 = vpop.f32.mrf.mxu0
      %v2596 = vadd.f32 %v2047, %v2595
      %v2597 = vpop.f32.mrf.mxu0
      %v2598 = vadd.f32 %v2049, %v2597
      %2599 = vmatmul.bf16.gmra.mxu0 %v1248
      %v2600 = vpop.f32.mrf.mxu0
      %v2601 = vadd.f32 %v2052, %v2600
      %v2602 = vpop.f32.mrf.mxu0
      %v2603 = vadd.f32 %v2054, %v2602
      %2604 = vmatmul.bf16.gmra.mxu0 %v1250
      %v2605 = vpop.f32.mrf.mxu0
      %v2606 = vadd.f32 %v2057, %v2605
      %v2607 = vpop.f32.mrf.mxu0
      %v2608 = vadd.f32 %v2059, %v2607
      %2609 = vmatmul.bf16.gmra.mxu0 %v1252
      %v2610 = vpop.f32.mrf.mxu0
      %v2611 = vadd.f32 %v2062, %v2610
      %v2612 = vpop.f32.mrf.mxu0
      %v2613 = vadd.f32 %v2064, %v2612
      %2614 = vmatmul.bf16.gmra.mxu0 %v1254
      %v2615 = vpop.f32.mrf.mxu0
      %v2616 = vadd.f32 %v2067, %v2615
      %v2617 = vpop.f32.mrf.mxu0
      %v2618 = vadd.f32 %v2069, %v2617
      %2619 = vmatmul.bf16.gmra.mxu0 %v1256
      %v2620 = vpop.f32.mrf.mxu0
      %v2621 = vadd.f32 %v2072, %v2620
      %v2622 = vpop.f32.mrf.mxu0
      %v2623 = vadd.f32 %v2074, %v2622
      %2624 = vmatmul.bf16.gmra.mxu0 %v1258
      %v2625 = vpop.f32.mrf.mxu0
      %v2626 = vadd.f32 %v2077, %v2625
      %v2627 = vpop.f32.mrf.mxu0
      %v2628 = vadd.f32 %v2079, %v2627
      %2629 = vmatmul.bf16.gmra.mxu0 %v1260
      %v2630 = vpop.f32.mrf.mxu0
      %v2631 = vadd.f32 %v2082, %v2630
      %v2632 = vpop.f32.mrf.mxu0
      %v2633 = vadd.f32 %v2084, %v2632
      %2634 = vmatmul.bf16.gmra.mxu0 %v1262
      %v2635 = vpop.f32.mrf.mxu0
      %v2636 = vadd.f32 %v2087, %v2635
      %v2637 = vpop.f32.mrf.mxu0
      %v2638 = vadd.f32 %v2089, %v2637
      %2639 = vmatmul.bf16.gmra.mxu0 %v1264
      %v2640 = vpop.f32.mrf.mxu0
      %v2641 = vadd.f32 %v2092, %v2640
      %v2642 = vpop.f32.mrf.mxu0
      %v2643 = vadd.f32 %v2094, %v2642
      %2644 = vmatmul.bf16.gmra.mxu0 %v1266
      %v2645 = vpop.f32.mrf.mxu0
      %v2646 = vadd.f32 %v2097, %v2645
      %v2647 = vpop.f32.mrf.mxu0
      %v2648 = vadd.f32 %v2099, %v2647
      %2649 = vmatmul.bf16.gmra.mxu0 %v1268
      %v2650 = vpop.f32.mrf.mxu0
      %v2651 = vadd.f32 %v2102, %v2650
      %v2652 = vpop.f32.mrf.mxu0
      %v2653 = vadd.f32 %v2104, %v2652
      %2654 = vmatmul.bf16.gmra.mxu0 %v1270
      %v2655 = vpop.f32.mrf.mxu0
      %v2656 = vadd.f32 %v2107, %v2655
      %v2657 = vpop.f32.mrf.mxu0
      %v2658 = vadd.f32 %v2109, %v2657
      %2659 = vmatmul.bf16.gmra.mxu0 %v1272
      %v2660 = vpop.f32.mrf.mxu0
      %v2661 = vadd.f32 %v2112, %v2660
      %v2662 = vpop.f32.mrf.mxu0
      %v2663 = vadd.f32 %v2114, %v2662
      %2664 = vmatmul.bf16.gmra.mxu0 %v1274
      %v2665 = vpop.f32.mrf.mxu0
      %v2666 = vadd.f32 %v2117, %v2665
      %v2667 = vpop.f32.mrf.mxu0
      %v2668 = vadd.f32 %v2119, %v2667
      %2669 = vmatmul.bf16.gmra.mxu0 %v1276
      %v2670 = vpop.f32.mrf.mxu0
      %v2671 = vadd.f32 %v2122, %v2670
      %v2672 = vpop.f32.mrf.mxu0
      %v2673 = vadd.f32 %v2124, %v2672
      %2674 = vmatmul.bf16.gmra.mxu0 %v1278
      %v2675 = vpop.f32.mrf.mxu0
      %v2676 = vadd.f32 %v2127, %v2675
      %v2677 = vpop.f32.mrf.mxu0
      %v2678 = vadd.f32 %v2129, %v2677
      %2679 = vmatmul.bf16.gmra.mxu0 %v1280
      %v2680 = vpop.f32.mrf.mxu0
      %v2681 = vadd.f32 %v2132, %v2680
      %v2682 = vpop.f32.mrf.mxu0
      %v2683 = vadd.f32 %v2134, %v2682
      %2684 = vmatmul.bf16.gmra.mxu0 %v1282
      %v2685 = vpop.f32.mrf.mxu0
      %v2686 = vadd.f32 %v2137, %v2685
      %v2687 = vpop.f32.mrf.mxu0
      %v2688 = vadd.f32 %v2139, %v2687
      %2689 = vmatmul.bf16.gmra.mxu0 %v1284
      %v2690 = vpop.f32.mrf.mxu0
      %v2691 = vadd.f32 %v2142, %v2690
      %v2692 = vpop.f32.mrf.mxu0
      %v2693 = vadd.f32 %v2144, %v2692
      %2694 = vdwg.mxu0
      %v2695 = vadd.f32 %v2156, %v2158
      %v2696 = vadd.f32 %v2695, %v2161
      %v2697 = vadd.f32 %v2696, %v2163
      %v2698 = vadd.f32 %v2697, %v2166
      %v2699 = vadd.f32 %v2698, %v2168
      %v2700 = vadd.f32 %v2699, %v2171
      %v2701 = vadd.f32 %v2700, %v2173
      %v2702 = vadd.f32 %v2701, %v2176
      %v2703 = vadd.f32 %v2702, %v2178
      %v2704 = vadd.f32 %v2703, %v2181
      %v2705 = vadd.f32 %v2704, %v2183
      %v2706 = vadd.f32 %v2705, %v2186
      %v2707 = vadd.f32 %v2706, %v2188
      %v2708 = vadd.f32 %v2707, %v2191
      %v2709 = vadd.f32 %v2708, %v2193
      %v2710 = vadd.f32 %v2709, %v2196
      %v2711 = vadd.f32 %v2710, %v2198
      %v2712 = vadd.f32 %v2711, %v2201
      %v2713 = vadd.f32 %v2712, %v2203
      %v2714 = vadd.f32 %v2713, %v2206
      %v2715 = vadd.f32 %v2714, %v2208
      %v2716 = vadd.f32 %v2715, %v2211
      %v2717 = vadd.f32 %v2716, %v2213
      %v2718 = vadd.f32 %v2717, %v2216
      %v2719 = vadd.f32 %v2718, %v2218
      %v2720 = vadd.f32 %v2719, %v2221
      %v2721 = vadd.f32 %v2720, %v2223
      %v2722 = vadd.f32 %v2721, %v2226
      %v2723 = vadd.f32 %v2722, %v2228
      %v2724 = vadd.f32 %v2723, %v2231
      %v2725 = vadd.f32 %v2724, %v2233
      %v2726 = vadd.f32 %v2725, %v2236
      %v2727 = vadd.f32 %v2726, %v2238
      %v2728 = vadd.f32 %v2727, %v2241
      %v2729 = vadd.f32 %v2728, %v2243
      %v2730 = vadd.f32 %v2729, %v2246
      %v2731 = vadd.f32 %v2730, %v2248
      %v2732 = vadd.f32 %v2731, %v2251
      %v2733 = vadd.f32 %v2732, %v2253
      %v2734 = vadd.f32 %v2733, %v2256
      %v2735 = vadd.f32 %v2734, %v2258
      %v2736 = vadd.f32 %v2735, %v2261
      %v2737 = vadd.f32 %v2736, %v2263
      %v2738 = vadd.f32 %v2737, %v2266
      %v2739 = vadd.f32 %v2738, %v2268
      %v2740 = vadd.f32 %v2739, %v2271
      %v2741 = vadd.f32 %v2740, %v2273
      %v2742 = vadd.f32 %v2741, %v2276
      %v2743 = vadd.f32 %v2742, %v2278
      %v2744 = vadd.f32 %v2743, %v2281
      %v2745 = vadd.f32 %v2744, %v2283
      %v2746 = vadd.f32 %v2745, %v2286
      %v2747 = vadd.f32 %v2746, %v2288
      %v2748 = vadd.f32 %v2747, %v2291
      %v2749 = vadd.f32 %v2748, %v2293
      %v2750 = vadd.f32 %v2749, %v2296
      %v2751 = vadd.f32 %v2750, %v2298
      %v2752 = vadd.f32 %v2751, %v2301
      %v2753 = vadd.f32 %v2752, %v2303
      %v2754 = vadd.f32 %v2753, %v2306
      %v2755 = vadd.f32 %v2754, %v2308
      %v2756 = vadd.f32 %v2755, %v2311
      %v2757 = vadd.f32 %v2756, %v2313
      %v2758 = vadd.f32 %v2757, %v2316
      %v2759 = vadd.f32 %v2758, %v2318
      %v2760 = vadd.f32 %v2759, %v2321
      %v2761 = vadd.f32 %v2760, %v2323
      %v2762 = vadd.f32 %v2761, %v2326
      %v2763 = vadd.f32 %v2762, %v2328
      %v2764 = vadd.f32 %v2763, %v2331
      %v2765 = vadd.f32 %v2764, %v2333
      %v2766 = vadd.f32 %v2765, %v2336
      %v2767 = vadd.f32 %v2766, %v2338
      %v2768 = vadd.f32 %v2767, %v2341
      %v2769 = vadd.f32 %v2768, %v2343
      %v2770 = vadd.f32 %v2769, %v2346
      %v2771 = vadd.f32 %v2770, %v2348
      %v2772 = vadd.f32 %v2771, %v2351
      %v2773 = vadd.f32 %v2772, %v2353
      %v2774 = vadd.f32 %v2773, %v2356
      %v2775 = vadd.f32 %v2774, %v2358
      %v2776 = vadd.f32 %v2775, %v2361
      %v2777 = vadd.f32 %v2776, %v2363
      %v2778 = vadd.f32 %v2777, %v2366
      %v2779 = vadd.f32 %v2778, %v2368
      %v2780 = vadd.f32 %v2779, %v2371
      %v2781 = vadd.f32 %v2780, %v2373
      %v2782 = vadd.f32 %v2781, %v2376
      %v2783 = vadd.f32 %v2782, %v2378
      %v2784 = vadd.f32 %v2783, %v2381
      %v2785 = vadd.f32 %v2784, %v2383
      %v2786 = vadd.f32 %v2785, %v2386
      %v2787 = vadd.f32 %v2786, %v2388
      %v2788 = vadd.f32 %v2787, %v2391
      %v2789 = vadd.f32 %v2788, %v2393
      %v2790 = vadd.f32 %v2789, %v2396
      %v2791 = vadd.f32 %v2790, %v2398
      %v2792 = vadd.f32 %v2791, %v2401
      %v2793 = vadd.f32 %v2792, %v2403
      %v2794 = vadd.f32 %v2793, %v2406
      %v2795 = vadd.f32 %v2794, %v2408
      %v2796 = vadd.f32 %v2795, %v2411
      %v2797 = vadd.f32 %v2796, %v2413
      %v2798 = vadd.f32 %v2797, %v2416
      %v2799 = vadd.f32 %v2798, %v2418
      %v2800 = vadd.f32 %v2799, %v2421
      %v2801 = vadd.f32 %v2800, %v2423
      %v2802 = vadd.f32 %v2801, %v2426
      %v2803 = vadd.f32 %v2802, %v2428
      %v2804 = vadd.f32 %v2803, %v2431
      %v2805 = vadd.f32 %v2804, %v2433
      %v2806 = vadd.f32 %v2805, %v2436
      %v2807 = vadd.f32 %v2806, %v2438
      %v2808 = vadd.f32 %v2807, %v2441
      %v2809 = vadd.f32 %v2808, %v2443
      %v2810 = vadd.f32 %v2809, %v2446
      %v2811 = vadd.f32 %v2810, %v2448
      %v2812 = vadd.f32 %v2811, %v2451
      %v2813 = vadd.f32 %v2812, %v2453
      %v2814 = vadd.f32 %v2813, %v2456
      %v2815 = vadd.f32 %v2814, %v2458
      %v2816 = vadd.f32 %v2815, %v2461
      %v2817 = vadd.f32 %v2816, %v2463
      %v2818 = vadd.f32 %v2817, %v2466
      %v2819 = vadd.f32 %v2818, %v2468
      %v2820 = vadd.f32 %v2819, %v2471
      %v2821 = vadd.f32 %v2820, %v2473
      %v2822 = vadd.f32 %v2821, %v2476
      %v2823 = vadd.f32 %v2822, %v2478
      %v2824 = vadd.f32 %v2823, %v2481
      %v2825 = vadd.f32 %v2824, %v2483
      %v2826 = vadd.f32 %v2825, %v2486
      %v2827 = vadd.f32 %v2826, %v2488
      %v2828 = vadd.f32 %v2827, %v2491
      %v2829 = vadd.f32 %v2828, %v2493
      %v2830 = vadd.f32 %v2829, %v2496
      %v2831 = vadd.f32 %v2830, %v2498
      %v2832 = vadd.f32 %v2831, %v2501
      %v2833 = vadd.f32 %v2832, %v2503
      %v2834 = vadd.f32 %v2833, %v2506
      %v2835 = vadd.f32 %v2834, %v2508
      %v2836 = vadd.f32 %v2835, %v2511
      %v2837 = vadd.f32 %v2836, %v2513
      %v2838 = vadd.f32 %v2837, %v2516
      %v2839 = vadd.f32 %v2838, %v2518
      %v2840 = vadd.f32 %v2839, %v2521
      %v2841 = vadd.f32 %v2840, %v2523
      %v2842 = vadd.f32 %v2841, %v2526
      %v2843 = vadd.f32 %v2842, %v2528
      %v2844 = vadd.f32 %v2843, %v2531
      %v2845 = vadd.f32 %v2844, %v2533
      %v2846 = vadd.f32 %v2845, %v2536
      %v2847 = vadd.f32 %v2846, %v2538
      %v2848 = vadd.f32 %v2847, %v2541
      %v2849 = vadd.f32 %v2848, %v2543
      %v2850 = vadd.f32 %v2849, %v2546
      %v2851 = vadd.f32 %v2850, %v2548
      %v2852 = vadd.f32 %v2851, %v2551
      %v2853 = vadd.f32 %v2852, %v2553
      %v2854 = vadd.f32 %v2853, %v2556
      %v2855 = vadd.f32 %v2854, %v2558
      %v2856 = vadd.f32 %v2855, %v2561
      %v2857 = vadd.f32 %v2856, %v2563
      %v2858 = vadd.f32 %v2857, %v2566
      %v2859 = vadd.f32 %v2858, %v2568
      %v2860 = vadd.f32 %v2859, %v2571
      %v2861 = vadd.f32 %v2860, %v2573
      %v2862 = vadd.f32 %v2861, %v2576
      %v2863 = vadd.f32 %v2862, %v2578
      %v2864 = vadd.f32 %v2863, %v2581
      %v2865 = vadd.f32 %v2864, %v2583
      %v2866 = vadd.f32 %v2865, %v2586
      %v2867 = vadd.f32 %v2866, %v2588
      %v2868 = vadd.f32 %v2867, %v2591
      %v2869 = vadd.f32 %v2868, %v2593
      %v2870 = vadd.f32 %v2869, %v2596
      %v2871 = vadd.f32 %v2870, %v2598
      %v2872 = vadd.f32 %v2871, %v2601
      %v2873 = vadd.f32 %v2872, %v2603
      %v2874 = vadd.f32 %v2873, %v2606
      %v2875 = vadd.f32 %v2874, %v2608
      %v2876 = vadd.f32 %v2875, %v2611
      %v2877 = vadd.f32 %v2876, %v2613
      %v2878 = vadd.f32 %v2877, %v2616
      %v2879 = vadd.f32 %v2878, %v2618
      %v2880 = vadd.f32 %v2879, %v2621
      %v2881 = vadd.f32 %v2880, %v2623
      %v2882 = vadd.f32 %v2881, %v2626
      %v2883 = vadd.f32 %v2882, %v2628
      %v2884 = vadd.f32 %v2883, %v2631
      %v2885 = vadd.f32 %v2884, %v2633
      %v2886 = vadd.f32 %v2885, %v2636
      %v2887 = vadd.f32 %v2886, %v2638
      %v2888 = vadd.f32 %v2887, %v2641
      %v2889 = vadd.f32 %v2888, %v2643
      %v2890 = vadd.f32 %v2889, %v2646
      %v2891 = vadd.f32 %v2890, %v2648
      %v2892 = vadd.f32 %v2891, %v2651
      %v2893 = vadd.f32 %v2892, %v2653
      %v2894 = vadd.f32 %v2893, %v2656
      %v2895 = vadd.f32 %v2894, %v2658
      %v2896 = vadd.f32 %v2895, %v2661
      %v2897 = vadd.f32 %v2896, %v2663
      %v2898 = vadd.f32 %v2897, %v2666
      %v2899 = vadd.f32 %v2898, %v2668
      %v2900 = vadd.f32 %v2899, %v2671
      %v2901 = vadd.f32 %v2900, %v2673
      %v2902 = vadd.f32 %v2901, %v2676
      %v2903 = vadd.f32 %v2902, %v2678
      %v2904 = vadd.f32 %v2903, %v2681
      %v2905 = vadd.f32 %v2904, %v2683
      %v2906 = vadd.f32 %v2905, %v2686
      %v2907 = vadd.f32 %v2906, %v2688
      %v2908 = vadd.f32 %v2907, %v2691
      %v2909 = vadd.f32 %v2908, %v2693
      %v2910 = vrot.slane %v2909, 4
      %v2911 = vadd.f32 %v2909, %v2910
      %v2912 = vrot.slane %v2911, 2
      %v2913 = vadd.f32 %v2911, %v2912
      %v2914 = vrot.slane %v2913, 1
      %v2915 = vadd.f32 %v2913, %v2914
      %v2916 = vadd.f32 %v2915, 0.0
      %vm2917 = vcmask 1040384
      %v2918 = vsel %vm2917, %v2916, 0.0
      %2919 = vadd.xlane.f32.xlu0 %v2918
      %v2920 = vpop.xlane.xlu0 %2919
      %v2921 = vrot.slane %v2920, 4
      %v2922 = vadd.f32 %v2920, %v2921
      %v2923 = vrot.slane %v2922, 2
      %v2924 = vadd.f32 %v2922, %v2923
      %v2925 = vrot.slane %v2924, 1
      %v2926 = vadd.f32 %v2924, %v2925
      %s2927 = vtos %v2926
      %s2928 = smul.f32 %s2927, 1.2056327e-05
      %v2929 = vstv %s2928
      %v2930 = vsub.f32 %v2156, %v2929
      %v2931 = vsub.f32 %v2158, %v2929
      %v2932 = vsub.f32 %v2161, %v2929
      %v2933 = vsub.f32 %v2163, %v2929
      %v2934 = vsub.f32 %v2166, %v2929
      %v2935 = vsub.f32 %v2168, %v2929
      %v2936 = vsub.f32 %v2171, %v2929
      %v2937 = vsub.f32 %v2173, %v2929
      %v2938 = vsub.f32 %v2176, %v2929
      %v2939 = vsub.f32 %v2178, %v2929
      %v2940 = vsub.f32 %v2181, %v2929
      %v2941 = vsub.f32 %v2183, %v2929
      %v2942 = vsub.f32 %v2186, %v2929
      %v2943 = vsub.f32 %v2188, %v2929
      %v2944 = vsub.f32 %v2191, %v2929
      %v2945 = vsub.f32 %v2193, %v2929
      %v2946 = vsub.f32 %v2196, %v2929
      %v2947 = vsub.f32 %v2198, %v2929
      %v2948 = vsub.f32 %v2201, %v2929
      %v2949 = vsub.f32 %v2203, %v2929
      %v2950 = vsub.f32 %v2206, %v2929
      %v2951 = vsub.f32 %v2208, %v2929
      %v2952 = vsub.f32 %v2211, %v2929
      %v2953 = vsub.f32 %v2213, %v2929
      %v2954 = vsub.f32 %v2216, %v2929
      %v2955 = vsub.f32 %v2218, %v2929
      %v2956 = vsub.f32 %v2221, %v2929
      %v2957 = vsub.f32 %v2223, %v2929
      %v2958 = vsub.f32 %v2226, %v2929
      %v2959 = vsub.f32 %v2228, %v2929
      %v2960 = vsub.f32 %v2231, %v2929
      %v2961 = vsub.f32 %v2233, %v2929
      %v2962 = vsub.f32 %v2236, %v2929
      %v2963 = vsub.f32 %v2238, %v2929
      %v2964 = vsub.f32 %v2241, %v2929
      %v2965 = vsub.f32 %v2243, %v2929
      %v2966 = vsub.f32 %v2246, %v2929
      %v2967 = vsub.f32 %v2248, %v2929
      %v2968 = vsub.f32 %v2251, %v2929
      %v2969 = vsub.f32 %v2253, %v2929
      %v2970 = vsub.f32 %v2256, %v2929
      %v2971 = vsub.f32 %v2258, %v2929
      %v2972 = vsub.f32 %v2261, %v2929
      %v2973 = vsub.f32 %v2263, %v2929
      %v2974 = vsub.f32 %v2266, %v2929
      %v2975 = vsub.f32 %v2268, %v2929
      %v2976 = vsub.f32 %v2271, %v2929
      %v2977 = vsub.f32 %v2273, %v2929
      %v2978 = vsub.f32 %v2276, %v2929
      %v2979 = vsub.f32 %v2278, %v2929
      %v2980 = vsub.f32 %v2281, %v2929
      %v2981 = vsub.f32 %v2283, %v2929
      %v2982 = vsub.f32 %v2286, %v2929
      %v2983 = vsub.f32 %v2288, %v2929
      %v2984 = vsub.f32 %v2291, %v2929
      %v2985 = vsub.f32 %v2293, %v2929
      %v2986 = vsub.f32 %v2296, %v2929
      %v2987 = vsub.f32 %v2298, %v2929
      %v2988 = vsub.f32 %v2301, %v2929
      %v2989 = vsub.f32 %v2303, %v2929
      %v2990 = vsub.f32 %v2306, %v2929
      %v2991 = vsub.f32 %v2308, %v2929
      %v2992 = vsub.f32 %v2311, %v2929
      %v2993 = vsub.f32 %v2313, %v2929
      %v2994 = vsub.f32 %v2316, %v2929
      %v2995 = vsub.f32 %v2318, %v2929
      %v2996 = vsub.f32 %v2321, %v2929
      %v2997 = vsub.f32 %v2323, %v2929
      %v2998 = vsub.f32 %v2326, %v2929
      %v2999 = vsub.f32 %v2328, %v2929
      %v3000 = vsub.f32 %v2331, %v2929
      %v3001 = vsub.f32 %v2333, %v2929
      %v3002 = vsub.f32 %v2336, %v2929
      %v3003 = vsub.f32 %v2338, %v2929
      %v3004 = vsub.f32 %v2341, %v2929
      %v3005 = vsub.f32 %v2343, %v2929
      %v3006 = vsub.f32 %v2346, %v2929
      %v3007 = vsub.f32 %v2348, %v2929
      %v3008 = vsub.f32 %v2351, %v2929
      %v3009 = vsub.f32 %v2353, %v2929
      %v3010 = vsub.f32 %v2356, %v2929
      %v3011 = vsub.f32 %v2358, %v2929
      %v3012 = vsub.f32 %v2361, %v2929
      %v3013 = vsub.f32 %v2363, %v2929
      %v3014 = vsub.f32 %v2366, %v2929
      %v3015 = vsub.f32 %v2368, %v2929
      %v3016 = vsub.f32 %v2371, %v2929
      %v3017 = vsub.f32 %v2373, %v2929
      %v3018 = vsub.f32 %v2376, %v2929
      %v3019 = vsub.f32 %v2378, %v2929
      %v3020 = vsub.f32 %v2381, %v2929
      %v3021 = vsub.f32 %v2383, %v2929
      %v3022 = vsub.f32 %v2386, %v2929
      %v3023 = vsub.f32 %v2388, %v2929
      %v3024 = vsub.f32 %v2391, %v2929
      %v3025 = vsub.f32 %v2393, %v2929
      %v3026 = vsub.f32 %v2396, %v2929
      %v3027 = vsub.f32 %v2398, %v2929
      %v3028 = vsub.f32 %v2401, %v2929
      %v3029 = vsub.f32 %v2403, %v2929
      %v3030 = vsub.f32 %v2406, %v2929
      %v3031 = vsub.f32 %v2408, %v2929
      %v3032 = vsub.f32 %v2411, %v2929
      %v3033 = vsub.f32 %v2413, %v2929
      %v3034 = vsub.f32 %v2416, %v2929
      %v3035 = vsub.f32 %v2418, %v2929
      %v3036 = vsub.f32 %v2421, %v2929
      %v3037 = vsub.f32 %v2423, %v2929
      %v3038 = vsub.f32 %v2426, %v2929
      %v3039 = vsub.f32 %v2428, %v2929
      %v3040 = vsub.f32 %v2431, %v2929
      %v3041 = vsub.f32 %v2433, %v2929
      %v3042 = vsub.f32 %v2436, %v2929
      %v3043 = vsub.f32 %v2438, %v2929
      %v3044 = vsub.f32 %v2441, %v2929
      %v3045 = vsub.f32 %v2443, %v2929
      %v3046 = vsub.f32 %v2446, %v2929
      %v3047 = vsub.f32 %v2448, %v2929
      %v3048 = vsub.f32 %v2451, %v2929
      %v3049 = vsub.f32 %v2453, %v2929
      %v3050 = vsub.f32 %v2456, %v2929
      %v3051 = vsub.f32 %v2458, %v2929
      %v3052 = vsub.f32 %v2461, %v2929
      %v3053 = vsub.f32 %v2463, %v2929
      %v3054 = vsub.f32 %v2466, %v2929
      %v3055 = vsub.f32 %v2468, %v2929
      %v3056 = vsub.f32 %v2471, %v2929
      %v3057 = vsub.f32 %v2473, %v2929
      %v3058 = vsub.f32 %v2476, %v2929
      %v3059 = vsub.f32 %v2478, %v2929
      %v3060 = vsub.f32 %v2481, %v2929
      %v3061 = vsub.f32 %v2483, %v2929
      %v3062 = vsub.f32 %v2486, %v2929
      %v3063 = vsub.f32 %v2488, %v2929
      %v3064 = vsub.f32 %v2491, %v2929
      %v3065 = vsub.f32 %v2493, %v2929
      %v3066 = vsub.f32 %v2496, %v2929
      %v3067 = vsub.f32 %v2498, %v2929
      %v3068 = vsub.f32 %v2501, %v2929
      %v3069 = vsub.f32 %v2503, %v2929
      %v3070 = vsub.f32 %v2506, %v2929
      %v3071 = vsub.f32 %v2508, %v2929
      %v3072 = vsub.f32 %v2511, %v2929
      %v3073 = vsub.f32 %v2513, %v2929
      %v3074 = vsub.f32 %v2516, %v2929
      %v3075 = vsub.f32 %v2518, %v2929
      %v3076 = vsub.f32 %v2521, %v2929
      %v3077 = vsub.f32 %v2523, %v2929
      %v3078 = vsub.f32 %v2526, %v2929
      %v3079 = vsub.f32 %v2528, %v2929
      %v3080 = vsub.f32 %v2531, %v2929
      %v3081 = vsub.f32 %v2533, %v2929
      %v3082 = vsub.f32 %v2536, %v2929
      %v3083 = vsub.f32 %v2538, %v2929
      %v3084 = vsub.f32 %v2541, %v2929
      %v3085 = vsub.f32 %v2543, %v2929
      %v3086 = vsub.f32 %v2546, %v2929
      %v3087 = vsub.f32 %v2548, %v2929
      %v3088 = vsub.f32 %v2551, %v2929
      %v3089 = vsub.f32 %v2553, %v2929
      %v3090 = vsub.f32 %v2556, %v2929
      %v3091 = vsub.f32 %v2558, %v2929
      %v3092 = vsub.f32 %v2561, %v2929
      %v3093 = vsub.f32 %v2563, %v2929
      %v3094 = vsub.f32 %v2566, %v2929
      %v3095 = vsub.f32 %v2568, %v2929
      %v3096 = vsub.f32 %v2571, %v2929
      %v3097 = vsub.f32 %v2573, %v2929
      %v3098 = vsub.f32 %v2576, %v2929
      %v3099 = vsub.f32 %v2578, %v2929
      %v3100 = vsub.f32 %v2581, %v2929
      %v3101 = vsub.f32 %v2583, %v2929
      %v3102 = vsub.f32 %v2586, %v2929
      %v3103 = vsub.f32 %v2588, %v2929
      %v3104 = vsub.f32 %v2591, %v2929
      %v3105 = vsub.f32 %v2593, %v2929
      %v3106 = vsub.f32 %v2596, %v2929
      %v3107 = vsub.f32 %v2598, %v2929
      %v3108 = vsub.f32 %v2601, %v2929
      %v3109 = vsub.f32 %v2603, %v2929
      %v3110 = vsub.f32 %v2606, %v2929
      %v3111 = vsub.f32 %v2608, %v2929
      %v3112 = vsub.f32 %v2611, %v2929
      %v3113 = vsub.f32 %v2613, %v2929
      %v3114 = vsub.f32 %v2616, %v2929
      %v3115 = vsub.f32 %v2618, %v2929
      %v3116 = vsub.f32 %v2621, %v2929
      %v3117 = vsub.f32 %v2623, %v2929
      %v3118 = vsub.f32 %v2626, %v2929
      %v3119 = vsub.f32 %v2628, %v2929
      %v3120 = vsub.f32 %v2631, %v2929
      %v3121 = vsub.f32 %v2633, %v2929
      %v3122 = vsub.f32 %v2636, %v2929
      %v3123 = vsub.f32 %v2638, %v2929
      %v3124 = vsub.f32 %v2641, %v2929
      %v3125 = vsub.f32 %v2643, %v2929
      %v3126 = vsub.f32 %v2646, %v2929
      %v3127 = vsub.f32 %v2648, %v2929
      %v3128 = vsub.f32 %v2651, %v2929
      %v3129 = vsub.f32 %v2653, %v2929
      %v3130 = vsub.f32 %v2656, %v2929
      %v3131 = vsub.f32 %v2658, %v2929
      %v3132 = vsub.f32 %v2661, %v2929
      %v3133 = vsub.f32 %v2663, %v2929
      %v3134 = vsub.f32 %v2666, %v2929
      %v3135 = vsub.f32 %v2668, %v2929
      %v3136 = vsub.f32 %v2671, %v2929
      %v3137 = vsub.f32 %v2673, %v2929
      %v3138 = vsub.f32 %v2676, %v2929
      %v3139 = vsub.f32 %v2678, %v2929
      %v3140 = vsub.f32 %v2681, %v2929
      %v3141 = vsub.f32 %v2683, %v2929
      %v3142 = vsub.f32 %v2686, %v2929
      %v3143 = vsub.f32 %v2688, %v2929
      %v3144 = vsub.f32 %v2691, %v2929
      %v3145 = vsub.f32 %v2693, %v2929
      %v3146 = vperm.slane %v171, 3
      %v3147 = vmul.f32 %v2930, %v3146
      %v3148 = vmul.f32 %v2931, %v3146
      %v3149 = vmul.f32 %v2932, %v3146
      %v3150 = vmul.f32 %v2933, %v3146
      %v3151 = vmul.f32 %v2934, %v3146
      %v3152 = vmul.f32 %v2935, %v3146
      %v3153 = vmul.f32 %v2936, %v3146
      %v3154 = vmul.f32 %v2937, %v3146
      %v3155 = vmul.f32 %v2938, %v3146
      %v3156 = vmul.f32 %v2939, %v3146
      %v3157 = vmul.f32 %v2940, %v3146
      %v3158 = vmul.f32 %v2941, %v3146
      %v3159 = vmul.f32 %v2942, %v3146
      %v3160 = vmul.f32 %v2943, %v3146
      %v3161 = vmul.f32 %v2944, %v3146
      %v3162 = vmul.f32 %v2945, %v3146
      %v3163 = vmul.f32 %v2946, %v3146
      %v3164 = vmul.f32 %v2947, %v3146
      %v3165 = vmul.f32 %v2948, %v3146
      %v3166 = vmul.f32 %v2949, %v3146
      %v3167 = vmul.f32 %v2950, %v3146
      %v3168 = vmul.f32 %v2951, %v3146
      %v3169 = vmul.f32 %v2952, %v3146
      %v3170 = vmul.f32 %v2953, %v3146
      %v3171 = vmul.f32 %v2954, %v3146
      %v3172 = vmul.f32 %v2955, %v3146
      %v3173 = vmul.f32 %v2956, %v3146
      %v3174 = vmul.f32 %v2957, %v3146
      %v3175 = vmul.f32 %v2958, %v3146
      %v3176 = vmul.f32 %v2959, %v3146
      %v3177 = vmul.f32 %v2960, %v3146
      %v3178 = vmul.f32 %v2961, %v3146
      %v3179 = vmul.f32 %v2962, %v3146
      %v3180 = vmul.f32 %v2963, %v3146
      %v3181 = vmul.f32 %v2964, %v3146
      %v3182 = vmul.f32 %v2965, %v3146
      %v3183 = vmul.f32 %v2966, %v3146
      %v3184 = vmul.f32 %v2967, %v3146
      %v3185 = vmul.f32 %v2968, %v3146
      %v3186 = vmul.f32 %v2969, %v3146
      %v3187 = vmul.f32 %v2970, %v3146
      %v3188 = vmul.f32 %v2971, %v3146
      %v3189 = vmul.f32 %v2972, %v3146
      %v3190 = vmul.f32 %v2973, %v3146
      %v3191 = vmul.f32 %v2974, %v3146
      %v3192 = vmul.f32 %v2975, %v3146
      %v3193 = vmul.f32 %v2976, %v3146
      %v3194 = vmul.f32 %v2977, %v3146
      %v3195 = vmul.f32 %v2978, %v3146
      %v3196 = vmul.f32 %v2979, %v3146
      %v3197 = vmul.f32 %v2980, %v3146
      %v3198 = vmul.f32 %v2981, %v3146
      %v3199 = vmul.f32 %v2982, %v3146
      %v3200 = vmul.f32 %v2983, %v3146
      %v3201 = vmul.f32 %v2984, %v3146
      %v3202 = vmul.f32 %v2985, %v3146
      %v3203 = vmul.f32 %v2986, %v3146
      %v3204 = vmul.f32 %v2987, %v3146
      %v3205 = vmul.f32 %v2988, %v3146
      %v3206 = vmul.f32 %v2989, %v3146
      %v3207 = vmul.f32 %v2990, %v3146
      %v3208 = vmul.f32 %v2991, %v3146
      %v3209 = vmul.f32 %v2992, %v3146
      %v3210 = vmul.f32 %v2993, %v3146
      %v3211 = vmul.f32 %v2994, %v3146
      %v3212 = vmul.f32 %v2995, %v3146
      %v3213 = vmul.f32 %v2996, %v3146
      %v3214 = vmul.f32 %v2997, %v3146
      %v3215 = vmul.f32 %v2998, %v3146
      %v3216 = vmul.f32 %v2999, %v3146
      %v3217 = vmul.f32 %v3000, %v3146
      %v3218 = vmul.f32 %v3001, %v3146
      %v3219 = vmul.f32 %v3002, %v3146
      %v3220 = vmul.f32 %v3003, %v3146
      %v3221 = vmul.f32 %v3004, %v3146
      %v3222 = vmul.f32 %v3005, %v3146
      %v3223 = vmul.f32 %v3006, %v3146
      %v3224 = vmul.f32 %v3007, %v3146
      %v3225 = vmul.f32 %v3008, %v3146
      %v3226 = vmul.f32 %v3009, %v3146
      %v3227 = vmul.f32 %v3010, %v3146
      %v3228 = vmul.f32 %v3011, %v3146
      %v3229 = vmul.f32 %v3012, %v3146
      %v3230 = vmul.f32 %v3013, %v3146
      %v3231 = vmul.f32 %v3014, %v3146
      %v3232 = vmul.f32 %v3015, %v3146
      %v3233 = vmul.f32 %v3016, %v3146
      %v3234 = vmul.f32 %v3017, %v3146
      %v3235 = vmul.f32 %v3018, %v3146
      %v3236 = vmul.f32 %v3019, %v3146
      %v3237 = vmul.f32 %v3020, %v3146
      %v3238 = vmul.f32 %v3021, %v3146
      %v3239 = vmul.f32 %v3022, %v3146
      %v3240 = vmul.f32 %v3023, %v3146
      %v3241 = vmul.f32 %v3024, %v3146
      %v3242 = vmul.f32 %v3025, %v3146
      %v3243 = vmul.f32 %v3026, %v3146
      %v3244 = vmul.f32 %v3027, %v3146
      %v3245 = vmul.f32 %v3028, %v3146
      %v3246 = vmul.f32 %v3029, %v3146
      %v3247 = vmul.f32 %v3030, %v3146
      %v3248 = vmul.f32 %v3031, %v3146
      %v3249 = vmul.f32 %v3032, %v3146
      %v3250 = vmul.f32 %v3033, %v3146
      %v3251 = vmul.f32 %v3034, %v3146
      %v3252 = vmul.f32 %v3035, %v3146
      %v3253 = vmul.f32 %v3036, %v3146
      %v3254 = vmul.f32 %v3037, %v3146
      %v3255 = vmul.f32 %v3038, %v3146
      %v3256 = vmul.f32 %v3039, %v3146
      %v3257 = vmul.f32 %v3040, %v3146
      %v3258 = vmul.f32 %v3041, %v3146
      %v3259 = vmul.f32 %v3042, %v3146
      %v3260 = vmul.f32 %v3043, %v3146
      %v3261 = vmul.f32 %v3044, %v3146
      %v3262 = vmul.f32 %v3045, %v3146
      %v3263 = vmul.f32 %v3046, %v3146
      %v3264 = vmul.f32 %v3047, %v3146
      %v3265 = vmul.f32 %v3048, %v3146
      %v3266 = vmul.f32 %v3049, %v3146
      %v3267 = vmul.f32 %v3050, %v3146
      %v3268 = vmul.f32 %v3051, %v3146
      %v3269 = vmul.f32 %v3052, %v3146
      %v3270 = vmul.f32 %v3053, %v3146
      %v3271 = vmul.f32 %v3054, %v3146
      %v3272 = vmul.f32 %v3055, %v3146
      %v3273 = vmul.f32 %v3056, %v3146
      %v3274 = vmul.f32 %v3057, %v3146
      %v3275 = vmul.f32 %v3058, %v3146
      %v3276 = vmul.f32 %v3059, %v3146
      %v3277 = vmul.f32 %v3060, %v3146
      %v3278 = vmul.f32 %v3061, %v3146
      %v3279 = vmul.f32 %v3062, %v3146
      %v3280 = vmul.f32 %v3063, %v3146
      %v3281 = vmul.f32 %v3064, %v3146
      %v3282 = vmul.f32 %v3065, %v3146
      %v3283 = vmul.f32 %v3066, %v3146
      %v3284 = vmul.f32 %v3067, %v3146
      %v3285 = vmul.f32 %v3068, %v3146
      %v3286 = vmul.f32 %v3069, %v3146
      %v3287 = vmul.f32 %v3070, %v3146
      %v3288 = vmul.f32 %v3071, %v3146
      %v3289 = vmul.f32 %v3072, %v3146
      %v3290 = vmul.f32 %v3073, %v3146
      %v3291 = vmul.f32 %v3074, %v3146
      %v3292 = vmul.f32 %v3075, %v3146
      %v3293 = vmul.f32 %v3076, %v3146
      %v3294 = vmul.f32 %v3077, %v3146
      %v3295 = vmul.f32 %v3078, %v3146
      %v3296 = vmul.f32 %v3079, %v3146
      %v3297 = vmul.f32 %v3080, %v3146
      %v3298 = vmul.f32 %v3081, %v3146
      %v3299 = vmul.f32 %v3082, %v3146
      %v3300 = vmul.f32 %v3083, %v3146
      %v3301 = vmul.f32 %v3084, %v3146
      %v3302 = vmul.f32 %v3085, %v3146
      %v3303 = vmul.f32 %v3086, %v3146
      %v3304 = vmul.f32 %v3087, %v3146
      %v3305 = vmul.f32 %v3088, %v3146
      %v3306 = vmul.f32 %v3089, %v3146
      %v3307 = vmul.f32 %v3090, %v3146
      %v3308 = vmul.f32 %v3091, %v3146
      %v3309 = vmul.f32 %v3092, %v3146
      %v3310 = vmul.f32 %v3093, %v3146
      %v3311 = vmul.f32 %v3094, %v3146
      %v3312 = vmul.f32 %v3095, %v3146
      %v3313 = vmul.f32 %v3096, %v3146
      %v3314 = vmul.f32 %v3097, %v3146
      %v3315 = vmul.f32 %v3098, %v3146
      %v3316 = vmul.f32 %v3099, %v3146
      %v3317 = vmul.f32 %v3100, %v3146
      %v3318 = vmul.f32 %v3101, %v3146
      %v3319 = vmul.f32 %v3102, %v3146
      %v3320 = vmul.f32 %v3103, %v3146
      %v3321 = vmul.f32 %v3104, %v3146
      %v3322 = vmul.f32 %v3105, %v3146
      %v3323 = vmul.f32 %v3106, %v3146
      %v3324 = vmul.f32 %v3107, %v3146
      %v3325 = vmul.f32 %v3108, %v3146
      %v3326 = vmul.f32 %v3109, %v3146
      %v3327 = vmul.f32 %v3110, %v3146
      %v3328 = vmul.f32 %v3111, %v3146
      %v3329 = vmul.f32 %v3112, %v3146
      %v3330 = vmul.f32 %v3113, %v3146
      %v3331 = vmul.f32 %v3114, %v3146
      %v3332 = vmul.f32 %v3115, %v3146
      %v3333 = vmul.f32 %v3116, %v3146
      %v3334 = vmul.f32 %v3117, %v3146
      %v3335 = vmul.f32 %v3118, %v3146
      %v3336 = vmul.f32 %v3119, %v3146
      %v3337 = vmul.f32 %v3120, %v3146
      %v3338 = vmul.f32 %v3121, %v3146
      %v3339 = vmul.f32 %v3122, %v3146
      %v3340 = vmul.f32 %v3123, %v3146
      %v3341 = vmul.f32 %v3124, %v3146
      %v3342 = vmul.f32 %v3125, %v3146
      %v3343 = vmul.f32 %v3126, %v3146
      %v3344 = vmul.f32 %v3127, %v3146
      %v3345 = vmul.f32 %v3128, %v3146
      %v3346 = vmul.f32 %v3129, %v3146
      %v3347 = vmul.f32 %v3130, %v3146
      %v3348 = vmul.f32 %v3131, %v3146
      %v3349 = vmul.f32 %v3132, %v3146
      %v3350 = vmul.f32 %v3133, %v3146
      %v3351 = vmul.f32 %v3134, %v3146
      %v3352 = vmul.f32 %v3135, %v3146
      %v3353 = vmul.f32 %v3136, %v3146
      %v3354 = vmul.f32 %v3137, %v3146
      %v3355 = vmul.f32 %v3138, %v3146
      %v3356 = vmul.f32 %v3139, %v3146
      %v3357 = vmul.f32 %v3140, %v3146
      %v3358 = vmul.f32 %v3141, %v3146
      %v3359 = vmul.f32 %v3142, %v3146
      %v3360 = vmul.f32 %v3143, %v3146
      %v3361 = vmul.f32 %v3144, %v3146
      %v3362 = vmul.f32 %v3145, %v3146
      %v3363 = vmul.f32 %v3147, %v3147
      %v3364 = vmul.f32 %v3148, %v3148
      %v3365 = vmul.f32 %v3149, %v3149
      %v3366 = vmul.f32 %v3150, %v3150
      %v3367 = vmul.f32 %v3151, %v3151
      %v3368 = vmul.f32 %v3152, %v3152
      %v3369 = vmul.f32 %v3153, %v3153
      %v3370 = vmul.f32 %v3154, %v3154
      %v3371 = vmul.f32 %v3155, %v3155
      %v3372 = vmul.f32 %v3156, %v3156
      %v3373 = vmul.f32 %v3157, %v3157
      %v3374 = vmul.f32 %v3158, %v3158
      %v3375 = vmul.f32 %v3159, %v3159
      %v3376 = vmul.f32 %v3160, %v3160
      %v3377 = vmul.f32 %v3161, %v3161
      %v3378 = vmul.f32 %v3162, %v3162
      %v3379 = vmul.f32 %v3163, %v3163
      %v3380 = vmul.f32 %v3164, %v3164
      %v3381 = vmul.f32 %v3165, %v3165
      %v3382 = vmul.f32 %v3166, %v3166
      %v3383 = vmul.f32 %v3167, %v3167
      %v3384 = vmul.f32 %v3168, %v3168
      %v3385 = vmul.f32 %v3169, %v3169
      %v3386 = vmul.f32 %v3170, %v3170
      %v3387 = vmul.f32 %v3171, %v3171
      %v3388 = vmul.f32 %v3172, %v3172
      %v3389 = vmul.f32 %v3173, %v3173
      %v3390 = vmul.f32 %v3174, %v3174
      %v3391 = vmul.f32 %v3175, %v3175
      %v3392 = vmul.f32 %v3176, %v3176
      %v3393 = vmul.f32 %v3177, %v3177
      %v3394 = vmul.f32 %v3178, %v3178
      %v3395 = vmul.f32 %v3179, %v3179
      %v3396 = vmul.f32 %v3180, %v3180
      %v3397 = vmul.f32 %v3181, %v3181
      %v3398 = vmul.f32 %v3182, %v3182
      %v3399 = vmul.f32 %v3183, %v3183
      %v3400 = vmul.f32 %v3184, %v3184
      %v3401 = vmul.f32 %v3185, %v3185
      %v3402 = vmul.f32 %v3186, %v3186
      %v3403 = vmul.f32 %v3187, %v3187
      %v3404 = vmul.f32 %v3188, %v3188
      %v3405 = vmul.f32 %v3189, %v3189
      %v3406 = vmul.f32 %v3190, %v3190
      %v3407 = vmul.f32 %v3191, %v3191
      %v3408 = vmul.f32 %v3192, %v3192
      %v3409 = vmul.f32 %v3193, %v3193
      %v3410 = vmul.f32 %v3194, %v3194
      %v3411 = vmul.f32 %v3195, %v3195
      %v3412 = vmul.f32 %v3196, %v3196
      %v3413 = vmul.f32 %v3197, %v3197
      %v3414 = vmul.f32 %v3198, %v3198
      %v3415 = vmul.f32 %v3199, %v3199
      %v3416 = vmul.f32 %v3200, %v3200
      %v3417 = vmul.f32 %v3201, %v3201
      %v3418 = vmul.f32 %v3202, %v3202
      %v3419 = vmul.f32 %v3203, %v3203
      %v3420 = vmul.f32 %v3204, %v3204
      %v3421 = vmul.f32 %v3205, %v3205
      %v3422 = vmul.f32 %v3206, %v3206
      %v3423 = vmul.f32 %v3207, %v3207
      %v3424 = vmul.f32 %v3208, %v3208
      %v3425 = vmul.f32 %v3209, %v3209
      %v3426 = vmul.f32 %v3210, %v3210
      %v3427 = vmul.f32 %v3211, %v3211
      %v3428 = vmul.f32 %v3212, %v3212
      %v3429 = vmul.f32 %v3213, %v3213
      %v3430 = vmul.f32 %v3214, %v3214
      %v3431 = vmul.f32 %v3215, %v3215
      %v3432 = vmul.f32 %v3216, %v3216
      %v3433 = vmul.f32 %v3217, %v3217
      %v3434 = vmul.f32 %v3218, %v3218
      %v3435 = vmul.f32 %v3219, %v3219
      %v3436 = vmul.f32 %v3220, %v3220
      %v3437 = vmul.f32 %v3221, %v3221
      %v3438 = vmul.f32 %v3222, %v3222
      %v3439 = vmul.f32 %v3223, %v3223
      %v3440 = vmul.f32 %v3224, %v3224
      %v3441 = vmul.f32 %v3225, %v3225
      %v3442 = vmul.f32 %v3226, %v3226
      %v3443 = vmul.f32 %v3227, %v3227
      %v3444 = vmul.f32 %v3228, %v3228
      %v3445 = vmul.f32 %v3229, %v3229
      %v3446 = vmul.f32 %v3230, %v3230
      %v3447 = vmul.f32 %v3231, %v3231
      %v3448 = vmul.f32 %v3232, %v3232
      %v3449 = vmul.f32 %v3233, %v3233
      %v3450 = vmul.f32 %v3234, %v3234
      %v3451 = vmul.f32 %v3235, %v3235
      %v3452 = vmul.f32 %v3236, %v3236
      %v3453 = vmul.f32 %v3237, %v3237
      %v3454 = vmul.f32 %v3238, %v3238
      %v3455 = vmul.f32 %v3239, %v3239
      %v3456 = vmul.f32 %v3240, %v3240
      %v3457 = vmul.f32 %v3241, %v3241
      %v3458 = vmul.f32 %v3242, %v3242
      %v3459 = vmul.f32 %v3243, %v3243
      %v3460 = vmul.f32 %v3244, %v3244
      %v3461 = vmul.f32 %v3245, %v3245
      %v3462 = vmul.f32 %v3246, %v3246
      %v3463 = vmul.f32 %v3247, %v3247
      %v3464 = vmul.f32 %v3248, %v3248
      %v3465 = vmul.f32 %v3249, %v3249
      %v3466 = vmul.f32 %v3250, %v3250
      %v3467 = vmul.f32 %v3251, %v3251
      %v3468 = vmul.f32 %v3252, %v3252
      %v3469 = vmul.f32 %v3253, %v3253
      %v3470 = vmul.f32 %v3254, %v3254
      %v3471 = vmul.f32 %v3255, %v3255
      %v3472 = vmul.f32 %v3256, %v3256
      %v3473 = vmul.f32 %v3257, %v3257
      %v3474 = vmul.f32 %v3258, %v3258
      %v3475 = vmul.f32 %v3259, %v3259
      %v3476 = vmul.f32 %v3260, %v3260
      %v3477 = vmul.f32 %v3261, %v3261
      %v3478 = vmul.f32 %v3262, %v3262
      %v3479 = vmul.f32 %v3263, %v3263
      %v3480 = vmul.f32 %v3264, %v3264
      %v3481 = vmul.f32 %v3265, %v3265
      %v3482 = vmul.f32 %v3266, %v3266
      %v3483 = vmul.f32 %v3267, %v3267
      %v3484 = vmul.f32 %v3268, %v3268
      %v3485 = vmul.f32 %v3269, %v3269
      %v3486 = vmul.f32 %v3270, %v3270
      %v3487 = vmul.f32 %v3271, %v3271
      %v3488 = vmul.f32 %v3272, %v3272
      %v3489 = vmul.f32 %v3273, %v3273
      %v3490 = vmul.f32 %v3274, %v3274
      %v3491 = vmul.f32 %v3275, %v3275
      %v3492 = vmul.f32 %v3276, %v3276
      %v3493 = vmul.f32 %v3277, %v3277
      %v3494 = vmul.f32 %v3278, %v3278
      %v3495 = vmul.f32 %v3279, %v3279
      %v3496 = vmul.f32 %v3280, %v3280
      %v3497 = vmul.f32 %v3281, %v3281
      %v3498 = vmul.f32 %v3282, %v3282
      %v3499 = vmul.f32 %v3283, %v3283
      %v3500 = vmul.f32 %v3284, %v3284
      %v3501 = vmul.f32 %v3285, %v3285
      %v3502 = vmul.f32 %v3286, %v3286
      %v3503 = vmul.f32 %v3287, %v3287
      %v3504 = vmul.f32 %v3288, %v3288
      %v3505 = vmul.f32 %v3289, %v3289
      %v3506 = vmul.f32 %v3290, %v3290
      %v3507 = vmul.f32 %v3291, %v3291
      %v3508 = vmul.f32 %v3292, %v3292
      %v3509 = vmul.f32 %v3293, %v3293
      %v3510 = vmul.f32 %v3294, %v3294
      %v3511 = vmul.f32 %v3295, %v3295
      %v3512 = vmul.f32 %v3296, %v3296
      %v3513 = vmul.f32 %v3297, %v3297
      %v3514 = vmul.f32 %v3298, %v3298
      %v3515 = vmul.f32 %v3299, %v3299
      %v3516 = vmul.f32 %v3300, %v3300
      %v3517 = vmul.f32 %v3301, %v3301
      %v3518 = vmul.f32 %v3302, %v3302
      %v3519 = vmul.f32 %v3303, %v3303
      %v3520 = vmul.f32 %v3304, %v3304
      %v3521 = vmul.f32 %v3305, %v3305
      %v3522 = vmul.f32 %v3306, %v3306
      %v3523 = vmul.f32 %v3307, %v3307
      %v3524 = vmul.f32 %v3308, %v3308
      %v3525 = vmul.f32 %v3309, %v3309
      %v3526 = vmul.f32 %v3310, %v3310
      %v3527 = vmul.f32 %v3311, %v3311
      %v3528 = vmul.f32 %v3312, %v3312
      %v3529 = vmul.f32 %v3313, %v3313
      %v3530 = vmul.f32 %v3314, %v3314
      %v3531 = vmul.f32 %v3315, %v3315
      %v3532 = vmul.f32 %v3316, %v3316
      %v3533 = vmul.f32 %v3317, %v3317
      %v3534 = vmul.f32 %v3318, %v3318
      %v3535 = vmul.f32 %v3319, %v3319
      %v3536 = vmul.f32 %v3320, %v3320
      %v3537 = vmul.f32 %v3321, %v3321
      %v3538 = vmul.f32 %v3322, %v3322
      %v3539 = vmul.f32 %v3323, %v3323
      %v3540 = vmul.f32 %v3324, %v3324
      %v3541 = vmul.f32 %v3325, %v3325
      %v3542 = vmul.f32 %v3326, %v3326
      %v3543 = vmul.f32 %v3327, %v3327
      %v3544 = vmul.f32 %v3328, %v3328
      %v3545 = vmul.f32 %v3329, %v3329
      %v3546 = vmul.f32 %v3330, %v3330
      %v3547 = vmul.f32 %v3331, %v3331
      %v3548 = vmul.f32 %v3332, %v3332
      %v3549 = vmul.f32 %v3333, %v3333
      %v3550 = vmul.f32 %v3334, %v3334
      %v3551 = vmul.f32 %v3335, %v3335
      %v3552 = vmul.f32 %v3336, %v3336
      %v3553 = vmul.f32 %v3337, %v3337
      %v3554 = vmul.f32 %v3338, %v3338
      %v3555 = vmul.f32 %v3339, %v3339
      %v3556 = vmul.f32 %v3340, %v3340
      %v3557 = vmul.f32 %v3341, %v3341
      %v3558 = vmul.f32 %v3342, %v3342
      %v3559 = vmul.f32 %v3343, %v3343
      %v3560 = vmul.f32 %v3344, %v3344
      %v3561 = vmul.f32 %v3345, %v3345
      %v3562 = vmul.f32 %v3346, %v3346
      %v3563 = vmul.f32 %v3347, %v3347
      %v3564 = vmul.f32 %v3348, %v3348
      %v3565 = vmul.f32 %v3349, %v3349
      %v3566 = vmul.f32 %v3350, %v3350
      %v3567 = vmul.f32 %v3351, %v3351
      %v3568 = vmul.f32 %v3352, %v3352
      %v3569 = vmul.f32 %v3353, %v3353
      %v3570 = vmul.f32 %v3354, %v3354
      %v3571 = vmul.f32 %v3355, %v3355
      %v3572 = vmul.f32 %v3356, %v3356
      %v3573 = vmul.f32 %v3357, %v3357
      %v3574 = vmul.f32 %v3358, %v3358
      %v3575 = vmul.f32 %v3359, %v3359
      %v3576 = vmul.f32 %v3360, %v3360
      %v3577 = vmul.f32 %v3361, %v3361
      %v3578 = vmul.f32 %v3362, %v3362
      %v3579 = vadd.f32 %v3363, %v3364
      %v3580 = vadd.f32 %v3579, %v3365
      %v3581 = vadd.f32 %v3580, %v3366
      %v3582 = vadd.f32 %v3581, %v3367
      %v3583 = vadd.f32 %v3582, %v3368
      %v3584 = vadd.f32 %v3583, %v3369
      %v3585 = vadd.f32 %v3584, %v3370
      %v3586 = vadd.f32 %v3585, %v3371
      %v3587 = vadd.f32 %v3586, %v3372
      %v3588 = vadd.f32 %v3587, %v3373
      %v3589 = vadd.f32 %v3588, %v3374
      %v3590 = vadd.f32 %v3589, %v3375
      %v3591 = vadd.f32 %v3590, %v3376
      %v3592 = vadd.f32 %v3591, %v3377
      %v3593 = vadd.f32 %v3592, %v3378
      %v3594 = vadd.f32 %v3593, %v3379
      %v3595 = vadd.f32 %v3594, %v3380
      %v3596 = vadd.f32 %v3595, %v3381
      %v3597 = vadd.f32 %v3596, %v3382
      %v3598 = vadd.f32 %v3597, %v3383
      %v3599 = vadd.f32 %v3598, %v3384
      %v3600 = vadd.f32 %v3599, %v3385
      %v3601 = vadd.f32 %v3600, %v3386
      %v3602 = vadd.f32 %v3601, %v3387
      %v3603 = vadd.f32 %v3602, %v3388
      %v3604 = vadd.f32 %v3603, %v3389
      %v3605 = vadd.f32 %v3604, %v3390
      %v3606 = vadd.f32 %v3605, %v3391
      %v3607 = vadd.f32 %v3606, %v3392
      %v3608 = vadd.f32 %v3607, %v3393
      %v3609 = vadd.f32 %v3608, %v3394
      %v3610 = vadd.f32 %v3609, %v3395
      %v3611 = vadd.f32 %v3610, %v3396
      %v3612 = vadd.f32 %v3611, %v3397
      %v3613 = vadd.f32 %v3612, %v3398
      %v3614 = vadd.f32 %v3613, %v3399
      %v3615 = vadd.f32 %v3614, %v3400
      %v3616 = vadd.f32 %v3615, %v3401
      %v3617 = vadd.f32 %v3616, %v3402
      %v3618 = vadd.f32 %v3617, %v3403
      %v3619 = vadd.f32 %v3618, %v3404
      %v3620 = vadd.f32 %v3619, %v3405
      %v3621 = vadd.f32 %v3620, %v3406
      %v3622 = vadd.f32 %v3621, %v3407
      %v3623 = vadd.f32 %v3622, %v3408
      %v3624 = vadd.f32 %v3623, %v3409
      %v3625 = vadd.f32 %v3624, %v3410
      %v3626 = vadd.f32 %v3625, %v3411
      %v3627 = vadd.f32 %v3626, %v3412
      %v3628 = vadd.f32 %v3627, %v3413
      %v3629 = vadd.f32 %v3628, %v3414
      %v3630 = vadd.f32 %v3629, %v3415
      %v3631 = vadd.f32 %v3630, %v3416
      %v3632 = vadd.f32 %v3631, %v3417
      %v3633 = vadd.f32 %v3632, %v3418
      %v3634 = vadd.f32 %v3633, %v3419
      %v3635 = vadd.f32 %v3634, %v3420
      %v3636 = vadd.f32 %v3635, %v3421
      %v3637 = vadd.f32 %v3636, %v3422
      %v3638 = vadd.f32 %v3637, %v3423
      %v3639 = vadd.f32 %v3638, %v3424
      %v3640 = vadd.f32 %v3639, %v3425
      %v3641 = vadd.f32 %v3640, %v3426
      %v3642 = vadd.f32 %v3641, %v3427
      %v3643 = vadd.f32 %v3642, %v3428
      %v3644 = vadd.f32 %v3643, %v3429
      %v3645 = vadd.f32 %v3644, %v3430
      %v3646 = vadd.f32 %v3645, %v3431
      %v3647 = vadd.f32 %v3646, %v3432
      %v3648 = vadd.f32 %v3647, %v3433
      %v3649 = vadd.f32 %v3648, %v3434
      %v3650 = vadd.f32 %v3649, %v3435
      %v3651 = vadd.f32 %v3650, %v3436
      %v3652 = vadd.f32 %v3651, %v3437
      %v3653 = vadd.f32 %v3652, %v3438
      %v3654 = vadd.f32 %v3653, %v3439
      %v3655 = vadd.f32 %v3654, %v3440
      %v3656 = vadd.f32 %v3655, %v3441
      %v3657 = vadd.f32 %v3656, %v3442
      %v3658 = vadd.f32 %v3657, %v3443
      %v3659 = vadd.f32 %v3658, %v3444
      %v3660 = vadd.f32 %v3659, %v3445
      %v3661 = vadd.f32 %v3660, %v3446
      %v3662 = vadd.f32 %v3661, %v3447
      %v3663 = vadd.f32 %v3662, %v3448
      %v3664 = vadd.f32 %v3663, %v3449
      %v3665 = vadd.f32 %v3664, %v3450
      %v3666 = vadd.f32 %v3665, %v3451
      %v3667 = vadd.f32 %v3666, %v3452
      %v3668 = vadd.f32 %v3667, %v3453
      %v3669 = vadd.f32 %v3668, %v3454
      %v3670 = vadd.f32 %v3669, %v3455
      %v3671 = vadd.f32 %v3670, %v3456
      %v3672 = vadd.f32 %v3671, %v3457
      %v3673 = vadd.f32 %v3672, %v3458
      %v3674 = vadd.f32 %v3673, %v3459
      %v3675 = vadd.f32 %v3674, %v3460
      %v3676 = vadd.f32 %v3675, %v3461
      %v3677 = vadd.f32 %v3676, %v3462
      %v3678 = vadd.f32 %v3677, %v3463
      %v3679 = vadd.f32 %v3678, %v3464
      %v3680 = vadd.f32 %v3679, %v3465
      %v3681 = vadd.f32 %v3680, %v3466
      %v3682 = vadd.f32 %v3681, %v3467
      %v3683 = vadd.f32 %v3682, %v3468
      %v3684 = vadd.f32 %v3683, %v3469
      %v3685 = vadd.f32 %v3684, %v3470
      %v3686 = vadd.f32 %v3685, %v3471
      %v3687 = vadd.f32 %v3686, %v3472
      %v3688 = vadd.f32 %v3687, %v3473
      %v3689 = vadd.f32 %v3688, %v3474
      %v3690 = vadd.f32 %v3689, %v3475
      %v3691 = vadd.f32 %v3690, %v3476
      %v3692 = vadd.f32 %v3691, %v3477
      %v3693 = vadd.f32 %v3692, %v3478
      %v3694 = vadd.f32 %v3693, %v3479
      %v3695 = vadd.f32 %v3694, %v3480
      %v3696 = vadd.f32 %v3695, %v3481
      %v3697 = vadd.f32 %v3696, %v3482
      %v3698 = vadd.f32 %v3697, %v3483
      %v3699 = vadd.f32 %v3698, %v3484
      %v3700 = vadd.f32 %v3699, %v3485
      %v3701 = vadd.f32 %v3700, %v3486
      %v3702 = vadd.f32 %v3701, %v3487
      %v3703 = vadd.f32 %v3702, %v3488
      %v3704 = vadd.f32 %v3703, %v3489
      %v3705 = vadd.f32 %v3704, %v3490
      %v3706 = vadd.f32 %v3705, %v3491
      %v3707 = vadd.f32 %v3706, %v3492
      %v3708 = vadd.f32 %v3707, %v3493
      %v3709 = vadd.f32 %v3708, %v3494
      %v3710 = vadd.f32 %v3709, %v3495
      %v3711 = vadd.f32 %v3710, %v3496
      %v3712 = vadd.f32 %v3711, %v3497
      %v3713 = vadd.f32 %v3712, %v3498
      %v3714 = vadd.f32 %v3713, %v3499
      %v3715 = vadd.f32 %v3714, %v3500
      %v3716 = vadd.f32 %v3715, %v3501
      %v3717 = vadd.f32 %v3716, %v3502
      %v3718 = vadd.f32 %v3717, %v3503
      %v3719 = vadd.f32 %v3718, %v3504
      %v3720 = vadd.f32 %v3719, %v3505
      %v3721 = vadd.f32 %v3720, %v3506
      %v3722 = vadd.f32 %v3721, %v3507
      %v3723 = vadd.f32 %v3722, %v3508
      %v3724 = vadd.f32 %v3723, %v3509
      %v3725 = vadd.f32 %v3724, %v3510
      %v3726 = vadd.f32 %v3725, %v3511
      %v3727 = vadd.f32 %v3726, %v3512
      %v3728 = vadd.f32 %v3727, %v3513
      %v3729 = vadd.f32 %v3728, %v3514
      %v3730 = vadd.f32 %v3729, %v3515
      %v3731 = vadd.f32 %v3730, %v3516
      %v3732 = vadd.f32 %v3731, %v3517
      %v3733 = vadd.f32 %v3732, %v3518
      %v3734 = vadd.f32 %v3733, %v3519
      %v3735 = vadd.f32 %v3734, %v3520
      %v3736 = vadd.f32 %v3735, %v3521
      %v3737 = vadd.f32 %v3736, %v3522
      %v3738 = vadd.f32 %v3737, %v3523
      %v3739 = vadd.f32 %v3738, %v3524
      %v3740 = vadd.f32 %v3739, %v3525
      %v3741 = vadd.f32 %v3740, %v3526
      %v3742 = vadd.f32 %v3741, %v3527
      %v3743 = vadd.f32 %v3742, %v3528
      %v3744 = vadd.f32 %v3743, %v3529
      %v3745 = vadd.f32 %v3744, %v3530
      %v3746 = vadd.f32 %v3745, %v3531
      %v3747 = vadd.f32 %v3746, %v3532
      %v3748 = vadd.f32 %v3747, %v3533
      %v3749 = vadd.f32 %v3748, %v3534
      %v3750 = vadd.f32 %v3749, %v3535
      %v3751 = vadd.f32 %v3750, %v3536
      %v3752 = vadd.f32 %v3751, %v3537
      %v3753 = vadd.f32 %v3752, %v3538
      %v3754 = vadd.f32 %v3753, %v3539
      %v3755 = vadd.f32 %v3754, %v3540
      %v3756 = vadd.f32 %v3755, %v3541
      %v3757 = vadd.f32 %v3756, %v3542
      %v3758 = vadd.f32 %v3757, %v3543
      %v3759 = vadd.f32 %v3758, %v3544
      %v3760 = vadd.f32 %v3759, %v3545
      %v3761 = vadd.f32 %v3760, %v3546
      %v3762 = vadd.f32 %v3761, %v3547
      %v3763 = vadd.f32 %v3762, %v3548
      %v3764 = vadd.f32 %v3763, %v3549
      %v3765 = vadd.f32 %v3764, %v3550
      %v3766 = vadd.f32 %v3765, %v3551
      %v3767 = vadd.f32 %v3766, %v3552
      %v3768 = vadd.f32 %v3767, %v3553
      %v3769 = vadd.f32 %v3768, %v3554
      %v3770 = vadd.f32 %v3769, %v3555
      %v3771 = vadd.f32 %v3770, %v3556
      %v3772 = vadd.f32 %v3771, %v3557
      %v3773 = vadd.f32 %v3772, %v3558
      %v3774 = vadd.f32 %v3773, %v3559
      %v3775 = vadd.f32 %v3774, %v3560
      %v3776 = vadd.f32 %v3775, %v3561
      %v3777 = vadd.f32 %v3776, %v3562
      %v3778 = vadd.f32 %v3777, %v3563
      %v3779 = vadd.f32 %v3778, %v3564
      %v3780 = vadd.f32 %v3779, %v3565
      %v3781 = vadd.f32 %v3780, %v3566
      %v3782 = vadd.f32 %v3781, %v3567
      %v3783 = vadd.f32 %v3782, %v3568
      %v3784 = vadd.f32 %v3783, %v3569
      %v3785 = vadd.f32 %v3784, %v3570
      %v3786 = vadd.f32 %v3785, %v3571
      %v3787 = vadd.f32 %v3786, %v3572
      %v3788 = vadd.f32 %v3787, %v3573
      %v3789 = vadd.f32 %v3788, %v3574
      %v3790 = vadd.f32 %v3789, %v3575
      %v3791 = vadd.f32 %v3790, %v3576
      %v3792 = vadd.f32 %v3791, %v3577
      %v3793 = vadd.f32 %v3792, %v3578
      %v3794 = vrot.slane %v3793, 4
      %v3795 = vadd.f32 %v3793, %v3794
      %v3796 = vrot.slane %v3795, 2
      %v3797 = vadd.f32 %v3795, %v3796
      %v3798 = vrot.slane %v3797, 1
      %v3799 = vadd.f32 %v3797, %v3798
      %v3800 = vadd.f32 %v3799, 0.0
      %v3801 = vsel %vm2917, %v3800, 0.0
      %3802 = vadd.xlane.f32.xlu0 %v3801
      %v3803 = vpop.xlane.xlu0 %3802
      %v3804 = vrot.slane %v3803, 4
      %v3805 = vadd.f32 %v3803, %v3804
      %v3806 = vrot.slane %v3805, 2
      %v3807 = vadd.f32 %v3805, %v3806
      %v3808 = vrot.slane %v3807, 1
      %v3809 = vadd.f32 %v3807, %v3808
      %s3810 = vtos %v3809
      %s3811 = smul.f32 %s3810, 1.2056327e-05
      %s3812 = sadd.f32 %s3811, 1e-05
      %v3813 = vstv %s3812
      %v3814 = vrsqrt.pop %v3813
      %v3815 = vmul.f32 %v3814, %v3813
      %v3816 = vmul.f32 %v3815, %v3814
      %v3817 = vmul.f32 0.5, %v3816
      %v3818 = vsub.f32 1.5, %v3817
      %v3819 = vmul.f32 %v3814, %v3818
      %vm3820 = vweird.f32 %v3813
      %vm3821 = vweird.f32 %v3814
      %vm3822 = vmor %vm3820, %vm3821
      %v3823 = vsel %vm3822, %v3814, %v3819
      %s3824 = vtos %v3823
      %v3825 = vstv %s3824
      %v3826 = vmul.f32 %v171, %v3825
      %v3827 = vperm.slane %v3826, 1
      %v3828 = vmul.f32 %v3147, %v3827
      %v3829 = vmul.f32 %v3148, %v3827
      %v3830 = vmul.f32 %v3149, %v3827
      %v3831 = vmul.f32 %v3150, %v3827
      %v3832 = vmul.f32 %v3151, %v3827
      %v3833 = vmul.f32 %v3152, %v3827
      %v3834 = vmul.f32 %v3153, %v3827
      %v3835 = vmul.f32 %v3154, %v3827
      %v3836 = vmul.f32 %v3155, %v3827
      %v3837 = vmul.f32 %v3156, %v3827
      %v3838 = vmul.f32 %v3157, %v3827
      %v3839 = vmul.f32 %v3158, %v3827
      %v3840 = vmul.f32 %v3159, %v3827
      %v3841 = vmul.f32 %v3160, %v3827
      %v3842 = vmul.f32 %v3161, %v3827
      %v3843 = vmul.f32 %v3162, %v3827
      %v3844 = vmul.f32 %v3163, %v3827
      %v3845 = vmul.f32 %v3164, %v3827
      %v3846 = vmul.f32 %v3165, %v3827
      %v3847 = vmul.f32 %v3166, %v3827
      %v3848 = vmul.f32 %v3167, %v3827
      %v3849 = vmul.f32 %v3168, %v3827
      %v3850 = vmul.f32 %v3169, %v3827
      %v3851 = vmul.f32 %v3170, %v3827
      %v3852 = vmul.f32 %v3171, %v3827
      %v3853 = vmul.f32 %v3172, %v3827
      %v3854 = vmul.f32 %v3173, %v3827
      %v3855 = vmul.f32 %v3174, %v3827
      %v3856 = vmul.f32 %v3175, %v3827
      %v3857 = vmul.f32 %v3176, %v3827
      %v3858 = vmul.f32 %v3177, %v3827
      %v3859 = vmul.f32 %v3178, %v3827
      %v3860 = vmul.f32 %v3179, %v3827
      %v3861 = vmul.f32 %v3180, %v3827
      %v3862 = vmul.f32 %v3181, %v3827
      %v3863 = vmul.f32 %v3182, %v3827
      %v3864 = vmul.f32 %v3183, %v3827
      %v3865 = vmul.f32 %v3184, %v3827
      %v3866 = vmul.f32 %v3185, %v3827
      %v3867 = vmul.f32 %v3186, %v3827
      %v3868 = vmul.f32 %v3187, %v3827
      %v3869 = vmul.f32 %v3188, %v3827
      %v3870 = vmul.f32 %v3189, %v3827
      %v3871 = vmul.f32 %v3190, %v3827
      %v3872 = vmul.f32 %v3191, %v3827
      %v3873 = vmul.f32 %v3192, %v3827
      %v3874 = vmul.f32 %v3193, %v3827
      %v3875 = vmul.f32 %v3194, %v3827
      %v3876 = vmul.f32 %v3195, %v3827
      %v3877 = vmul.f32 %v3196, %v3827
      %v3878 = vmul.f32 %v3197, %v3827
      %v3879 = vmul.f32 %v3198, %v3827
      %v3880 = vmul.f32 %v3199, %v3827
      %v3881 = vmul.f32 %v3200, %v3827
      %v3882 = vmul.f32 %v3201, %v3827
      %v3883 = vmul.f32 %v3202, %v3827
      %v3884 = vmul.f32 %v3203, %v3827
      %v3885 = vmul.f32 %v3204, %v3827
      %v3886 = vmul.f32 %v3205, %v3827
      %v3887 = vmul.f32 %v3206, %v3827
      %v3888 = vmul.f32 %v3207, %v3827
      %v3889 = vmul.f32 %v3208, %v3827
      %v3890 = vmul.f32 %v3209, %v3827
      %v3891 = vmul.f32 %v3210, %v3827
      %v3892 = vmul.f32 %v3211, %v3827
      %v3893 = vmul.f32 %v3212, %v3827
      %v3894 = vmul.f32 %v3213, %v3827
      %v3895 = vmul.f32 %v3214, %v3827
      %v3896 = vmul.f32 %v3215, %v3827
      %v3897 = vmul.f32 %v3216, %v3827
      %v3898 = vmul.f32 %v3217, %v3827
      %v3899 = vmul.f32 %v3218, %v3827
      %v3900 = vmul.f32 %v3219, %v3827
      %v3901 = vmul.f32 %v3220, %v3827
      %v3902 = vmul.f32 %v3221, %v3827
      %v3903 = vmul.f32 %v3222, %v3827
      %v3904 = vmul.f32 %v3223, %v3827
      %v3905 = vmul.f32 %v3224, %v3827
      %v3906 = vmul.f32 %v3225, %v3827
      %v3907 = vmul.f32 %v3226, %v3827
      %v3908 = vmul.f32 %v3227, %v3827
      %v3909 = vmul.f32 %v3228, %v3827
      %v3910 = vmul.f32 %v3229, %v3827
      %v3911 = vmul.f32 %v3230, %v3827
      %v3912 = vmul.f32 %v3231, %v3827
      %v3913 = vmul.f32 %v3232, %v3827
      %v3914 = vmul.f32 %v3233, %v3827
      %v3915 = vmul.f32 %v3234, %v3827
      %v3916 = vmul.f32 %v3235, %v3827
      %v3917 = vmul.f32 %v3236, %v3827
      %v3918 = vmul.f32 %v3237, %v3827
      %v3919 = vmul.f32 %v3238, %v3827
      %v3920 = vmul.f32 %v3239, %v3827
      %v3921 = vmul.f32 %v3240, %v3827
      %v3922 = vmul.f32 %v3241, %v3827
      %v3923 = vmul.f32 %v3242, %v3827
      %v3924 = vmul.f32 %v3243, %v3827
      %v3925 = vmul.f32 %v3244, %v3827
      %v3926 = vmul.f32 %v3245, %v3827
      %v3927 = vmul.f32 %v3246, %v3827
      %v3928 = vmul.f32 %v3247, %v3827
      %v3929 = vmul.f32 %v3248, %v3827
      %v3930 = vmul.f32 %v3249, %v3827
      %v3931 = vmul.f32 %v3250, %v3827
      %v3932 = vmul.f32 %v3251, %v3827
      %v3933 = vmul.f32 %v3252, %v3827
      %v3934 = vmul.f32 %v3253, %v3827
      %v3935 = vmul.f32 %v3254, %v3827
      %v3936 = vmul.f32 %v3255, %v3827
      %v3937 = vmul.f32 %v3256, %v3827
      %v3938 = vmul.f32 %v3257, %v3827
      %v3939 = vmul.f32 %v3258, %v3827
      %v3940 = vmul.f32 %v3259, %v3827
      %v3941 = vmul.f32 %v3260, %v3827
      %v3942 = vmul.f32 %v3261, %v3827
      %v3943 = vmul.f32 %v3262, %v3827
      %v3944 = vmul.f32 %v3263, %v3827
      %v3945 = vmul.f32 %v3264, %v3827
      %v3946 = vmul.f32 %v3265, %v3827
      %v3947 = vmul.f32 %v3266, %v3827
      %v3948 = vmul.f32 %v3267, %v3827
      %v3949 = vmul.f32 %v3268, %v3827
      %v3950 = vmul.f32 %v3269, %v3827
      %v3951 = vmul.f32 %v3270, %v3827
      %v3952 = vmul.f32 %v3271, %v3827
      %v3953 = vmul.f32 %v3272, %v3827
      %v3954 = vmul.f32 %v3273, %v3827
      %v3955 = vmul.f32 %v3274, %v3827
      %v3956 = vmul.f32 %v3275, %v3827
      %v3957 = vmul.f32 %v3276, %v3827
      %v3958 = vmul.f32 %v3277, %v3827
      %v3959 = vmul.f32 %v3278, %v3827
      %v3960 = vmul.f32 %v3279, %v3827
      %v3961 = vmul.f32 %v3280, %v3827
      %v3962 = vmul.f32 %v3281, %v3827
      %v3963 = vmul.f32 %v3282, %v3827
      %v3964 = vmul.f32 %v3283, %v3827
      %v3965 = vmul.f32 %v3284, %v3827
      %v3966 = vmul.f32 %v3285, %v3827
      %v3967 = vmul.f32 %v3286, %v3827
      %v3968 = vmul.f32 %v3287, %v3827
      %v3969 = vmul.f32 %v3288, %v3827
      %v3970 = vmul.f32 %v3289, %v3827
      %v3971 = vmul.f32 %v3290, %v3827
      %v3972 = vmul.f32 %v3291, %v3827
      %v3973 = vmul.f32 %v3292, %v3827
      %v3974 = vmul.f32 %v3293, %v3827
      %v3975 = vmul.f32 %v3294, %v3827
      %v3976 = vmul.f32 %v3295, %v3827
      %v3977 = vmul.f32 %v3296, %v3827
      %v3978 = vmul.f32 %v3297, %v3827
      %v3979 = vmul.f32 %v3298, %v3827
      %v3980 = vmul.f32 %v3299, %v3827
      %v3981 = vmul.f32 %v3300, %v3827
      %v3982 = vmul.f32 %v3301, %v3827
      %v3983 = vmul.f32 %v3302, %v3827
      %v3984 = vmul.f32 %v3303, %v3827
      %v3985 = vmul.f32 %v3304, %v3827
      %v3986 = vmul.f32 %v3305, %v3827
      %v3987 = vmul.f32 %v3306, %v3827
      %v3988 = vmul.f32 %v3307, %v3827
      %v3989 = vmul.f32 %v3308, %v3827
      %v3990 = vmul.f32 %v3309, %v3827
      %v3991 = vmul.f32 %v3310, %v3827
      %v3992 = vmul.f32 %v3311, %v3827
      %v3993 = vmul.f32 %v3312, %v3827
      %v3994 = vmul.f32 %v3313, %v3827
      %v3995 = vmul.f32 %v3314, %v3827
      %v3996 = vmul.f32 %v3315, %v3827
      %v3997 = vmul.f32 %v3316, %v3827
      %v3998 = vmul.f32 %v3317, %v3827
      %v3999 = vmul.f32 %v3318, %v3827
      %v4000 = vmul.f32 %v3319, %v3827
      %v4001 = vmul.f32 %v3320, %v3827
      %v4002 = vmul.f32 %v3321, %v3827
      %v4003 = vmul.f32 %v3322, %v3827
      %v4004 = vmul.f32 %v3323, %v3827
      %v4005 = vmul.f32 %v3324, %v3827
      %v4006 = vmul.f32 %v3325, %v3827
      %v4007 = vmul.f32 %v3326, %v3827
      %v4008 = vmul.f32 %v3327, %v3827
      %v4009 = vmul.f32 %v3328, %v3827
      %v4010 = vmul.f32 %v3329, %v3827
      %v4011 = vmul.f32 %v3330, %v3827
      %v4012 = vmul.f32 %v3331, %v3827
      %v4013 = vmul.f32 %v3332, %v3827
      %v4014 = vmul.f32 %v3333, %v3827
      %v4015 = vmul.f32 %v3334, %v3827
      %v4016 = vmul.f32 %v3335, %v3827
      %v4017 = vmul.f32 %v3336, %v3827
      %v4018 = vmul.f32 %v3337, %v3827
      %v4019 = vmul.f32 %v3338, %v3827
      %v4020 = vmul.f32 %v3339, %v3827
      %v4021 = vmul.f32 %v3340, %v3827
      %v4022 = vmul.f32 %v3341, %v3827
      %v4023 = vmul.f32 %v3342, %v3827
      %v4024 = vmul.f32 %v3343, %v3827
      %v4025 = vmul.f32 %v3344, %v3827
      %v4026 = vmul.f32 %v3345, %v3827
      %v4027 = vmul.f32 %v3346, %v3827
      %v4028 = vmul.f32 %v3347, %v3827
      %v4029 = vmul.f32 %v3348, %v3827
      %v4030 = vmul.f32 %v3349, %v3827
      %v4031 = vmul.f32 %v3350, %v3827
      %v4032 = vmul.f32 %v3351, %v3827
      %v4033 = vmul.f32 %v3352, %v3827
      %v4034 = vmul.f32 %v3353, %v3827
      %v4035 = vmul.f32 %v3354, %v3827
      %v4036 = vmul.f32 %v3355, %v3827
      %v4037 = vmul.f32 %v3356, %v3827
      %v4038 = vmul.f32 %v3357, %v3827
      %v4039 = vmul.f32 %v3358, %v3827
      %v4040 = vmul.f32 %v3359, %v3827
      %v4041 = vmul.f32 %v3360, %v3827
      %v4042 = vmul.f32 %v3361, %v3827
      %v4043 = vmul.f32 %v3362, %v3827
      %v4044 = vperm.slane %v171, 2
      %v4045 = vadd.f32 %v3828, %v4044
      %v4046 = vadd.f32 %v3829, %v4044
      %v4047 = vadd.f32 %v3830, %v4044
      %v4048 = vadd.f32 %v3831, %v4044
      %v4049 = vadd.f32 %v3832, %v4044
      %v4050 = vadd.f32 %v3833, %v4044
      %v4051 = vadd.f32 %v3834, %v4044
      %v4052 = vadd.f32 %v3835, %v4044
      %v4053 = vadd.f32 %v3836, %v4044
      %v4054 = vadd.f32 %v3837, %v4044
      %v4055 = vadd.f32 %v3838, %v4044
      %v4056 = vadd.f32 %v3839, %v4044
      %v4057 = vadd.f32 %v3840, %v4044
      %v4058 = vadd.f32 %v3841, %v4044
      %v4059 = vadd.f32 %v3842, %v4044
      %v4060 = vadd.f32 %v3843, %v4044
      %v4061 = vadd.f32 %v3844, %v4044
      %v4062 = vadd.f32 %v3845, %v4044
      %v4063 = vadd.f32 %v3846, %v4044
      %v4064 = vadd.f32 %v3847, %v4044
      %v4065 = vadd.f32 %v3848, %v4044
      %v4066 = vadd.f32 %v3849, %v4044
      %v4067 = vadd.f32 %v3850, %v4044
      %v4068 = vadd.f32 %v3851, %v4044
      %v4069 = vadd.f32 %v3852, %v4044
      %v4070 = vadd.f32 %v3853, %v4044
      %v4071 = vadd.f32 %v3854, %v4044
      %v4072 = vadd.f32 %v3855, %v4044
      %v4073 = vadd.f32 %v3856, %v4044
      %v4074 = vadd.f32 %v3857, %v4044
      %v4075 = vadd.f32 %v3858, %v4044
      %v4076 = vadd.f32 %v3859, %v4044
      %v4077 = vadd.f32 %v3860, %v4044
      %v4078 = vadd.f32 %v3861, %v4044
      %v4079 = vadd.f32 %v3862, %v4044
      %v4080 = vadd.f32 %v3863, %v4044
      %v4081 = vadd.f32 %v3864, %v4044
      %v4082 = vadd.f32 %v3865, %v4044
      %v4083 = vadd.f32 %v3866, %v4044
      %v4084 = vadd.f32 %v3867, %v4044
      %v4085 = vadd.f32 %v3868, %v4044
      %v4086 = vadd.f32 %v3869, %v4044
      %v4087 = vadd.f32 %v3870, %v4044
      %v4088 = vadd.f32 %v3871, %v4044
      %v4089 = vadd.f32 %v3872, %v4044
      %v4090 = vadd.f32 %v3873, %v4044
      %v4091 = vadd.f32 %v3874, %v4044
      %v4092 = vadd.f32 %v3875, %v4044
      %v4093 = vadd.f32 %v3876, %v4044
      %v4094 = vadd.f32 %v3877, %v4044
      %v4095 = vadd.f32 %v3878, %v4044
      %v4096 = vadd.f32 %v3879, %v4044
      %v4097 = vadd.f32 %v3880, %v4044
      %v4098 = vadd.f32 %v3881, %v4044
      %v4099 = vadd.f32 %v3882, %v4044
      %v4100 = vadd.f32 %v3883, %v4044
      %v4101 = vadd.f32 %v3884, %v4044
      %v4102 = vadd.f32 %v3885, %v4044
      %v4103 = vadd.f32 %v3886, %v4044
      %v4104 = vadd.f32 %v3887, %v4044
      %v4105 = vadd.f32 %v3888, %v4044
      %v4106 = vadd.f32 %v3889, %v4044
      %v4107 = vadd.f32 %v3890, %v4044
      %v4108 = vadd.f32 %v3891, %v4044
      %v4109 = vadd.f32 %v3892, %v4044
      %v4110 = vadd.f32 %v3893, %v4044
      %v4111 = vadd.f32 %v3894, %v4044
      %v4112 = vadd.f32 %v3895, %v4044
      %v4113 = vadd.f32 %v3896, %v4044
      %v4114 = vadd.f32 %v3897, %v4044
      %v4115 = vadd.f32 %v3898, %v4044
      %v4116 = vadd.f32 %v3899, %v4044
      %v4117 = vadd.f32 %v3900, %v4044
      %v4118 = vadd.f32 %v3901, %v4044
      %v4119 = vadd.f32 %v3902, %v4044
      %v4120 = vadd.f32 %v3903, %v4044
      %v4121 = vadd.f32 %v3904, %v4044
      %v4122 = vadd.f32 %v3905, %v4044
      %v4123 = vadd.f32 %v3906, %v4044
      %v4124 = vadd.f32 %v3907, %v4044
      %v4125 = vadd.f32 %v3908, %v4044
      %v4126 = vadd.f32 %v3909, %v4044
      %v4127 = vadd.f32 %v3910, %v4044
      %v4128 = vadd.f32 %v3911, %v4044
      %v4129 = vadd.f32 %v3912, %v4044
      %v4130 = vadd.f32 %v3913, %v4044
      %v4131 = vadd.f32 %v3914, %v4044
      %v4132 = vadd.f32 %v3915, %v4044
      %v4133 = vadd.f32 %v3916, %v4044
      %v4134 = vadd.f32 %v3917, %v4044
      %v4135 = vadd.f32 %v3918, %v4044
      %v4136 = vadd.f32 %v3919, %v4044
      %v4137 = vadd.f32 %v3920, %v4044
      %v4138 = vadd.f32 %v3921, %v4044
      %v4139 = vadd.f32 %v3922, %v4044
      %v4140 = vadd.f32 %v3923, %v4044
      %v4141 = vadd.f32 %v3924, %v4044
      %v4142 = vadd.f32 %v3925, %v4044
      %v4143 = vadd.f32 %v3926, %v4044
      %v4144 = vadd.f32 %v3927, %v4044
      %v4145 = vadd.f32 %v3928, %v4044
      %v4146 = vadd.f32 %v3929, %v4044
      %v4147 = vadd.f32 %v3930, %v4044
      %v4148 = vadd.f32 %v3931, %v4044
      %v4149 = vadd.f32 %v3932, %v4044
      %v4150 = vadd.f32 %v3933, %v4044
      %v4151 = vadd.f32 %v3934, %v4044
      %v4152 = vadd.f32 %v3935, %v4044
      %v4153 = vadd.f32 %v3936, %v4044
      %v4154 = vadd.f32 %v3937, %v4044
      %v4155 = vadd.f32 %v3938, %v4044
      %v4156 = vadd.f32 %v3939, %v4044
      %v4157 = vadd.f32 %v3940, %v4044
      %v4158 = vadd.f32 %v3941, %v4044
      %v4159 = vadd.f32 %v3942, %v4044
      %v4160 = vadd.f32 %v3943, %v4044
      %v4161 = vadd.f32 %v3944, %v4044
      %v4162 = vadd.f32 %v3945, %v4044
      %v4163 = vadd.f32 %v3946, %v4044
      %v4164 = vadd.f32 %v3947, %v4044
      %v4165 = vadd.f32 %v3948, %v4044
      %v4166 = vadd.f32 %v3949, %v4044
      %v4167 = vadd.f32 %v3950, %v4044
      %v4168 = vadd.f32 %v3951, %v4044
      %v4169 = vadd.f32 %v3952, %v4044
      %v4170 = vadd.f32 %v3953, %v4044
      %v4171 = vadd.f32 %v3954, %v4044
      %v4172 = vadd.f32 %v3955, %v4044
      %v4173 = vadd.f32 %v3956, %v4044
      %v4174 = vadd.f32 %v3957, %v4044
      %v4175 = vadd.f32 %v3958, %v4044
      %v4176 = vadd.f32 %v3959, %v4044
      %v4177 = vadd.f32 %v3960, %v4044
      %v4178 = vadd.f32 %v3961, %v4044
      %v4179 = vadd.f32 %v3962, %v4044
      %v4180 = vadd.f32 %v3963, %v4044
      %v4181 = vadd.f32 %v3964, %v4044
      %v4182 = vadd.f32 %v3965, %v4044
      %v4183 = vadd.f32 %v3966, %v4044
      %v4184 = vadd.f32 %v3967, %v4044
      %v4185 = vadd.f32 %v3968, %v4044
      %v4186 = vadd.f32 %v3969, %v4044
      %v4187 = vadd.f32 %v3970, %v4044
      %v4188 = vadd.f32 %v3971, %v4044
      %v4189 = vadd.f32 %v3972, %v4044
      %v4190 = vadd.f32 %v3973, %v4044
      %v4191 = vadd.f32 %v3974, %v4044
      %v4192 = vadd.f32 %v3975, %v4044
      %v4193 = vadd.f32 %v3976, %v4044
      %v4194 = vadd.f32 %v3977, %v4044
      %v4195 = vadd.f32 %v3978, %v4044
      %v4196 = vadd.f32 %v3979, %v4044
      %v4197 = vadd.f32 %v3980, %v4044
      %v4198 = vadd.f32 %v3981, %v4044
      %v4199 = vadd.f32 %v3982, %v4044
      %v4200 = vadd.f32 %v3983, %v4044
      %v4201 = vadd.f32 %v3984, %v4044
      %v4202 = vadd.f32 %v3985, %v4044
      %v4203 = vadd.f32 %v3986, %v4044
      %v4204 = vadd.f32 %v3987, %v4044
      %v4205 = vadd.f32 %v3988, %v4044
      %v4206 = vadd.f32 %v3989, %v4044
      %v4207 = vadd.f32 %v3990, %v4044
      %v4208 = vadd.f32 %v3991, %v4044
      %v4209 = vadd.f32 %v3992, %v4044
      %v4210 = vadd.f32 %v3993, %v4044
      %v4211 = vadd.f32 %v3994, %v4044
      %v4212 = vadd.f32 %v3995, %v4044
      %v4213 = vadd.f32 %v3996, %v4044
      %v4214 = vadd.f32 %v3997, %v4044
      %v4215 = vadd.f32 %v3998, %v4044
      %v4216 = vadd.f32 %v3999, %v4044
      %v4217 = vadd.f32 %v4000, %v4044
      %v4218 = vadd.f32 %v4001, %v4044
      %v4219 = vadd.f32 %v4002, %v4044
      %v4220 = vadd.f32 %v4003, %v4044
      %v4221 = vadd.f32 %v4004, %v4044
      %v4222 = vadd.f32 %v4005, %v4044
      %v4223 = vadd.f32 %v4006, %v4044
      %v4224 = vadd.f32 %v4007, %v4044
      %v4225 = vadd.f32 %v4008, %v4044
      %v4226 = vadd.f32 %v4009, %v4044
      %v4227 = vadd.f32 %v4010, %v4044
      %v4228 = vadd.f32 %v4011, %v4044
      %v4229 = vadd.f32 %v4012, %v4044
      %v4230 = vadd.f32 %v4013, %v4044
      %v4231 = vadd.f32 %v4014, %v4044
      %v4232 = vadd.f32 %v4015, %v4044
      %v4233 = vadd.f32 %v4016, %v4044
      %v4234 = vadd.f32 %v4017, %v4044
      %v4235 = vadd.f32 %v4018, %v4044
      %v4236 = vadd.f32 %v4019, %v4044
      %v4237 = vadd.f32 %v4020, %v4044
      %v4238 = vadd.f32 %v4021, %v4044
      %v4239 = vadd.f32 %v4022, %v4044
      %v4240 = vadd.f32 %v4023, %v4044
      %v4241 = vadd.f32 %v4024, %v4044
      %v4242 = vadd.f32 %v4025, %v4044
      %v4243 = vadd.f32 %v4026, %v4044
      %v4244 = vadd.f32 %v4027, %v4044
      %v4245 = vadd.f32 %v4028, %v4044
      %v4246 = vadd.f32 %v4029, %v4044
      %v4247 = vadd.f32 %v4030, %v4044
      %v4248 = vadd.f32 %v4031, %v4044
      %v4249 = vadd.f32 %v4032, %v4044
      %v4250 = vadd.f32 %v4033, %v4044
      %v4251 = vadd.f32 %v4034, %v4044
      %v4252 = vadd.f32 %v4035, %v4044
      %v4253 = vadd.f32 %v4036, %v4044
      %v4254 = vadd.f32 %v4037, %v4044
      %v4255 = vadd.f32 %v4038, %v4044
      %v4256 = vadd.f32 %v4039, %v4044
      %v4257 = vadd.f32 %v4040, %v4044
      %v4258 = vadd.f32 %v4041, %v4044
      %v4259 = vadd.f32 %v4042, %v4044
      %v4260 = vadd.f32 %v4043, %v4044
      %v4261 = vpack.c.bf16 %v4045, %v4045
      %v4262 = vpack.c.bf16 %v4046, %v4046
      %v4263 = vpack.c.bf16 %v4047, %v4047
      %v4264 = vpack.c.bf16 %v4048, %v4048
      %v4265 = vpack.c.bf16 %v4049, %v4049
      %v4266 = vpack.c.bf16 %v4050, %v4050
      %v4267 = vpack.c.bf16 %v4051, %v4051
      %v4268 = vpack.c.bf16 %v4052, %v4052
      %v4269 = vpack.c.bf16 %v4053, %v4053
      %v4270 = vpack.c.bf16 %v4054, %v4054
      %v4271 = vpack.c.bf16 %v4055, %v4055
      %v4272 = vpack.c.bf16 %v4056, %v4056
      %v4273 = vpack.c.bf16 %v4057, %v4057
      %v4274 = vpack.c.bf16 %v4058, %v4058
      %v4275 = vpack.c.bf16 %v4059, %v4059
      %v4276 = vpack.c.bf16 %v4060, %v4060
      %v4277 = vpack.c.bf16 %v4061, %v4061
      %v4278 = vpack.c.bf16 %v4062, %v4062
      %v4279 = vpack.c.bf16 %v4063, %v4063
      %v4280 = vpack.c.bf16 %v4064, %v4064
      %v4281 = vpack.c.bf16 %v4065, %v4065
      %v4282 = vpack.c.bf16 %v4066, %v4066
      %v4283 = vpack.c.bf16 %v4067, %v4067
      %v4284 = vpack.c.bf16 %v4068, %v4068
      %v4285 = vpack.c.bf16 %v4069, %v4069
      %v4286 = vpack.c.bf16 %v4070, %v4070
      %v4287 = vpack.c.bf16 %v4071, %v4071
      %v4288 = vpack.c.bf16 %v4072, %v4072
      %v4289 = vpack.c.bf16 %v4073, %v4073
      %v4290 = vpack.c.bf16 %v4074, %v4074
      %v4291 = vpack.c.bf16 %v4075, %v4075
      %v4292 = vpack.c.bf16 %v4076, %v4076
      %v4293 = vpack.c.bf16 %v4077, %v4077
      %v4294 = vpack.c.bf16 %v4078, %v4078
      %v4295 = vpack.c.bf16 %v4079, %v4079
      %v4296 = vpack.c.bf16 %v4080, %v4080
      %v4297 = vpack.c.bf16 %v4081, %v4081
      %v4298 = vpack.c.bf16 %v4082, %v4082
      %v4299 = vpack.c.bf16 %v4083, %v4083
      %v4300 = vpack.c.bf16 %v4084, %v4084
      %v4301 = vpack.c.bf16 %v4085, %v4085
      %v4302 = vpack.c.bf16 %v4086, %v4086
      %v4303 = vpack.c.bf16 %v4087, %v4087
      %v4304 = vpack.c.bf16 %v4088, %v4088
      %v4305 = vpack.c.bf16 %v4089, %v4089
      %v4306 = vpack.c.bf16 %v4090, %v4090
      %v4307 = vpack.c.bf16 %v4091, %v4091
      %v4308 = vpack.c.bf16 %v4092, %v4092
      %v4309 = vpack.c.bf16 %v4093, %v4093
      %v4310 = vpack.c.bf16 %v4094, %v4094
      %v4311 = vpack.c.bf16 %v4095, %v4095
      %v4312 = vpack.c.bf16 %v4096, %v4096
      %v4313 = vpack.c.bf16 %v4097, %v4097
      %v4314 = vpack.c.bf16 %v4098, %v4098
      %v4315 = vpack.c.bf16 %v4099, %v4099
      %v4316 = vpack.c.bf16 %v4100, %v4100
      %v4317 = vpack.c.bf16 %v4101, %v4101
      %v4318 = vpack.c.bf16 %v4102, %v4102
      %v4319 = vpack.c.bf16 %v4103, %v4103
      %v4320 = vpack.c.bf16 %v4104, %v4104
      %v4321 = vpack.c.bf16 %v4105, %v4105
      %v4322 = vpack.c.bf16 %v4106, %v4106
      %v4323 = vpack.c.bf16 %v4107, %v4107
      %v4324 = vpack.c.bf16 %v4108, %v4108
      %v4325 = vpack.c.bf16 %v4109, %v4109
      %v4326 = vpack.c.bf16 %v4110, %v4110
      %v4327 = vpack.c.bf16 %v4111, %v4111
      %v4328 = vpack.c.bf16 %v4112, %v4112
      %v4329 = vpack.c.bf16 %v4113, %v4113
      %v4330 = vpack.c.bf16 %v4114, %v4114
      %v4331 = vpack.c.bf16 %v4115, %v4115
      %v4332 = vpack.c.bf16 %v4116, %v4116
      %v4333 = vpack.c.bf16 %v4117, %v4117
      %v4334 = vpack.c.bf16 %v4118, %v4118
      %v4335 = vpack.c.bf16 %v4119, %v4119
      %v4336 = vpack.c.bf16 %v4120, %v4120
      %v4337 = vpack.c.bf16 %v4121, %v4121
      %v4338 = vpack.c.bf16 %v4122, %v4122
      %v4339 = vpack.c.bf16 %v4123, %v4123
      %v4340 = vpack.c.bf16 %v4124, %v4124
      %v4341 = vpack.c.bf16 %v4125, %v4125
      %v4342 = vpack.c.bf16 %v4126, %v4126
      %v4343 = vpack.c.bf16 %v4127, %v4127
      %v4344 = vpack.c.bf16 %v4128, %v4128
      %v4345 = vpack.c.bf16 %v4129, %v4129
      %v4346 = vpack.c.bf16 %v4130, %v4130
      %v4347 = vpack.c.bf16 %v4131, %v4131
      %v4348 = vpack.c.bf16 %v4132, %v4132
      %v4349 = vpack.c.bf16 %v4133, %v4133
      %v4350 = vpack.c.bf16 %v4134, %v4134
      %v4351 = vpack.c.bf16 %v4135, %v4135
      %v4352 = vpack.c.bf16 %v4136, %v4136
      %v4353 = vpack.c.bf16 %v4137, %v4137
      %v4354 = vpack.c.bf16 %v4138, %v4138
      %v4355 = vpack.c.bf16 %v4139, %v4139
      %v4356 = vpack.c.bf16 %v4140, %v4140
      %v4357 = vpack.c.bf16 %v4141, %v4141
      %v4358 = vpack.c.bf16 %v4142, %v4142
      %v4359 = vpack.c.bf16 %v4143, %v4143
      %v4360 = vpack.c.bf16 %v4144, %v4144
      %v4361 = vpack.c.bf16 %v4145, %v4145
      %v4362 = vpack.c.bf16 %v4146, %v4146
      %v4363 = vpack.c.bf16 %v4147, %v4147
      %v4364 = vpack.c.bf16 %v4148, %v4148
      %v4365 = vpack.c.bf16 %v4149, %v4149
      %v4366 = vpack.c.bf16 %v4150, %v4150
      %v4367 = vpack.c.bf16 %v4151, %v4151
      %v4368 = vpack.c.bf16 %v4152, %v4152
      %v4369 = vpack.c.bf16 %v4153, %v4153
      %v4370 = vpack.c.bf16 %v4154, %v4154
      %v4371 = vpack.c.bf16 %v4155, %v4155
      %v4372 = vpack.c.bf16 %v4156, %v4156
      %v4373 = vpack.c.bf16 %v4157, %v4157
      %v4374 = vpack.c.bf16 %v4158, %v4158
      %v4375 = vpack.c.bf16 %v4159, %v4159
      %v4376 = vpack.c.bf16 %v4160, %v4160
      %v4377 = vpack.c.bf16 %v4161, %v4161
      %v4378 = vpack.c.bf16 %v4162, %v4162
      %v4379 = vpack.c.bf16 %v4163, %v4163
      %v4380 = vpack.c.bf16 %v4164, %v4164
      %v4381 = vpack.c.bf16 %v4165, %v4165
      %v4382 = vpack.c.bf16 %v4166, %v4166
      %v4383 = vpack.c.bf16 %v4167, %v4167
      %v4384 = vpack.c.bf16 %v4168, %v4168
      %v4385 = vpack.c.bf16 %v4169, %v4169
      %v4386 = vpack.c.bf16 %v4170, %v4170
      %v4387 = vpack.c.bf16 %v4171, %v4171
      %v4388 = vpack.c.bf16 %v4172, %v4172
      %v4389 = vpack.c.bf16 %v4173, %v4173
      %v4390 = vpack.c.bf16 %v4174, %v4174
      %v4391 = vpack.c.bf16 %v4175, %v4175
      %v4392 = vpack.c.bf16 %v4176, %v4176
      %v4393 = vpack.c.bf16 %v4177, %v4177
      %v4394 = vpack.c.bf16 %v4178, %v4178
      %v4395 = vpack.c.bf16 %v4179, %v4179
      %v4396 = vpack.c.bf16 %v4180, %v4180
      %v4397 = vpack.c.bf16 %v4181, %v4181
      %v4398 = vpack.c.bf16 %v4182, %v4182
      %v4399 = vpack.c.bf16 %v4183, %v4183
      %v4400 = vpack.c.bf16 %v4184, %v4184
      %v4401 = vpack.c.bf16 %v4185, %v4185
      %v4402 = vpack.c.bf16 %v4186, %v4186
      %v4403 = vpack.c.bf16 %v4187, %v4187
      %v4404 = vpack.c.bf16 %v4188, %v4188
      %v4405 = vpack.c.bf16 %v4189, %v4189
      %v4406 = vpack.c.bf16 %v4190, %v4190
      %v4407 = vpack.c.bf16 %v4191, %v4191
      %v4408 = vpack.c.bf16 %v4192, %v4192
      %v4409 = vpack.c.bf16 %v4193, %v4193
      %v4410 = vpack.c.bf16 %v4194, %v4194
      %v4411 = vpack.c.bf16 %v4195, %v4195
      %v4412 = vpack.c.bf16 %v4196, %v4196
      %v4413 = vpack.c.bf16 %v4197, %v4197
      %v4414 = vpack.c.bf16 %v4198, %v4198
      %v4415 = vpack.c.bf16 %v4199, %v4199
      %v4416 = vpack.c.bf16 %v4200, %v4200
      %v4417 = vpack.c.bf16 %v4201, %v4201
      %v4418 = vpack.c.bf16 %v4202, %v4202
      %v4419 = vpack.c.bf16 %v4203, %v4203
      %v4420 = vpack.c.bf16 %v4204, %v4204
      %v4421 = vpack.c.bf16 %v4205, %v4205
      %v4422 = vpack.c.bf16 %v4206, %v4206
      %v4423 = vpack.c.bf16 %v4207, %v4207
      %v4424 = vpack.c.bf16 %v4208, %v4208
      %v4425 = vpack.c.bf16 %v4209, %v4209
      %v4426 = vpack.c.bf16 %v4210, %v4210
      %v4427 = vpack.c.bf16 %v4211, %v4211
      %v4428 = vpack.c.bf16 %v4212, %v4212
      %v4429 = vpack.c.bf16 %v4213, %v4213
      %v4430 = vpack.c.bf16 %v4214, %v4214
      %v4431 = vpack.c.bf16 %v4215, %v4215
      %v4432 = vpack.c.bf16 %v4216, %v4216
      %v4433 = vpack.c.bf16 %v4217, %v4217
      %v4434 = vpack.c.bf16 %v4218, %v4218
      %v4435 = vpack.c.bf16 %v4219, %v4219
      %v4436 = vpack.c.bf16 %v4220, %v4220
      %v4437 = vpack.c.bf16 %v4221, %v4221
      %v4438 = vpack.c.bf16 %v4222, %v4222
      %v4439 = vpack.c.bf16 %v4223, %v4223
      %v4440 = vpack.c.bf16 %v4224, %v4224
      %v4441 = vpack.c.bf16 %v4225, %v4225
      %v4442 = vpack.c.bf16 %v4226, %v4226
      %v4443 = vpack.c.bf16 %v4227, %v4227
      %v4444 = vpack.c.bf16 %v4228, %v4228
      %v4445 = vpack.c.bf16 %v4229, %v4229
      %v4446 = vpack.c.bf16 %v4230, %v4230
      %v4447 = vpack.c.bf16 %v4231, %v4231
      %v4448 = vpack.c.bf16 %v4232, %v4232
      %v4449 = vpack.c.bf16 %v4233, %v4233
      %v4450 = vpack.c.bf16 %v4234, %v4234
      %v4451 = vpack.c.bf16 %v4235, %v4235
      %v4452 = vpack.c.bf16 %v4236, %v4236
      %v4453 = vpack.c.bf16 %v4237, %v4237
      %v4454 = vpack.c.bf16 %v4238, %v4238
      %v4455 = vpack.c.bf16 %v4239, %v4239
      %v4456 = vpack.c.bf16 %v4240, %v4240
      %v4457 = vpack.c.bf16 %v4241, %v4241
      %v4458 = vpack.c.bf16 %v4242, %v4242
      %v4459 = vpack.c.bf16 %v4243, %v4243
      %v4460 = vpack.c.bf16 %v4244, %v4244
      %v4461 = vpack.c.bf16 %v4245, %v4245
      %v4462 = vpack.c.bf16 %v4246, %v4246
      %v4463 = vpack.c.bf16 %v4247, %v4247
      %v4464 = vpack.c.bf16 %v4248, %v4248
      %v4465 = vpack.c.bf16 %v4249, %v4249
      %v4466 = vpack.c.bf16 %v4250, %v4250
      %v4467 = vpack.c.bf16 %v4251, %v4251
      %v4468 = vpack.c.bf16 %v4252, %v4252
      %v4469 = vpack.c.bf16 %v4253, %v4253
      %v4470 = vpack.c.bf16 %v4254, %v4254
      %v4471 = vpack.c.bf16 %v4255, %v4255
      %v4472 = vpack.c.bf16 %v4256, %v4256
      %v4473 = vpack.c.bf16 %v4257, %v4257
      %v4474 = vpack.c.bf16 %v4258, %v4258
      %v4475 = vpack.c.bf16 %v4259, %v4259
      %v4476 = vpack.c.bf16 %v4260, %v4260
      %4477 = vst [vmem:[%s170] sm:$0xf] %v4261
      %4478 = vst [vmem:[%s170 + $0x4] sm:$0xf] %v4262
      %4479 = vst [vmem:[%s170 + $0x8] sm:$0xf] %v4263
      %4480 = vst [vmem:[%s170 + $0xc] sm:$0xf] %v4264
      %4481 = vst [vmem:[%s170 + $0x10] sm:$0xf] %v4265
      %4482 = vst [vmem:[%s170 + $0x14] sm:$0xf] %v4266
      %4483 = vst [vmem:[%s170 + $0x18] sm:$0xf] %v4267
      %4484 = vst [vmem:[%s170 + $0x1c] sm:$0xf] %v4268
      %4485 = vst [vmem:[%s170 + $0x20] sm:$0xf] %v4269
      %4486 = vst [vmem:[%s170 + $0x24] sm:$0xf] %v4270
      %4487 = vst [vmem:[%s170 + $0x28] sm:$0xf] %v4271
      %4488 = vst [vmem:[%s170 + $0x2c] sm:$0xf] %v4272
      %4489 = vst [vmem:[%s170 + $0x30] sm:$0xf] %v4273
      %4490 = vst [vmem:[%s170 + $0x34] sm:$0xf] %v4274
      %4491 = vst [vmem:[%s170 + $0x38] sm:$0xf] %v4275
      %4492 = vst [vmem:[%s170 + $0x3c] sm:$0xf] %v4276
      %4493 = vst [vmem:[%s170 + $0x40] sm:$0xf] %v4277
      %4494 = vst [vmem:[%s170 + $0x44] sm:$0xf] %v4278
      %4495 = vst [vmem:[%s170 + $0x48] sm:$0xf] %v4279
      %4496 = vst [vmem:[%s170 + $0x4c] sm:$0xf] %v4280
      %4497 = vst [vmem:[%s170 + $0x50] sm:$0xf] %v4281
      %4498 = vst [vmem:[%s170 + $0x54] sm:$0xf] %v4282
      %4499 = vst [vmem:[%s170 + $0x58] sm:$0xf] %v4283
      %4500 = vst [vmem:[%s170 + $0x5c] sm:$0xf] %v4284
      %4501 = vst [vmem:[%s170 + $0x60] sm:$0xf] %v4285
      %4502 = vst [vmem:[%s170 + $0x64] sm:$0xf] %v4286
      %4503 = vst [vmem:[%s170 + $0x68] sm:$0xf] %v4287
      %4504 = vst [vmem:[%s170 + $0x6c] sm:$0xf] %v4288
      %4505 = vst [vmem:[%s170 + $0x70] sm:$0xf] %v4289
      %4506 = vst [vmem:[%s170 + $0x74] sm:$0xf] %v4290
      %4507 = vst [vmem:[%s170 + $0x78] sm:$0xf] %v4291
      %4508 = vst [vmem:[%s170 + $0x7c] sm:$0xf] %v4292
      %4509 = vst [vmem:[%s170 + $0x80] sm:$0xf] %v4293
      %4510 = vst [vmem:[%s170 + $0x84] sm:$0xf] %v4294
      %4511 = vst [vmem:[%s170 + $0x88] sm:$0xf] %v4295
      %4512 = vst [vmem:[%s170 + $0x8c] sm:$0xf] %v4296
      %4513 = vst [vmem:[%s170 + $0x90] sm:$0xf] %v4297
      %4514 = vst [vmem:[%s170 + $0x94] sm:$0xf] %v4298
      %4515 = vst [vmem:[%s170 + $0x98] sm:$0xf] %v4299
      %4516 = vst [vmem:[%s170 + $0x9c] sm:$0xf] %v4300
      %4517 = vst [vmem:[%s170 + $0xa0] sm:$0xf] %v4301
      %4518 = vst [vmem:[%s170 + $0xa4] sm:$0xf] %v4302
      %4519 = vst [vmem:[%s170 + $0xa8] sm:$0xf] %v4303
      %4520 = vst [vmem:[%s170 + $0xac] sm:$0xf] %v4304
      %4521 = vst [vmem:[%s170 + $0xb0] sm:$0xf] %v4305
      %4522 = vst [vmem:[%s170 + $0xb4] sm:$0xf] %v4306
      %4523 = vst [vmem:[%s170 + $0xb8] sm:$0xf] %v4307
      %4524 = vst [vmem:[%s170 + $0xbc] sm:$0xf] %v4308
      %4525 = vst [vmem:[%s170 + $0xc0] sm:$0xf] %v4309
      %4526 = vst [vmem:[%s170 + $0xc4] sm:$0xf] %v4310
      %4527 = vst [vmem:[%s170 + $0xc8] sm:$0xf] %v4311
      %4528 = vst [vmem:[%s170 + $0xcc] sm:$0xf] %v4312
      %4529 = vst [vmem:[%s170 + $0xd0] sm:$0xf] %v4313
      %4530 = vst [vmem:[%s170 + $0xd4] sm:$0xf] %v4314
      %4531 = vst [vmem:[%s170 + $0xd8] sm:$0xf] %v4315
      %4532 = vst [vmem:[%s170 + $0xdc] sm:$0xf] %v4316
      %4533 = vst [vmem:[%s170 + $0xe0] sm:$0xf] %v4317
      %4534 = vst [vmem:[%s170 + $0xe4] sm:$0xf] %v4318
      %4535 = vst [vmem:[%s170 + $0xe8] sm:$0xf] %v4319
      %4536 = vst [vmem:[%s170 + $0xec] sm:$0xf] %v4320
      %4537 = vst [vmem:[%s170 + $0xf0] sm:$0xf] %v4321
      %4538 = vst [vmem:[%s170 + $0xf4] sm:$0xf] %v4322
      %4539 = vst [vmem:[%s170 + $0xf8] sm:$0xf] %v4323
      %4540 = vst [vmem:[%s170 + $0xfc] sm:$0xf] %v4324
      %4541 = vst [vmem:[%s170 + $0x100] sm:$0xf] %v4325
      %4542 = vst [vmem:[%s170 + $0x104] sm:$0xf] %v4326
      %4543 = vst [vmem:[%s170 + $0x108] sm:$0xf] %v4327
      %4544 = vst [vmem:[%s170 + $0x10c] sm:$0xf] %v4328
      %4545 = vst [vmem:[%s170 + $0x110] sm:$0xf] %v4329
      %4546 = vst [vmem:[%s170 + $0x114] sm:$0xf] %v4330
      %4547 = vst [vmem:[%s170 + $0x118] sm:$0xf] %v4331
      %4548 = vst [vmem:[%s170 + $0x11c] sm:$0xf] %v4332
      %4549 = vst [vmem:[%s170 + $0x120] sm:$0xf] %v4333
      %4550 = vst [vmem:[%s170 + $0x124] sm:$0xf] %v4334
      %4551 = vst [vmem:[%s170 + $0x128] sm:$0xf] %v4335
      %4552 = vst [vmem:[%s170 + $0x12c] sm:$0xf] %v4336
      %4553 = vst [vmem:[%s170 + $0x130] sm:$0xf] %v4337
      %4554 = vst [vmem:[%s170 + $0x134] sm:$0xf] %v4338
      %4555 = vst [vmem:[%s170 + $0x138] sm:$0xf] %v4339
      %4556 = vst [vmem:[%s170 + $0x13c] sm:$0xf] %v4340
      %4557 = vst [vmem:[%s170 + $0x140] sm:$0xf] %v4341
      %4558 = vst [vmem:[%s170 + $0x144] sm:$0xf] %v4342
      %4559 = vst [vmem:[%s170 + $0x148] sm:$0xf] %v4343
      %4560 = vst [vmem:[%s170 + $0x14c] sm:$0xf] %v4344
      %4561 = vst [vmem:[%s170 + $0x150] sm:$0xf] %v4345
      %4562 = vst [vmem:[%s170 + $0x154] sm:$0xf] %v4346
      %4563 = vst [vmem:[%s170 + $0x158] sm:$0xf] %v4347
      %4564 = vst [vmem:[%s170 + $0x15c] sm:$0xf] %v4348
      %4565 = vst [vmem:[%s170 + $0x160] sm:$0xf] %v4349
      %4566 = vst [vmem:[%s170 + $0x164] sm:$0xf] %v4350
      %4567 = vst [vmem:[%s170 + $0x168] sm:$0xf] %v4351
      %4568 = vst [vmem:[%s170 + $0x16c] sm:$0xf] %v4352
      %4569 = vst [vmem:[%s170 + $0x170] sm:$0xf] %v4353
      %4570 = vst [vmem:[%s170 + $0x174] sm:$0xf] %v4354
      %4571 = vst [vmem:[%s170 + $0x178] sm:$0xf] %v4355
      %4572 = vst [vmem:[%s170 + $0x17c] sm:$0xf] %v4356
      %4573 = vst [vmem:[%s170 + $0x180] sm:$0xf] %v4357
      %4574 = vst [vmem:[%s170 + $0x184] sm:$0xf] %v4358
      %4575 = vst [vmem:[%s170 + $0x188] sm:$0xf] %v4359
      %4576 = vst [vmem:[%s170 + $0x18c] sm:$0xf] %v4360
      %4577 = vst [vmem:[%s170 + $0x190] sm:$0xf] %v4361
      %4578 = vst [vmem:[%s170 + $0x194] sm:$0xf] %v4362
      %4579 = vst [vmem:[%s170 + $0x198] sm:$0xf] %v4363
      %4580 = vst [vmem:[%s170 + $0x19c] sm:$0xf] %v4364
      %4581 = vst [vmem:[%s170 + $0x1a0] sm:$0xf] %v4365
      %4582 = vst [vmem:[%s170 + $0x1a4] sm:$0xf] %v4366
      %4583 = vst [vmem:[%s170 + $0x1a8] sm:$0xf] %v4367
      %4584 = vst [vmem:[%s170 + $0x1ac] sm:$0xf] %v4368
      %4585 = vst [vmem:[%s170 + $0x1b0] sm:$0xf] %v4369
      %4586 = vst [vmem:[%s170 + $0x1b4] sm:$0xf] %v4370
      %4587 = vst [vmem:[%s170 + $0x1b8] sm:$0xf] %v4371
      %4588 = vst [vmem:[%s170 + $0x1bc] sm:$0xf] %v4372
      %4589 = vst [vmem:[%s170 + $0x1c0] sm:$0xf] %v4373
      %4590 = vst [vmem:[%s170 + $0x1c4] sm:$0xf] %v4374
      %4591 = vst [vmem:[%s170 + $0x1c8] sm:$0xf] %v4375
      %4592 = vst [vmem:[%s170 + $0x1cc] sm:$0xf] %v4376
      %4593 = vst [vmem:[%s170 + $0x1d0] sm:$0xf] %v4377
      %4594 = vst [vmem:[%s170 + $0x1d4] sm:$0xf] %v4378
      %4595 = vst [vmem:[%s170 + $0x1d8] sm:$0xf] %v4379
      %4596 = vst [vmem:[%s170 + $0x1dc] sm:$0xf] %v4380
      %4597 = vst [vmem:[%s170 + $0x1e0] sm:$0xf] %v4381
      %4598 = vst [vmem:[%s170 + $0x1e4] sm:$0xf] %v4382
      %4599 = vst [vmem:[%s170 + $0x1e8] sm:$0xf] %v4383
      %4600 = vst [vmem:[%s170 + $0x1ec] sm:$0xf] %v4384
      %4601 = vst [vmem:[%s170 + $0x1f0] sm:$0xf] %v4385
      %4602 = vst [vmem:[%s170 + $0x1f4] sm:$0xf] %v4386
      %4603 = vst [vmem:[%s170 + $0x1f8] sm:$0xf] %v4387
      %4604 = vst [vmem:[%s170 + $0x1fc] sm:$0xf] %v4388
      %4605 = vst [vmem:[%s170 + $0x200] sm:$0xf] %v4389
      %4606 = vst [vmem:[%s170 + $0x204] sm:$0xf] %v4390
      %4607 = vst [vmem:[%s170 + $0x208] sm:$0xf] %v4391
      %4608 = vst [vmem:[%s170 + $0x20c] sm:$0xf] %v4392
      %4609 = vst [vmem:[%s170 + $0x210] sm:$0xf] %v4393
      %4610 = vst [vmem:[%s170 + $0x214] sm:$0xf] %v4394
      %4611 = vst [vmem:[%s170 + $0x218] sm:$0xf] %v4395
      %4612 = vst [vmem:[%s170 + $0x21c] sm:$0xf] %v4396
      %4613 = vst [vmem:[%s170 + $0x220] sm:$0xf] %v4397
      %4614 = vst [vmem:[%s170 + $0x224] sm:$0xf] %v4398
      %4615 = vst [vmem:[%s170 + $0x228] sm:$0xf] %v4399
      %4616 = vst [vmem:[%s170 + $0x22c] sm:$0xf] %v4400
      %4617 = vst [vmem:[%s170 + $0x230] sm:$0xf] %v4401
      %4618 = vst [vmem:[%s170 + $0x234] sm:$0xf] %v4402
      %4619 = vst [vmem:[%s170 + $0x238] sm:$0xf] %v4403
      %4620 = vst [vmem:[%s170 + $0x23c] sm:$0xf] %v4404
      %4621 = vst [vmem:[%s170 + $0x240] sm:$0xf] %v4405
      %4622 = vst [vmem:[%s170 + $0x244] sm:$0xf] %v4406
      %4623 = vst [vmem:[%s170 + $0x248] sm:$0xf] %v4407
      %4624 = vst [vmem:[%s170 + $0x24c] sm:$0xf] %v4408
      %4625 = vst [vmem:[%s170 + $0x250] sm:$0xf] %v4409
      %4626 = vst [vmem:[%s170 + $0x254] sm:$0xf] %v4410
      %4627 = vst [vmem:[%s170 + $0x258] sm:$0xf] %v4411
      %4628 = vst [vmem:[%s170 + $0x25c] sm:$0xf] %v4412
      %4629 = vst [vmem:[%s170 + $0x260] sm:$0xf] %v4413
      %4630 = vst [vmem:[%s170 + $0x264] sm:$0xf] %v4414
      %4631 = vst [vmem:[%s170 + $0x268] sm:$0xf] %v4415
      %4632 = vst [vmem:[%s170 + $0x26c] sm:$0xf] %v4416
      %4633 = vst [vmem:[%s170 + $0x270] sm:$0xf] %v4417
      %4634 = vst [vmem:[%s170 + $0x274] sm:$0xf] %v4418
      %4635 = vst [vmem:[%s170 + $0x278] sm:$0xf] %v4419
      %4636 = vst [vmem:[%s170 + $0x27c] sm:$0xf] %v4420
      %4637 = vst [vmem:[%s170 + $0x280] sm:$0xf] %v4421
      %4638 = vst [vmem:[%s170 + $0x284] sm:$0xf] %v4422
      %4639 = vst [vmem:[%s170 + $0x288] sm:$0xf] %v4423
      %4640 = vst [vmem:[%s170 + $0x28c] sm:$0xf] %v4424
      %4641 = vst [vmem:[%s170 + $0x290] sm:$0xf] %v4425
      %4642 = vst [vmem:[%s170 + $0x294] sm:$0xf] %v4426
      %4643 = vst [vmem:[%s170 + $0x298] sm:$0xf] %v4427
      %4644 = vst [vmem:[%s170 + $0x29c] sm:$0xf] %v4428
      %4645 = vst [vmem:[%s170 + $0x2a0] sm:$0xf] %v4429
      %4646 = vst [vmem:[%s170 + $0x2a4] sm:$0xf] %v4430
      %4647 = vst [vmem:[%s170 + $0x2a8] sm:$0xf] %v4431
      %4648 = vst [vmem:[%s170 + $0x2ac] sm:$0xf] %v4432
      %4649 = vst [vmem:[%s170 + $0x2b0] sm:$0xf] %v4433
      %4650 = vst [vmem:[%s170 + $0x2b4] sm:$0xf] %v4434
      %4651 = vst [vmem:[%s170 + $0x2b8] sm:$0xf] %v4435
      %4652 = vst [vmem:[%s170 + $0x2bc] sm:$0xf] %v4436
      %4653 = vst [vmem:[%s170 + $0x2c0] sm:$0xf] %v4437
      %4654 = vst [vmem:[%s170 + $0x2c4] sm:$0xf] %v4438
      %4655 = vst [vmem:[%s170 + $0x2c8] sm:$0xf] %v4439
      %4656 = vst [vmem:[%s170 + $0x2cc] sm:$0xf] %v4440
      %4657 = vst [vmem:[%s170 + $0x2d0] sm:$0xf] %v4441
      %4658 = vst [vmem:[%s170 + $0x2d4] sm:$0xf] %v4442
      %4659 = vst [vmem:[%s170 + $0x2d8] sm:$0xf] %v4443
      %4660 = vst [vmem:[%s170 + $0x2dc] sm:$0xf] %v4444
      %4661 = vst [vmem:[%s170 + $0x2e0] sm:$0xf] %v4445
      %4662 = vst [vmem:[%s170 + $0x2e4] sm:$0xf] %v4446
      %4663 = vst [vmem:[%s170 + $0x2e8] sm:$0xf] %v4447
      %4664 = vst [vmem:[%s170 + $0x2ec] sm:$0xf] %v4448
      %4665 = vst [vmem:[%s170 + $0x2f0] sm:$0xf] %v4449
      %4666 = vst [vmem:[%s170 + $0x2f4] sm:$0xf] %v4450
      %4667 = vst [vmem:[%s170 + $0x2f8] sm:$0xf] %v4451
      %4668 = vst [vmem:[%s170 + $0x2fc] sm:$0xf] %v4452
      %4669 = vst [vmem:[%s170 + $0x300] sm:$0xf] %v4453
      %4670 = vst [vmem:[%s170 + $0x304] sm:$0xf] %v4454
      %4671 = vst [vmem:[%s170 + $0x308] sm:$0xf] %v4455
      %4672 = vst [vmem:[%s170 + $0x30c] sm:$0xf] %v4456
      %4673 = vst [vmem:[%s170 + $0x310] sm:$0xf] %v4457
      %4674 = vst [vmem:[%s170 + $0x314] sm:$0xf] %v4458
      %4675 = vst [vmem:[%s170 + $0x318] sm:$0xf] %v4459
      %4676 = vst [vmem:[%s170 + $0x31c] sm:$0xf] %v4460
      %4677 = vst [vmem:[%s170 + $0x320] sm:$0xf] %v4461
      %4678 = vst [vmem:[%s170 + $0x324] sm:$0xf] %v4462
      %4679 = vst [vmem:[%s170 + $0x328] sm:$0xf] %v4463
      %4680 = vst [vmem:[%s170 + $0x32c] sm:$0xf] %v4464
      %4681 = vst [vmem:[%s170 + $0x330] sm:$0xf] %v4465
      %4682 = vst [vmem:[%s170 + $0x334] sm:$0xf] %v4466
      %4683 = vst [vmem:[%s170 + $0x338] sm:$0xf] %v4467
      %4684 = vst [vmem:[%s170 + $0x33c] sm:$0xf] %v4468
      %4685 = vst [vmem:[%s170 + $0x340] sm:$0xf] %v4469
      %4686 = vst [vmem:[%s170 + $0x344] sm:$0xf] %v4470
      %4687 = vst [vmem:[%s170 + $0x348] sm:$0xf] %v4471
      %4688 = vst [vmem:[%s170 + $0x34c] sm:$0xf] %v4472
      %4689 = vst [vmem:[%s170 + $0x350] sm:$0xf] %v4473
      %4690 = vst [vmem:[%s170 + $0x354] sm:$0xf] %v4474
      %4691 = vst [vmem:[%s170 + $0x358] sm:$0xf] %v4475
      %4692 = vst [vmem:[%s170 + $0x35c] sm:$0xf] %v4476
      %p4693 = scmp.lt.s32.totalorder %s14, 1
      %s4694 = scalar_select %p4693, %s14, 1
      %s4695 = smul.addr %s4694, 216
      %s4696 = smul.addr %s4695, 4
      %s4697 = scalar_lea.vmem %s3, %s4696
      // Predicated region
      $region33: #{_encoder_forward.2} parent=31 // pred_check
        %p4698 = pneg %p100
      $region34: #{_encoder_forward.2} parent=31 // pred_check_branch
        %4700 = sbr.rel (%p4698) target = $region36
      $region35: #{_encoder_forward.2} parent=31 // pred_region
        _
      $region36: #{_encoder_forward.2} parent=31 // pred_fallthru
        _
    $region32: #{_encoder_forward.2} parent=5 // pred_fallthru
      _
    %p4701 = scmp.le.s32.totalorder 2, %s9
    // Predicated region
    $region37: #{_encoder_forward.2} parent=5 // pred_check
      %p4702 = pneg %p4701
    $region38: #{_encoder_forward.2} parent=5 // pred_check_branch
      %4704 = sbr.rel (%p4702) target = $region40
    $region39: #{_encoder_forward.2} parent=5 // pred_region
      %s4705 = ssub.s32 %s9, 2
      // Predicated region
      $region41: #{_encoder_forward.2} parent=39 // pred_check
        %p4706 = pneg %p106
      $region42: #{_encoder_forward.2} parent=39 // pred_check_branch
        %4708 = sbr.rel (%p4706) target = $region44
      $region43: #{_encoder_forward.2} parent=39 // pred_region
        %p4709 = scmp.lt.s32.totalorder %s15, 1
        %s4710 = scalar_select %p4709, %s15, 1
        %s4711 = smul.addr %s4710, 216
        %s4712 = smul.addr %s4711, 4
        %s4713 = scalar_lea.vmem %s3, %s4712
      $region44: #{_encoder_forward.2} parent=39 // pred_fallthru
        _
    $region40: #{_encoder_forward.2} parent=5 // pred_fallthru
      _
  $region6: #{_encoder_forward.2} parent=0 // loop_footer
    %s13 = sadd.s32 1, %s9
  $region7: #{_encoder_forward.2} parent=0 // loop_footer_branch
    %8 = sbr.rel target = $region3
  $region8: #{_encoder_forward.2} parent=0 // loop_exit
    _

// kernel: _encoder_forward.3
$region0: #{_encoder_forward.3}
  #allocation0 [shape = 'u32[]', space=smem, size = 0x4, offset = 0x4, fixed_abs, tag = 'smem constant byte address 0x4 - core index']
  #allocation1 [shape = 'u32[72,128]{1,0:T(1,128)}', space=vmem, size = 0x9000, scoped, tag = 'internal scratch']
  %s0 = inlined_call_operand.vmem [shape: bf16[2,8,27,384], index: 0, kind: input, shape index: {}]
  %s1 = inlined_call_operand.vmem [shape: bf16[384,128], index: 1, kind: input, shape index: {}]
  %s2 = inlined_call_operand.vmem [shape: f32[8,128], index: 2, kind: input, shape index: {}]
  %s3 = inlined_call_operand.vmem [shape: bf16[8,128,256], index: 3, kind: input, shape index: {}]
  %s4 = inlined_call_operand.vmem [shape: f32[8,256], index: 4, kind: input, shape index: {}]
  %s5 = inlined_call_operand.vmem [shape: bf16[256,384], index: 5, kind: input, shape index: {}]
  %s6 = inlined_call_operand.vmem [shape: f32[8,384], index: 6, kind: input, shape index: {}]
  %s7 = inlined_call_operand.vmem [shape: f32[1,27,384], index: 7, kind: input, shape index: {}]
  %s8 = inlined_call_operand.vmem [shape: f32[2,8,27,128], index: 8, kind: output, shape index: {0}]
  %s9 = inlined_call_operand.vmem [shape: f32[2,27,256], index: 9, kind: output, shape index: {1}]
  %s10 = inlined_call_operand.vmem [shape: f32[2,27,384], index: 10, kind: output, shape index: {2}]
  %11 = xla_tuple %s8, %s9, %s10
  %s12 = sld [smem:[#allocation0]]
  $region81: #{_encoder_forward.3} parent=0
    _
  %s14 = ssub.s32 1, %s12
  %s15 = scalar_select 0, %s14, %s12
  loop: start=0, step=1, limit=4
  $region2: #{_encoder_forward.3} parent=0 // loop_pre_header
    _
  $region3: #{_encoder_forward.3} parent=0 // loop_header
    %s17 = sphi 0, %s21
    %p18 = scmp.ge.s32.totalorder %s17, 4
    %s27 = sphi 0, %s29
    %s30 = sphi 0, %s27
    %s31 = sphi 0, %s30
    %s47 = sphi 0, %s31
    %s51 = sphi 0, %s51
    %s53 = sphi 0, %s51
    %s54 = sphi 0, %s53
    %s68 = sphi 0, %s54
    %s72 = sphi 0, %s72
    %s74 = sphi 0, %s72
    %s75 = sphi 0, %s74
    %s89 = sphi 0, %s75
    %s93 = sphi 0, %s93
    %s95 = sphi 0, %s93
    %s96 = sphi 0, %s95
    %s110 = sphi 0, %s96
    %s114 = sphi 0, %s114
    %s116 = sphi 0, %s114
    %s117 = sphi 0, %s116
    %s131 = sphi 0, %s117
    %s135 = sphi 0, %s135
    %s137 = sphi 0, %s135
    %s138 = sphi 0, %s137
    %s152 = sphi 0, %s138
    %s156 = sphi 0, %s156
    %s158 = sphi 0, %s156
    %s159 = sphi 0, %s158
    %s173 = sphi 0, %s159
    %s177 = sphi 0, %s177
    %s179 = sphi 0, %s177
    %s180 = sphi 0, %s179
    %s194 = sphi 0, %s180
    %s200 = sphi 0, %s202
    %s203 = sphi 0, %s200
    %s204 = sphi 0, %s203
    %s220 = sphi 0, %s204
    %s226 = sphi 0, %s228
    %s229 = sphi 0, %s226
    %s230 = sphi 0, %s229
    %s246 = sphi 0, %s230
    %s252 = sphi 0, %s254
    %s255 = sphi 0, %s252
    %s256 = sphi 0, %s255
    %s272 = sphi 0, %s256
  $region4: #{_encoder_forward.3} parent=0 // loop_header_branch
    %20 = sbr.rel (%p18) target = $region8
  $region5: #{_encoder_forward.3} parent=0 // loop_body
    %s22 = ssub.s32 %s17, 1
    %s23 = ssub.s32 %s17, 2
    %s24 = sadd.s32 %s17, 1
    %s25 = ssub.s32 %s17, %s24
    %p26 = scmp.eq.s32.totalorder %s25, 0
    %s28 = sadd.s32 %s27, 1
    %s29 = scalar_select %p26, %s27, %s28
    %p32 = pneg %p26
    %p33 = scmp.eq.s32.totalorder %s17, 1
    %p34 = por %p32, %p33
    %p35 = scmp.ne.s32.totalorder %s27, %s30
    %p36 = scmp.eq.s32.totalorder %s17, 0
    %p37 = por %p35, %p36
    %p38 = scmp.ne.s32.totalorder %s27, %s30
    %p39 = scmp.eq.s32.totalorder %s22, 1
    %p40 = por %p38, %p39
    %p41 = scmp.ne.s32.totalorder %s30, %s31
    %p42 = scmp.eq.s32.totalorder %s22, 0
    %p43 = por %p41, %p42
    %p44 = scmp.ne.s32.totalorder %s30, %s31
    %p45 = scmp.eq.s32.totalorder %s23, 1
    %p46 = por %p44, %p45
    %p48 = scmp.ne.s32.totalorder %s31, %s47
    %p49 = scmp.eq.s32.totalorder %s23, 0
    %p50 = por %p48, %p49
    %s52 = sadd.s32 %s51, 1
    %p55 = scmp.eq.s32.totalorder %s17, 1
    %p56 = scmp.ne.s32.totalorder %s51, %s53
    %p57 = scmp.eq.s32.totalorder %s17, 0
    %p58 = por %p56, %p57
    %p59 = scmp.ne.s32.totalorder %s51, %s53
    %p60 = scmp.eq.s32.totalorder %s22, 1
    %p61 = por %p59, %p60
    %p62 = scmp.ne.s32.totalorder %s53, %s54
    %p63 = scmp.eq.s32.totalorder %s22, 0
    %p64 = por %p62, %p63
    %p65 = scmp.ne.s32.totalorder %s53, %s54
    %p66 = scmp.eq.s32.totalorder %s23, 1
    %p67 = por %p65, %p66
    %p69 = scmp.ne.s32.totalorder %s54, %s68
    %p70 = scmp.eq.s32.totalorder %s23, 0
    %p71 = por %p69, %p70
    %s73 = sadd.s32 %s72, 1
    %p76 = scmp.eq.s32.totalorder %s17, 1
    %p77 = scmp.ne.s32.totalorder %s72, %s74
    %p78 = scmp.eq.s32.totalorder %s17, 0
    %p79 = por %p77, %p78
    %p80 = scmp.ne.s32.totalorder %s72, %s74
    %p81 = scmp.eq.s32.totalorder %s22, 1
    %p82 = por %p80, %p81
    %p83 = scmp.ne.s32.totalorder %s74, %s75
    %p84 = scmp.eq.s32.totalorder %s22, 0
    %p85 = por %p83, %p84
    %p86 = scmp.ne.s32.totalorder %s74, %s75
    %p87 = scmp.eq.s32.totalorder %s23, 1
    %p88 = por %p86, %p87
    %p90 = scmp.ne.s32.totalorder %s75, %s89
    %p91 = scmp.eq.s32.totalorder %s23, 0
    %p92 = por %p90, %p91
    %s94 = sadd.s32 %s93, 1
    %p97 = scmp.eq.s32.totalorder %s17, 1
    %p98 = scmp.ne.s32.totalorder %s93, %s95
    %p99 = scmp.eq.s32.totalorder %s17, 0
    %p100 = por %p98, %p99
    %p101 = scmp.ne.s32.totalorder %s93, %s95
    %p102 = scmp.eq.s32.totalorder %s22, 1
    %p103 = por %p101, %p102
    %p104 = scmp.ne.s32.totalorder %s95, %s96
    %p105 = scmp.eq.s32.totalorder %s22, 0
    %p106 = por %p104, %p105
    %p107 = scmp.ne.s32.totalorder %s95, %s96
    %p108 = scmp.eq.s32.totalorder %s23, 1
    %p109 = por %p107, %p108
    %p111 = scmp.ne.s32.totalorder %s96, %s110
    %p112 = scmp.eq.s32.totalorder %s23, 0
    %p113 = por %p111, %p112
    %s115 = sadd.s32 %s114, 1
    %p118 = scmp.eq.s32.totalorder %s17, 1
    %p119 = scmp.ne.s32.totalorder %s114, %s116
    %p120 = scmp.eq.s32.totalorder %s17, 0
    %p121 = por %p119, %p120
    %p122 = scmp.ne.s32.totalorder %s114, %s116
    %p123 = scmp.eq.s32.totalorder %s22, 1
    %p124 = por %p122, %p123
    %p125 = scmp.ne.s32.totalorder %s116, %s117
    %p126 = scmp.eq.s32.totalorder %s22, 0
    %p127 = por %p125, %p126
    %p128 = scmp.ne.s32.totalorder %s116, %s117
    %p129 = scmp.eq.s32.totalorder %s23, 1
    %p130 = por %p128, %p129
    %p132 = scmp.ne.s32.totalorder %s117, %s131
    %p133 = scmp.eq.s32.totalorder %s23, 0
    %p134 = por %p132, %p133
    %s136 = sadd.s32 %s135, 1
    %p139 = scmp.eq.s32.totalorder %s17, 1
    %p140 = scmp.ne.s32.totalorder %s135, %s137
    %p141 = scmp.eq.s32.totalorder %s17, 0
    %p142 = por %p140, %p141
    %p143 = scmp.ne.s32.totalorder %s135, %s137
    %p144 = scmp.eq.s32.totalorder %s22, 1
    %p145 = por %p143, %p144
    %p146 = scmp.ne.s32.totalorder %s137, %s138
    %p147 = scmp.eq.s32.totalorder %s22, 0
    %p148 = por %p146, %p147
    %p149 = scmp.ne.s32.totalorder %s137, %s138
    %p150 = scmp.eq.s32.totalorder %s23, 1
    %p151 = por %p149, %p150
    %p153 = scmp.ne.s32.totalorder %s138, %s152
    %p154 = scmp.eq.s32.totalorder %s23, 0
    %p155 = por %p153, %p154
    %s157 = sadd.s32 %s156, 1
    %p160 = scmp.eq.s32.totalorder %s17, 1
    %p161 = scmp.ne.s32.totalorder %s156, %s158
    %p162 = scmp.eq.s32.totalorder %s17, 0
    %p163 = por %p161, %p162
    %p164 = scmp.ne.s32.totalorder %s156, %s158
    %p165 = scmp.eq.s32.totalorder %s22, 1
    %p166 = por %p164, %p165
    %p167 = scmp.ne.s32.totalorder %s158, %s159
    %p168 = scmp.eq.s32.totalorder %s22, 0
    %p169 = por %p167, %p168
    %p170 = scmp.ne.s32.totalorder %s158, %s159
    %p171 = scmp.eq.s32.totalorder %s23, 1
    %p172 = por %p170, %p171
    %p174 = scmp.ne.s32.totalorder %s159, %s173
    %p175 = scmp.eq.s32.totalorder %s23, 0
    %p176 = por %p174, %p175
    %s178 = sadd.s32 %s177, 1
    %p181 = scmp.eq.s32.totalorder %s17, 1
    %p182 = scmp.ne.s32.totalorder %s177, %s179
    %p183 = scmp.eq.s32.totalorder %s17, 0
    %p184 = por %p182, %p183
    %p185 = scmp.ne.s32.totalorder %s177, %s179
    %p186 = scmp.eq.s32.totalorder %s22, 1
    %p187 = por %p185, %p186
    %p188 = scmp.ne.s32.totalorder %s179, %s180
    %p189 = scmp.eq.s32.totalorder %s22, 0
    %p190 = por %p188, %p189
    %p191 = scmp.ne.s32.totalorder %s179, %s180
    %p192 = scmp.eq.s32.totalorder %s23, 1
    %p193 = por %p191, %p192
    %p195 = scmp.ne.s32.totalorder %s180, %s194
    %p196 = scmp.eq.s32.totalorder %s23, 0
    %p197 = por %p195, %p196
    %s198 = ssub.s32 %s17, %s24
    %p199 = scmp.eq.s32.totalorder %s198, 0
    %s201 = sadd.s32 %s200, 1
    %s202 = scalar_select %p199, %s200, %s201
    %p205 = pneg %p199
    %p206 = scmp.eq.s32.totalorder %s17, 1
    %p207 = por %p205, %p206
    %p208 = scmp.ne.s32.totalorder %s200, %s203
    %p209 = scmp.eq.s32.totalorder %s17, 0
    %p210 = por %p208, %p209
    %p211 = scmp.ne.s32.totalorder %s200, %s203
    %p212 = scmp.eq.s32.totalorder %s22, 1
    %p213 = por %p211, %p212
    %p214 = scmp.ne.s32.totalorder %s203, %s204
    %p215 = scmp.eq.s32.totalorder %s22, 0
    %p216 = por %p214, %p215
    %p217 = scmp.ne.s32.totalorder %s203, %s204
    %p218 = scmp.eq.s32.totalorder %s23, 1
    %p219 = por %p217, %p218
    %p221 = scmp.ne.s32.totalorder %s204, %s220
    %p222 = scmp.eq.s32.totalorder %s23, 0
    %p223 = por %p221, %p222
    %s224 = ssub.s32 %s17, %s24
    %p225 = scmp.eq.s32.totalorder %s224, 0
    %s227 = sadd.s32 %s226, 1
    %s228 = scalar_select %p225, %s226, %s227
    %p231 = pneg %p225
    %p232 = scmp.eq.s32.totalorder %s17, 1
    %p233 = por %p231, %p232
    %p234 = scmp.ne.s32.totalorder %s226, %s229
    %p235 = scmp.eq.s32.totalorder %s17, 0
    %p236 = por %p234, %p235
    %p237 = scmp.ne.s32.totalorder %s226, %s229
    %p238 = scmp.eq.s32.totalorder %s22, 1
    %p239 = por %p237, %p238
    %p240 = scmp.ne.s32.totalorder %s229, %s230
    %p241 = scmp.eq.s32.totalorder %s22, 0
    %p242 = por %p240, %p241
    %p243 = scmp.ne.s32.totalorder %s229, %s230
    %p244 = scmp.eq.s32.totalorder %s23, 1
    %p245 = por %p243, %p244
    %p247 = scmp.ne.s32.totalorder %s230, %s246
    %p248 = scmp.eq.s32.totalorder %s23, 0
    %p249 = por %p247, %p248
    %s250 = ssub.s32 %s17, %s24
    %p251 = scmp.eq.s32.totalorder %s250, 0
    %s253 = sadd.s32 %s252, 1
    %s254 = scalar_select %p251, %s252, %s253
    %p257 = pneg %p251
    %p258 = scmp.eq.s32.totalorder %s17, 1
    %p259 = por %p257, %p258
    %p260 = scmp.ne.s32.totalorder %s252, %s255
    %p261 = scmp.eq.s32.totalorder %s17, 0
    %p262 = por %p260, %p261
    %p263 = scmp.ne.s32.totalorder %s252, %s255
    %p264 = scmp.eq.s32.totalorder %s22, 1
    %p265 = por %p263, %p264
    %p266 = scmp.ne.s32.totalorder %s255, %s256
    %p267 = scmp.eq.s32.totalorder %s22, 0
    %p268 = por %p266, %p267
    %p269 = scmp.ne.s32.totalorder %s255, %s256
    %p270 = scmp.eq.s32.totalorder %s23, 1
    %p271 = por %p269, %p270
    %p273 = scmp.ne.s32.totalorder %s256, %s272
    %p274 = scmp.eq.s32.totalorder %s23, 0
    %p275 = por %p273, %p274
    %p276 = scmp.le.s32.totalorder 1, %s17
    %p277 = scmp.lt.s32.totalorder %s17, 3
    %p278 = pnand %p276, %p277
    %p279 = pneg %p278
    // Predicated region
    $region9: #{_encoder_forward.3} parent=5 // pred_check
      _
    $region10: #{_encoder_forward.3} parent=5 // pred_check_branch
      %281 = sbr.rel (%p278) target = $region12
    $region11: #{_encoder_forward.3} parent=5 // pred_region
      %s282 = ssub.s32 %s17, 1
      // Predicated region
      $region13: #{_encoder_forward.3} parent=11 // pred_check
        %p283 = pneg %p64
      $region14: #{_encoder_forward.3} parent=11 // pred_check_branch
        %285 = sbr.rel (%p283) target = $region16
      $region15: #{_encoder_forward.3} parent=11 // pred_region
        _
      $region16: #{_encoder_forward.3} parent=11 // pred_fallthru
        _
      // Predicated region
      $region17: #{_encoder_forward.3} parent=11 // pred_check
        %p286 = pneg %p85
      $region18: #{_encoder_forward.3} parent=11 // pred_check_branch
        %288 = sbr.rel (%p286) target = $region20
      $region19: #{_encoder_forward.3} parent=11 // pred_region
        _
      $region20: #{_encoder_forward.3} parent=11 // pred_fallthru
        _
      // Predicated region
      $region21: #{_encoder_forward.3} parent=11 // pred_check
        %p289 = pneg %p106
      $region22: #{_encoder_forward.3} parent=11 // pred_check_branch
        %291 = sbr.rel (%p289) target = $region24
      $region23: #{_encoder_forward.3} parent=11 // pred_region
        _
      $region24: #{_encoder_forward.3} parent=11 // pred_fallthru
        _
      // Predicated region
      $region25: #{_encoder_forward.3} parent=11 // pred_check
        %p292 = pneg %p127
      $region26: #{_encoder_forward.3} parent=11 // pred_check_branch
        %294 = sbr.rel (%p292) target = $region28
      $region27: #{_encoder_forward.3} parent=11 // pred_region
        _
      $region28: #{_encoder_forward.3} parent=11 // pred_fallthru
        _
      // Predicated region
      $region29: #{_encoder_forward.3} parent=11 // pred_check
        %p295 = pneg %p148
      $region30: #{_encoder_forward.3} parent=11 // pred_check_branch
        %297 = sbr.rel (%p295) target = $region32
      $region31: #{_encoder_forward.3} parent=11 // pred_region
        _
      $region32: #{_encoder_forward.3} parent=11 // pred_fallthru
        _
      // Predicated region
      $region33: #{_encoder_forward.3} parent=11 // pred_check
        %p298 = pneg %p169
      $region34: #{_encoder_forward.3} parent=11 // pred_check_branch
        %300 = sbr.rel (%p298) target = $region36
      $region35: #{_encoder_forward.3} parent=11 // pred_region
        _
      $region36: #{_encoder_forward.3} parent=11 // pred_fallthru
        _
      // Predicated region
      $region37: #{_encoder_forward.3} parent=11 // pred_check
        %p301 = pneg %p190
      $region38: #{_encoder_forward.3} parent=11 // pred_check_branch
        %303 = sbr.rel (%p301) target = $region40
      $region39: #{_encoder_forward.3} parent=11 // pred_region
        _
      $region40: #{_encoder_forward.3} parent=11 // pred_fallthru
        _
    $region12: #{_encoder_forward.3} parent=5 // pred_fallthru
      _
    %p304 = scmp.lt.s32.totalorder %s17, 2
    // Predicated region
    $region41: #{_encoder_forward.3} parent=5 // pred_check
      %p305 = pneg %p304
    $region42: #{_encoder_forward.3} parent=5 // pred_check_branch
      %307 = sbr.rel (%p305) target = $region44
    $region43: #{_encoder_forward.3} parent=5 // pred_region
      // Predicated region
      $region45: #{_encoder_forward.3} parent=43 // pred_check
        %p308 = pneg %p37
      $region46: #{_encoder_forward.3} parent=43 // pred_check_branch
        %310 = sbr.rel (%p308) target = $region48
      $region47: #{_encoder_forward.3} parent=43 // pred_region
        %p311 = scmp.lt.s32.totalorder %s17, 1
        %s312 = scalar_select %p311, %s17, 1
        %s313 = smul.addr %s312, 96
        %s314 = smul.addr %s313, 4
        %s315 = scalar_lea.vmem %s0, %s314
      $region48: #{_encoder_forward.3} parent=43 // pred_fallthru
        _
    $region44: #{_encoder_forward.3} parent=5 // pred_fallthru
      _
    %p316 = scmp.le.s32.totalorder 1, %s17
    %p317 = scmp.lt.s32.totalorder %s17, 3
    %p318 = pnand %p316, %p317
    %p319 = pneg %p318
    // Predicated region
    $region49: #{_encoder_forward.3} parent=5 // pred_check
      _
    $region50: #{_encoder_forward.3} parent=5 // pred_check_branch
      %321 = sbr.rel (%p318) target = $region52
    $region51: #{_encoder_forward.3} parent=5 // pred_region
      %s322 = ssub.s32 %s17, 1
      %p323 = scmp.lt.s32.totalorder %s22, 1
      %s324 = scalar_select %p323, %s22, 1
      %s325 = smul.addr %s324, 96
      %s326 = smul.addr %s325, 4
      %s327 = scalar_lea.vmem %s0, %s326
      %p328 = pneg %p43
      %p329 = pneg %p40
      %p330 = pneg %p64
      %p331 = pneg %p61
      %p332 = pneg %p85
      %p333 = pneg %p82
      %p334 = pneg %p106
      %p335 = pneg %p103
      %p336 = pneg %p127
      %p337 = pneg %p124
      %p338 = pneg %p148
      %p339 = pneg %p145
      %p340 = pneg %p169
      %p341 = pneg %p166
      %p342 = pneg %p190
      %p343 = pneg %p187
      %p344 = pneg %p216
      %p345 = pneg %p213
      %p346 = scmp.lt.s32.totalorder %s22, 1
      %s347 = scalar_select %p346, %s22, 1
      %s348 = smul.addr %s347, 32
      %s349 = smul.addr %s348, 8
      %s350 = scalar_lea.vmem %s8, %s349
      %p351 = pneg %p242
      %p352 = pneg %p239
      %p353 = scmp.lt.s32.totalorder %s22, 1
      %s354 = scalar_select %p353, %s22, 1
      %s355 = smul.addr %s354, 8
      %s356 = smul.addr %s355, 8
      %s357 = scalar_lea.vmem %s9, %s356
      %p358 = pneg %p268
      %p359 = pneg %p265
      %p360 = scmp.lt.s32.totalorder %s22, 1
      %s361 = scalar_select %p360, %s22, 1
      %s362 = smul.addr %s361, 12
      %s363 = smul.addr %s362, 8
      %s364 = scalar_lea.vmem %s10, %s363
      %p365 = scmp.lt.s32.totalorder %s22, 1
      %s366 = scalar_select %p365, %s22, 1
      %s367 = smul.addr %s366, 96
      %s368 = smul.addr %s367, 4
      %s369 = scalar_lea.vmem %s0, %s368
      %p370 = scmp.lt.s32.totalorder %s22, 1
      %s371 = scalar_select %p370, %s22, 1
      %s372 = smul.addr %s371, 32
      %s373 = smul.addr %s372, 8
      %s374 = scalar_lea.vmem %s8, %s373
      %p375 = scmp.lt.s32.totalorder %s22, 1
      %s376 = scalar_select %p375, %s22, 1
      %s377 = smul.addr %s376, 8
      %s378 = smul.addr %s377, 8
      %s379 = scalar_lea.vmem %s9, %s378
      %p380 = scmp.lt.s32.totalorder %s22, 1
      %s381 = scalar_select %p380, %s22, 1
      %s382 = smul.addr %s381, 12
      %s383 = smul.addr %s382, 8
      %s384 = scalar_lea.vmem %s10, %s383
      %v385 = vld [vmem:[%s2] sm:$0xff]
      %v386 = vld [vmem:[%s1] sm:$0xf]
      %v387 = vld [vmem:[%s1 + $0x4] sm:$0xf]
      %v388 = vld [vmem:[%s1 + $0x8] sm:$0xf]
      %v389 = vld [vmem:[%s1 + $0xc] sm:$0xf]
      %v390 = vld [vmem:[%s1 + $0x10] sm:$0xf]
      %v391 = vld [vmem:[%s1 + $0x14] sm:$0xf]
      %v392 = vld [vmem:[%s1 + $0x18] sm:$0xf]
      %v393 = vld [vmem:[%s1 + $0x1c] sm:$0xf]
      %v394 = vld [vmem:[%s1 + $0x20] sm:$0xf]
      %v395 = vld [vmem:[%s1 + $0x24] sm:$0xf]
      %v396 = vld [vmem:[%s1 + $0x28] sm:$0xf]
      %v397 = vld [vmem:[%s1 + $0x2c] sm:$0xf]
      %v398 = vld [vmem:[%s1 + $0x30] sm:$0xf]
      %v399 = vld [vmem:[%s1 + $0x34] sm:$0xf]
      %v400 = vld [vmem:[%s1 + $0x38] sm:$0xf]
      %v401 = vld [vmem:[%s1 + $0x3c] sm:$0xf]
      %v402 = vld [vmem:[%s1 + $0x40] sm:$0xf]
      %v403 = vld [vmem:[%s1 + $0x44] sm:$0xf]
      %v404 = vld [vmem:[%s1 + $0x48] sm:$0xf]
      %v405 = vld [vmem:[%s1 + $0x4c] sm:$0xf]
      %v406 = vld [vmem:[%s1 + $0x50] sm:$0xf]
      %v407 = vld [vmem:[%s1 + $0x54] sm:$0xf]
      %v408 = vld [vmem:[%s1 + $0x58] sm:$0xf]
      %v409 = vld [vmem:[%s1 + $0x5c] sm:$0xf]
      %v410 = vld [vmem:[%s1 + $0x60] sm:$0xf]
      %v411 = vld [vmem:[%s1 + $0x64] sm:$0xf]
      %v412 = vld [vmem:[%s1 + $0x68] sm:$0xf]
      %v413 = vld [vmem:[%s1 + $0x6c] sm:$0xf]
      %v414 = vld [vmem:[%s1 + $0x70] sm:$0xf]
      %v415 = vld [vmem:[%s1 + $0x74] sm:$0xf]
      %v416 = vld [vmem:[%s1 + $0x78] sm:$0xf]
      %v417 = vld [vmem:[%s1 + $0x7c] sm:$0xf]
      %v418 = vld [vmem:[%s1 + $0x80] sm:$0xf]
      %v419 = vld [vmem:[%s1 + $0x84] sm:$0xf]
      %v420 = vld [vmem:[%s1 + $0x88] sm:$0xf]
      %v421 = vld [vmem:[%s1 + $0x8c] sm:$0xf]
      %v422 = vld [vmem:[%s1 + $0x90] sm:$0xf]
      %v423 = vld [vmem:[%s1 + $0x94] sm:$0xf]
      %v424 = vld [vmem:[%s1 + $0x98] sm:$0xf]
      %v425 = vld [vmem:[%s1 + $0x9c] sm:$0xf]
      %v426 = vld [vmem:[%s1 + $0xa0] sm:$0xf]
      %v427 = vld [vmem:[%s1 + $0xa4] sm:$0xf]
      %v428 = vld [vmem:[%s1 + $0xa8] sm:$0xf]
      %v429 = vld [vmem:[%s1 + $0xac] sm:$0xf]
      %v430 = vld [vmem:[%s1 + $0xb0] sm:$0xf]
      %v431 = vld [vmem:[%s1 + $0xb4] sm:$0xf]
      %v432 = vld [vmem:[%s1 + $0xb8] sm:$0xf]
      %v433 = vld [vmem:[%s1 + $0xbc] sm:$0xf]
      %v434 = vld [vmem:[%s369] sm:$0xff]
      %v435 = vld [vmem:[%s369 + $0x8] sm:$0xf]
      %v436 = vld [vmem:[%s369 + $0xc] sm:$0xff]
      %v437 = vld [vmem:[%s369 + $0x14] sm:$0xf]
      %v438 = vld [vmem:[%s369 + $0x18] sm:$0xff]
      %v439 = vld [vmem:[%s369 + $0x20] sm:$0xf]
      %v440 = vld [vmem:[%s369 + $0x24] sm:$0x33]
      %v441 = vld [vmem:[%s369 + $0x2c] sm:$0x3]
      %v442 = vperm.slane %v385, 0
      %v451 = vunpack.c.l.b16 %v434
      %v452 = vunpack.c.h.b16 %v434
      %v453 = vunpack.c.l.b16 %v435
      %v454 = vunpack.c.l.b16 %v436
      %v455 = vunpack.c.h.b16 %v436
      %v456 = vunpack.c.l.b16 %v437
      %v457 = vunpack.c.l.b16 %v438
      %v458 = vunpack.c.h.b16 %v438
      %v459 = vunpack.c.l.b16 %v439
      %v460 = vunpack.c.l.b16 %v440
      %v461 = vunpack.c.h.b16 %v440
      %v462 = vunpack.c.l.b16 %v441
      %v463 = vpack.c.b16 %v454, %v451
      %v464 = vpack.c.b16 %v455, %v452
      %v465 = vpack.c.b16 %v456, %v453
      %v466 = vpack.c.b16 %v460, %v457
      %v467 = vpack.c.b16 %v461, %v458
      %v468 = vpack.c.b16 %v462, %v459
      %v523 = vunpack.c.l.b16 %v386
      %v524 = vunpack.c.l.b16 %v387
      %v525 = vunpack.c.l.b16 %v388
      %v526 = vunpack.c.l.b16 %v389
      %v527 = vunpack.c.l.b16 %v390
      %v528 = vunpack.c.l.b16 %v391
      %v529 = vunpack.c.l.b16 %v392
      %v530 = vunpack.c.l.b16 %v393
      %v531 = vunpack.c.l.b16 %v394
      %v532 = vunpack.c.l.b16 %v395
      %v533 = vunpack.c.l.b16 %v396
      %v534 = vunpack.c.l.b16 %v397
      %v535 = vunpack.c.l.b16 %v398
      %v536 = vunpack.c.l.b16 %v399
      %v537 = vunpack.c.l.b16 %v400
      %v538 = vunpack.c.l.b16 %v401
      %v539 = vunpack.c.l.b16 %v402
      %v540 = vunpack.c.l.b16 %v403
      %v541 = vunpack.c.l.b16 %v404
      %v542 = vunpack.c.l.b16 %v405
      %v543 = vunpack.c.l.b16 %v406
      %v544 = vunpack.c.l.b16 %v407
      %v545 = vunpack.c.l.b16 %v408
      %v546 = vunpack.c.l.b16 %v409
      %v547 = vunpack.c.l.b16 %v410
      %v548 = vunpack.c.l.b16 %v411
      %v549 = vunpack.c.l.b16 %v412
      %v550 = vunpack.c.l.b16 %v413
      %v551 = vunpack.c.l.b16 %v414
      %v552 = vunpack.c.l.b16 %v415
      %v553 = vunpack.c.l.b16 %v416
      %v554 = vunpack.c.l.b16 %v417
      %v555 = vunpack.c.l.b16 %v418
      %v556 = vunpack.c.l.b16 %v419
      %v557 = vunpack.c.l.b16 %v420
      %v558 = vunpack.c.l.b16 %v421
      %v559 = vunpack.c.l.b16 %v422
      %v560 = vunpack.c.l.b16 %v423
      %v561 = vunpack.c.l.b16 %v424
      %v562 = vunpack.c.l.b16 %v425
      %v563 = vunpack.c.l.b16 %v426
      %v564 = vunpack.c.l.b16 %v427
      %v565 = vunpack.c.l.b16 %v428
      %v566 = vunpack.c.l.b16 %v429
      %v567 = vunpack.c.l.b16 %v430
      %v568 = vunpack.c.l.b16 %v431
      %v569 = vunpack.c.l.b16 %v432
      %v570 = vunpack.c.l.b16 %v433
      %v571 = vpack.c.b16 %v524, %v523
      %v572 = vpack.c.b16 %v526, %v525
      %v573 = vpack.c.b16 %v528, %v527
      %v574 = vpack.c.b16 %v530, %v529
      %v575 = vpack.c.b16 %v532, %v531
      %v576 = vpack.c.b16 %v534, %v533
      %v577 = vpack.c.b16 %v536, %v535
      %v578 = vpack.c.b16 %v538, %v537
      %v579 = vpack.c.b16 %v540, %v539
      %v580 = vpack.c.b16 %v542, %v541
      %v581 = vpack.c.b16 %v544, %v543
      %v582 = vpack.c.b16 %v546, %v545
      %v583 = vpack.c.b16 %v548, %v547
      %v584 = vpack.c.b16 %v550, %v549
      %v585 = vpack.c.b16 %v552, %v551
      %v586 = vpack.c.b16 %v554, %v553
      %v587 = vpack.c.b16 %v556, %v555
      %v588 = vpack.c.b16 %v558, %v557
      %v589 = vpack.c.b16 %v560, %v559
      %v590 = vpack.c.b16 %v562, %v561
      %v591 = vpack.c.b16 %v564, %v563
      %v592 = vpack.c.b16 %v566, %v565
      %v593 = vpack.c.b16 %v568, %v567
      %v594 = vpack.c.b16 %v570, %v569
      %619 = vmatpush.bf16.msra.mxu0 %v578
      %620 = vmatpush.bf16.msra.mxu0 %v577
      %621 = vmatpush.bf16.msra.mxu0 %v576
      %622 = vmatpush.bf16.msra.mxu0 %v575
      %623 = vmatpush.bf16.msra.mxu0 %v574
      %624 = vmatpush.bf16.msra.mxu0 %v573
      %625 = vmatpush.bf16.msra.mxu0 %v572
      %626 = vmatpush.bf16.msra.mxu0 %v571
      %627 = vmatmul.bf16.gmra.mxu0 %v463
      %v628 = vpop.f32.mrf.mxu0
      %v629 = vadd.f32 %v442, %v628
      %v630 = vpop.f32.mrf.mxu0
      %v631 = vadd.f32 %v442, %v630
      %632 = vmatmul.bf16.gmra.mxu0 %v466
      %v633 = vpop.f32.mrf.mxu0
      %v634 = vadd.f32 %v442, %v633
      %v635 = vpop.f32.mrf.mxu0
      %v636 = vadd.f32 %v442, %v635
      %637 = vdwg.mxu0
      %638 = vmatpush.bf16.msra.mxu0 %v586
      %639 = vmatpush.bf16.msra.mxu0 %v585
      %640 = vmatpush.bf16.msra.mxu0 %v584
      %641 = vmatpush.bf16.msra.mxu0 %v583
      %642 = vmatpush.bf16.msra.mxu0 %v582
      %643 = vmatpush.bf16.msra.mxu0 %v581
      %644 = vmatpush.bf16.msra.mxu0 %v580
      %645 = vmatpush.bf16.msra.mxu0 %v579
      %646 = vmatmul.bf16.gmra.mxu0 %v464
      %v647 = vpop.f32.mrf.mxu0
      %v648 = vadd.f32 %v629, %v647
      %v649 = vpop.f32.mrf.mxu0
      %v650 = vadd.f32 %v631, %v649
      %651 = vmatmul.bf16.gmra.mxu0 %v467
      %v652 = vpop.f32.mrf.mxu0
      %v653 = vadd.f32 %v634, %v652
      %v654 = vpop.f32.mrf.mxu0
      %v655 = vadd.f32 %v636, %v654
      %656 = vdwg.mxu0
      %657 = vmatpush.bf16.msra.mxu0 %v594
      %658 = vmatpush.bf16.msra.mxu0 %v593
      %659 = vmatpush.bf16.msra.mxu0 %v592
      %660 = vmatpush.bf16.msra.mxu0 %v591
      %661 = vmatpush.bf16.msra.mxu0 %v590
      %662 = vmatpush.bf16.msra.mxu0 %v589
      %663 = vmatpush.bf16.msra.mxu0 %v588
      %664 = vmatpush.bf16.msra.mxu0 %v587
      %665 = vmatmul.bf16.gmra.mxu0 %v465
      %v666 = vpop.f32.mrf.mxu0
      %v667 = vadd.f32 %v648, %v666
      %v668 = vpop.f32.mrf.mxu0
      %v669 = vadd.f32 %v650, %v668
      %670 = vmatmul.bf16.gmra.mxu0 %v468
      %v671 = vpop.f32.mrf.mxu0
      %v672 = vadd.f32 %v653, %v671
      %v673 = vpop.f32.mrf.mxu0
      %v674 = vadd.f32 %v655, %v673
      %675 = vdwg.mxu0
      %s676 = scalar_lea.vmem %s369, 48
      %v677 = vld [vmem:[%s676] sm:$0xff]
      %v678 = vld [vmem:[%s676 + $0x8] sm:$0xf]
      %v679 = vld [vmem:[%s676 + $0xc] sm:$0xff]
      %v680 = vld [vmem:[%s676 + $0x14] sm:$0xf]
      %v681 = vld [vmem:[%s676 + $0x18] sm:$0xff]
      %v682 = vld [vmem:[%s676 + $0x20] sm:$0xf]
      %v683 = vld [vmem:[%s676 + $0x24] sm:$0x33]
      %v684 = vld [vmem:[%s676 + $0x2c] sm:$0x3]
      %v693 = vunpack.c.l.b16 %v677
      %v694 = vunpack.c.h.b16 %v677
      %v695 = vunpack.c.l.b16 %v678
      %v696 = vunpack.c.l.b16 %v679
      %v697 = vunpack.c.h.b16 %v679
      %v698 = vunpack.c.l.b16 %v680
      %v699 = vunpack.c.l.b16 %v681
      %v700 = vunpack.c.h.b16 %v681
      %v701 = vunpack.c.l.b16 %v682
      %v702 = vunpack.c.l.b16 %v683
      %v703 = vunpack.c.h.b16 %v683
      %v704 = vunpack.c.l.b16 %v684
      %v705 = vpack.c.b16 %v696, %v693
      %v706 = vpack.c.b16 %v697, %v694
      %v707 = vpack.c.b16 %v698, %v695
      %v708 = vpack.c.b16 %v702, %v699
      %v709 = vpack.c.b16 %v703, %v700
      %v710 = vpack.c.b16 %v704, %v701
      %717 = vmatpush.bf16.msra.mxu0 %v578
      %718 = vmatpush.bf16.msra.mxu0 %v577
      %719 = vmatpush.bf16.msra.mxu0 %v576
      %720 = vmatpush.bf16.msra.mxu0 %v575
      %721 = vmatpush.bf16.msra.mxu0 %v574
      %722 = vmatpush.bf16.msra.mxu0 %v573
      %723 = vmatpush.bf16.msra.mxu0 %v572
      %724 = vmatpush.bf16.msra.mxu0 %v571
      %725 = vmatmul.bf16.gmra.mxu0 %v705
      %v726 = vpop.f32.mrf.mxu0
      %v727 = vadd.f32 %v442, %v726
      %v728 = vpop.f32.mrf.mxu0
      %v729 = vadd.f32 %v442, %v728
      %730 = vmatmul.bf16.gmra.mxu0 %v708
      %v731 = vpop.f32.mrf.mxu0
      %v732 = vadd.f32 %v442, %v731
      %v733 = vpop.f32.mrf.mxu0
      %v734 = vadd.f32 %v442, %v733
      %735 = vdwg.mxu0
      %736 = vmatpush.bf16.msra.mxu0 %v586
      %737 = vmatpush.bf16.msra.mxu0 %v585
      %738 = vmatpush.bf16.msra.mxu0 %v584
      %739 = vmatpush.bf16.msra.mxu0 %v583
      %740 = vmatpush.bf16.msra.mxu0 %v582
      %741 = vmatpush.bf16.msra.mxu0 %v581
      %742 = vmatpush.bf16.msra.mxu0 %v580
      %743 = vmatpush.bf16.msra.mxu0 %v579
      %744 = vmatmul.bf16.gmra.mxu0 %v706
      %v745 = vpop.f32.mrf.mxu0
      %v746 = vadd.f32 %v727, %v745
      %v747 = vpop.f32.mrf.mxu0
      %v748 = vadd.f32 %v729, %v747
      %749 = vmatmul.bf16.gmra.mxu0 %v709
      %v750 = vpop.f32.mrf.mxu0
      %v751 = vadd.f32 %v732, %v750
      %v752 = vpop.f32.mrf.mxu0
      %v753 = vadd.f32 %v734, %v752
      %754 = vdwg.mxu0
      %755 = vmatpush.bf16.msra.mxu0 %v594
      %756 = vmatpush.bf16.msra.mxu0 %v593
      %757 = vmatpush.bf16.msra.mxu0 %v592
      %758 = vmatpush.bf16.msra.mxu0 %v591
      %759 = vmatpush.bf16.msra.mxu0 %v590
      %760 = vmatpush.bf16.msra.mxu0 %v589
      %761 = vmatpush.bf16.msra.mxu0 %v588
      %762 = vmatpush.bf16.msra.mxu0 %v587
      %763 = vmatmul.bf16.gmra.mxu0 %v707
      %v764 = vpop.f32.mrf.mxu0
      %v765 = vadd.f32 %v746, %v764
      %v766 = vpop.f32.mrf.mxu0
      %v767 = vadd.f32 %v748, %v766
      %768 = vmatmul.bf16.gmra.mxu0 %v710
      %v769 = vpop.f32.mrf.mxu0
      %v770 = vadd.f32 %v751, %v769
      %v771 = vpop.f32.mrf.mxu0
      %v772 = vadd.f32 %v753, %v771
      %773 = vdwg.mxu0
      %s774 = scalar_lea.vmem %s369, 96
      %v775 = vld [vmem:[%s774] sm:$0xff]
      %v776 = vld [vmem:[%s774 + $0x8] sm:$0xf]
      %v777 = vld [vmem:[%s774 + $0xc] sm:$0xff]
      %v778 = vld [vmem:[%s774 + $0x14] sm:$0xf]
      %v779 = vld [vmem:[%s774 + $0x18] sm:$0xff]
      %v780 = vld [vmem:[%s774 + $0x20] sm:$0xf]
      %v781 = vld [vmem:[%s774 + $0x24] sm:$0x33]
      %v782 = vld [vmem:[%s774 + $0x2c] sm:$0x3]
      %v791 = vunpack.c.l.b16 %v775
      %v792 = vunpack.c.h.b16 %v775
      %v793 = vunpack.c.l.b16 %v776
      %v794 = vunpack.c.l.b16 %v777
      %v795 = vunpack.c.h.b16 %v777
      %v796 = vunpack.c.l.b16 %v778
      %v797 = vunpack.c.l.b16 %v779
      %v798 = vunpack.c.h.b16 %v779
      %v799 = vunpack.c.l.b16 %v780
      %v800 = vunpack.c.l.b16 %v781
      %v801 = vunpack.c.h.b16 %v781
      %v802 = vunpack.c.l.b16 %v782
      %v803 = vpack.c.b16 %v794, %v791
      %v804 = vpack.c.b16 %v795, %v792
      %v805 = vpack.c.b16 %v796, %v793
      %v806 = vpack.c.b16 %v800, %v797
      %v807 = vpack.c.b16 %v801, %v798
      %v808 = vpack.c.b16 %v802, %v799
      %815 = vmatpush.bf16.msra.mxu0 %v578
      %816 = vmatpush.bf16.msra.mxu0 %v577
      %817 = vmatpush.bf16.msra.mxu0 %v576
      %818 = vmatpush.bf16.msra.mxu0 %v575
      %819 = vmatpush.bf16.msra.mxu0 %v574
      %820 = vmatpush.bf16.msra.mxu0 %v573
      %821 = vmatpush.bf16.msra.mxu0 %v572
      %822 = vmatpush.bf16.msra.mxu0 %v571
      %823 = vmatmul.bf16.gmra.mxu0 %v803
      %v824 = vpop.f32.mrf.mxu0
      %v825 = vadd.f32 %v442, %v824
      %v826 = vpop.f32.mrf.mxu0
      %v827 = vadd.f32 %v442, %v826
      %828 = vmatmul.bf16.gmra.mxu0 %v806
      %v829 = vpop.f32.mrf.mxu0
      %v830 = vadd.f32 %v442, %v829
      %v831 = vpop.f32.mrf.mxu0
      %v832 = vadd.f32 %v442, %v831
      %833 = vdwg.mxu0
      %834 = vmatpush.bf16.msra.mxu0 %v586
      %835 = vmatpush.bf16.msra.mxu0 %v585
      %836 = vmatpush.bf16.msra.mxu0 %v584
      %837 = vmatpush.bf16.msra.mxu0 %v583
      %838 = vmatpush.bf16.msra.mxu0 %v582
      %839 = vmatpush.bf16.msra.mxu0 %v581
      %840 = vmatpush.bf16.msra.mxu0 %v580
      %841 = vmatpush.bf16.msra.mxu0 %v579
      %842 = vmatmul.bf16.gmra.mxu0 %v804
      %v843 = vpop.f32.mrf.mxu0
      %v844 = vadd.f32 %v825, %v843
      %v845 = vpop.f32.mrf.mxu0
      %v846 = vadd.f32 %v827, %v845
      %847 = vmatmul.bf16.gmra.mxu0 %v807
      %v848 = vpop.f32.mrf.mxu0
      %v849 = vadd.f32 %v830, %v848
      %v850 = vpop.f32.mrf.mxu0
      %v851 = vadd.f32 %v832, %v850
      %852 = vdwg.mxu0
      %853 = vmatpush.bf16.msra.mxu0 %v594
      %854 = vmatpush.bf16.msra.mxu0 %v593
      %855 = vmatpush.bf16.msra.mxu0 %v592
      %856 = vmatpush.bf16.msra.mxu0 %v591
      %857 = vmatpush.bf16.msra.mxu0 %v590
      %858 = vmatpush.bf16.msra.mxu0 %v589
      %859 = vmatpush.bf16.msra.mxu0 %v588
      %860 = vmatpush.bf16.msra.mxu0 %v587
      %861 = vmatmul.bf16.gmra.mxu0 %v805
      %v862 = vpop.f32.mrf.mxu0
      %v863 = vadd.f32 %v844, %v862
      %v864 = vpop.f32.mrf.mxu0
      %v865 = vadd.f32 %v846, %v864
      %866 = vmatmul.bf16.gmra.mxu0 %v808
      %v867 = vpop.f32.mrf.mxu0
      %v868 = vadd.f32 %v849, %v867
      %v869 = vpop.f32.mrf.mxu0
      %v870 = vadd.f32 %v851, %v869
      %871 = vdwg.mxu0
      %s872 = scalar_lea.vmem %s369, 144
      %v873 = vld [vmem:[%s872] sm:$0xff]
      %v874 = vld [vmem:[%s872 + $0x8] sm:$0xf]
      %v875 = vld [vmem:[%s872 + $0xc] sm:$0xff]
      %v876 = vld [vmem:[%s872 + $0x14] sm:$0xf]
      %v877 = vld [vmem:[%s872 + $0x18] sm:$0xff]
      %v878 = vld [vmem:[%s872 + $0x20] sm:$0xf]
      %v879 = vld [vmem:[%s872 + $0x24] sm:$0x33]
      %v880 = vld [vmem:[%s872 + $0x2c] sm:$0x3]
      %v889 = vunpack.c.l.b16 %v873
      %v890 = vunpack.c.h.b16 %v873
      %v891 = vunpack.c.l.b16 %v874
      %v892 = vunpack.c.l.b16 %v875
      %v893 = vunpack.c.h.b16 %v875
      %v894 = vunpack.c.l.b16 %v876
      %v895 = vunpack.c.l.b16 %v877
      %v896 = vunpack.c.h.b16 %v877
      %v897 = vunpack.c.l.b16 %v878
      %v898 = vunpack.c.l.b16 %v879
      %v899 = vunpack.c.h.b16 %v879
      %v900 = vunpack.c.l.b16 %v880
      %v901 = vpack.c.b16 %v892, %v889
      %v902 = vpack.c.b16 %v893, %v890
      %v903 = vpack.c.b16 %v894, %v891
      %v904 = vpack.c.b16 %v898, %v895
      %v905 = vpack.c.b16 %v899, %v896
      %v906 = vpack.c.b16 %v900, %v897
      %913 = vmatpush.bf16.msra.mxu0 %v578
      %914 = vmatpush.bf16.msra.mxu0 %v577
      %915 = vmatpush.bf16.msra.mxu0 %v576
      %916 = vmatpush.bf16.msra.mxu0 %v575
      %917 = vmatpush.bf16.msra.mxu0 %v574
      %918 = vmatpush.bf16.msra.mxu0 %v573
      %919 = vmatpush.bf16.msra.mxu0 %v572
      %920 = vmatpush.bf16.msra.mxu0 %v571
      %921 = vmatmul.bf16.gmra.mxu0 %v901
      %v922 = vpop.f32.mrf.mxu0
      %v923 = vadd.f32 %v442, %v922
      %v924 = vpop.f32.mrf.mxu0
      %v925 = vadd.f32 %v442, %v924
      %926 = vmatmul.bf16.gmra.mxu0 %v904
      %v927 = vpop.f32.mrf.mxu0
      %v928 = vadd.f32 %v442, %v927
      %v929 = vpop.f32.mrf.mxu0
      %v930 = vadd.f32 %v442, %v929
      %931 = vdwg.mxu0
      %932 = vmatpush.bf16.msra.mxu0 %v586
      %933 = vmatpush.bf16.msra.mxu0 %v585
      %934 = vmatpush.bf16.msra.mxu0 %v584
      %935 = vmatpush.bf16.msra.mxu0 %v583
      %936 = vmatpush.bf16.msra.mxu0 %v582
      %937 = vmatpush.bf16.msra.mxu0 %v581
      %938 = vmatpush.bf16.msra.mxu0 %v580
      %939 = vmatpush.bf16.msra.mxu0 %v579
      %940 = vmatmul.bf16.gmra.mxu0 %v902
      %v941 = vpop.f32.mrf.mxu0
      %v942 = vadd.f32 %v923, %v941
      %v943 = vpop.f32.mrf.mxu0
      %v944 = vadd.f32 %v925, %v943
      %945 = vmatmul.bf16.gmra.mxu0 %v905
      %v946 = vpop.f32.mrf.mxu0
      %v947 = vadd.f32 %v928, %v946
      %v948 = vpop.f32.mrf.mxu0
      %v949 = vadd.f32 %v930, %v948
      %950 = vdwg.mxu0
      %951 = vmatpush.bf16.msra.mxu0 %v594
      %952 = vmatpush.bf16.msra.mxu0 %v593
      %953 = vmatpush.bf16.msra.mxu0 %v592
      %954 = vmatpush.bf16.msra.mxu0 %v591
      %955 = vmatpush.bf16.msra.mxu0 %v590
      %956 = vmatpush.bf16.msra.mxu0 %v589
      %957 = vmatpush.bf16.msra.mxu0 %v588
      %958 = vmatpush.bf16.msra.mxu0 %v587
      %959 = vmatmul.bf16.gmra.mxu0 %v903
      %v960 = vpop.f32.mrf.mxu0
      %v961 = vadd.f32 %v942, %v960
      %v962 = vpop.f32.mrf.mxu0
      %v963 = vadd.f32 %v944, %v962
      %964 = vmatmul.bf16.gmra.mxu0 %v906
      %v965 = vpop.f32.mrf.mxu0
      %v966 = vadd.f32 %v947, %v965
      %v967 = vpop.f32.mrf.mxu0
      %v968 = vadd.f32 %v949, %v967
      %969 = vdwg.mxu0
      %s970 = scalar_lea.vmem %s369, 192
      %v971 = vld [vmem:[%s970] sm:$0xff]
      %v972 = vld [vmem:[%s970 + $0x8] sm:$0xf]
      %v973 = vld [vmem:[%s970 + $0xc] sm:$0xff]
      %v974 = vld [vmem:[%s970 + $0x14] sm:$0xf]
      %v975 = vld [vmem:[%s970 + $0x18] sm:$0xff]
      %v976 = vld [vmem:[%s970 + $0x20] sm:$0xf]
      %v977 = vld [vmem:[%s970 + $0x24] sm:$0x33]
      %v978 = vld [vmem:[%s970 + $0x2c] sm:$0x3]
      %v987 = vunpack.c.l.b16 %v971
      %v988 = vunpack.c.h.b16 %v971
      %v989 = vunpack.c.l.b16 %v972
      %v990 = vunpack.c.l.b16 %v973
      %v991 = vunpack.c.h.b16 %v973
      %v992 = vunpack.c.l.b16 %v974
      %v993 = vunpack.c.l.b16 %v975
      %v994 = vunpack.c.h.b16 %v975
      %v995 = vunpack.c.l.b16 %v976
      %v996 = vunpack.c.l.b16 %v977
      %v997 = vunpack.c.h.b16 %v977
      %v998 = vunpack.c.l.b16 %v978
      %v999 = vpack.c.b16 %v990, %v987
      %v1000 = vpack.c.b16 %v991, %v988
      %v1001 = vpack.c.b16 %v992, %v989
      %v1002 = vpack.c.b16 %v996, %v993
      %v1003 = vpack.c.b16 %v997, %v994
      %v1004 = vpack.c.b16 %v998, %v995
      %1011 = vmatpush.bf16.msra.mxu0 %v578
      %1012 = vmatpush.bf16.msra.mxu0 %v577
      %1013 = vmatpush.bf16.msra.mxu0 %v576
      %1014 = vmatpush.bf16.msra.mxu0 %v575
      %1015 = vmatpush.bf16.msra.mxu0 %v574
      %1016 = vmatpush.bf16.msra.mxu0 %v573
      %1017 = vmatpush.bf16.msra.mxu0 %v572
      %1018 = vmatpush.bf16.msra.mxu0 %v571
      %1019 = vmatmul.bf16.gmra.mxu0 %v999
      %v1020 = vpop.f32.mrf.mxu0
      %v1021 = vadd.f32 %v442, %v1020
      %v1022 = vpop.f32.mrf.mxu0
      %v1023 = vadd.f32 %v442, %v1022
      %1024 = vmatmul.bf16.gmra.mxu0 %v1002
      %v1025 = vpop.f32.mrf.mxu0
      %v1026 = vadd.f32 %v442, %v1025
      %v1027 = vpop.f32.mrf.mxu0
      %v1028 = vadd.f32 %v442, %v1027
      %1029 = vdwg.mxu0
      %1030 = vmatpush.bf16.msra.mxu0 %v586
      %1031 = vmatpush.bf16.msra.mxu0 %v585
      %1032 = vmatpush.bf16.msra.mxu0 %v584
      %1033 = vmatpush.bf16.msra.mxu0 %v583
      %1034 = vmatpush.bf16.msra.mxu0 %v582
      %1035 = vmatpush.bf16.msra.mxu0 %v581
      %1036 = vmatpush.bf16.msra.mxu0 %v580
      %1037 = vmatpush.bf16.msra.mxu0 %v579
      %1038 = vmatmul.bf16.gmra.mxu0 %v1000
      %v1039 = vpop.f32.mrf.mxu0
      %v1040 = vadd.f32 %v1021, %v1039
      %v1041 = vpop.f32.mrf.mxu0
      %v1042 = vadd.f32 %v1023, %v1041
      %1043 = vmatmul.bf16.gmra.mxu0 %v1003
      %v1044 = vpop.f32.mrf.mxu0
      %v1045 = vadd.f32 %v1026, %v1044
      %v1046 = vpop.f32.mrf.mxu0
      %v1047 = vadd.f32 %v1028, %v1046
      %1048 = vdwg.mxu0
      %1049 = vmatpush.bf16.msra.mxu0 %v594
      %1050 = vmatpush.bf16.msra.mxu0 %v593
      %1051 = vmatpush.bf16.msra.mxu0 %v592
      %1052 = vmatpush.bf16.msra.mxu0 %v591
      %1053 = vmatpush.bf16.msra.mxu0 %v590
      %1054 = vmatpush.bf16.msra.mxu0 %v589
      %1055 = vmatpush.bf16.msra.mxu0 %v588
      %1056 = vmatpush.bf16.msra.mxu0 %v587
      %1057 = vmatmul.bf16.gmra.mxu0 %v1001
      %v1058 = vpop.f32.mrf.mxu0
      %v1059 = vadd.f32 %v1040, %v1058
      %v1060 = vpop.f32.mrf.mxu0
      %v1061 = vadd.f32 %v1042, %v1060
      %1062 = vmatmul.bf16.gmra.mxu0 %v1004
      %v1063 = vpop.f32.mrf.mxu0
      %v1064 = vadd.f32 %v1045, %v1063
      %v1065 = vpop.f32.mrf.mxu0
      %v1066 = vadd.f32 %v1047, %v1065
      %1067 = vdwg.mxu0
      %s1068 = scalar_lea.vmem %s369, 240
      %v1069 = vld [vmem:[%s1068] sm:$0xff]
      %v1070 = vld [vmem:[%s1068 + $0x8] sm:$0xf]
      %v1071 = vld [vmem:[%s1068 + $0xc] sm:$0xff]
      %v1072 = vld [vmem:[%s1068 + $0x14] sm:$0xf]
      %v1073 = vld [vmem:[%s1068 + $0x18] sm:$0xff]
      %v1074 = vld [vmem:[%s1068 + $0x20] sm:$0xf]
      %v1075 = vld [vmem:[%s1068 + $0x24] sm:$0x33]
      %v1076 = vld [vmem:[%s1068 + $0x2c] sm:$0x3]
      %v1085 = vunpack.c.l.b16 %v1069
      %v1086 = vunpack.c.h.b16 %v1069
      %v1087 = vunpack.c.l.b16 %v1070
      %v1088 = vunpack.c.l.b16 %v1071
      %v1089 = vunpack.c.h.b16 %v1071
      %v1090 = vunpack.c.l.b16 %v1072
      %v1091 = vunpack.c.l.b16 %v1073
      %v1092 = vunpack.c.h.b16 %v1073
      %v1093 = vunpack.c.l.b16 %v1074
      %v1094 = vunpack.c.l.b16 %v1075
      %v1095 = vunpack.c.h.b16 %v1075
      %v1096 = vunpack.c.l.b16 %v1076
      %v1097 = vpack.c.b16 %v1088, %v1085
      %v1098 = vpack.c.b16 %v1089, %v1086
      %v1099 = vpack.c.b16 %v1090, %v1087
      %v1100 = vpack.c.b16 %v1094, %v1091
      %v1101 = vpack.c.b16 %v1095, %v1092
      %v1102 = vpack.c.b16 %v1096, %v1093
      %1109 = vmatpush.bf16.msra.mxu0 %v578
      %1110 = vmatpush.bf16.msra.mxu0 %v577
      %1111 = vmatpush.bf16.msra.mxu0 %v576
      %1112 = vmatpush.bf16.msra.mxu0 %v575
      %1113 = vmatpush.bf16.msra.mxu0 %v574
      %1114 = vmatpush.bf16.msra.mxu0 %v573
      %1115 = vmatpush.bf16.msra.mxu0 %v572
      %1116 = vmatpush.bf16.msra.mxu0 %v571
      %1117 = vmatmul.bf16.gmra.mxu0 %v1097
      %v1118 = vpop.f32.mrf.mxu0
      %v1119 = vadd.f32 %v442, %v1118
      %v1120 = vpop.f32.mrf.mxu0
      %v1121 = vadd.f32 %v442, %v1120
      %1122 = vmatmul.bf16.gmra.mxu0 %v1100
      %v1123 = vpop.f32.mrf.mxu0
      %v1124 = vadd.f32 %v442, %v1123
      %v1125 = vpop.f32.mrf.mxu0
      %v1126 = vadd.f32 %v442, %v1125
      %1127 = vdwg.mxu0
      %1128 = vmatpush.bf16.msra.mxu0 %v586
      %1129 = vmatpush.bf16.msra.mxu0 %v585
      %1130 = vmatpush.bf16.msra.mxu0 %v584
      %1131 = vmatpush.bf16.msra.mxu0 %v583
      %1132 = vmatpush.bf16.msra.mxu0 %v582
      %1133 = vmatpush.bf16.msra.mxu0 %v581
      %1134 = vmatpush.bf16.msra.mxu0 %v580
      %1135 = vmatpush.bf16.msra.mxu0 %v579
      %1136 = vmatmul.bf16.gmra.mxu0 %v1098
      %v1137 = vpop.f32.mrf.mxu0
      %v1138 = vadd.f32 %v1119, %v1137
      %v1139 = vpop.f32.mrf.mxu0
      %v1140 = vadd.f32 %v1121, %v1139
      %1141 = vmatmul.bf16.gmra.mxu0 %v1101
      %v1142 = vpop.f32.mrf.mxu0
      %v1143 = vadd.f32 %v1124, %v1142
      %v1144 = vpop.f32.mrf.mxu0
      %v1145 = vadd.f32 %v1126, %v1144
      %1146 = vdwg.mxu0
      %1147 = vmatpush.bf16.msra.mxu0 %v594
      %1148 = vmatpush.bf16.msra.mxu0 %v593
      %1149 = vmatpush.bf16.msra.mxu0 %v592
      %1150 = vmatpush.bf16.msra.mxu0 %v591
      %1151 = vmatpush.bf16.msra.mxu0 %v590
      %1152 = vmatpush.bf16.msra.mxu0 %v589
      %1153 = vmatpush.bf16.msra.mxu0 %v588
      %1154 = vmatpush.bf16.msra.mxu0 %v587
      %1155 = vmatmul.bf16.gmra.mxu0 %v1099
      %v1156 = vpop.f32.mrf.mxu0
      %v1157 = vadd.f32 %v1138, %v1156
      %v1158 = vpop.f32.mrf.mxu0
      %v1159 = vadd.f32 %v1140, %v1158
      %1160 = vmatmul.bf16.gmra.mxu0 %v1102
      %v1161 = vpop.f32.mrf.mxu0
      %v1162 = vadd.f32 %v1143, %v1161
      %v1163 = vpop.f32.mrf.mxu0
      %v1164 = vadd.f32 %v1145, %v1163
      %1165 = vdwg.mxu0
      %s1166 = scalar_lea.vmem %s369, 288
      %v1167 = vld [vmem:[%s1166] sm:$0xff]
      %v1168 = vld [vmem:[%s1166 + $0x8] sm:$0xf]
      %v1169 = vld [vmem:[%s1166 + $0xc] sm:$0xff]
      %v1170 = vld [vmem:[%s1166 + $0x14] sm:$0xf]
      %v1171 = vld [vmem:[%s1166 + $0x18] sm:$0xff]
      %v1172 = vld [vmem:[%s1166 + $0x20] sm:$0xf]
      %v1173 = vld [vmem:[%s1166 + $0x24] sm:$0x33]
      %v1174 = vld [vmem:[%s1166 + $0x2c] sm:$0x3]
      %v1183 = vunpack.c.l.b16 %v1167
      %v1184 = vunpack.c.h.b16 %v1167
      %v1185 = vunpack.c.l.b16 %v1168
      %v1186 = vunpack.c.l.b16 %v1169
      %v1187 = vunpack.c.h.b16 %v1169
      %v1188 = vunpack.c.l.b16 %v1170
      %v1189 = vunpack.c.l.b16 %v1171
      %v1190 = vunpack.c.h.b16 %v1171
      %v1191 = vunpack.c.l.b16 %v1172
      %v1192 = vunpack.c.l.b16 %v1173
      %v1193 = vunpack.c.h.b16 %v1173
      %v1194 = vunpack.c.l.b16 %v1174
      %v1195 = vpack.c.b16 %v1186, %v1183
      %v1196 = vpack.c.b16 %v1187, %v1184
      %v1197 = vpack.c.b16 %v1188, %v1185
      %v1198 = vpack.c.b16 %v1192, %v1189
      %v1199 = vpack.c.b16 %v1193, %v1190
      %v1200 = vpack.c.b16 %v1194, %v1191
      %1207 = vmatpush.bf16.msra.mxu0 %v578
      %1208 = vmatpush.bf16.msra.mxu0 %v577
      %1209 = vmatpush.bf16.msra.mxu0 %v576
      %1210 = vmatpush.bf16.msra.mxu0 %v575
      %1211 = vmatpush.bf16.msra.mxu0 %v574
      %1212 = vmatpush.bf16.msra.mxu0 %v573
      %1213 = vmatpush.bf16.msra.mxu0 %v572
      %1214 = vmatpush.bf16.msra.mxu0 %v571
      %1215 = vmatmul.bf16.gmra.mxu0 %v1195
      %v1216 = vpop.f32.mrf.mxu0
      %v1217 = vadd.f32 %v442, %v1216
      %v1218 = vpop.f32.mrf.mxu0
      %v1219 = vadd.f32 %v442, %v1218
      %1220 = vmatmul.bf16.gmra.mxu0 %v1198
      %v1221 = vpop.f32.mrf.mxu0
      %v1222 = vadd.f32 %v442, %v1221
      %v1223 = vpop.f32.mrf.mxu0
      %v1224 = vadd.f32 %v442, %v1223
      %1225 = vdwg.mxu0
      %1226 = vmatpush.bf16.msra.mxu0 %v586
      %1227 = vmatpush.bf16.msra.mxu0 %v585
      %1228 = vmatpush.bf16.msra.mxu0 %v584
      %1229 = vmatpush.bf16.msra.mxu0 %v583
      %1230 = vmatpush.bf16.msra.mxu0 %v582
      %1231 = vmatpush.bf16.msra.mxu0 %v581
      %1232 = vmatpush.bf16.msra.mxu0 %v580
      %1233 = vmatpush.bf16.msra.mxu0 %v579
      %1234 = vmatmul.bf16.gmra.mxu0 %v1196
      %v1235 = vpop.f32.mrf.mxu0
      %v1236 = vadd.f32 %v1217, %v1235
      %v1237 = vpop.f32.mrf.mxu0
      %v1238 = vadd.f32 %v1219, %v1237
      %1239 = vmatmul.bf16.gmra.mxu0 %v1199
      %v1240 = vpop.f32.mrf.mxu0
      %v1241 = vadd.f32 %v1222, %v1240
      %v1242 = vpop.f32.mrf.mxu0
      %v1243 = vadd.f32 %v1224, %v1242
      %1244 = vdwg.mxu0
      %1245 = vmatpush.bf16.msra.mxu0 %v594
      %1246 = vmatpush.bf16.msra.mxu0 %v593
      %1247 = vmatpush.bf16.msra.mxu0 %v592
      %1248 = vmatpush.bf16.msra.mxu0 %v591
      %1249 = vmatpush.bf16.msra.mxu0 %v590
      %1250 = vmatpush.bf16.msra.mxu0 %v589
      %1251 = vmatpush.bf16.msra.mxu0 %v588
      %1252 = vmatpush.bf16.msra.mxu0 %v587
      %1253 = vmatmul.bf16.gmra.mxu0 %v1197
      %v1254 = vpop.f32.mrf.mxu0
      %v1255 = vadd.f32 %v1236, %v1254
      %v1256 = vpop.f32.mrf.mxu0
      %v1257 = vadd.f32 %v1238, %v1256
      %1258 = vmatmul.bf16.gmra.mxu0 %v1200
      %v1259 = vpop.f32.mrf.mxu0
      %v1260 = vadd.f32 %v1241, %v1259
      %v1261 = vpop.f32.mrf.mxu0
      %v1262 = vadd.f32 %v1243, %v1261
      %1263 = vdwg.mxu0
      %s1264 = scalar_lea.vmem %s369, 336
      %v1265 = vld [vmem:[%s1264] sm:$0xff]
      %v1266 = vld [vmem:[%s1264 + $0x8] sm:$0xf]
      %v1267 = vld [vmem:[%s1264 + $0xc] sm:$0xff]
      %v1268 = vld [vmem:[%s1264 + $0x14] sm:$0xf]
      %v1269 = vld [vmem:[%s1264 + $0x18] sm:$0xff]
      %v1270 = vld [vmem:[%s1264 + $0x20] sm:$0xf]
      %v1271 = vld [vmem:[%s1264 + $0x24] sm:$0x33]
      %v1272 = vld [vmem:[%s1264 + $0x2c] sm:$0x3]
      %v1281 = vunpack.c.l.b16 %v1265
      %v1282 = vunpack.c.h.b16 %v1265
      %v1283 = vunpack.c.l.b16 %v1266
      %v1284 = vunpack.c.l.b16 %v1267
      %v1285 = vunpack.c.h.b16 %v1267
      %v1286 = vunpack.c.l.b16 %v1268
      %v1287 = vunpack.c.l.b16 %v1269
      %v1288 = vunpack.c.h.b16 %v1269
      %v1289 = vunpack.c.l.b16 %v1270
      %v1290 = vunpack.c.l.b16 %v1271
      %v1291 = vunpack.c.h.b16 %v1271
      %v1292 = vunpack.c.l.b16 %v1272
      %v1293 = vpack.c.b16 %v1284, %v1281
      %v1294 = vpack.c.b16 %v1285, %v1282
      %v1295 = vpack.c.b16 %v1286, %v1283
      %v1296 = vpack.c.b16 %v1290, %v1287
      %v1297 = vpack.c.b16 %v1291, %v1288
      %v1298 = vpack.c.b16 %v1292, %v1289
      %1305 = vmatpush.bf16.msra.mxu0 %v578
      %1306 = vmatpush.bf16.msra.mxu0 %v577
      %1307 = vmatpush.bf16.msra.mxu0 %v576
      %1308 = vmatpush.bf16.msra.mxu0 %v575
      %1309 = vmatpush.bf16.msra.mxu0 %v574
      %1310 = vmatpush.bf16.msra.mxu0 %v573
      %1311 = vmatpush.bf16.msra.mxu0 %v572
      %1312 = vmatpush.bf16.msra.mxu0 %v571
      %1313 = vmatmul.bf16.gmra.mxu0 %v1293
      %v1314 = vpop.f32.mrf.mxu0
      %v1315 = vadd.f32 %v442, %v1314
      %v1316 = vpop.f32.mrf.mxu0
      %v1317 = vadd.f32 %v442, %v1316
      %1318 = vmatmul.bf16.gmra.mxu0 %v1296
      %v1319 = vpop.f32.mrf.mxu0
      %v1320 = vadd.f32 %v442, %v1319
      %v1321 = vpop.f32.mrf.mxu0
      %v1322 = vadd.f32 %v442, %v1321
      %1323 = vdwg.mxu0
      %1324 = vmatpush.bf16.msra.mxu0 %v586
      %1325 = vmatpush.bf16.msra.mxu0 %v585
      %1326 = vmatpush.bf16.msra.mxu0 %v584
      %1327 = vmatpush.bf16.msra.mxu0 %v583
      %1328 = vmatpush.bf16.msra.mxu0 %v582
      %1329 = vmatpush.bf16.msra.mxu0 %v581
      %1330 = vmatpush.bf16.msra.mxu0 %v580
      %1331 = vmatpush.bf16.msra.mxu0 %v579
      %1332 = vmatmul.bf16.gmra.mxu0 %v1294
      %v1333 = vpop.f32.mrf.mxu0
      %v1334 = vadd.f32 %v1315, %v1333
      %v1335 = vpop.f32.mrf.mxu0
      %v1336 = vadd.f32 %v1317, %v1335
      %1337 = vmatmul.bf16.gmra.mxu0 %v1297
      %v1338 = vpop.f32.mrf.mxu0
      %v1339 = vadd.f32 %v1320, %v1338
      %v1340 = vpop.f32.mrf.mxu0
      %v1341 = vadd.f32 %v1322, %v1340
      %1342 = vdwg.mxu0
      %1343 = vmatpush.bf16.msra.mxu0 %v594
      %1344 = vmatpush.bf16.msra.mxu0 %v593
      %1345 = vmatpush.bf16.msra.mxu0 %v592
      %1346 = vmatpush.bf16.msra.mxu0 %v591
      %1347 = vmatpush.bf16.msra.mxu0 %v590
      %1348 = vmatpush.bf16.msra.mxu0 %v589
      %1349 = vmatpush.bf16.msra.mxu0 %v588
      %1350 = vmatpush.bf16.msra.mxu0 %v587
      %1351 = vmatmul.bf16.gmra.mxu0 %v1295
      %v1352 = vpop.f32.mrf.mxu0
      %v1353 = vadd.f32 %v1334, %v1352
      %v1354 = vpop.f32.mrf.mxu0
      %v1355 = vadd.f32 %v1336, %v1354
      %1356 = vmatmul.bf16.gmra.mxu0 %v1298
      %v1357 = vpop.f32.mrf.mxu0
      %v1358 = vadd.f32 %v1339, %v1357
      %v1359 = vpop.f32.mrf.mxu0
      %v1360 = vadd.f32 %v1341, %v1359
      %1361 = vdwg.mxu0
      %v1362 = vadd.f32 %v667, %v669
      %v1363 = vadd.f32 %v1362, %v672
      %vm1364 = vcmask 1042432
      %v1365 = vsel %vm1364, %v674, 0.0
      %v1366 = vadd.f32 %v1363, %v1365
      %v1367 = vrot.slane %v1366, 4
      %v1368 = vadd.f32 %v1366, %v1367
      %v1369 = vrot.slane %v1368, 2
      %v1370 = vadd.f32 %v1368, %v1369
      %v1371 = vrot.slane %v1370, 1
      %v1372 = vadd.f32 %v1370, %v1371
      %v1373 = vadd.f32 %v1372, 0.0
      %v1374 = vadd.f32 %v765, %v767
      %v1375 = vadd.f32 %v1374, %v770
      %v1376 = vsel %vm1364, %v772, 0.0
      %v1377 = vadd.f32 %v1375, %v1376
      %v1378 = vrot.slane %v1377, 4
      %v1379 = vadd.f32 %v1377, %v1378
      %v1380 = vrot.slane %v1379, 2
      %v1381 = vadd.f32 %v1379, %v1380
      %v1382 = vrot.slane %v1381, 1
      %v1383 = vadd.f32 %v1381, %v1382
      %v1384 = vadd.f32 %v1373, %v1383
      %v1385 = vadd.f32 %v863, %v865
      %v1386 = vadd.f32 %v1385, %v868
      %v1387 = vsel %vm1364, %v870, 0.0
      %v1388 = vadd.f32 %v1386, %v1387
      %v1389 = vrot.slane %v1388, 4
      %v1390 = vadd.f32 %v1388, %v1389
      %v1391 = vrot.slane %v1390, 2
      %v1392 = vadd.f32 %v1390, %v1391
      %v1393 = vrot.slane %v1392, 1
      %v1394 = vadd.f32 %v1392, %v1393
      %v1395 = vadd.f32 %v1384, %v1394
      %v1396 = vadd.f32 %v961, %v963
      %v1397 = vadd.f32 %v1396, %v966
      %v1398 = vsel %vm1364, %v968, 0.0
      %v1399 = vadd.f32 %v1397, %v1398
      %v1400 = vrot.slane %v1399, 4
      %v1401 = vadd.f32 %v1399, %v1400
      %v1402 = vrot.slane %v1401, 2
      %v1403 = vadd.f32 %v1401, %v1402
      %v1404 = vrot.slane %v1403, 1
      %v1405 = vadd.f32 %v1403, %v1404
      %v1406 = vadd.f32 %v1395, %v1405
      %v1407 = vadd.f32 %v1059, %v1061
      %v1408 = vadd.f32 %v1407, %v1064
      %v1409 = vsel %vm1364, %v1066, 0.0
      %v1410 = vadd.f32 %v1408, %v1409
      %v1411 = vrot.slane %v1410, 4
      %v1412 = vadd.f32 %v1410, %v1411
      %v1413 = vrot.slane %v1412, 2
      %v1414 = vadd.f32 %v1412, %v1413
      %v1415 = vrot.slane %v1414, 1
      %v1416 = vadd.f32 %v1414, %v1415
      %v1417 = vadd.f32 %v1406, %v1416
      %v1418 = vadd.f32 %v1157, %v1159
      %v1419 = vadd.f32 %v1418, %v1162
      %v1420 = vsel %vm1364, %v1164, 0.0
      %v1421 = vadd.f32 %v1419, %v1420
      %v1422 = vrot.slane %v1421, 4
      %v1423 = vadd.f32 %v1421, %v1422
      %v1424 = vrot.slane %v1423, 2
      %v1425 = vadd.f32 %v1423, %v1424
      %v1426 = vrot.slane %v1425, 1
      %v1427 = vadd.f32 %v1425, %v1426
      %v1428 = vadd.f32 %v1417, %v1427
      %v1429 = vadd.f32 %v1255, %v1257
      %v1430 = vadd.f32 %v1429, %v1260
      %v1431 = vsel %vm1364, %v1262, 0.0
      %v1432 = vadd.f32 %v1430, %v1431
      %v1433 = vrot.slane %v1432, 4
      %v1434 = vadd.f32 %v1432, %v1433
      %v1435 = vrot.slane %v1434, 2
      %v1436 = vadd.f32 %v1434, %v1435
      %v1437 = vrot.slane %v1436, 1
      %v1438 = vadd.f32 %v1436, %v1437
      %v1439 = vadd.f32 %v1428, %v1438
      %v1440 = vadd.f32 %v1353, %v1355
      %v1441 = vadd.f32 %v1440, %v1358
      %v1442 = vsel %vm1364, %v1360, 0.0
      %v1443 = vadd.f32 %v1441, %v1442
      %v1444 = vrot.slane %v1443, 4
      %v1445 = vadd.f32 %v1443, %v1444
      %v1446 = vrot.slane %v1445, 2
      %v1447 = vadd.f32 %v1445, %v1446
      %v1448 = vrot.slane %v1447, 1
      %v1449 = vadd.f32 %v1447, %v1448
      %v1450 = vadd.f32 %v1439, %v1449
      %vm1451 = vcmask 1040384
      %v1452 = vsel %vm1451, %v1450, 0.0
      %1453 = vadd.xlane.f32.xlu0 %v1452
      %v1454 = vpop.xlane.xlu0 %1453
      %v1455 = vrot.slane %v1454, 4
      %v1456 = vadd.f32 %v1454, %v1455
      %v1457 = vrot.slane %v1456, 2
      %v1458 = vadd.f32 %v1456, %v1457
      %v1459 = vrot.slane %v1458, 1
      %v1460 = vadd.f32 %v1458, %v1459
      %s1461 = vtos %v1460
      %s1462 = smul.f32 %s1461, 4.822531e-05
      %v1463 = vstv %s1462
      %v1464 = vsub.f32 %v667, %v1463
      %v1465 = vsub.f32 %v669, %v1463
      %v1466 = vsub.f32 %v672, %v1463
      %v1467 = vsub.f32 %v674, %v1463
      %v1468 = vperm.slane %v385, 3
      %v1469 = vmul.f32 %v1464, %v1468
      %v1470 = vmul.f32 %v1465, %v1468
      %v1471 = vmul.f32 %v1466, %v1468
      %v1472 = vmul.f32 %v1467, %v1468
      %v1473 = vsub.f32 %v765, %v1463
      %v1474 = vsub.f32 %v767, %v1463
      %v1475 = vsub.f32 %v770, %v1463
      %v1476 = vsub.f32 %v772, %v1463
      %v1477 = vmul.f32 %v1473, %v1468
      %v1478 = vmul.f32 %v1474, %v1468
      %v1479 = vmul.f32 %v1475, %v1468
      %v1480 = vmul.f32 %v1476, %v1468
      %v1481 = vsub.f32 %v863, %v1463
      %v1482 = vsub.f32 %v865, %v1463
      %v1483 = vsub.f32 %v868, %v1463
      %v1484 = vsub.f32 %v870, %v1463
      %v1485 = vmul.f32 %v1481, %v1468
      %v1486 = vmul.f32 %v1482, %v1468
      %v1487 = vmul.f32 %v1483, %v1468
      %v1488 = vmul.f32 %v1484, %v1468
      %v1489 = vsub.f32 %v961, %v1463
      %v1490 = vsub.f32 %v963, %v1463
      %v1491 = vsub.f32 %v966, %v1463
      %v1492 = vsub.f32 %v968, %v1463
      %v1493 = vmul.f32 %v1489, %v1468
      %v1494 = vmul.f32 %v1490, %v1468
      %v1495 = vmul.f32 %v1491, %v1468
      %v1496 = vmul.f32 %v1492, %v1468
      %v1497 = vsub.f32 %v1059, %v1463
      %v1498 = vsub.f32 %v1061, %v1463
      %v1499 = vsub.f32 %v1064, %v1463
      %v1500 = vsub.f32 %v1066, %v1463
      %v1501 = vmul.f32 %v1497, %v1468
      %v1502 = vmul.f32 %v1498, %v1468
      %v1503 = vmul.f32 %v1499, %v1468
      %v1504 = vmul.f32 %v1500, %v1468
      %v1505 = vsub.f32 %v1157, %v1463
      %v1506 = vsub.f32 %v1159, %v1463
      %v1507 = vsub.f32 %v1162, %v1463
      %v1508 = vsub.f32 %v1164, %v1463
      %v1509 = vmul.f32 %v1505, %v1468
      %v1510 = vmul.f32 %v1506, %v1468
      %v1511 = vmul.f32 %v1507, %v1468
      %v1512 = vmul.f32 %v1508, %v1468
      %v1513 = vsub.f32 %v1255, %v1463
      %v1514 = vsub.f32 %v1257, %v1463
      %v1515 = vsub.f32 %v1260, %v1463
      %v1516 = vsub.f32 %v1262, %v1463
      %v1517 = vmul.f32 %v1513, %v1468
      %v1518 = vmul.f32 %v1514, %v1468
      %v1519 = vmul.f32 %v1515, %v1468
      %v1520 = vmul.f32 %v1516, %v1468
      %v1521 = vsub.f32 %v1353, %v1463
      %v1522 = vsub.f32 %v1355, %v1463
      %v1523 = vsub.f32 %v1358, %v1463
      %v1524 = vsub.f32 %v1360, %v1463
      %v1525 = vmul.f32 %v1521, %v1468
      %v1526 = vmul.f32 %v1522, %v1468
      %v1527 = vmul.f32 %v1523, %v1468
      %v1528 = vmul.f32 %v1524, %v1468
      %v1529 = vmul.f32 %v1469, %v1469
      %v1530 = vmul.f32 %v1470, %v1470
      %v1531 = vmul.f32 %v1471, %v1471
      %v1532 = vmul.f32 %v1472, %v1472
      %v1533 = vadd.f32 %v1529, %v1530
      %v1534 = vadd.f32 %v1533, %v1531
      %v1535 = vsel %vm1364, %v1532, 0.0
      %v1536 = vadd.f32 %v1534, %v1535
      %v1537 = vrot.slane %v1536, 4
      %v1538 = vadd.f32 %v1536, %v1537
      %v1539 = vrot.slane %v1538, 2
      %v1540 = vadd.f32 %v1538, %v1539
      %v1541 = vrot.slane %v1540, 1
      %v1542 = vadd.f32 %v1540, %v1541
      %v1543 = vadd.f32 %v1542, 0.0
      %v1544 = vmul.f32 %v1477, %v1477
      %v1545 = vmul.f32 %v1478, %v1478
      %v1546 = vmul.f32 %v1479, %v1479
      %v1547 = vmul.f32 %v1480, %v1480
      %v1548 = vadd.f32 %v1544, %v1545
      %v1549 = vadd.f32 %v1548, %v1546
      %v1550 = vsel %vm1364, %v1547, 0.0
      %v1551 = vadd.f32 %v1549, %v1550
      %v1552 = vrot.slane %v1551, 4
      %v1553 = vadd.f32 %v1551, %v1552
      %v1554 = vrot.slane %v1553, 2
      %v1555 = vadd.f32 %v1553, %v1554
      %v1556 = vrot.slane %v1555, 1
      %v1557 = vadd.f32 %v1555, %v1556
      %v1558 = vadd.f32 %v1543, %v1557
      %v1559 = vmul.f32 %v1485, %v1485
      %v1560 = vmul.f32 %v1486, %v1486
      %v1561 = vmul.f32 %v1487, %v1487
      %v1562 = vmul.f32 %v1488, %v1488
      %v1563 = vadd.f32 %v1559, %v1560
      %v1564 = vadd.f32 %v1563, %v1561
      %v1565 = vsel %vm1364, %v1562, 0.0
      %v1566 = vadd.f32 %v1564, %v1565
      %v1567 = vrot.slane %v1566, 4
      %v1568 = vadd.f32 %v1566, %v1567
      %v1569 = vrot.slane %v1568, 2
      %v1570 = vadd.f32 %v1568, %v1569
      %v1571 = vrot.slane %v1570, 1
      %v1572 = vadd.f32 %v1570, %v1571
      %v1573 = vadd.f32 %v1558, %v1572
      %v1574 = vmul.f32 %v1493, %v1493
      %v1575 = vmul.f32 %v1494, %v1494
      %v1576 = vmul.f32 %v1495, %v1495
      %v1577 = vmul.f32 %v1496, %v1496
      %v1578 = vadd.f32 %v1574, %v1575
      %v1579 = vadd.f32 %v1578, %v1576
      %v1580 = vsel %vm1364, %v1577, 0.0
      %v1581 = vadd.f32 %v1579, %v1580
      %v1582 = vrot.slane %v1581, 4
      %v1583 = vadd.f32 %v1581, %v1582
      %v1584 = vrot.slane %v1583, 2
      %v1585 = vadd.f32 %v1583, %v1584
      %v1586 = vrot.slane %v1585, 1
      %v1587 = vadd.f32 %v1585, %v1586
      %v1588 = vadd.f32 %v1573, %v1587
      %v1589 = vmul.f32 %v1501, %v1501
      %v1590 = vmul.f32 %v1502, %v1502
      %v1591 = vmul.f32 %v1503, %v1503
      %v1592 = vmul.f32 %v1504, %v1504
      %v1593 = vadd.f32 %v1589, %v1590
      %v1594 = vadd.f32 %v1593, %v1591
      %v1595 = vsel %vm1364, %v1592, 0.0
      %v1596 = vadd.f32 %v1594, %v1595
      %v1597 = vrot.slane %v1596, 4
      %v1598 = vadd.f32 %v1596, %v1597
      %v1599 = vrot.slane %v1598, 2
      %v1600 = vadd.f32 %v1598, %v1599
      %v1601 = vrot.slane %v1600, 1
      %v1602 = vadd.f32 %v1600, %v1601
      %v1603 = vadd.f32 %v1588, %v1602
      %v1604 = vmul.f32 %v1509, %v1509
      %v1605 = vmul.f32 %v1510, %v1510
      %v1606 = vmul.f32 %v1511, %v1511
      %v1607 = vmul.f32 %v1512, %v1512
      %v1608 = vadd.f32 %v1604, %v1605
      %v1609 = vadd.f32 %v1608, %v1606
      %v1610 = vsel %vm1364, %v1607, 0.0
      %v1611 = vadd.f32 %v1609, %v1610
      %v1612 = vrot.slane %v1611, 4
      %v1613 = vadd.f32 %v1611, %v1612
      %v1614 = vrot.slane %v1613, 2
      %v1615 = vadd.f32 %v1613, %v1614
      %v1616 = vrot.slane %v1615, 1
      %v1617 = vadd.f32 %v1615, %v1616
      %v1618 = vadd.f32 %v1603, %v1617
      %v1619 = vmul.f32 %v1517, %v1517
      %v1620 = vmul.f32 %v1518, %v1518
      %v1621 = vmul.f32 %v1519, %v1519
      %v1622 = vmul.f32 %v1520, %v1520
      %v1623 = vadd.f32 %v1619, %v1620
      %v1624 = vadd.f32 %v1623, %v1621
      %v1625 = vsel %vm1364, %v1622, 0.0
      %v1626 = vadd.f32 %v1624, %v1625
      %v1627 = vrot.slane %v1626, 4
      %v1628 = vadd.f32 %v1626, %v1627
      %v1629 = vrot.slane %v1628, 2
      %v1630 = vadd.f32 %v1628, %v1629
      %v1631 = vrot.slane %v1630, 1
      %v1632 = vadd.f32 %v1630, %v1631
      %v1633 = vadd.f32 %v1618, %v1632
      %v1634 = vmul.f32 %v1525, %v1525
      %v1635 = vmul.f32 %v1526, %v1526
      %v1636 = vmul.f32 %v1527, %v1527
      %v1637 = vmul.f32 %v1528, %v1528
      %v1638 = vadd.f32 %v1634, %v1635
      %v1639 = vadd.f32 %v1638, %v1636
      %v1640 = vsel %vm1364, %v1637, 0.0
      %v1641 = vadd.f32 %v1639, %v1640
      %v1642 = vrot.slane %v1641, 4
      %v1643 = vadd.f32 %v1641, %v1642
      %v1644 = vrot.slane %v1643, 2
      %v1645 = vadd.f32 %v1643, %v1644
      %v1646 = vrot.slane %v1645, 1
      %v1647 = vadd.f32 %v1645, %v1646
      %v1648 = vadd.f32 %v1633, %v1647
      %v1649 = vsel %vm1451, %v1648, 0.0
      %1650 = vadd.xlane.f32.xlu0 %v1649
      %v1651 = vpop.xlane.xlu0 %1650
      %v1652 = vrot.slane %v1651, 4
      %v1653 = vadd.f32 %v1651, %v1652
      %v1654 = vrot.slane %v1653, 2
      %v1655 = vadd.f32 %v1653, %v1654
      %v1656 = vrot.slane %v1655, 1
      %v1657 = vadd.f32 %v1655, %v1656
      %s1658 = vtos %v1657
      %s1659 = smul.f32 %s1658, 4.822531e-05
      %s1660 = sadd.f32 %s1659, 1e-05
      %v1661 = vstv %s1660
      %v1662 = vrsqrt.pop %v1661
      %v1663 = vmul.f32 %v1662, %v1661
      %v1664 = vmul.f32 %v1663, %v1662
      %v1665 = vmul.f32 0.5, %v1664
      %v1666 = vsub.f32 1.5, %v1665
      %v1667 = vmul.f32 %v1662, %v1666
      %vm1668 = vweird.f32 %v1661
      %vm1669 = vweird.f32 %v1662
      %vm1670 = vmor %vm1668, %vm1669
      %v1671 = vsel %vm1670, %v1662, %v1667
      %s1672 = vtos %v1671
      %v1673 = vstv %s1672
      %v1674 = vmul.f32 %v385, %v1673
      %v1675 = vperm.slane %v1674, 1
      %v1676 = vmul.f32 %v1469, %v1675
      %v1677 = vmul.f32 %v1470, %v1675
      %v1678 = vmul.f32 %v1471, %v1675
      %v1679 = vmul.f32 %v1472, %v1675
      %v1680 = vperm.slane %v385, 2
      %v1681 = vadd.f32 %v1676, %v1680
      %v1682 = vadd.f32 %v1677, %v1680
      %v1683 = vadd.f32 %v1678, %v1680
      %v1684 = vadd.f32 %v1679, %v1680
      %v1685 = vmul.f32 %v1477, %v1675
      %v1686 = vmul.f32 %v1478, %v1675
      %v1687 = vmul.f32 %v1479, %v1675
      %v1688 = vmul.f32 %v1480, %v1675
      %v1689 = vadd.f32 %v1685, %v1680
      %v1690 = vadd.f32 %v1686, %v1680
      %v1691 = vadd.f32 %v1687, %v1680
      %v1692 = vadd.f32 %v1688, %v1680
      %v1693 = vmul.f32 %v1485, %v1675
      %v1694 = vmul.f32 %v1486, %v1675
      %v1695 = vmul.f32 %v1487, %v1675
      %v1696 = vmul.f32 %v1488, %v1675
      %v1697 = vadd.f32 %v1693, %v1680
      %v1698 = vadd.f32 %v1694, %v1680
      %v1699 = vadd.f32 %v1695, %v1680
      %v1700 = vadd.f32 %v1696, %v1680
      %v1701 = vmul.f32 %v1493, %v1675
      %v1702 = vmul.f32 %v1494, %v1675
      %v1703 = vmul.f32 %v1495, %v1675
      %v1704 = vmul.f32 %v1496, %v1675
      %v1705 = vadd.f32 %v1701, %v1680
      %v1706 = vadd.f32 %v1702, %v1680
      %v1707 = vadd.f32 %v1703, %v1680
      %v1708 = vadd.f32 %v1704, %v1680
      %v1709 = vmul.f32 %v1501, %v1675
      %v1710 = vmul.f32 %v1502, %v1675
      %v1711 = vmul.f32 %v1503, %v1675
      %v1712 = vmul.f32 %v1504, %v1675
      %v1713 = vadd.f32 %v1709, %v1680
      %v1714 = vadd.f32 %v1710, %v1680
      %v1715 = vadd.f32 %v1711, %v1680
      %v1716 = vadd.f32 %v1712, %v1680
      %v1717 = vmul.f32 %v1509, %v1675
      %v1718 = vmul.f32 %v1510, %v1675
      %v1719 = vmul.f32 %v1511, %v1675
      %v1720 = vmul.f32 %v1512, %v1675
      %v1721 = vadd.f32 %v1717, %v1680
      %v1722 = vadd.f32 %v1718, %v1680
      %v1723 = vadd.f32 %v1719, %v1680
      %v1724 = vadd.f32 %v1720, %v1680
      %v1725 = vmul.f32 %v1517, %v1675
      %v1726 = vmul.f32 %v1518, %v1675
      %v1727 = vmul.f32 %v1519, %v1675
      %v1728 = vmul.f32 %v1520, %v1675
      %v1729 = vadd.f32 %v1725, %v1680
      %v1730 = vadd.f32 %v1726, %v1680
      %v1731 = vadd.f32 %v1727, %v1680
      %v1732 = vadd.f32 %v1728, %v1680
      %v1733 = vmul.f32 %v1525, %v1675
      %v1734 = vmul.f32 %v1526, %v1675
      %v1735 = vmul.f32 %v1527, %v1675
      %v1736 = vmul.f32 %v1528, %v1675
      %v1737 = vadd.f32 %v1733, %v1680
      %v1738 = vadd.f32 %v1734, %v1680
      %v1739 = vadd.f32 %v1735, %v1680
      %v1740 = vadd.f32 %v1736, %v1680
      %1741 = vst [vmem:[%s374] sm:$0xff] %v1681
      %1742 = vst [vmem:[%s374 + $0x8] sm:$0xff] %v1682
      %1743 = vst [vmem:[%s374 + $0x10] sm:$0xff] %v1683
      %1744 = vst [vmem:[%s374 + $0x18] sm:$0x7] %v1684
      %s1745 = scalar_lea.vmem %s374, 32
      %1746 = vst [vmem:[%s1745] sm:$0xff] %v1689
      %1747 = vst [vmem:[%s1745 + $0x8] sm:$0xff] %v1690
      %1748 = vst [vmem:[%s1745 + $0x10] sm:$0xff] %v1691
      %1749 = vst [vmem:[%s1745 + $0x18] sm:$0x7] %v1692
      %s1750 = scalar_lea.vmem %s374, 64
      %1751 = vst [vmem:[%s1750] sm:$0xff] %v1697
      %1752 = vst [vmem:[%s1750 + $0x8] sm:$0xff] %v1698
      %1753 = vst [vmem:[%s1750 + $0x10] sm:$0xff] %v1699
      %1754 = vst [vmem:[%s1750 + $0x18] sm:$0x7] %v1700
      %s1755 = scalar_lea.vmem %s374, 96
      %1756 = vst [vmem:[%s1755] sm:$0xff] %v1705
      %1757 = vst [vmem:[%s1755 + $0x8] sm:$0xff] %v1706
      %1758 = vst [vmem:[%s1755 + $0x10] sm:$0xff] %v1707
      %1759 = vst [vmem:[%s1755 + $0x18] sm:$0x7] %v1708
      %s1760 = scalar_lea.vmem %s374, 128
      %1761 = vst [vmem:[%s1760] sm:$0xff] %v1713
      %1762 = vst [vmem:[%s1760 + $0x8] sm:$0xff] %v1714
      %1763 = vst [vmem:[%s1760 + $0x10] sm:$0xff] %v1715
      %1764 = vst [vmem:[%s1760 + $0x18] sm:$0x7] %v1716
      %s1765 = scalar_lea.vmem %s374, 160
      %1766 = vst [vmem:[%s1765] sm:$0xff] %v1721
      %1767 = vst [vmem:[%s1765 + $0x8] sm:$0xff] %v1722
      %1768 = vst [vmem:[%s1765 + $0x10] sm:$0xff] %v1723
      %1769 = vst [vmem:[%s1765 + $0x18] sm:$0x7] %v1724
      %s1770 = scalar_lea.vmem %s374, 192
      %1771 = vst [vmem:[%s1770] sm:$0xff] %v1729
      %1772 = vst [vmem:[%s1770 + $0x8] sm:$0xff] %v1730
      %1773 = vst [vmem:[%s1770 + $0x10] sm:$0xff] %v1731
      %1774 = vst [vmem:[%s1770 + $0x18] sm:$0x7] %v1732
      %s1775 = scalar_lea.vmem %s374, 224
      %1776 = vst [vmem:[%s1775] sm:$0xff] %v1737
      %1777 = vst [vmem:[%s1775 + $0x8] sm:$0xff] %v1738
      %1778 = vst [vmem:[%s1775 + $0x10] sm:$0xff] %v1739
      %1779 = vst [vmem:[%s1775 + $0x18] sm:$0x7] %v1740
      %v1780 = vld [vmem:[%s4] sm:$0xff]
      %v1781 = vld [vmem:[%s4 + $0x8] sm:$0xff]
      %v1782 = vpack.c.bf16 %v1682, %v1681
      %v1783 = vpack.c.bf16 %v1684, %v1683
      %v1784 = vld [vmem:[%s3] sm:$0xff]
      %v1785 = vld [vmem:[%s3 + $0x8] sm:$0xff]
      %v1786 = vld [vmem:[%s3 + $0x10] sm:$0xff]
      %v1787 = vld [vmem:[%s3 + $0x18] sm:$0xff]
      %v1788 = vld [vmem:[%s3 + $0x20] sm:$0xff]
      %v1789 = vld [vmem:[%s3 + $0x28] sm:$0xff]
      %v1790 = vld [vmem:[%s3 + $0x30] sm:$0xff]
      %v1791 = vld [vmem:[%s3 + $0x38] sm:$0xff]
      %v1792 = vld [vmem:[%s3 + $0x40] sm:$0xff]
      %v1793 = vld [vmem:[%s3 + $0x48] sm:$0xff]
      %v1794 = vld [vmem:[%s3 + $0x50] sm:$0xff]
      %v1795 = vld [vmem:[%s3 + $0x58] sm:$0xff]
      %v1796 = vld [vmem:[%s3 + $0x60] sm:$0xff]
      %v1797 = vld [vmem:[%s3 + $0x68] sm:$0xff]
      %v1798 = vld [vmem:[%s3 + $0x70] sm:$0xff]
      %v1799 = vld [vmem:[%s3 + $0x78] sm:$0xff]
      %v1800 = vpack.c.bf16 %v1690, %v1689
      %v1801 = vpack.c.bf16 %v1692, %v1691
      %s1802 = scalar_lea.vmem %s3, 128
      %v1803 = vld [vmem:[%s1802] sm:$0xff]
      %v1804 = vld [vmem:[%s1802 + $0x8] sm:$0xff]
      %v1805 = vld [vmem:[%s1802 + $0x10] sm:$0xff]
      %v1806 = vld [vmem:[%s1802 + $0x18] sm:$0xff]
      %v1807 = vld [vmem:[%s1802 + $0x20] sm:$0xff]
      %v1808 = vld [vmem:[%s1802 + $0x28] sm:$0xff]
      %v1809 = vld [vmem:[%s1802 + $0x30] sm:$0xff]
      %v1810 = vld [vmem:[%s1802 + $0x38] sm:$0xff]
      %v1811 = vld [vmem:[%s1802 + $0x40] sm:$0xff]
      %v1812 = vld [vmem:[%s1802 + $0x48] sm:$0xff]
      %v1813 = vld [vmem:[%s1802 + $0x50] sm:$0xff]
      %v1814 = vld [vmem:[%s1802 + $0x58] sm:$0xff]
      %v1815 = vld [vmem:[%s1802 + $0x60] sm:$0xff]
      %v1816 = vld [vmem:[%s1802 + $0x68] sm:$0xff]
      %v1817 = vld [vmem:[%s1802 + $0x70] sm:$0xff]
      %v1818 = vld [vmem:[%s1802 + $0x78] sm:$0xff]
      %v1835 = vunpack.c.l.b16 %v1803
      %v1836 = vunpack.c.h.b16 %v1803
      %v1837 = vunpack.c.l.b16 %v1804
      %v1838 = vunpack.c.h.b16 %v1804
      %v1839 = vunpack.c.l.b16 %v1805
      %v1840 = vunpack.c.h.b16 %v1805
      %v1841 = vunpack.c.l.b16 %v1806
      %v1842 = vunpack.c.h.b16 %v1806
      %v1843 = vunpack.c.l.b16 %v1807
      %v1844 = vunpack.c.h.b16 %v1807
      %v1845 = vunpack.c.l.b16 %v1808
      %v1846 = vunpack.c.h.b16 %v1808
      %v1847 = vunpack.c.l.b16 %v1809
      %v1848 = vunpack.c.h.b16 %v1809
      %v1849 = vunpack.c.l.b16 %v1810
      %v1850 = vunpack.c.h.b16 %v1810
      %v1851 = vunpack.c.l.b16 %v1811
      %v1852 = vunpack.c.h.b16 %v1811
      %v1853 = vunpack.c.l.b16 %v1812
      %v1854 = vunpack.c.h.b16 %v1812
      %v1855 = vunpack.c.l.b16 %v1813
      %v1856 = vunpack.c.h.b16 %v1813
      %v1857 = vunpack.c.l.b16 %v1814
      %v1858 = vunpack.c.h.b16 %v1814
      %v1859 = vunpack.c.l.b16 %v1815
      %v1860 = vunpack.c.h.b16 %v1815
      %v1861 = vunpack.c.l.b16 %v1816
      %v1862 = vunpack.c.h.b16 %v1816
      %v1863 = vunpack.c.l.b16 %v1817
      %v1864 = vunpack.c.h.b16 %v1817
      %v1865 = vunpack.c.l.b16 %v1818
      %v1866 = vunpack.c.h.b16 %v1818
      %v1867 = vpack.c.b16 %v1837, %v1835
      %v1868 = vpack.c.b16 %v1838, %v1836
      %v1869 = vpack.c.b16 %v1841, %v1839
      %v1870 = vpack.c.b16 %v1842, %v1840
      %v1871 = vpack.c.b16 %v1845, %v1843
      %v1872 = vpack.c.b16 %v1846, %v1844
      %v1873 = vpack.c.b16 %v1849, %v1847
      %v1874 = vpack.c.b16 %v1850, %v1848
      %v1875 = vpack.c.b16 %v1853, %v1851
      %v1876 = vpack.c.b16 %v1854, %v1852
      %v1877 = vpack.c.b16 %v1857, %v1855
      %v1878 = vpack.c.b16 %v1858, %v1856
      %v1879 = vpack.c.b16 %v1861, %v1859
      %v1880 = vpack.c.b16 %v1862, %v1860
      %v1881 = vpack.c.b16 %v1865, %v1863
      %v1882 = vpack.c.b16 %v1866, %v1864
      %1899 = vmatpush.bf16.msra.mxu0 %v1881
      %1900 = vmatpush.bf16.msra.mxu0 %v1879
      %1901 = vmatpush.bf16.msra.mxu0 %v1877
      %1902 = vmatpush.bf16.msra.mxu0 %v1875
      %1903 = vmatpush.bf16.msra.mxu0 %v1873
      %1904 = vmatpush.bf16.msra.mxu0 %v1871
      %1905 = vmatpush.bf16.msra.mxu0 %v1869
      %1906 = vmatpush.bf16.msra.mxu0 %v1867
      %1907 = vmatmul.bf16.gmra.mxu0 %v1800
      %v1908 = vpop.f32.mrf.mxu0
      %v1909 = vadd.f32 0.0, %v1908
      %v1910 = vpop.f32.mrf.mxu0
      %v1911 = vadd.f32 0.0, %v1910
      %1912 = vmatmul.bf16.gmra.mxu0 %v1801
      %v1913 = vpop.f32.mrf.mxu0
      %v1914 = vadd.f32 0.0, %v1913
      %v1915 = vpop.f32.mrf.mxu0
      %v1916 = vadd.f32 0.0, %v1915
      %1917 = vdwg.mxu0
      %1918 = vmatpush.bf16.msra.mxu0 %v1882
      %1919 = vmatpush.bf16.msra.mxu0 %v1880
      %1920 = vmatpush.bf16.msra.mxu0 %v1878
      %1921 = vmatpush.bf16.msra.mxu0 %v1876
      %1922 = vmatpush.bf16.msra.mxu0 %v1874
      %1923 = vmatpush.bf16.msra.mxu0 %v1872
      %1924 = vmatpush.bf16.msra.mxu0 %v1870
      %1925 = vmatpush.bf16.msra.mxu0 %v1868
      %1926 = vmatmul.bf16.gmra.mxu0 %v1800
      %v1927 = vpop.f32.mrf.mxu0
      %v1928 = vadd.f32 0.0, %v1927
      %v1929 = vpop.f32.mrf.mxu0
      %v1930 = vadd.f32 0.0, %v1929
      %1931 = vmatmul.bf16.gmra.mxu0 %v1801
      %v1932 = vpop.f32.mrf.mxu0
      %v1933 = vadd.f32 0.0, %v1932
      %v1934 = vpop.f32.mrf.mxu0
      %v1935 = vadd.f32 0.0, %v1934
      %1936 = vdwg.mxu0
      %v1953 = vunpack.c.l.b16 %v1784
      %v1954 = vunpack.c.h.b16 %v1784
      %v1955 = vunpack.c.l.b16 %v1785
      %v1956 = vunpack.c.h.b16 %v1785
      %v1957 = vunpack.c.l.b16 %v1786
      %v1958 = vunpack.c.h.b16 %v1786
      %v1959 = vunpack.c.l.b16 %v1787
      %v1960 = vunpack.c.h.b16 %v1787
      %v1961 = vunpack.c.l.b16 %v1788
      %v1962 = vunpack.c.h.b16 %v1788
      %v1963 = vunpack.c.l.b16 %v1789
      %v1964 = vunpack.c.h.b16 %v1789
      %v1965 = vunpack.c.l.b16 %v1790
      %v1966 = vunpack.c.h.b16 %v1790
      %v1967 = vunpack.c.l.b16 %v1791
      %v1968 = vunpack.c.h.b16 %v1791
      %v1969 = vunpack.c.l.b16 %v1792
      %v1970 = vunpack.c.h.b16 %v1792
      %v1971 = vunpack.c.l.b16 %v1793
      %v1972 = vunpack.c.h.b16 %v1793
      %v1973 = vunpack.c.l.b16 %v1794
      %v1974 = vunpack.c.h.b16 %v1794
      %v1975 = vunpack.c.l.b16 %v1795
      %v1976 = vunpack.c.h.b16 %v1795
      %v1977 = vunpack.c.l.b16 %v1796
      %v1978 = vunpack.c.h.b16 %v1796
      %v1979 = vunpack.c.l.b16 %v1797
      %v1980 = vunpack.c.h.b16 %v1797
      %v1981 = vunpack.c.l.b16 %v1798
      %v1982 = vunpack.c.h.b16 %v1798
      %v1983 = vunpack.c.l.b16 %v1799
      %v1984 = vunpack.c.h.b16 %v1799
      %v1985 = vpack.c.b16 %v1955, %v1953
      %v1986 = vpack.c.b16 %v1956, %v1954
      %v1987 = vpack.c.b16 %v1959, %v1957
      %v1988 = vpack.c.b16 %v1960, %v1958
      %v1989 = vpack.c.b16 %v1963, %v1961
      %v1990 = vpack.c.b16 %v1964, %v1962
      %v1991 = vpack.c.b16 %v1967, %v1965
      %v1992 = vpack.c.b16 %v1968, %v1966
      %v1993 = vpack.c.b16 %v1971, %v1969
      %v1994 = vpack.c.b16 %v1972, %v1970
      %v1995 = vpack.c.b16 %v1975, %v1973
      %v1996 = vpack.c.b16 %v1976, %v1974
      %v1997 = vpack.c.b16 %v1979, %v1977
      %v1998 = vpack.c.b16 %v1980, %v1978
      %v1999 = vpack.c.b16 %v1983, %v1981
      %v2000 = vpack.c.b16 %v1984, %v1982
      %2017 = vmatpush.bf16.msra.mxu0 %v1999
      %2018 = vmatpush.bf16.msra.mxu0 %v1997
      %2019 = vmatpush.bf16.msra.mxu0 %v1995
      %2020 = vmatpush.bf16.msra.mxu0 %v1993
      %2021 = vmatpush.bf16.msra.mxu0 %v1991
      %2022 = vmatpush.bf16.msra.mxu0 %v1989
      %2023 = vmatpush.bf16.msra.mxu0 %v1987
      %2024 = vmatpush.bf16.msra.mxu0 %v1985
      %2025 = vmatmul.bf16.gmra.mxu0 %v1782
      %v2026 = vpop.f32.mrf.mxu0
      %v2027 = vadd.f32 %v1909, %v2026
      %v2028 = vpop.f32.mrf.mxu0
      %v2029 = vadd.f32 %v1911, %v2028
      %2030 = vmatmul.bf16.gmra.mxu0 %v1783
      %v2031 = vpop.f32.mrf.mxu0
      %v2032 = vadd.f32 %v1914, %v2031
      %v2033 = vpop.f32.mrf.mxu0
      %v2034 = vadd.f32 %v1916, %v2033
      %2035 = vdwg.mxu0
      %2036 = vmatpush.bf16.msra.mxu0 %v2000
      %2037 = vmatpush.bf16.msra.mxu0 %v1998
      %2038 = vmatpush.bf16.msra.mxu0 %v1996
      %2039 = vmatpush.bf16.msra.mxu0 %v1994
      %2040 = vmatpush.bf16.msra.mxu0 %v1992
      %2041 = vmatpush.bf16.msra.mxu0 %v1990
      %2042 = vmatpush.bf16.msra.mxu0 %v1988
      %2043 = vmatpush.bf16.msra.mxu0 %v1986
      %2044 = vmatmul.bf16.gmra.mxu0 %v1782
      %v2045 = vpop.f32.mrf.mxu0
      %v2046 = vadd.f32 %v1928, %v2045
      %v2047 = vpop.f32.mrf.mxu0
      %v2048 = vadd.f32 %v1930, %v2047
      %2049 = vmatmul.bf16.gmra.mxu0 %v1783
      %v2050 = vpop.f32.mrf.mxu0
      %v2051 = vadd.f32 %v1933, %v2050
      %v2052 = vpop.f32.mrf.mxu0
      %v2053 = vadd.f32 %v1935, %v2052
      %2054 = vdwg.mxu0
      %v2055 = vpack.c.bf16 %v1698, %v1697
      %v2056 = vpack.c.bf16 %v1700, %v1699
      %s2057 = scalar_lea.vmem %s3, 256
      %v2058 = vld [vmem:[%s2057] sm:$0xff]
      %v2059 = vld [vmem:[%s2057 + $0x8] sm:$0xff]
      %v2060 = vld [vmem:[%s2057 + $0x10] sm:$0xff]
      %v2061 = vld [vmem:[%s2057 + $0x18] sm:$0xff]
      %v2062 = vld [vmem:[%s2057 + $0x20] sm:$0xff]
      %v2063 = vld [vmem:[%s2057 + $0x28] sm:$0xff]
      %v2064 = vld [vmem:[%s2057 + $0x30] sm:$0xff]
      %v2065 = vld [vmem:[%s2057 + $0x38] sm:$0xff]
      %v2066 = vld [vmem:[%s2057 + $0x40] sm:$0xff]
      %v2067 = vld [vmem:[%s2057 + $0x48] sm:$0xff]
      %v2068 = vld [vmem:[%s2057 + $0x50] sm:$0xff]
      %v2069 = vld [vmem:[%s2057 + $0x58] sm:$0xff]
      %v2070 = vld [vmem:[%s2057 + $0x60] sm:$0xff]
      %v2071 = vld [vmem:[%s2057 + $0x68] sm:$0xff]
      %v2072 = vld [vmem:[%s2057 + $0x70] sm:$0xff]
      %v2073 = vld [vmem:[%s2057 + $0x78] sm:$0xff]
      %v2090 = vunpack.c.l.b16 %v2058
      %v2091 = vunpack.c.h.b16 %v2058
      %v2092 = vunpack.c.l.b16 %v2059
      %v2093 = vunpack.c.h.b16 %v2059
      %v2094 = vunpack.c.l.b16 %v2060
      %v2095 = vunpack.c.h.b16 %v2060
      %v2096 = vunpack.c.l.b16 %v2061
      %v2097 = vunpack.c.h.b16 %v2061
      %v2098 = vunpack.c.l.b16 %v2062
      %v2099 = vunpack.c.h.b16 %v2062
      %v2100 = vunpack.c.l.b16 %v2063
      %v2101 = vunpack.c.h.b16 %v2063
      %v2102 = vunpack.c.l.b16 %v2064
      %v2103 = vunpack.c.h.b16 %v2064
      %v2104 = vunpack.c.l.b16 %v2065
      %v2105 = vunpack.c.h.b16 %v2065
      %v2106 = vunpack.c.l.b16 %v2066
      %v2107 = vunpack.c.h.b16 %v2066
      %v2108 = vunpack.c.l.b16 %v2067
      %v2109 = vunpack.c.h.b16 %v2067
      %v2110 = vunpack.c.l.b16 %v2068
      %v2111 = vunpack.c.h.b16 %v2068
      %v2112 = vunpack.c.l.b16 %v2069
      %v2113 = vunpack.c.h.b16 %v2069
      %v2114 = vunpack.c.l.b16 %v2070
      %v2115 = vunpack.c.h.b16 %v2070
      %v2116 = vunpack.c.l.b16 %v2071
      %v2117 = vunpack.c.h.b16 %v2071
      %v2118 = vunpack.c.l.b16 %v2072
      %v2119 = vunpack.c.h.b16 %v2072
      %v2120 = vunpack.c.l.b16 %v2073
      %v2121 = vunpack.c.h.b16 %v2073
      %v2122 = vpack.c.b16 %v2092, %v2090
      %v2123 = vpack.c.b16 %v2093, %v2091
      %v2124 = vpack.c.b16 %v2096, %v2094
      %v2125 = vpack.c.b16 %v2097, %v2095
      %v2126 = vpack.c.b16 %v2100, %v2098
      %v2127 = vpack.c.b16 %v2101, %v2099
      %v2128 = vpack.c.b16 %v2104, %v2102
      %v2129 = vpack.c.b16 %v2105, %v2103
      %v2130 = vpack.c.b16 %v2108, %v2106
      %v2131 = vpack.c.b16 %v2109, %v2107
      %v2132 = vpack.c.b16 %v2112, %v2110
      %v2133 = vpack.c.b16 %v2113, %v2111
      %v2134 = vpack.c.b16 %v2116, %v2114
      %v2135 = vpack.c.b16 %v2117, %v2115
      %v2136 = vpack.c.b16 %v2120, %v2118
      %v2137 = vpack.c.b16 %v2121, %v2119
      %2154 = vmatpush.bf16.msra.mxu0 %v2136
      %2155 = vmatpush.bf16.msra.mxu0 %v2134
      %2156 = vmatpush.bf16.msra.mxu0 %v2132
      %2157 = vmatpush.bf16.msra.mxu0 %v2130
      %2158 = vmatpush.bf16.msra.mxu0 %v2128
      %2159 = vmatpush.bf16.msra.mxu0 %v2126
      %2160 = vmatpush.bf16.msra.mxu0 %v2124
      %2161 = vmatpush.bf16.msra.mxu0 %v2122
      %2162 = vmatmul.bf16.gmra.mxu0 %v2055
      %v2163 = vpop.f32.mrf.mxu0
      %v2164 = vadd.f32 0.0, %v2163
      %v2165 = vpop.f32.mrf.mxu0
      %v2166 = vadd.f32 0.0, %v2165
      %2167 = vmatmul.bf16.gmra.mxu0 %v2056
      %v2168 = vpop.f32.mrf.mxu0
      %v2169 = vadd.f32 0.0, %v2168
      %v2170 = vpop.f32.mrf.mxu0
      %v2171 = vadd.f32 0.0, %v2170
      %2172 = vdwg.mxu0
      %2173 = vmatpush.bf16.msra.mxu0 %v2137
      %2174 = vmatpush.bf16.msra.mxu0 %v2135
      %2175 = vmatpush.bf16.msra.mxu0 %v2133
      %2176 = vmatpush.bf16.msra.mxu0 %v2131
      %2177 = vmatpush.bf16.msra.mxu0 %v2129
      %2178 = vmatpush.bf16.msra.mxu0 %v2127
      %2179 = vmatpush.bf16.msra.mxu0 %v2125
      %2180 = vmatpush.bf16.msra.mxu0 %v2123
      %2181 = vmatmul.bf16.gmra.mxu0 %v2055
      %v2182 = vpop.f32.mrf.mxu0
      %v2183 = vadd.f32 0.0, %v2182
      %v2184 = vpop.f32.mrf.mxu0
      %v2185 = vadd.f32 0.0, %v2184
      %2186 = vmatmul.bf16.gmra.mxu0 %v2056
      %v2187 = vpop.f32.mrf.mxu0
      %v2188 = vadd.f32 0.0, %v2187
      %v2189 = vpop.f32.mrf.mxu0
      %v2190 = vadd.f32 0.0, %v2189
      %2191 = vdwg.mxu0
      %v2192 = vadd.f32 %v2027, %v2164
      %v2193 = vadd.f32 %v2046, %v2183
      %v2194 = vadd.f32 %v2029, %v2166
      %v2195 = vadd.f32 %v2048, %v2185
      %v2196 = vadd.f32 %v2032, %v2169
      %v2197 = vadd.f32 %v2051, %v2188
      %v2198 = vadd.f32 %v2034, %v2171
      %v2199 = vadd.f32 %v2053, %v2190
      %v2200 = vpack.c.bf16 %v1706, %v1705
      %v2201 = vpack.c.bf16 %v1708, %v1707
      %s2202 = scalar_lea.vmem %s3, 384
      %v2203 = vld [vmem:[%s2202] sm:$0xff]
      %v2204 = vld [vmem:[%s2202 + $0x8] sm:$0xff]
      %v2205 = vld [vmem:[%s2202 + $0x10] sm:$0xff]
      %v2206 = vld [vmem:[%s2202 + $0x18] sm:$0xff]
      %v2207 = vld [vmem:[%s2202 + $0x20] sm:$0xff]
      %v2208 = vld [vmem:[%s2202 + $0x28] sm:$0xff]
      %v2209 = vld [vmem:[%s2202 + $0x30] sm:$0xff]
      %v2210 = vld [vmem:[%s2202 + $0x38] sm:$0xff]
      %v2211 = vld [vmem:[%s2202 + $0x40] sm:$0xff]
      %v2212 = vld [vmem:[%s2202 + $0x48] sm:$0xff]
      %v2213 = vld [vmem:[%s2202 + $0x50] sm:$0xff]
      %v2214 = vld [vmem:[%s2202 + $0x58] sm:$0xff]
      %v2215 = vld [vmem:[%s2202 + $0x60] sm:$0xff]
      %v2216 = vld [vmem:[%s2202 + $0x68] sm:$0xff]
      %v2217 = vld [vmem:[%s2202 + $0x70] sm:$0xff]
      %v2218 = vld [vmem:[%s2202 + $0x78] sm:$0xff]
      %v2235 = vunpack.c.l.b16 %v2203
      %v2236 = vunpack.c.h.b16 %v2203
      %v2237 = vunpack.c.l.b16 %v2204
      %v2238 = vunpack.c.h.b16 %v2204
      %v2239 = vunpack.c.l.b16 %v2205
      %v2240 = vunpack.c.h.b16 %v2205
      %v2241 = vunpack.c.l.b16 %v2206
      %v2242 = vunpack.c.h.b16 %v2206
      %v2243 = vunpack.c.l.b16 %v2207
      %v2244 = vunpack.c.h.b16 %v2207
      %v2245 = vunpack.c.l.b16 %v2208
      %v2246 = vunpack.c.h.b16 %v2208
      %v2247 = vunpack.c.l.b16 %v2209
      %v2248 = vunpack.c.h.b16 %v2209
      %v2249 = vunpack.c.l.b16 %v2210
      %v2250 = vunpack.c.h.b16 %v2210
      %v2251 = vunpack.c.l.b16 %v2211
      %v2252 = vunpack.c.h.b16 %v2211
      %v2253 = vunpack.c.l.b16 %v2212
      %v2254 = vunpack.c.h.b16 %v2212
      %v2255 = vunpack.c.l.b16 %v2213
      %v2256 = vunpack.c.h.b16 %v2213
      %v2257 = vunpack.c.l.b16 %v2214
      %v2258 = vunpack.c.h.b16 %v2214
      %v2259 = vunpack.c.l.b16 %v2215
      %v2260 = vunpack.c.h.b16 %v2215
      %v2261 = vunpack.c.l.b16 %v2216
      %v2262 = vunpack.c.h.b16 %v2216
      %v2263 = vunpack.c.l.b16 %v2217
      %v2264 = vunpack.c.h.b16 %v2217
      %v2265 = vunpack.c.l.b16 %v2218
      %v2266 = vunpack.c.h.b16 %v2218
      %v2267 = vpack.c.b16 %v2237, %v2235
      %v2268 = vpack.c.b16 %v2238, %v2236
      %v2269 = vpack.c.b16 %v2241, %v2239
      %v2270 = vpack.c.b16 %v2242, %v2240
      %v2271 = vpack.c.b16 %v2245, %v2243
      %v2272 = vpack.c.b16 %v2246, %v2244
      %v2273 = vpack.c.b16 %v2249, %v2247
      %v2274 = vpack.c.b16 %v2250, %v2248
      %v2275 = vpack.c.b16 %v2253, %v2251
      %v2276 = vpack.c.b16 %v2254, %v2252
      %v2277 = vpack.c.b16 %v2257, %v2255
      %v2278 = vpack.c.b16 %v2258, %v2256
      %v2279 = vpack.c.b16 %v2261, %v2259
      %v2280 = vpack.c.b16 %v2262, %v2260
      %v2281 = vpack.c.b16 %v2265, %v2263
      %v2282 = vpack.c.b16 %v2266, %v2264
      %2299 = vmatpush.bf16.msra.mxu0 %v2281
      %2300 = vmatpush.bf16.msra.mxu0 %v2279
      %2301 = vmatpush.bf16.msra.mxu0 %v2277
      %2302 = vmatpush.bf16.msra.mxu0 %v2275
      %2303 = vmatpush.bf16.msra.mxu0 %v2273
      %2304 = vmatpush.bf16.msra.mxu0 %v2271
      %2305 = vmatpush.bf16.msra.mxu0 %v2269
      %2306 = vmatpush.bf16.msra.mxu0 %v2267
      %2307 = vmatmul.bf16.gmra.mxu0 %v2200
      %v2308 = vpop.f32.mrf.mxu0
      %v2309 = vadd.f32 0.0, %v2308
      %v2310 = vpop.f32.mrf.mxu0
      %v2311 = vadd.f32 0.0, %v2310
      %2312 = vmatmul.bf16.gmra.mxu0 %v2201
      %v2313 = vpop.f32.mrf.mxu0
      %v2314 = vadd.f32 0.0, %v2313
      %v2315 = vpop.f32.mrf.mxu0
      %v2316 = vadd.f32 0.0, %v2315
      %2317 = vdwg.mxu0
      %2318 = vmatpush.bf16.msra.mxu0 %v2282
      %2319 = vmatpush.bf16.msra.mxu0 %v2280
      %2320 = vmatpush.bf16.msra.mxu0 %v2278
      %2321 = vmatpush.bf16.msra.mxu0 %v2276
      %2322 = vmatpush.bf16.msra.mxu0 %v2274
      %2323 = vmatpush.bf16.msra.mxu0 %v2272
      %2324 = vmatpush.bf16.msra.mxu0 %v2270
      %2325 = vmatpush.bf16.msra.mxu0 %v2268
      %2326 = vmatmul.bf16.gmra.mxu0 %v2200
      %v2327 = vpop.f32.mrf.mxu0
      %v2328 = vadd.f32 0.0, %v2327
      %v2329 = vpop.f32.mrf.mxu0
      %v2330 = vadd.f32 0.0, %v2329
      %2331 = vmatmul.bf16.gmra.mxu0 %v2201
      %v2332 = vpop.f32.mrf.mxu0
      %v2333 = vadd.f32 0.0, %v2332
      %v2334 = vpop.f32.mrf.mxu0
      %v2335 = vadd.f32 0.0, %v2334
      %2336 = vdwg.mxu0
      %v2337 = vadd.f32 %v2192, %v2309
      %v2338 = vadd.f32 %v2193, %v2328
      %v2339 = vadd.f32 %v2194, %v2311
      %v2340 = vadd.f32 %v2195, %v2330
      %v2341 = vadd.f32 %v2196, %v2314
      %v2342 = vadd.f32 %v2197, %v2333
      %v2343 = vadd.f32 %v2198, %v2316
      %v2344 = vadd.f32 %v2199, %v2335
      %v2345 = vpack.c.bf16 %v1714, %v1713
      %v2346 = vpack.c.bf16 %v1716, %v1715
      %s2347 = scalar_lea.vmem %s3, 512
      %v2348 = vld [vmem:[%s2347] sm:$0xff]
      %v2349 = vld [vmem:[%s2347 + $0x8] sm:$0xff]
      %v2350 = vld [vmem:[%s2347 + $0x10] sm:$0xff]
      %v2351 = vld [vmem:[%s2347 + $0x18] sm:$0xff]
      %v2352 = vld [vmem:[%s2347 + $0x20] sm:$0xff]
      %v2353 = vld [vmem:[%s2347 + $0x28] sm:$0xff]
      %v2354 = vld [vmem:[%s2347 + $0x30] sm:$0xff]
      %v2355 = vld [vmem:[%s2347 + $0x38] sm:$0xff]
      %v2356 = vld [vmem:[%s2347 + $0x40] sm:$0xff]
      %v2357 = vld [vmem:[%s2347 + $0x48] sm:$0xff]
      %v2358 = vld [vmem:[%s2347 + $0x50] sm:$0xff]
      %v2359 = vld [vmem:[%s2347 + $0x58] sm:$0xff]
      %v2360 = vld [vmem:[%s2347 + $0x60] sm:$0xff]
      %v2361 = vld [vmem:[%s2347 + $0x68] sm:$0xff]
      %v2362 = vld [vmem:[%s2347 + $0x70] sm:$0xff]
      %v2363 = vld [vmem:[%s2347 + $0x78] sm:$0xff]
      %v2380 = vunpack.c.l.b16 %v2348
      %v2381 = vunpack.c.h.b16 %v2348
      %v2382 = vunpack.c.l.b16 %v2349
      %v2383 = vunpack.c.h.b16 %v2349
      %v2384 = vunpack.c.l.b16 %v2350
      %v2385 = vunpack.c.h.b16 %v2350
      %v2386 = vunpack.c.l.b16 %v2351
      %v2387 = vunpack.c.h.b16 %v2351
      %v2388 = vunpack.c.l.b16 %v2352
      %v2389 = vunpack.c.h.b16 %v2352
      %v2390 = vunpack.c.l.b16 %v2353
      %v2391 = vunpack.c.h.b16 %v2353
      %v2392 = vunpack.c.l.b16 %v2354
      %v2393 = vunpack.c.h.b16 %v2354
      %v2394 = vunpack.c.l.b16 %v2355
      %v2395 = vunpack.c.h.b16 %v2355
      %v2396 = vunpack.c.l.b16 %v2356
      %v2397 = vunpack.c.h.b16 %v2356
      %v2398 = vunpack.c.l.b16 %v2357
      %v2399 = vunpack.c.h.b16 %v2357
      %v2400 = vunpack.c.l.b16 %v2358
      %v2401 = vunpack.c.h.b16 %v2358
      %v2402 = vunpack.c.l.b16 %v2359
      %v2403 = vunpack.c.h.b16 %v2359
      %v2404 = vunpack.c.l.b16 %v2360
      %v2405 = vunpack.c.h.b16 %v2360
      %v2406 = vunpack.c.l.b16 %v2361
      %v2407 = vunpack.c.h.b16 %v2361
      %v2408 = vunpack.c.l.b16 %v2362
      %v2409 = vunpack.c.h.b16 %v2362
      %v2410 = vunpack.c.l.b16 %v2363
      %v2411 = vunpack.c.h.b16 %v2363
      %v2412 = vpack.c.b16 %v2382, %v2380
      %v2413 = vpack.c.b16 %v2383, %v2381
      %v2414 = vpack.c.b16 %v2386, %v2384
      %v2415 = vpack.c.b16 %v2387, %v2385
      %v2416 = vpack.c.b16 %v2390, %v2388
      %v2417 = vpack.c.b16 %v2391, %v2389
      %v2418 = vpack.c.b16 %v2394, %v2392
      %v2419 = vpack.c.b16 %v2395, %v2393
      %v2420 = vpack.c.b16 %v2398, %v2396
      %v2421 = vpack.c.b16 %v2399, %v2397
      %v2422 = vpack.c.b16 %v2402, %v2400
      %v2423 = vpack.c.b16 %v2403, %v2401
      %v2424 = vpack.c.b16 %v2406, %v2404
      %v2425 = vpack.c.b16 %v2407, %v2405
      %v2426 = vpack.c.b16 %v2410, %v2408
      %v2427 = vpack.c.b16 %v2411, %v2409
      %2444 = vmatpush.bf16.msra.mxu0 %v2426
      %2445 = vmatpush.bf16.msra.mxu0 %v2424
      %2446 = vmatpush.bf16.msra.mxu0 %v2422
      %2447 = vmatpush.bf16.msra.mxu0 %v2420
      %2448 = vmatpush.bf16.msra.mxu0 %v2418
      %2449 = vmatpush.bf16.msra.mxu0 %v2416
      %2450 = vmatpush.bf16.msra.mxu0 %v2414
      %2451 = vmatpush.bf16.msra.mxu0 %v2412
      %2452 = vmatmul.bf16.gmra.mxu0 %v2345
      %v2453 = vpop.f32.mrf.mxu0
      %v2454 = vadd.f32 0.0, %v2453
      %v2455 = vpop.f32.mrf.mxu0
      %v2456 = vadd.f32 0.0, %v2455
      %2457 = vmatmul.bf16.gmra.mxu0 %v2346
      %v2458 = vpop.f32.mrf.mxu0
      %v2459 = vadd.f32 0.0, %v2458
      %v2460 = vpop.f32.mrf.mxu0
      %v2461 = vadd.f32 0.0, %v2460
      %2462 = vdwg.mxu0
      %2463 = vmatpush.bf16.msra.mxu0 %v2427
      %2464 = vmatpush.bf16.msra.mxu0 %v2425
      %2465 = vmatpush.bf16.msra.mxu0 %v2423
      %2466 = vmatpush.bf16.msra.mxu0 %v2421
      %2467 = vmatpush.bf16.msra.mxu0 %v2419
      %2468 = vmatpush.bf16.msra.mxu0 %v2417
      %2469 = vmatpush.bf16.msra.mxu0 %v2415
      %2470 = vmatpush.bf16.msra.mxu0 %v2413
      %2471 = vmatmul.bf16.gmra.mxu0 %v2345
      %v2472 = vpop.f32.mrf.mxu0
      %v2473 = vadd.f32 0.0, %v2472
      %v2474 = vpop.f32.mrf.mxu0
      %v2475 = vadd.f32 0.0, %v2474
      %2476 = vmatmul.bf16.gmra.mxu0 %v2346
      %v2477 = vpop.f32.mrf.mxu0
      %v2478 = vadd.f32 0.0, %v2477
      %v2479 = vpop.f32.mrf.mxu0
      %v2480 = vadd.f32 0.0, %v2479
      %2481 = vdwg.mxu0
      %v2482 = vadd.f32 %v2337, %v2454
      %v2483 = vadd.f32 %v2338, %v2473
      %v2484 = vadd.f32 %v2339, %v2456
      %v2485 = vadd.f32 %v2340, %v2475
      %v2486 = vadd.f32 %v2341, %v2459
      %v2487 = vadd.f32 %v2342, %v2478
      %v2488 = vadd.f32 %v2343, %v2461
      %v2489 = vadd.f32 %v2344, %v2480
      %v2490 = vpack.c.bf16 %v1722, %v1721
      %v2491 = vpack.c.bf16 %v1724, %v1723
      %s2492 = scalar_lea.vmem %s3, 640
      %v2493 = vld [vmem:[%s2492] sm:$0xff]
      %v2494 = vld [vmem:[%s2492 + $0x8] sm:$0xff]
      %v2495 = vld [vmem:[%s2492 + $0x10] sm:$0xff]
      %v2496 = vld [vmem:[%s2492 + $0x18] sm:$0xff]
      %v2497 = vld [vmem:[%s2492 + $0x20] sm:$0xff]
      %v2498 = vld [vmem:[%s2492 + $0x28] sm:$0xff]
      %v2499 = vld [vmem:[%s2492 + $0x30] sm:$0xff]
      %v2500 = vld [vmem:[%s2492 + $0x38] sm:$0xff]
      %v2501 = vld [vmem:[%s2492 + $0x40] sm:$0xff]
      %v2502 = vld [vmem:[%s2492 + $0x48] sm:$0xff]
      %v2503 = vld [vmem:[%s2492 + $0x50] sm:$0xff]
      %v2504 = vld [vmem:[%s2492 + $0x58] sm:$0xff]
      %v2505 = vld [vmem:[%s2492 + $0x60] sm:$0xff]
      %v2506 = vld [vmem:[%s2492 + $0x68] sm:$0xff]
      %v2507 = vld [vmem:[%s2492 + $0x70] sm:$0xff]
      %v2508 = vld [vmem:[%s2492 + $0x78] sm:$0xff]
      %v2525 = vunpack.c.l.b16 %v2493
      %v2526 = vunpack.c.h.b16 %v2493
      %v2527 = vunpack.c.l.b16 %v2494
      %v2528 = vunpack.c.h.b16 %v2494
      %v2529 = vunpack.c.l.b16 %v2495
      %v2530 = vunpack.c.h.b16 %v2495
      %v2531 = vunpack.c.l.b16 %v2496
      %v2532 = vunpack.c.h.b16 %v2496
      %v2533 = vunpack.c.l.b16 %v2497
      %v2534 = vunpack.c.h.b16 %v2497
      %v2535 = vunpack.c.l.b16 %v2498
      %v2536 = vunpack.c.h.b16 %v2498
      %v2537 = vunpack.c.l.b16 %v2499
      %v2538 = vunpack.c.h.b16 %v2499
      %v2539 = vunpack.c.l.b16 %v2500
      %v2540 = vunpack.c.h.b16 %v2500
      %v2541 = vunpack.c.l.b16 %v2501
      %v2542 = vunpack.c.h.b16 %v2501
      %v2543 = vunpack.c.l.b16 %v2502
      %v2544 = vunpack.c.h.b16 %v2502
      %v2545 = vunpack.c.l.b16 %v2503
      %v2546 = vunpack.c.h.b16 %v2503
      %v2547 = vunpack.c.l.b16 %v2504
      %v2548 = vunpack.c.h.b16 %v2504
      %v2549 = vunpack.c.l.b16 %v2505
      %v2550 = vunpack.c.h.b16 %v2505
      %v2551 = vunpack.c.l.b16 %v2506
      %v2552 = vunpack.c.h.b16 %v2506
      %v2553 = vunpack.c.l.b16 %v2507
      %v2554 = vunpack.c.h.b16 %v2507
      %v2555 = vunpack.c.l.b16 %v2508
      %v2556 = vunpack.c.h.b16 %v2508
      %v2557 = vpack.c.b16 %v2527, %v2525
      %v2558 = vpack.c.b16 %v2528, %v2526
      %v2559 = vpack.c.b16 %v2531, %v2529
      %v2560 = vpack.c.b16 %v2532, %v2530
      %v2561 = vpack.c.b16 %v2535, %v2533
      %v2562 = vpack.c.b16 %v2536, %v2534
      %v2563 = vpack.c.b16 %v2539, %v2537
      %v2564 = vpack.c.b16 %v2540, %v2538
      %v2565 = vpack.c.b16 %v2543, %v2541
      %v2566 = vpack.c.b16 %v2544, %v2542
      %v2567 = vpack.c.b16 %v2547, %v2545
      %v2568 = vpack.c.b16 %v2548, %v2546
      %v2569 = vpack.c.b16 %v2551, %v2549
      %v2570 = vpack.c.b16 %v2552, %v2550
      %v2571 = vpack.c.b16 %v2555, %v2553
      %v2572 = vpack.c.b16 %v2556, %v2554
      %2589 = vmatpush.bf16.msra.mxu0 %v2571
      %2590 = vmatpush.bf16.msra.mxu0 %v2569
      %2591 = vmatpush.bf16.msra.mxu0 %v2567
      %2592 = vmatpush.bf16.msra.mxu0 %v2565
      %2593 = vmatpush.bf16.msra.mxu0 %v2563
      %2594 = vmatpush.bf16.msra.mxu0 %v2561
      %2595 = vmatpush.bf16.msra.mxu0 %v2559
      %2596 = vmatpush.bf16.msra.mxu0 %v2557
      %2597 = vmatmul.bf16.gmra.mxu0 %v2490
      %v2598 = vpop.f32.mrf.mxu0
      %v2599 = vadd.f32 0.0, %v2598
      %v2600 = vpop.f32.mrf.mxu0
      %v2601 = vadd.f32 0.0, %v2600
      %2602 = vmatmul.bf16.gmra.mxu0 %v2491
      %v2603 = vpop.f32.mrf.mxu0
      %v2604 = vadd.f32 0.0, %v2603
      %v2605 = vpop.f32.mrf.mxu0
      %v2606 = vadd.f32 0.0, %v2605
      %2607 = vdwg.mxu0
      %2608 = vmatpush.bf16.msra.mxu0 %v2572
      %2609 = vmatpush.bf16.msra.mxu0 %v2570
      %2610 = vmatpush.bf16.msra.mxu0 %v2568
      %2611 = vmatpush.bf16.msra.mxu0 %v2566
      %2612 = vmatpush.bf16.msra.mxu0 %v2564
      %2613 = vmatpush.bf16.msra.mxu0 %v2562
      %2614 = vmatpush.bf16.msra.mxu0 %v2560
      %2615 = vmatpush.bf16.msra.mxu0 %v2558
      %2616 = vmatmul.bf16.gmra.mxu0 %v2490
      %v2617 = vpop.f32.mrf.mxu0
      %v2618 = vadd.f32 0.0, %v2617
      %v2619 = vpop.f32.mrf.mxu0
      %v2620 = vadd.f32 0.0, %v2619
      %2621 = vmatmul.bf16.gmra.mxu0 %v2491
      %v2622 = vpop.f32.mrf.mxu0
      %v2623 = vadd.f32 0.0, %v2622
      %v2624 = vpop.f32.mrf.mxu0
      %v2625 = vadd.f32 0.0, %v2624
      %2626 = vdwg.mxu0
      %v2627 = vadd.f32 %v2482, %v2599
      %v2628 = vadd.f32 %v2483, %v2618
      %v2629 = vadd.f32 %v2484, %v2601
      %v2630 = vadd.f32 %v2485, %v2620
      %v2631 = vadd.f32 %v2486, %v2604
      %v2632 = vadd.f32 %v2487, %v2623
      %v2633 = vadd.f32 %v2488, %v2606
      %v2634 = vadd.f32 %v2489, %v2625
      %v2635 = vpack.c.bf16 %v1730, %v1729
      %v2636 = vpack.c.bf16 %v1732, %v1731
      %s2637 = scalar_lea.vmem %s3, 768
      %v2638 = vld [vmem:[%s2637] sm:$0xff]
      %v2639 = vld [vmem:[%s2637 + $0x8] sm:$0xff]
      %v2640 = vld [vmem:[%s2637 + $0x10] sm:$0xff]
      %v2641 = vld [vmem:[%s2637 + $0x18] sm:$0xff]
      %v2642 = vld [vmem:[%s2637 + $0x20] sm:$0xff]
      %v2643 = vld [vmem:[%s2637 + $0x28] sm:$0xff]
      %v2644 = vld [vmem:[%s2637 + $0x30] sm:$0xff]
      %v2645 = vld [vmem:[%s2637 + $0x38] sm:$0xff]
      %v2646 = vld [vmem:[%s2637 + $0x40] sm:$0xff]
      %v2647 = vld [vmem:[%s2637 + $0x48] sm:$0xff]
      %v2648 = vld [vmem:[%s2637 + $0x50] sm:$0xff]
      %v2649 = vld [vmem:[%s2637 + $0x58] sm:$0xff]
      %v2650 = vld [vmem:[%s2637 + $0x60] sm:$0xff]
      %v2651 = vld [vmem:[%s2637 + $0x68] sm:$0xff]
      %v2652 = vld [vmem:[%s2637 + $0x70] sm:$0xff]
      %v2653 = vld [vmem:[%s2637 + $0x78] sm:$0xff]
      %v2670 = vunpack.c.l.b16 %v2638
      %v2671 = vunpack.c.h.b16 %v2638
      %v2672 = vunpack.c.l.b16 %v2639
      %v2673 = vunpack.c.h.b16 %v2639
      %v2674 = vunpack.c.l.b16 %v2640
      %v2675 = vunpack.c.h.b16 %v2640
      %v2676 = vunpack.c.l.b16 %v2641
      %v2677 = vunpack.c.h.b16 %v2641
      %v2678 = vunpack.c.l.b16 %v2642
      %v2679 = vunpack.c.h.b16 %v2642
      %v2680 = vunpack.c.l.b16 %v2643
      %v2681 = vunpack.c.h.b16 %v2643
      %v2682 = vunpack.c.l.b16 %v2644
      %v2683 = vunpack.c.h.b16 %v2644
      %v2684 = vunpack.c.l.b16 %v2645
      %v2685 = vunpack.c.h.b16 %v2645
      %v2686 = vunpack.c.l.b16 %v2646
      %v2687 = vunpack.c.h.b16 %v2646
      %v2688 = vunpack.c.l.b16 %v2647
      %v2689 = vunpack.c.h.b16 %v2647
      %v2690 = vunpack.c.l.b16 %v2648
      %v2691 = vunpack.c.h.b16 %v2648
      %v2692 = vunpack.c.l.b16 %v2649
      %v2693 = vunpack.c.h.b16 %v2649
      %v2694 = vunpack.c.l.b16 %v2650
      %v2695 = vunpack.c.h.b16 %v2650
      %v2696 = vunpack.c.l.b16 %v2651
      %v2697 = vunpack.c.h.b16 %v2651
      %v2698 = vunpack.c.l.b16 %v2652
      %v2699 = vunpack.c.h.b16 %v2652
      %v2700 = vunpack.c.l.b16 %v2653
      %v2701 = vunpack.c.h.b16 %v2653
      %v2702 = vpack.c.b16 %v2672, %v2670
      %v2703 = vpack.c.b16 %v2673, %v2671
      %v2704 = vpack.c.b16 %v2676, %v2674
      %v2705 = vpack.c.b16 %v2677, %v2675
      %v2706 = vpack.c.b16 %v2680, %v2678
      %v2707 = vpack.c.b16 %v2681, %v2679
      %v2708 = vpack.c.b16 %v2684, %v2682
      %v2709 = vpack.c.b16 %v2685, %v2683
      %v2710 = vpack.c.b16 %v2688, %v2686
      %v2711 = vpack.c.b16 %v2689, %v2687
      %v2712 = vpack.c.b16 %v2692, %v2690
      %v2713 = vpack.c.b16 %v2693, %v2691
      %v2714 = vpack.c.b16 %v2696, %v2694
      %v2715 = vpack.c.b16 %v2697, %v2695
      %v2716 = vpack.c.b16 %v2700, %v2698
      %v2717 = vpack.c.b16 %v2701, %v2699
      %2734 = vmatpush.bf16.msra.mxu0 %v2716
      %2735 = vmatpush.bf16.msra.mxu0 %v2714
      %2736 = vmatpush.bf16.msra.mxu0 %v2712
      %2737 = vmatpush.bf16.msra.mxu0 %v2710
      %2738 = vmatpush.bf16.msra.mxu0 %v2708
      %2739 = vmatpush.bf16.msra.mxu0 %v2706
      %2740 = vmatpush.bf16.msra.mxu0 %v2704
      %2741 = vmatpush.bf16.msra.mxu0 %v2702
      %2742 = vmatmul.bf16.gmra.mxu0 %v2635
      %v2743 = vpop.f32.mrf.mxu0
      %v2744 = vadd.f32 0.0, %v2743
      %v2745 = vpop.f32.mrf.mxu0
      %v2746 = vadd.f32 0.0, %v2745
      %2747 = vmatmul.bf16.gmra.mxu0 %v2636
      %v2748 = vpop.f32.mrf.mxu0
      %v2749 = vadd.f32 0.0, %v2748
      %v2750 = vpop.f32.mrf.mxu0
      %v2751 = vadd.f32 0.0, %v2750
      %2752 = vdwg.mxu0
      %2753 = vmatpush.bf16.msra.mxu0 %v2717
      %2754 = vmatpush.bf16.msra.mxu0 %v2715
      %2755 = vmatpush.bf16.msra.mxu0 %v2713
      %2756 = vmatpush.bf16.msra.mxu0 %v2711
      %2757 = vmatpush.bf16.msra.mxu0 %v2709
      %2758 = vmatpush.bf16.msra.mxu0 %v2707
      %2759 = vmatpush.bf16.msra.mxu0 %v2705
      %2760 = vmatpush.bf16.msra.mxu0 %v2703
      %2761 = vmatmul.bf16.gmra.mxu0 %v2635
      %v2762 = vpop.f32.mrf.mxu0
      %v2763 = vadd.f32 0.0, %v2762
      %v2764 = vpop.f32.mrf.mxu0
      %v2765 = vadd.f32 0.0, %v2764
      %2766 = vmatmul.bf16.gmra.mxu0 %v2636
      %v2767 = vpop.f32.mrf.mxu0
      %v2768 = vadd.f32 0.0, %v2767
      %v2769 = vpop.f32.mrf.mxu0
      %v2770 = vadd.f32 0.0, %v2769
      %2771 = vdwg.mxu0
      %v2772 = vadd.f32 %v2627, %v2744
      %v2773 = vadd.f32 %v2628, %v2763
      %v2774 = vadd.f32 %v2629, %v2746
      %v2775 = vadd.f32 %v2630, %v2765
      %v2776 = vadd.f32 %v2631, %v2749
      %v2777 = vadd.f32 %v2632, %v2768
      %v2778 = vadd.f32 %v2633, %v2751
      %v2779 = vadd.f32 %v2634, %v2770
      %v2780 = vpack.c.bf16 %v1738, %v1737
      %v2781 = vpack.c.bf16 %v1740, %v1739
      %s2782 = scalar_lea.vmem %s3, 896
      %v2783 = vld [vmem:[%s2782] sm:$0xff]
      %v2784 = vld [vmem:[%s2782 + $0x8] sm:$0xff]
      %v2785 = vld [vmem:[%s2782 + $0x10] sm:$0xff]
      %v2786 = vld [vmem:[%s2782 + $0x18] sm:$0xff]
      %v2787 = vld [vmem:[%s2782 + $0x20] sm:$0xff]
      %v2788 = vld [vmem:[%s2782 + $0x28] sm:$0xff]
      %v2789 = vld [vmem:[%s2782 + $0x30] sm:$0xff]
      %v2790 = vld [vmem:[%s2782 + $0x38] sm:$0xff]
      %v2791 = vld [vmem:[%s2782 + $0x40] sm:$0xff]
      %v2792 = vld [vmem:[%s2782 + $0x48] sm:$0xff]
      %v2793 = vld [vmem:[%s2782 + $0x50] sm:$0xff]
      %v2794 = vld [vmem:[%s2782 + $0x58] sm:$0xff]
      %v2795 = vld [vmem:[%s2782 + $0x60] sm:$0xff]
      %v2796 = vld [vmem:[%s2782 + $0x68] sm:$0xff]
      %v2797 = vld [vmem:[%s2782 + $0x70] sm:$0xff]
      %v2798 = vld [vmem:[%s2782 + $0x78] sm:$0xff]
      %v2815 = vunpack.c.l.b16 %v2783
      %v2816 = vunpack.c.h.b16 %v2783
      %v2817 = vunpack.c.l.b16 %v2784
      %v2818 = vunpack.c.h.b16 %v2784
      %v2819 = vunpack.c.l.b16 %v2785
      %v2820 = vunpack.c.h.b16 %v2785
      %v2821 = vunpack.c.l.b16 %v2786
      %v2822 = vunpack.c.h.b16 %v2786
      %v2823 = vunpack.c.l.b16 %v2787
      %v2824 = vunpack.c.h.b16 %v2787
      %v2825 = vunpack.c.l.b16 %v2788
      %v2826 = vunpack.c.h.b16 %v2788
      %v2827 = vunpack.c.l.b16 %v2789
      %v2828 = vunpack.c.h.b16 %v2789
      %v2829 = vunpack.c.l.b16 %v2790
      %v2830 = vunpack.c.h.b16 %v2790
      %v2831 = vunpack.c.l.b16 %v2791
      %v2832 = vunpack.c.h.b16 %v2791
      %v2833 = vunpack.c.l.b16 %v2792
      %v2834 = vunpack.c.h.b16 %v2792
      %v2835 = vunpack.c.l.b16 %v2793
      %v2836 = vunpack.c.h.b16 %v2793
      %v2837 = vunpack.c.l.b16 %v2794
      %v2838 = vunpack.c.h.b16 %v2794
      %v2839 = vunpack.c.l.b16 %v2795
      %v2840 = vunpack.c.h.b16 %v2795
      %v2841 = vunpack.c.l.b16 %v2796
      %v2842 = vunpack.c.h.b16 %v2796
      %v2843 = vunpack.c.l.b16 %v2797
      %v2844 = vunpack.c.h.b16 %v2797
      %v2845 = vunpack.c.l.b16 %v2798
      %v2846 = vunpack.c.h.b16 %v2798
      %v2847 = vpack.c.b16 %v2817, %v2815
      %v2848 = vpack.c.b16 %v2818, %v2816
      %v2849 = vpack.c.b16 %v2821, %v2819
      %v2850 = vpack.c.b16 %v2822, %v2820
      %v2851 = vpack.c.b16 %v2825, %v2823
      %v2852 = vpack.c.b16 %v2826, %v2824
      %v2853 = vpack.c.b16 %v2829, %v2827
      %v2854 = vpack.c.b16 %v2830, %v2828
      %v2855 = vpack.c.b16 %v2833, %v2831
      %v2856 = vpack.c.b16 %v2834, %v2832
      %v2857 = vpack.c.b16 %v2837, %v2835
      %v2858 = vpack.c.b16 %v2838, %v2836
      %v2859 = vpack.c.b16 %v2841, %v2839
      %v2860 = vpack.c.b16 %v2842, %v2840
      %v2861 = vpack.c.b16 %v2845, %v2843
      %v2862 = vpack.c.b16 %v2846, %v2844
      %2879 = vmatpush.bf16.msra.mxu0 %v2861
      %2880 = vmatpush.bf16.msra.mxu0 %v2859
      %2881 = vmatpush.bf16.msra.mxu0 %v2857
      %2882 = vmatpush.bf16.msra.mxu0 %v2855
      %2883 = vmatpush.bf16.msra.mxu0 %v2853
      %2884 = vmatpush.bf16.msra.mxu0 %v2851
      %2885 = vmatpush.bf16.msra.mxu0 %v2849
      %2886 = vmatpush.bf16.msra.mxu0 %v2847
      %2887 = vmatmul.bf16.gmra.mxu0 %v2780
      %v2888 = vpop.f32.mrf.mxu0
      %v2889 = vadd.f32 0.0, %v2888
      %v2890 = vpop.f32.mrf.mxu0
      %v2891 = vadd.f32 0.0, %v2890
      %2892 = vmatmul.bf16.gmra.mxu0 %v2781
      %v2893 = vpop.f32.mrf.mxu0
      %v2894 = vadd.f32 0.0, %v2893
      %v2895 = vpop.f32.mrf.mxu0
      %v2896 = vadd.f32 0.0, %v2895
      %2897 = vdwg.mxu0
      %2898 = vmatpush.bf16.msra.mxu0 %v2862
      %2899 = vmatpush.bf16.msra.mxu0 %v2860
      %2900 = vmatpush.bf16.msra.mxu0 %v2858
      %2901 = vmatpush.bf16.msra.mxu0 %v2856
      %2902 = vmatpush.bf16.msra.mxu0 %v2854
      %2903 = vmatpush.bf16.msra.mxu0 %v2852
      %2904 = vmatpush.bf16.msra.mxu0 %v2850
      %2905 = vmatpush.bf16.msra.mxu0 %v2848
      %2906 = vmatmul.bf16.gmra.mxu0 %v2780
      %v2907 = vpop.f32.mrf.mxu0
      %v2908 = vadd.f32 0.0, %v2907
      %v2909 = vpop.f32.mrf.mxu0
      %v2910 = vadd.f32 0.0, %v2909
      %2911 = vmatmul.bf16.gmra.mxu0 %v2781
      %v2912 = vpop.f32.mrf.mxu0
      %v2913 = vadd.f32 0.0, %v2912
      %v2914 = vpop.f32.mrf.mxu0
      %v2915 = vadd.f32 0.0, %v2914
      %2916 = vdwg.mxu0
      %v2917 = vadd.f32 %v2772, %v2889
      %v2918 = vadd.f32 %v2773, %v2908
      %v2919 = vadd.f32 %v2774, %v2891
      %v2920 = vadd.f32 %v2775, %v2910
      %v2921 = vadd.f32 %v2776, %v2894
      %v2922 = vadd.f32 %v2777, %v2913
      %v2923 = vadd.f32 %v2778, %v2896
      %v2924 = vadd.f32 %v2779, %v2915
      %v2925 = vperm.slane %v1780, 0
      %v2926 = vperm.slane %v1781, 0
      %v2927 = vadd.f32 %v2917, %v2925
      %v2928 = vadd.f32 %v2918, %v2926
      %v2929 = vadd.f32 %v2919, %v2925
      %v2930 = vadd.f32 %v2920, %v2926
      %v2931 = vadd.f32 %v2921, %v2925
      %v2932 = vadd.f32 %v2922, %v2926
      %v2933 = vadd.f32 %v2923, %v2925
      %v2934 = vadd.f32 %v2924, %v2926
      %v2935 = vadd.f32 %v2927, %v2929
      %v2936 = vadd.f32 %v2935, %v2931
      %v2937 = vsel %vm1364, %v2933, 0.0
      %v2938 = vadd.f32 %v2936, %v2937
      %v2939 = vrot.slane %v2938, 4
      %v2940 = vadd.f32 %v2938, %v2939
      %v2941 = vrot.slane %v2940, 2
      %v2942 = vadd.f32 %v2940, %v2941
      %v2943 = vrot.slane %v2942, 1
      %v2944 = vadd.f32 %v2942, %v2943
      %v2945 = vadd.f32 %v2928, %v2930
      %v2946 = vadd.f32 %v2945, %v2932
      %v2947 = vsel %vm1364, %v2934, 0.0
      %v2948 = vadd.f32 %v2946, %v2947
      %v2949 = vrot.slane %v2948, 4
      %v2950 = vadd.f32 %v2948, %v2949
      %v2951 = vrot.slane %v2950, 2
      %v2952 = vadd.f32 %v2950, %v2951
      %v2953 = vrot.slane %v2952, 1
      %v2954 = vadd.f32 %v2952, %v2953
      %v2955 = vadd.f32 %v2944, 0.0
      %v2956 = vadd.f32 %v2954, 0.0
      %v2957 = vsel %vm1451, %v2955, 0.0
      %v2958 = vsel %vm1451, %v2956, 0.0
      %v2959 = vadd.f32 %v2957, %v2958
      %2960 = vadd.xlane.f32.xlu0 %v2959
      %v2961 = vpop.xlane.xlu0 %2960
      %v2962 = vrot.slane %v2961, 4
      %v2963 = vadd.f32 %v2961, %v2962
      %v2964 = vrot.slane %v2963, 2
      %v2965 = vadd.f32 %v2963, %v2964
      %v2966 = vrot.slane %v2965, 1
      %v2967 = vadd.f32 %v2965, %v2966
      %s2968 = vtos %v2967
      %s2969 = smul.f32 %s2968, 0.000154321
      %v2970 = vstv %s2969
      %v2971 = vsub.f32 %v2927, %v2970
      %v2972 = vsub.f32 %v2928, %v2970
      %v2973 = vsub.f32 %v2929, %v2970
      %v2974 = vsub.f32 %v2930, %v2970
      %v2975 = vsub.f32 %v2931, %v2970
      %v2976 = vsub.f32 %v2932, %v2970
      %v2977 = vsub.f32 %v2933, %v2970
      %v2978 = vsub.f32 %v2934, %v2970
      %v2979 = vperm.slane %v1780, 3
      %v2980 = vperm.slane %v1781, 3
      %v2981 = vmul.f32 %v2971, %v2979
      %v2982 = vmul.f32 %v2972, %v2980
      %v2983 = vmul.f32 %v2973, %v2979
      %v2984 = vmul.f32 %v2974, %v2980
      %v2985 = vmul.f32 %v2975, %v2979
      %v2986 = vmul.f32 %v2976, %v2980
      %v2987 = vmul.f32 %v2977, %v2979
      %v2988 = vmul.f32 %v2978, %v2980
      %v2989 = vmul.f32 %v2981, %v2981
      %v2990 = vmul.f32 %v2982, %v2982
      %v2991 = vmul.f32 %v2983, %v2983
      %v2992 = vmul.f32 %v2984, %v2984
      %v2993 = vmul.f32 %v2985, %v2985
      %v2994 = vmul.f32 %v2986, %v2986
      %v2995 = vmul.f32 %v2987, %v2987
      %v2996 = vmul.f32 %v2988, %v2988
      %v2997 = vadd.f32 %v2989, %v2991
      %v2998 = vadd.f32 %v2997, %v2993
      %v2999 = vsel %vm1364, %v2995, 0.0
      %v3000 = vadd.f32 %v2998, %v2999
      %v3001 = vrot.slane %v3000, 4
      %v3002 = vadd.f32 %v3000, %v3001
      %v3003 = vrot.slane %v3002, 2
      %v3004 = vadd.f32 %v3002, %v3003
      %v3005 = vrot.slane %v3004, 1
      %v3006 = vadd.f32 %v3004, %v3005
      %v3007 = vadd.f32 %v2990, %v2992
      %v3008 = vadd.f32 %v3007, %v2994
      %v3009 = vsel %vm1364, %v2996, 0.0
      %v3010 = vadd.f32 %v3008, %v3009
      %v3011 = vrot.slane %v3010, 4
      %v3012 = vadd.f32 %v3010, %v3011
      %v3013 = vrot.slane %v3012, 2
      %v3014 = vadd.f32 %v3012, %v3013
      %v3015 = vrot.slane %v3014, 1
      %v3016 = vadd.f32 %v3014, %v3015
      %v3017 = vadd.f32 %v3006, 0.0
      %v3018 = vadd.f32 %v3016, 0.0
      %v3019 = vsel %vm1451, %v3017, 0.0
      %v3020 = vsel %vm1451, %v3018, 0.0
      %v3021 = vadd.f32 %v3019, %v3020
      %3022 = vadd.xlane.f32.xlu0 %v3021
      %v3023 = vpop.xlane.xlu0 %3022
      %v3024 = vrot.slane %v3023, 4
      %v3025 = vadd.f32 %v3023, %v3024
      %v3026 = vrot.slane %v3025, 2
      %v3027 = vadd.f32 %v3025, %v3026
      %v3028 = vrot.slane %v3027, 1
      %v3029 = vadd.f32 %v3027, %v3028
      %s3030 = vtos %v3029
      %s3031 = smul.f32 %s3030, 0.000154321
      %s3032 = sadd.f32 %s3031, 1e-05
      %v3033 = vstv %s3032
      %v3034 = vrsqrt.pop %v3033
      %v3035 = vmul.f32 %v3034, %v3033
      %v3036 = vmul.f32 %v3035, %v3034
      %v3037 = vmul.f32 0.5, %v3036
      %v3038 = vsub.f32 1.5, %v3037
      %v3039 = vmul.f32 %v3034, %v3038
      %vm3040 = vweird.f32 %v3033
      %vm3041 = vweird.f32 %v3034
      %vm3042 = vmor %vm3040, %vm3041
      %v3043 = vsel %vm3042, %v3034, %v3039
      %s3044 = vtos %v3043
      %v3045 = vstv %s3044
      %v3046 = vmul.f32 %v1780, %v3045
      %v3047 = vmul.f32 %v1781, %v3045
      %v3048 = vperm.slane %v3046, 1
      %v3049 = vperm.slane %v3047, 1
      %v3050 = vmul.f32 %v2981, %v3048
      %v3051 = vmul.f32 %v2982, %v3049
      %v3052 = vmul.f32 %v2983, %v3048
      %v3053 = vmul.f32 %v2984, %v3049
      %v3054 = vmul.f32 %v2985, %v3048
      %v3055 = vmul.f32 %v2986, %v3049
      %v3056 = vmul.f32 %v2987, %v3048
      %v3057 = vmul.f32 %v2988, %v3049
      %v3058 = vperm.slane %v1780, 2
      %v3059 = vperm.slane %v1781, 2
      %v3060 = vadd.f32 %v3050, %v3058
      %v3061 = vadd.f32 %v3051, %v3059
      %v3062 = vadd.f32 %v3052, %v3058
      %v3063 = vadd.f32 %v3053, %v3059
      %v3064 = vadd.f32 %v3054, %v3058
      %v3065 = vadd.f32 %v3055, %v3059
      %v3066 = vadd.f32 %v3056, %v3058
      %v3067 = vadd.f32 %v3057, %v3059
      %3068 = vst [vmem:[%s379] sm:$0xff] %v3060
      %3069 = vst [vmem:[%s379 + $0x8] sm:$0xff] %v3061
      %3070 = vst [vmem:[%s379 + $0x10] sm:$0xff] %v3062
      %3071 = vst [vmem:[%s379 + $0x18] sm:$0xff] %v3063
      %3072 = vst [vmem:[%s379 + $0x20] sm:$0xff] %v3064
      %3073 = vst [vmem:[%s379 + $0x28] sm:$0xff] %v3065
      %3074 = vst [vmem:[%s379 + $0x30] sm:$0x7] %v3066
      %3075 = vst [vmem:[%s379 + $0x38] sm:$0x7] %v3067
      %v3076 = vld [vmem:[%s6] sm:$0xff]
      %v3077 = vld [vmem:[%s6 + $0x8] sm:$0xff]
      %v3078 = vld [vmem:[%s6 + $0x10] sm:$0xff]
      %v3079 = vpack.c.bf16 %v3062, %v3060
      %v3080 = vpack.c.bf16 %v3063, %v3061
      %v3081 = vpack.c.bf16 %v3066, %v3064
      %v3082 = vpack.c.bf16 %v3067, %v3065
      %v3083 = vld [vmem:[%s5] sm:$0xff]
      %v3084 = vld [vmem:[%s5 + $0x8] sm:$0xf]
      %v3085 = vld [vmem:[%s5 + $0xc] sm:$0xff]
      %v3086 = vld [vmem:[%s5 + $0x14] sm:$0xf]
      %v3087 = vld [vmem:[%s5 + $0x18] sm:$0xff]
      %v3088 = vld [vmem:[%s5 + $0x20] sm:$0xf]
      %v3089 = vld [vmem:[%s5 + $0x24] sm:$0xff]
      %v3090 = vld [vmem:[%s5 + $0x2c] sm:$0xf]
      %v3091 = vld [vmem:[%s5 + $0x30] sm:$0xff]
      %v3092 = vld [vmem:[%s5 + $0x38] sm:$0xf]
      %v3093 = vld [vmem:[%s5 + $0x3c] sm:$0xff]
      %v3094 = vld [vmem:[%s5 + $0x44] sm:$0xf]
      %v3095 = vld [vmem:[%s5 + $0x48] sm:$0xff]
      %v3096 = vld [vmem:[%s5 + $0x50] sm:$0xf]
      %v3097 = vld [vmem:[%s5 + $0x54] sm:$0xff]
      %v3098 = vld [vmem:[%s5 + $0x5c] sm:$0xf]
      %v3099 = vld [vmem:[%s5 + $0x60] sm:$0xff]
      %v3100 = vld [vmem:[%s5 + $0x68] sm:$0xf]
      %v3101 = vld [vmem:[%s5 + $0x6c] sm:$0xff]
      %v3102 = vld [vmem:[%s5 + $0x74] sm:$0xf]
      %v3103 = vld [vmem:[%s5 + $0x78] sm:$0xff]
      %v3104 = vld [vmem:[%s5 + $0x80] sm:$0xf]
      %v3105 = vld [vmem:[%s5 + $0x84] sm:$0xff]
      %v3106 = vld [vmem:[%s5 + $0x8c] sm:$0xf]
      %v3107 = vld [vmem:[%s5 + $0x90] sm:$0xff]
      %v3108 = vld [vmem:[%s5 + $0x98] sm:$0xf]
      %v3109 = vld [vmem:[%s5 + $0x9c] sm:$0xff]
      %v3110 = vld [vmem:[%s5 + $0xa4] sm:$0xf]
      %v3111 = vld [vmem:[%s5 + $0xa8] sm:$0xff]
      %v3112 = vld [vmem:[%s5 + $0xb0] sm:$0xf]
      %v3113 = vld [vmem:[%s5 + $0xb4] sm:$0xff]
      %v3114 = vld [vmem:[%s5 + $0xbc] sm:$0xf]
      %v3115 = vld [vmem:[%s5 + $0xc0] sm:$0xff]
      %v3116 = vld [vmem:[%s5 + $0xc8] sm:$0xf]
      %v3117 = vld [vmem:[%s5 + $0xcc] sm:$0xff]
      %v3118 = vld [vmem:[%s5 + $0xd4] sm:$0xf]
      %v3119 = vld [vmem:[%s5 + $0xd8] sm:$0xff]
      %v3120 = vld [vmem:[%s5 + $0xe0] sm:$0xf]
      %v3121 = vld [vmem:[%s5 + $0xe4] sm:$0xff]
      %v3122 = vld [vmem:[%s5 + $0xec] sm:$0xf]
      %v3123 = vld [vmem:[%s5 + $0xf0] sm:$0xff]
      %v3124 = vld [vmem:[%s5 + $0xf8] sm:$0xf]
      %v3125 = vld [vmem:[%s5 + $0xfc] sm:$0xff]
      %v3126 = vld [vmem:[%s5 + $0x104] sm:$0xf]
      %v3127 = vld [vmem:[%s5 + $0x108] sm:$0xff]
      %v3128 = vld [vmem:[%s5 + $0x110] sm:$0xf]
      %v3129 = vld [vmem:[%s5 + $0x114] sm:$0xff]
      %v3130 = vld [vmem:[%s5 + $0x11c] sm:$0xf]
      %v3131 = vld [vmem:[%s5 + $0x120] sm:$0xff]
      %v3132 = vld [vmem:[%s5 + $0x128] sm:$0xf]
      %v3133 = vld [vmem:[%s5 + $0x12c] sm:$0xff]
      %v3134 = vld [vmem:[%s5 + $0x134] sm:$0xf]
      %v3135 = vld [vmem:[%s5 + $0x138] sm:$0xff]
      %v3136 = vld [vmem:[%s5 + $0x140] sm:$0xf]
      %v3137 = vld [vmem:[%s5 + $0x144] sm:$0xff]
      %v3138 = vld [vmem:[%s5 + $0x14c] sm:$0xf]
      %v3139 = vld [vmem:[%s5 + $0x150] sm:$0xff]
      %v3140 = vld [vmem:[%s5 + $0x158] sm:$0xf]
      %v3141 = vld [vmem:[%s5 + $0x15c] sm:$0xff]
      %v3142 = vld [vmem:[%s5 + $0x164] sm:$0xf]
      %v3143 = vld [vmem:[%s5 + $0x168] sm:$0xff]
      %v3144 = vld [vmem:[%s5 + $0x170] sm:$0xf]
      %v3145 = vld [vmem:[%s5 + $0x174] sm:$0xff]
      %v3146 = vld [vmem:[%s5 + $0x17c] sm:$0xf]
      %v3147 = vperm.slane %v3076, 0
      %v3148 = vperm.slane %v3077, 0
      %v3149 = vperm.slane %v3078, 0
      %v3214 = vunpack.c.l.b16 %v3083
      %v3215 = vunpack.c.h.b16 %v3083
      %v3216 = vunpack.c.l.b16 %v3084
      %v3217 = vunpack.c.l.b16 %v3085
      %v3218 = vunpack.c.h.b16 %v3085
      %v3219 = vunpack.c.l.b16 %v3086
      %v3220 = vunpack.c.l.b16 %v3087
      %v3221 = vunpack.c.h.b16 %v3087
      %v3222 = vunpack.c.l.b16 %v3088
      %v3223 = vunpack.c.l.b16 %v3089
      %v3224 = vunpack.c.h.b16 %v3089
      %v3225 = vunpack.c.l.b16 %v3090
      %v3226 = vunpack.c.l.b16 %v3091
      %v3227 = vunpack.c.h.b16 %v3091
      %v3228 = vunpack.c.l.b16 %v3092
      %v3229 = vunpack.c.l.b16 %v3093
      %v3230 = vunpack.c.h.b16 %v3093
      %v3231 = vunpack.c.l.b16 %v3094
      %v3232 = vunpack.c.l.b16 %v3095
      %v3233 = vunpack.c.h.b16 %v3095
      %v3234 = vunpack.c.l.b16 %v3096
      %v3235 = vunpack.c.l.b16 %v3097
      %v3236 = vunpack.c.h.b16 %v3097
      %v3237 = vunpack.c.l.b16 %v3098
      %v3238 = vunpack.c.l.b16 %v3099
      %v3239 = vunpack.c.h.b16 %v3099
      %v3240 = vunpack.c.l.b16 %v3100
      %v3241 = vunpack.c.l.b16 %v3101
      %v3242 = vunpack.c.h.b16 %v3101
      %v3243 = vunpack.c.l.b16 %v3102
      %v3244 = vunpack.c.l.b16 %v3103
      %v3245 = vunpack.c.h.b16 %v3103
      %v3246 = vunpack.c.l.b16 %v3104
      %v3247 = vunpack.c.l.b16 %v3105
      %v3248 = vunpack.c.h.b16 %v3105
      %v3249 = vunpack.c.l.b16 %v3106
      %v3250 = vunpack.c.l.b16 %v3107
      %v3251 = vunpack.c.h.b16 %v3107
      %v3252 = vunpack.c.l.b16 %v3108
      %v3253 = vunpack.c.l.b16 %v3109
      %v3254 = vunpack.c.h.b16 %v3109
      %v3255 = vunpack.c.l.b16 %v3110
      %v3256 = vunpack.c.l.b16 %v3111
      %v3257 = vunpack.c.h.b16 %v3111
      %v3258 = vunpack.c.l.b16 %v3112
      %v3259 = vunpack.c.l.b16 %v3113
      %v3260 = vunpack.c.h.b16 %v3113
      %v3261 = vunpack.c.l.b16 %v3114
      %v3262 = vunpack.c.l.b16 %v3115
      %v3263 = vunpack.c.h.b16 %v3115
      %v3264 = vunpack.c.l.b16 %v3116
      %v3265 = vunpack.c.l.b16 %v3117
      %v3266 = vunpack.c.h.b16 %v3117
      %v3267 = vunpack.c.l.b16 %v3118
      %v3268 = vunpack.c.l.b16 %v3119
      %v3269 = vunpack.c.h.b16 %v3119
      %v3270 = vunpack.c.l.b16 %v3120
      %v3271 = vunpack.c.l.b16 %v3121
      %v3272 = vunpack.c.h.b16 %v3121
      %v3273 = vunpack.c.l.b16 %v3122
      %v3274 = vunpack.c.l.b16 %v3123
      %v3275 = vunpack.c.h.b16 %v3123
      %v3276 = vunpack.c.l.b16 %v3124
      %v3277 = vunpack.c.l.b16 %v3125
      %v3278 = vunpack.c.h.b16 %v3125
      %v3279 = vunpack.c.l.b16 %v3126
      %v3280 = vunpack.c.l.b16 %v3127
      %v3281 = vunpack.c.h.b16 %v3127
      %v3282 = vunpack.c.l.b16 %v3128
      %v3283 = vunpack.c.l.b16 %v3129
      %v3284 = vunpack.c.h.b16 %v3129
      %v3285 = vunpack.c.l.b16 %v3130
      %v3286 = vunpack.c.l.b16 %v3131
      %v3287 = vunpack.c.h.b16 %v3131
      %v3288 = vunpack.c.l.b16 %v3132
      %v3289 = vunpack.c.l.b16 %v3133
      %v3290 = vunpack.c.h.b16 %v3133
      %v3291 = vunpack.c.l.b16 %v3134
      %v3292 = vunpack.c.l.b16 %v3135
      %v3293 = vunpack.c.h.b16 %v3135
      %v3294 = vunpack.c.l.b16 %v3136
      %v3295 = vunpack.c.l.b16 %v3137
      %v3296 = vunpack.c.h.b16 %v3137
      %v3297 = vunpack.c.l.b16 %v3138
      %v3298 = vunpack.c.l.b16 %v3139
      %v3299 = vunpack.c.h.b16 %v3139
      %v3300 = vunpack.c.l.b16 %v3140
      %v3301 = vunpack.c.l.b16 %v3141
      %v3302 = vunpack.c.h.b16 %v3141
      %v3303 = vunpack.c.l.b16 %v3142
      %v3304 = vunpack.c.l.b16 %v3143
      %v3305 = vunpack.c.h.b16 %v3143
      %v3306 = vunpack.c.l.b16 %v3144
      %v3307 = vunpack.c.l.b16 %v3145
      %v3308 = vunpack.c.h.b16 %v3145
      %v3309 = vunpack.c.l.b16 %v3146
      %v3310 = vpack.c.b16 %v3217, %v3214
      %v3311 = vpack.c.b16 %v3218, %v3215
      %v3312 = vpack.c.b16 %v3219, %v3216
      %v3313 = vpack.c.b16 %v3223, %v3220
      %v3314 = vpack.c.b16 %v3224, %v3221
      %v3315 = vpack.c.b16 %v3225, %v3222
      %v3316 = vpack.c.b16 %v3229, %v3226
      %v3317 = vpack.c.b16 %v3230, %v3227
      %v3318 = vpack.c.b16 %v3231, %v3228
      %v3319 = vpack.c.b16 %v3235, %v3232
      %v3320 = vpack.c.b16 %v3236, %v3233
      %v3321 = vpack.c.b16 %v3237, %v3234
      %v3322 = vpack.c.b16 %v3241, %v3238
      %v3323 = vpack.c.b16 %v3242, %v3239
      %v3324 = vpack.c.b16 %v3243, %v3240
      %v3325 = vpack.c.b16 %v3247, %v3244
      %v3326 = vpack.c.b16 %v3248, %v3245
      %v3327 = vpack.c.b16 %v3249, %v3246
      %v3328 = vpack.c.b16 %v3253, %v3250
      %v3329 = vpack.c.b16 %v3254, %v3251
      %v3330 = vpack.c.b16 %v3255, %v3252
      %v3331 = vpack.c.b16 %v3259, %v3256
      %v3332 = vpack.c.b16 %v3260, %v3257
      %v3333 = vpack.c.b16 %v3261, %v3258
      %v3334 = vpack.c.b16 %v3265, %v3262
      %v3335 = vpack.c.b16 %v3266, %v3263
      %v3336 = vpack.c.b16 %v3267, %v3264
      %v3337 = vpack.c.b16 %v3271, %v3268
      %v3338 = vpack.c.b16 %v3272, %v3269
      %v3339 = vpack.c.b16 %v3273, %v3270
      %v3340 = vpack.c.b16 %v3277, %v3274
      %v3341 = vpack.c.b16 %v3278, %v3275
      %v3342 = vpack.c.b16 %v3279, %v3276
      %v3343 = vpack.c.b16 %v3283, %v3280
      %v3344 = vpack.c.b16 %v3284, %v3281
      %v3345 = vpack.c.b16 %v3285, %v3282
      %v3346 = vpack.c.b16 %v3289, %v3286
      %v3347 = vpack.c.b16 %v3290, %v3287
      %v3348 = vpack.c.b16 %v3291, %v3288
      %v3349 = vpack.c.b16 %v3295, %v3292
      %v3350 = vpack.c.b16 %v3296, %v3293
      %v3351 = vpack.c.b16 %v3297, %v3294
      %v3352 = vpack.c.b16 %v3301, %v3298
      %v3353 = vpack.c.b16 %v3302, %v3299
      %v3354 = vpack.c.b16 %v3303, %v3300
      %v3355 = vpack.c.b16 %v3307, %v3304
      %v3356 = vpack.c.b16 %v3308, %v3305
      %v3357 = vpack.c.b16 %v3309, %v3306
      %3406 = vmatpush.bf16.msra.mxu0 %v3331
      %3407 = vmatpush.bf16.msra.mxu0 %v3328
      %3408 = vmatpush.bf16.msra.mxu0 %v3325
      %3409 = vmatpush.bf16.msra.mxu0 %v3322
      %3410 = vmatpush.bf16.msra.mxu0 %v3319
      %3411 = vmatpush.bf16.msra.mxu0 %v3316
      %3412 = vmatpush.bf16.msra.mxu0 %v3313
      %3413 = vmatpush.bf16.msra.mxu0 %v3310
      %3414 = vmatmul.bf16.gmra.mxu0 %v3079
      %v3415 = vpop.f32.mrf.mxu0
      %v3416 = vadd.f32 %v3147, %v3415
      %v3417 = vpop.f32.mrf.mxu0
      %v3418 = vadd.f32 %v3147, %v3417
      %3419 = vmatmul.bf16.gmra.mxu0 %v3081
      %v3420 = vpop.f32.mrf.mxu0
      %v3421 = vadd.f32 %v3147, %v3420
      %v3422 = vpop.f32.mrf.mxu0
      %v3423 = vadd.f32 %v3147, %v3422
      %3424 = vdwg.mxu0
      %3425 = vmatpush.bf16.msra.mxu0 %v3355
      %3426 = vmatpush.bf16.msra.mxu0 %v3352
      %3427 = vmatpush.bf16.msra.mxu0 %v3349
      %3428 = vmatpush.bf16.msra.mxu0 %v3346
      %3429 = vmatpush.bf16.msra.mxu0 %v3343
      %3430 = vmatpush.bf16.msra.mxu0 %v3340
      %3431 = vmatpush.bf16.msra.mxu0 %v3337
      %3432 = vmatpush.bf16.msra.mxu0 %v3334
      %3433 = vmatmul.bf16.gmra.mxu0 %v3080
      %v3434 = vpop.f32.mrf.mxu0
      %v3435 = vadd.f32 %v3416, %v3434
      %v3436 = vpop.f32.mrf.mxu0
      %v3437 = vadd.f32 %v3418, %v3436
      %3438 = vmatmul.bf16.gmra.mxu0 %v3082
      %v3439 = vpop.f32.mrf.mxu0
      %v3440 = vadd.f32 %v3421, %v3439
      %v3441 = vpop.f32.mrf.mxu0
      %v3442 = vadd.f32 %v3423, %v3441
      %3443 = vdwg.mxu0
      %3444 = vmatpush.bf16.msra.mxu0 %v3332
      %3445 = vmatpush.bf16.msra.mxu0 %v3329
      %3446 = vmatpush.bf16.msra.mxu0 %v3326
      %3447 = vmatpush.bf16.msra.mxu0 %v3323
      %3448 = vmatpush.bf16.msra.mxu0 %v3320
      %3449 = vmatpush.bf16.msra.mxu0 %v3317
      %3450 = vmatpush.bf16.msra.mxu0 %v3314
      %3451 = vmatpush.bf16.msra.mxu0 %v3311
      %3452 = vmatmul.bf16.gmra.mxu0 %v3079
      %v3453 = vpop.f32.mrf.mxu0
      %v3454 = vadd.f32 %v3148, %v3453
      %v3455 = vpop.f32.mrf.mxu0
      %v3456 = vadd.f32 %v3148, %v3455
      %3457 = vmatmul.bf16.gmra.mxu0 %v3081
      %v3458 = vpop.f32.mrf.mxu0
      %v3459 = vadd.f32 %v3148, %v3458
      %v3460 = vpop.f32.mrf.mxu0
      %v3461 = vadd.f32 %v3148, %v3460
      %3462 = vdwg.mxu0
      %3463 = vmatpush.bf16.msra.mxu0 %v3356
      %3464 = vmatpush.bf16.msra.mxu0 %v3353
      %3465 = vmatpush.bf16.msra.mxu0 %v3350
      %3466 = vmatpush.bf16.msra.mxu0 %v3347
      %3467 = vmatpush.bf16.msra.mxu0 %v3344
      %3468 = vmatpush.bf16.msra.mxu0 %v3341
      %3469 = vmatpush.bf16.msra.mxu0 %v3338
      %3470 = vmatpush.bf16.msra.mxu0 %v3335
      %3471 = vmatmul.bf16.gmra.mxu0 %v3080
      %v3472 = vpop.f32.mrf.mxu0
      %v3473 = vadd.f32 %v3454, %v3472
      %v3474 = vpop.f32.mrf.mxu0
      %v3475 = vadd.f32 %v3456, %v3474
      %3476 = vmatmul.bf16.gmra.mxu0 %v3082
      %v3477 = vpop.f32.mrf.mxu0
      %v3478 = vadd.f32 %v3459, %v3477
      %v3479 = vpop.f32.mrf.mxu0
      %v3480 = vadd.f32 %v3461, %v3479
      %3481 = vdwg.mxu0
      %3482 = vmatpush.bf16.msra.mxu0 %v3333
      %3483 = vmatpush.bf16.msra.mxu0 %v3330
      %3484 = vmatpush.bf16.msra.mxu0 %v3327
      %3485 = vmatpush.bf16.msra.mxu0 %v3324
      %3486 = vmatpush.bf16.msra.mxu0 %v3321
      %3487 = vmatpush.bf16.msra.mxu0 %v3318
      %3488 = vmatpush.bf16.msra.mxu0 %v3315
      %3489 = vmatpush.bf16.msra.mxu0 %v3312
      %3490 = vmatmul.bf16.gmra.mxu0 %v3079
      %v3491 = vpop.f32.mrf.mxu0
      %v3492 = vadd.f32 %v3149, %v3491
      %v3493 = vpop.f32.mrf.mxu0
      %v3494 = vadd.f32 %v3149, %v3493
      %3495 = vmatmul.bf16.gmra.mxu0 %v3081
      %v3496 = vpop.f32.mrf.mxu0
      %v3497 = vadd.f32 %v3149, %v3496
      %v3498 = vpop.f32.mrf.mxu0
      %v3499 = vadd.f32 %v3149, %v3498
      %3500 = vdwg.mxu0
      %3501 = vmatpush.bf16.msra.mxu0 %v3357
      %3502 = vmatpush.bf16.msra.mxu0 %v3354
      %3503 = vmatpush.bf16.msra.mxu0 %v3351
      %3504 = vmatpush.bf16.msra.mxu0 %v3348
      %3505 = vmatpush.bf16.msra.mxu0 %v3345
      %3506 = vmatpush.bf16.msra.mxu0 %v3342
      %3507 = vmatpush.bf16.msra.mxu0 %v3339
      %3508 = vmatpush.bf16.msra.mxu0 %v3336
      %3509 = vmatmul.bf16.gmra.mxu0 %v3080
      %v3510 = vpop.f32.mrf.mxu0
      %v3511 = vadd.f32 %v3492, %v3510
      %v3512 = vpop.f32.mrf.mxu0
      %v3513 = vadd.f32 %v3494, %v3512
      %3514 = vmatmul.bf16.gmra.mxu0 %v3082
      %v3515 = vpop.f32.mrf.mxu0
      %v3516 = vadd.f32 %v3497, %v3515
      %v3517 = vpop.f32.mrf.mxu0
      %v3518 = vadd.f32 %v3499, %v3517
      %3519 = vdwg.mxu0
      %v3520 = vadd.f32 %v3435, %v3437
      %v3521 = vadd.f32 %v3520, %v3440
      %v3522 = vsel %vm1364, %v3442, 0.0
      %v3523 = vadd.f32 %v3521, %v3522
      %v3524 = vrot.slane %v3523, 4
      %v3525 = vadd.f32 %v3523, %v3524
      %v3526 = vrot.slane %v3525, 2
      %v3527 = vadd.f32 %v3525, %v3526
      %v3528 = vrot.slane %v3527, 1
      %v3529 = vadd.f32 %v3527, %v3528
      %v3530 = vadd.f32 %v3473, %v3475
      %v3531 = vadd.f32 %v3530, %v3478
      %v3532 = vsel %vm1364, %v3480, 0.0
      %v3533 = vadd.f32 %v3531, %v3532
      %v3534 = vrot.slane %v3533, 4
      %v3535 = vadd.f32 %v3533, %v3534
      %v3536 = vrot.slane %v3535, 2
      %v3537 = vadd.f32 %v3535, %v3536
      %v3538 = vrot.slane %v3537, 1
      %v3539 = vadd.f32 %v3537, %v3538
      %v3540 = vadd.f32 %v3511, %v3513
      %v3541 = vadd.f32 %v3540, %v3516
      %v3542 = vsel %vm1364, %v3518, 0.0
      %v3543 = vadd.f32 %v3541, %v3542
      %v3544 = vrot.slane %v3543, 4
      %v3545 = vadd.f32 %v3543, %v3544
      %v3546 = vrot.slane %v3545, 2
      %v3547 = vadd.f32 %v3545, %v3546
      %v3548 = vrot.slane %v3547, 1
      %v3549 = vadd.f32 %v3547, %v3548
      %v3550 = vadd.f32 %v3529, 0.0
      %v3551 = vadd.f32 %v3539, 0.0
      %v3552 = vadd.f32 %v3549, 0.0
      %v3553 = vsel %vm1451, %v3550, 0.0
      %v3554 = vsel %vm1451, %v3551, 0.0
      %v3555 = vadd.f32 %v3553, %v3554
      %v3556 = vsel %vm1451, %v3552, 0.0
      %v3557 = vadd.f32 %v3555, %v3556
      %3558 = vadd.xlane.f32.xlu0 %v3557
      %v3559 = vpop.xlane.xlu0 %3558
      %v3560 = vrot.slane %v3559, 4
      %v3561 = vadd.f32 %v3559, %v3560
      %v3562 = vrot.slane %v3561, 2
      %v3563 = vadd.f32 %v3561, %v3562
      %v3564 = vrot.slane %v3563, 1
      %v3565 = vadd.f32 %v3563, %v3564
      %s3566 = vtos %v3565
      %s3567 = smul.f32 %s3566, 9.645062e-05
      %v3568 = vstv %s3567
      %v3569 = vsub.f32 %v3435, %v3568
      %v3570 = vsub.f32 %v3473, %v3568
      %v3571 = vsub.f32 %v3511, %v3568
      %v3572 = vsub.f32 %v3437, %v3568
      %v3573 = vsub.f32 %v3475, %v3568
      %v3574 = vsub.f32 %v3513, %v3568
      %v3575 = vsub.f32 %v3440, %v3568
      %v3576 = vsub.f32 %v3478, %v3568
      %v3577 = vsub.f32 %v3516, %v3568
      %v3578 = vsub.f32 %v3442, %v3568
      %v3579 = vsub.f32 %v3480, %v3568
      %v3580 = vsub.f32 %v3518, %v3568
      %v3581 = vperm.slane %v3076, 3
      %v3582 = vperm.slane %v3077, 3
      %v3583 = vperm.slane %v3078, 3
      %v3584 = vmul.f32 %v3569, %v3581
      %v3585 = vmul.f32 %v3570, %v3582
      %v3586 = vmul.f32 %v3571, %v3583
      %v3587 = vmul.f32 %v3572, %v3581
      %v3588 = vmul.f32 %v3573, %v3582
      %v3589 = vmul.f32 %v3574, %v3583
      %v3590 = vmul.f32 %v3575, %v3581
      %v3591 = vmul.f32 %v3576, %v3582
      %v3592 = vmul.f32 %v3577, %v3583
      %v3593 = vmul.f32 %v3578, %v3581
      %v3594 = vmul.f32 %v3579, %v3582
      %v3595 = vmul.f32 %v3580, %v3583
      %v3596 = vmul.f32 %v3584, %v3584
      %v3597 = vmul.f32 %v3585, %v3585
      %v3598 = vmul.f32 %v3586, %v3586
      %v3599 = vmul.f32 %v3587, %v3587
      %v3600 = vmul.f32 %v3588, %v3588
      %v3601 = vmul.f32 %v3589, %v3589
      %v3602 = vmul.f32 %v3590, %v3590
      %v3603 = vmul.f32 %v3591, %v3591
      %v3604 = vmul.f32 %v3592, %v3592
      %v3605 = vmul.f32 %v3593, %v3593
      %v3606 = vmul.f32 %v3594, %v3594
      %v3607 = vmul.f32 %v3595, %v3595
      %v3608 = vadd.f32 %v3596, %v3599
      %v3609 = vadd.f32 %v3608, %v3602
      %v3610 = vsel %vm1364, %v3605, 0.0
      %v3611 = vadd.f32 %v3609, %v3610
      %v3612 = vrot.slane %v3611, 4
      %v3613 = vadd.f32 %v3611, %v3612
      %v3614 = vrot.slane %v3613, 2
      %v3615 = vadd.f32 %v3613, %v3614
      %v3616 = vrot.slane %v3615, 1
      %v3617 = vadd.f32 %v3615, %v3616
      %v3618 = vadd.f32 %v3597, %v3600
      %v3619 = vadd.f32 %v3618, %v3603
      %v3620 = vsel %vm1364, %v3606, 0.0
      %v3621 = vadd.f32 %v3619, %v3620
      %v3622 = vrot.slane %v3621, 4
      %v3623 = vadd.f32 %v3621, %v3622
      %v3624 = vrot.slane %v3623, 2
      %v3625 = vadd.f32 %v3623, %v3624
      %v3626 = vrot.slane %v3625, 1
      %v3627 = vadd.f32 %v3625, %v3626
      %v3628 = vadd.f32 %v3598, %v3601
      %v3629 = vadd.f32 %v3628, %v3604
      %v3630 = vsel %vm1364, %v3607, 0.0
      %v3631 = vadd.f32 %v3629, %v3630
      %v3632 = vrot.slane %v3631, 4
      %v3633 = vadd.f32 %v3631, %v3632
      %v3634 = vrot.slane %v3633, 2
      %v3635 = vadd.f32 %v3633, %v3634
      %v3636 = vrot.slane %v3635, 1
      %v3637 = vadd.f32 %v3635, %v3636
      %v3638 = vadd.f32 %v3617, 0.0
      %v3639 = vadd.f32 %v3627, 0.0
      %v3640 = vadd.f32 %v3637, 0.0
      %v3641 = vsel %vm1451, %v3638, 0.0
      %v3642 = vsel %vm1451, %v3639, 0.0
      %v3643 = vadd.f32 %v3641, %v3642
      %v3644 = vsel %vm1451, %v3640, 0.0
      %v3645 = vadd.f32 %v3643, %v3644
      %3646 = vadd.xlane.f32.xlu0 %v3645
      %v3647 = vpop.xlane.xlu0 %3646
      %v3648 = vrot.slane %v3647, 4
      %v3649 = vadd.f32 %v3647, %v3648
      %v3650 = vrot.slane %v3649, 2
      %v3651 = vadd.f32 %v3649, %v3650
      %v3652 = vrot.slane %v3651, 1
      %v3653 = vadd.f32 %v3651, %v3652
      %s3654 = vtos %v3653
      %s3655 = smul.f32 %s3654, 9.645062e-05
      %s3656 = sadd.f32 %s3655, 1e-05
      %v3657 = vstv %s3656
      %v3658 = vrsqrt.pop %v3657
      %v3659 = vmul.f32 %v3658, %v3657
      %v3660 = vmul.f32 %v3659, %v3658
      %v3661 = vmul.f32 0.5, %v3660
      %v3662 = vsub.f32 1.5, %v3661
      %v3663 = vmul.f32 %v3658, %v3662
      %vm3664 = vweird.f32 %v3657
      %vm3665 = vweird.f32 %v3658
      %vm3666 = vmor %vm3664, %vm3665
      %v3667 = vsel %vm3666, %v3658, %v3663
      %s3668 = vtos %v3667
      %v3669 = vstv %s3668
      %v3670 = vmul.f32 %v3076, %v3669
      %v3671 = vmul.f32 %v3077, %v3669
      %v3672 = vmul.f32 %v3078, %v3669
      %v3673 = vperm.slane %v3670, 1
      %v3674 = vperm.slane %v3671, 1
      %v3675 = vperm.slane %v3672, 1
      %v3676 = vmul.f32 %v3584, %v3673
      %v3677 = vmul.f32 %v3585, %v3674
      %v3678 = vmul.f32 %v3586, %v3675
      %v3679 = vmul.f32 %v3587, %v3673
      %v3680 = vmul.f32 %v3588, %v3674
      %v3681 = vmul.f32 %v3589, %v3675
      %v3682 = vmul.f32 %v3590, %v3673
      %v3683 = vmul.f32 %v3591, %v3674
      %v3684 = vmul.f32 %v3592, %v3675
      %v3685 = vmul.f32 %v3593, %v3673
      %v3686 = vmul.f32 %v3594, %v3674
      %v3687 = vmul.f32 %v3595, %v3675
      %v3688 = vperm.slane %v3076, 2
      %v3689 = vperm.slane %v3077, 2
      %v3690 = vperm.slane %v3078, 2
      %v3691 = vadd.f32 %v3676, %v3688
      %v3692 = vadd.f32 %v3677, %v3689
      %v3693 = vadd.f32 %v3678, %v3690
      %v3694 = vadd.f32 %v3679, %v3688
      %v3695 = vadd.f32 %v3680, %v3689
      %v3696 = vadd.f32 %v3681, %v3690
      %v3697 = vadd.f32 %v3682, %v3688
      %v3698 = vadd.f32 %v3683, %v3689
      %v3699 = vadd.f32 %v3684, %v3690
      %v3700 = vadd.f32 %v3685, %v3688
      %v3701 = vadd.f32 %v3686, %v3689
      %v3702 = vadd.f32 %v3687, %v3690
      %v3703 = vld [vmem:[%s7] sm:$0xff]
      %v3704 = vld [vmem:[%s7 + $0x8] sm:$0xff]
      %v3705 = vld [vmem:[%s7 + $0x10] sm:$0xff]
      %v3706 = vld [vmem:[%s7 + $0x18] sm:$0xff]
      %v3707 = vld [vmem:[%s7 + $0x20] sm:$0xff]
      %v3708 = vld [vmem:[%s7 + $0x28] sm:$0xff]
      %v3709 = vld [vmem:[%s7 + $0x30] sm:$0xff]
      %v3710 = vld [vmem:[%s7 + $0x38] sm:$0xff]
      %v3711 = vld [vmem:[%s7 + $0x40] sm:$0xff]
      %v3712 = vld [vmem:[%s7 + $0x48] sm:$0x7]
      %v3713 = vld [vmem:[%s7 + $0x50] sm:$0x7]
      %v3714 = vld [vmem:[%s7 + $0x58] sm:$0x7]
      %v3715 = vadd.f32 %v3691, %v3703
      %v3716 = vadd.f32 %v3692, %v3704
      %v3717 = vadd.f32 %v3693, %v3705
      %v3718 = vadd.f32 %v3694, %v3706
      %v3719 = vadd.f32 %v3695, %v3707
      %v3720 = vadd.f32 %v3696, %v3708
      %v3721 = vadd.f32 %v3697, %v3709
      %v3722 = vadd.f32 %v3698, %v3710
      %v3723 = vadd.f32 %v3699, %v3711
      %v3724 = vadd.f32 %v3700, %v3712
      %v3725 = vadd.f32 %v3701, %v3713
      %v3726 = vadd.f32 %v3702, %v3714
      %3727 = vst [vmem:[%s384] sm:$0xff] %v3715
      %3728 = vst [vmem:[%s384 + $0x8] sm:$0xff] %v3716
      %3729 = vst [vmem:[%s384 + $0x10] sm:$0xff] %v3717
      %3730 = vst [vmem:[%s384 + $0x18] sm:$0xff] %v3718
      %3731 = vst [vmem:[%s384 + $0x20] sm:$0xff] %v3719
      %3732 = vst [vmem:[%s384 + $0x28] sm:$0xff] %v3720
      %3733 = vst [vmem:[%s384 + $0x30] sm:$0xff] %v3721
      %3734 = vst [vmem:[%s384 + $0x38] sm:$0xff] %v3722
      %3735 = vst [vmem:[%s384 + $0x40] sm:$0xff] %v3723
      %3736 = vst [vmem:[%s384 + $0x48] sm:$0x7] %v3724
      %3737 = vst [vmem:[%s384 + $0x50] sm:$0x7] %v3725
      %3738 = vst [vmem:[%s384 + $0x58] sm:$0x7] %v3726
      %p3739 = scmp.lt.s32.totalorder %s22, 1
      %s3740 = scalar_select %p3739, %s22, 1
      %s3741 = smul.addr %s3740, 32
      %s3742 = smul.addr %s3741, 8
      %s3743 = scalar_lea.vmem %s8, %s3742
      %p3744 = scmp.lt.s32.totalorder %s22, 1
      %s3745 = scalar_select %p3744, %s22, 1
      %s3746 = smul.addr %s3745, 8
      %s3747 = smul.addr %s3746, 8
      %s3748 = scalar_lea.vmem %s9, %s3747
      %p3749 = scmp.lt.s32.totalorder %s22, 1
      %s3750 = scalar_select %p3749, %s22, 1
      %s3751 = smul.addr %s3750, 12
      %s3752 = smul.addr %s3751, 8
      %s3753 = scalar_lea.vmem %s10, %s3752
      // Predicated region
      $region53: #{_encoder_forward.3} parent=51 // pred_check
        %p3754 = pneg %p213
      $region54: #{_encoder_forward.3} parent=51 // pred_check_branch
        %3756 = sbr.rel (%p3754) target = $region56
      $region55: #{_encoder_forward.3} parent=51 // pred_region
        _
      $region56: #{_encoder_forward.3} parent=51 // pred_fallthru
        _
      // Predicated region
      $region57: #{_encoder_forward.3} parent=51 // pred_check
        %p3757 = pneg %p239
      $region58: #{_encoder_forward.3} parent=51 // pred_check_branch
        %3759 = sbr.rel (%p3757) target = $region60
      $region59: #{_encoder_forward.3} parent=51 // pred_region
        _
      $region60: #{_encoder_forward.3} parent=51 // pred_fallthru
        _
      // Predicated region
      $region61: #{_encoder_forward.3} parent=51 // pred_check
        %p3760 = pneg %p265
      $region62: #{_encoder_forward.3} parent=51 // pred_check_branch
        %3762 = sbr.rel (%p3760) target = $region64
      $region63: #{_encoder_forward.3} parent=51 // pred_region
        _
      $region64: #{_encoder_forward.3} parent=51 // pred_fallthru
        _
    $region52: #{_encoder_forward.3} parent=5 // pred_fallthru
      _
    %p3763 = scmp.le.s32.totalorder 2, %s17
    // Predicated region
    $region65: #{_encoder_forward.3} parent=5 // pred_check
      %p3764 = pneg %p3763
    $region66: #{_encoder_forward.3} parent=5 // pred_check_branch
      %3766 = sbr.rel (%p3764) target = $region68
    $region67: #{_encoder_forward.3} parent=5 // pred_region
      %s3767 = ssub.s32 %s17, 2
      // Predicated region
      $region69: #{_encoder_forward.3} parent=67 // pred_check
        %p3768 = pneg %p219
      $region70: #{_encoder_forward.3} parent=67 // pred_check_branch
        %3770 = sbr.rel (%p3768) target = $region72
      $region71: #{_encoder_forward.3} parent=67 // pred_region
        %p3771 = scmp.lt.s32.totalorder %s23, 1
        %s3772 = scalar_select %p3771, %s23, 1
        %s3773 = smul.addr %s3772, 32
        %s3774 = smul.addr %s3773, 8
        %s3775 = scalar_lea.vmem %s8, %s3774
      $region72: #{_encoder_forward.3} parent=67 // pred_fallthru
        _
      // Predicated region
      $region73: #{_encoder_forward.3} parent=67 // pred_check
        %p3776 = pneg %p245
      $region74: #{_encoder_forward.3} parent=67 // pred_check_branch
        %3778 = sbr.rel (%p3776) target = $region76
      $region75: #{_encoder_forward.3} parent=67 // pred_region
        %p3779 = scmp.lt.s32.totalorder %s23, 1
        %s3780 = scalar_select %p3779, %s23, 1
        %s3781 = smul.addr %s3780, 8
        %s3782 = smul.addr %s3781, 8
        %s3783 = scalar_lea.vmem %s9, %s3782
      $region76: #{_encoder_forward.3} parent=67 // pred_fallthru
        _
      // Predicated region
      $region77: #{_encoder_forward.3} parent=67 // pred_check
        %p3784 = pneg %p271
      $region78: #{_encoder_forward.3} parent=67 // pred_check_branch
        %3786 = sbr.rel (%p3784) target = $region80
      $region79: #{_encoder_forward.3} parent=67 // pred_region
        %p3787 = scmp.lt.s32.totalorder %s23, 1
        %s3788 = scalar_select %p3787, %s23, 1
        %s3789 = smul.addr %s3788, 12
        %s3790 = smul.addr %s3789, 8
        %s3791 = scalar_lea.vmem %s10, %s3790
      $region80: #{_encoder_forward.3} parent=67 // pred_fallthru
        _
    $region68: #{_encoder_forward.3} parent=5 // pred_fallthru
      _
  $region6: #{_encoder_forward.3} parent=0 // loop_footer
    %s21 = sadd.s32 1, %s17
  $region7: #{_encoder_forward.3} parent=0 // loop_footer_branch
    %16 = sbr.rel target = $region3
  $region8: #{_encoder_forward.3} parent=0 // loop_exit
    _

</llo_original>
